<compile_context>
chip_gen: v7x
topology: tpu7x:2x2x1
jax: 0.10.0
libtpu: 0.0.40
codegen_flags: <defaults>
</compile_context>

<pallas_src>
import functools

import jax
import jax.numpy as jnp
from jax import lax
from jax.experimental import pallas as pl
from jax.experimental.pallas import tpu as pltpu

EPS = 1e-5


# ----------------------------- pallas_call glue -----------------------------

def _full_spec(shape):
    # Whole-array block for a single grid step (block == full dims).
    return pl.BlockSpec(shape, lambda i, _n=len(shape): (0,) * _n)


def _padded_f32_bytes(shape):
    """VMEM footprint of an f32 array after (8,128) tile padding."""
    if len(shape) == 1:
        return 8 * (-(-shape[0] // 128) * 128) * 4
    lead = 1
    for d in shape[:-2]:
        lead *= int(d)
    sub = -(-int(shape[-2]) // 8) * 8
    lane = -(-int(shape[-1]) // 128) * 128
    return lead * sub * lane * 4


# ------------------------------ kernel helpers -------------------------------

def _bn_train(y, gamma, beta):
    """Training-mode BatchNorm over all axes but the channel (last) axis.

    Two-pass (subtract-mean) statistics to avoid the E[x^2]-mean^2 cancellation,
    biased variance, eps=1e-5.  gamma/beta are [1, C] and broadcast.
    """
    red = tuple(range(y.ndim - 1))
    mean = jnp.mean(y, axis=red, keepdims=True)
    d = y - mean
    var = jnp.mean(d * d, axis=red, keepdims=True)
    return d * lax.rsqrt(var + EPS) * gamma + beta


def _silu(y):
    return y * jax.nn.sigmoid(y)


# ------------------------------ fused MBConv kernel --------------------------

def _mbconv_kernel(x_ref,
                   w1_ref, g1_ref, b1_ref,
                   wdw_ref, g2_ref, b2_ref,
                   sw1_ref, sb1_ref, sw2_ref, sb2_ref,
                   w3_ref, g3_ref, b3_ref,
                   o_ref, hbuf_ref, *dec_refs,
                   ksize, stride, pad, use_skip):
    n, h, w, cin = x_ref.shape
    _, hp, wbuf, e = hbuf_ref.shape
    cout = w3_ref.shape[1]
    oh = (h + 2 * pad - ksize) // stride + 1
    ow = (w + 2 * pad - ksize) // stride + 1
    # Left pad along W is rounded up to a multiple of 8 so the big interior store
    # below is sublane-aligned; `woff` maps "conceptual padded" W coords -> buffer.
    lpad = wbuf - w - pad
    woff = lpad - pad

    # ---- 1x1 expand conv (MXU) + BN1 + SiLU ---------------------------------
    x2d = x_ref[...].astype(jnp.float32).reshape(n * h * w, cin)     # leading collapse
    y1 = jnp.dot(x2d, w1_ref[...], preferred_element_type=jnp.float32)   # [M1, E]
    y1 = _silu(_bn_train(y1, g1_ref[...], b1_ref[...]))
    y1 = y1.reshape(n, h, w, e)

    # ---- in-kernel zero padding: aligned interior write + thin ring zeros ---
    hbuf_ref[:, pad:pad + h, lpad:lpad + w, :] = y1
    if pad > 0:
        zrow = jnp.zeros((n, pad, wbuf, e), jnp.float32)
        hbuf_ref[:, 0:pad, :, :] = zrow                      # top rows
        hbuf_ref[:, pad + h:hp, :, :] = zrow                 # bottom rows
        hbuf_ref[:, pad:pad + h, 0:lpad, :] = jnp.zeros((n, h, lpad, e), jnp.float32)
        hbuf_ref[:, pad:pad + h, lpad + w:wbuf, :] = jnp.zeros((n, h, pad, e),
                                                               jnp.float32)

    # ---- depthwise KxK conv + BN2 + SiLU ------------------------------------
    if stride == 1:
        def tap(dh, dw):
            return hbuf_ref[:, pl.ds(dh, oh), pl.ds(woff + dw, ow), :]
    else:
        # Decimate once into `stride` W-parity planes so every tap read below is
        # W-contiguous (only these `stride` reads are sublane-strided).
        for r in range(stride):
            wd_r = dec_refs[r].shape[2]
            dec_refs[r][...] = hbuf_ref[:, :, pl.ds(woff + r, wd_r, stride), :]

        def tap(dh, dw):
            return dec_refs[dw % stride][:, pl.ds(dh, oh, stride),
                                         pl.ds(dw // stride, ow), :]

    acc = None
    for dh in range(ksize):
        for dw in range(ksize):
            term = tap(dh, dw) * wdw_ref[dh * ksize + dw]    # per-channel weight [E]
            acc = term if acc is None else acc + term
    y2 = _silu(_bn_train(acc, g2_ref[...], b2_ref[...]))     # [N, OH, OW, E]

    # ---- squeeze-and-excitation (MXU MLP on the pooled vector) ---------------
    pooled = jnp.mean(y2, axis=(1, 2), keepdims=True).reshape(n, e)        # [N, E]
    se = jnp.dot(pooled, sw1_ref[...], preferred_element_type=jnp.float32) + sb1_ref[...]
    se = _silu(se)
    se = jnp.dot(se, sw2_ref[...], preferred_element_type=jnp.float32) + sb2_ref[...]
    se = jax.nn.sigmoid(se)                                                # [N, E]
    y2 = y2 * se[:, None, None, :]

    # ---- 1x1 project conv (MXU) + BN3 (+ residual) ---------------------------
    y2f = y2.reshape(n * oh * ow, e)                                       # [M2, E]
    y3 = jnp.dot(y2f, w3_ref[...], preferred_element_type=jnp.float32)     # [M2, Cout]
    y3 = _bn_train(y3, g3_ref[...], b3_ref[...])
    if use_skip:
        y3 = y3 + x2d                                                      # Cin == Cout

    # ---- lane-dense epilogue store -------------------------------------------
    # Transpose to [Cout, M2] on the otherwise-idle MXU (identity @ y3^T) so the
    # output store uses all 128 lanes (unmasked vst, dense DMA) instead of
    # Cout/128 masked lanes.  The wrapper unpacks back to NHWC.
    rows = lax.broadcasted_iota(jnp.int32, (cout, cout), 0)
    cols = lax.broadcasted_iota(jnp.int32, (cout, cout), 1)
    eye = (rows == cols).astype(jnp.float32)
    o_t = lax.dot_general(eye, y3, (((1,), (1,)), ((), ())),
                          preferred_element_type=jnp.float32)              # [Cout, M2]
    o_ref[...] = o_t.astype(o_ref.dtype)


# ------------------------------ block wrapper --------------------------------

def mbconv_block(x, p, *, ksize, stride):
    """One fused MBConv block as a single pallas_call.  x: [N, H, W, Cin] f32."""
    assert stride >= 1
    n, h, w, cin = x.shape
    e = p["conv1_w"].shape[1]
    cout = p["conv3_w"].shape[1]
    pad = ksize // 2
    hp = h + 2 * pad
    lpad = ((pad + 7) // 8) * 8 if pad > 0 else 0     # sublane-aligned interior start
    wbuf = lpad + w + pad
    oh = (h + 2 * pad - ksize) // stride + 1
    ow = (w + 2 * pad - ksize) // stride + 1
    m2 = n * oh * ow
    use_skip = (cin == cout) and stride == 1

    args = (x,
            p["conv1_w"], p["bn1_g"], p["bn1_b"],
            p["conv2_w"], p["bn2_g"], p["bn2_b"],
            p["se_w1"], p["se_b1"], p["se_w2"], p["se_b2"],
            p["conv3_w"], p["bn3_g"], p["bn3_b"])

    scr_shapes = [(n, hp, wbuf, e)]                   # padded BN1+SiLU activation
    if stride > 1:
        wp_orig = w + 2 * pad
        scr_shapes += [(n, hp, (wp_orig - r + stride - 1) // stride, e)
                       for r in range(stride)]        # W-parity decimation planes
    scratch = [pltpu.VMEM(s, jnp.float32) for s in scr_shapes]

    # Explicit VMEM budget: double-buffered I/O + scratch + headroom, well under the
    # v7x 64 MiB physical VMEM (v5e/v6e have 128 MiB; scoped defaults are 16/32/32 MiB).
    io_bytes = sum(_padded_f32_bytes(a.shape) for a in args)
    io_bytes += _padded_f32_bytes((cout, m2))
    scr_bytes = sum(_padded_f32_bytes(s) for s in scr_shapes)
    vmem_limit = int(min(2 * io_bytes + scr_bytes + (4 << 20), 32 << 20))

    kernel = functools.partial(
        _mbconv_kernel, ksize=ksize, stride=stride, pad=pad, use_skip=use_skip)

    out_t = pl.pallas_call(
        kernel,
        grid=(1,),
        in_specs=[_full_spec(a.shape) for a in args],
        out_specs=_full_spec((cout, m2)),
        out_shape=jax.ShapeDtypeStruct((cout, m2), jnp.float32),
        scratch_shapes=scratch,
        compiler_params=pltpu.CompilerParams(
            dimension_semantics=("arbitrary",),
            vmem_limit_bytes=vmem_limit),
    )(*args)

    # Unpack the lane-dense [Cout, N*OH*OW] slab back to NHWC (cheap XLA op).
    return jnp.transpose(out_t.reshape(cout, n, oh, ow), (1, 2, 3, 0))


# ----------------------------- params / forward -------------------------------

def init_mbconv_params(key, in_f, out_f, expand, ksize):
    e = in_f * expand
    r = e // 4
    keys = jax.random.split(key, 5)
    scale = jnp.float32(0.1)
    return dict(
        conv1_w=jax.random.normal(keys[0], (in_f, e), jnp.float32) * scale,
        bn1_g=jnp.ones((1, e), jnp.float32), bn1_b=jnp.zeros((1, e), jnp.float32),
        conv2_w=jax.random.normal(keys[1], (ksize * ksize, e), jnp.float32) * scale,
        bn2_g=jnp.ones((1, e), jnp.float32), bn2_b=jnp.zeros((1, e), jnp.float32),
        se_w1=jax.random.normal(keys[2], (e, r), jnp.float32) * scale,
        se_b1=jnp.zeros((1, r), jnp.float32),
        se_w2=jax.random.normal(keys[3], (r, e), jnp.float32) * scale,
        se_b2=jnp.zeros((1, e), jnp.float32),
        conv3_w=jax.random.normal(keys[4], (e, out_f), jnp.float32) * scale,
        bn3_g=jnp.ones((1, out_f), jnp.float32),
        bn3_b=jnp.zeros((1, out_f), jnp.float32),
    )


def mbconv_layers_forward(x, params_list, *, ksize, stride):
    h = mbconv_block(x, params_list[0], ksize=ksize, stride=stride)
    for p in params_list[1:]:
        h = mbconv_block(h, p, ksize=ksize, stride=1)
    return h


# ----------------------------------- main --------------------------------------

if __name__ == "__main__":
    key = jax.random.PRNGKey(0)
    # MBconvLayers(in_channel=4, out_channel=8, expand=4, kernel=3, stride=2, layers=2)
    N, C_IN, H, W = 2, 4, 16, 16
    OUT_C, EXPAND, KSIZE, STRIDE, LAYERS = 8, 4, 3, 2, 2

    k_x, k_p = jax.random.split(key)
    x_nchw = jax.random.normal(k_x, (N, C_IN, H, W), jnp.float32)   # PyTorch layout
    x = jnp.transpose(x_nchw, (0, 2, 3, 1))                         # -> NHWC for kernels

    pkeys = jax.random.split(k_p, LAYERS)
    params = [init_mbconv_params(pkeys[0], C_IN, OUT_C, EXPAND, KSIZE)]
    for i in range(1, LAYERS):
        params.append(init_mbconv_params(pkeys[i], OUT_C, OUT_C, EXPAND, KSIZE))

    fwd = jax.jit(functools.partial(mbconv_layers_forward, ksize=KSIZE, stride=STRIDE))
    out = fwd(x, params)
    out = jax.block_until_ready(out)
    out_nchw = jnp.transpose(out, (0, 3, 1, 2))                     # back to NCHW
    assert out_nchw.shape == (N, OUT_C, H // STRIDE, W // STRIDE)
    assert bool(jnp.all(jnp.isfinite(out_nchw)))
    print("KERNEL_OK")
</pallas_src>

<mosaic_0001>
module attributes {stable_mosaic.version = 11 : i64} {
  func.func @_mbconv_kernel(%arg0: i32, %arg1: memref<2x16x16x4xf32, #tpu.memory_space<vmem>>, %arg2: memref<4x16xf32, #tpu.memory_space<vmem>>, %arg3: memref<1x16xf32, #tpu.memory_space<vmem>>, %arg4: memref<1x16xf32, #tpu.memory_space<vmem>>, %arg5: memref<9x16xf32, #tpu.memory_space<vmem>>, %arg6: memref<1x16xf32, #tpu.memory_space<vmem>>, %arg7: memref<1x16xf32, #tpu.memory_space<vmem>>, %arg8: memref<16x4xf32, #tpu.memory_space<vmem>>, %arg9: memref<1x4xf32, #tpu.memory_space<vmem>>, %arg10: memref<4x16xf32, #tpu.memory_space<vmem>>, %arg11: memref<1x16xf32, #tpu.memory_space<vmem>>, %arg12: memref<16x8xf32, #tpu.memory_space<vmem>>, %arg13: memref<1x8xf32, #tpu.memory_space<vmem>>, %arg14: memref<1x8xf32, #tpu.memory_space<vmem>>, %arg15: memref<8x128xf32, #tpu.memory_space<vmem>>, %arg16: memref<2x18x25x16xf32, #tpu.memory_space<vmem>>, %arg17: memref<2x18x9x16xf32, #tpu.memory_space<vmem>>, %arg18: memref<2x18x9x16xf32, #tpu.memory_space<vmem>>) attributes {dimension_semantics = [#tpu.dimension_semantics<arbitrary>], iteration_bounds = array<i64: 1>, scalar_prefetch = 0 : i64, scratch_operands = 3 : i64, tpu.core_type = #tpu.core_type<tc>, window_params = [{pipeline_mode = #tpu.pipeline_mode<synchronous>, transform_indices = @transform_0, window_bounds = array<i64: 2, 16, 16, 4>}, {pipeline_mode = #tpu.pipeline_mode<synchronous>, transform_indices = @transform_1, window_bounds = array<i64: 4, 16>}, {pipeline_mode = #tpu.pipeline_mode<synchronous>, transform_indices = @transform_2, window_bounds = array<i64: 1, 16>}, {pipeline_mode = #tpu.pipeline_mode<synchronous>, transform_indices = @transform_3, window_bounds = array<i64: 1, 16>}, {pipeline_mode = #tpu.pipeline_mode<synchronous>, transform_indices = @transform_4, window_bounds = array<i64: 9, 16>}, {pipeline_mode = #tpu.pipeline_mode<synchronous>, transform_indices = @transform_5, window_bounds = array<i64: 1, 16>}, {pipeline_mode = #tpu.pipeline_mode<synchronous>, transform_indices = @transform_6, window_bounds = array<i64: 1, 16>}, {pipeline_mode = #tpu.pipeline_mode<synchronous>, transform_indices = @transform_7, window_bounds = array<i64: 16, 4>}, {pipeline_mode = #tpu.pipeline_mode<synchronous>, transform_indices = @transform_8, window_bounds = array<i64: 1, 4>}, {pipeline_mode = #tpu.pipeline_mode<synchronous>, transform_indices = @transform_9, window_bounds = array<i64: 4, 16>}, {pipeline_mode = #tpu.pipeline_mode<synchronous>, transform_indices = @transform_10, window_bounds = array<i64: 1, 16>}, {pipeline_mode = #tpu.pipeline_mode<synchronous>, transform_indices = @transform_11, window_bounds = array<i64: 16, 8>}, {pipeline_mode = #tpu.pipeline_mode<synchronous>, transform_indices = @transform_12, window_bounds = array<i64: 1, 8>}, {pipeline_mode = #tpu.pipeline_mode<synchronous>, transform_indices = @transform_13, window_bounds = array<i64: 1, 8>}, {pipeline_mode = #tpu.pipeline_mode<synchronous>, transform_indices = @transform_14, window_bounds = array<i64: 8, 128>}]} {
    %c0 = arith.constant 0 : index
    %c0_0 = arith.constant 0 : index
    %c0_1 = arith.constant 0 : index
    %c0_2 = arith.constant 0 : index
    %0 = vector.load %arg1[%c0, %c0_0, %c0_1, %c0_2] : memref<2x16x16x4xf32, #tpu.memory_space<vmem>>, vector<2x16x16x4xf32>
    %1 = vector.shape_cast %0 : vector<2x16x16x4xf32> to vector<512x4xf32>
    %c0_3 = arith.constant 0 : index
    %c0_4 = arith.constant 0 : index
    %2 = vector.load %arg2[%c0_3, %c0_4] : memref<4x16xf32, #tpu.memory_space<vmem>>, vector<4x16xf32>
    %cst = arith.constant dense<0.000000e+00> : vector<512x16xf32>
    %3 = tpu.matmul %1, %2, %cst {dimension_numbers = #tpu.dot_dimension_numbers<[1], [0], [0], [1], [0, 0, 1, 1], [], []>} : vector<512x4xf32>, vector<4x16xf32>, vector<512x16xf32> -> vector<512x16xf32>
    %c0_5 = arith.constant 0 : index
    %c0_6 = arith.constant 0 : index
    %4 = vector.load %arg3[%c0_5, %c0_6] : memref<1x16xf32, #tpu.memory_space<vmem>>, vector<1x16xf32>
    %c0_7 = arith.constant 0 : index
    %c0_8 = arith.constant 0 : index
    %5 = vector.load %arg4[%c0_7, %c0_8] : memref<1x16xf32, #tpu.memory_space<vmem>>, vector<1x16xf32>
    %cst_9 = arith.constant dense<0.000000e+00> : vector<16xf32>
    %6 = vector.multi_reduction <add>, %3, %cst_9 [0] : vector<512x16xf32> to vector<16xf32>
    %7 = vector.shape_cast %6 : vector<16xf32> to vector<1x16xf32>
    %cst_10 = arith.constant 5.120000e+02 : f32
    %8 = vector.broadcast %cst_10 : f32 to vector<1x16xf32>
    %9 = arith.divf %7, %8 : vector<1x16xf32>
    %10 = vector.broadcast %9 : vector<1x16xf32> to vector<512x16xf32>
    %11 = arith.subf %3, %10 : vector<512x16xf32>
    %12 = arith.mulf %11, %11 : vector<512x16xf32>
    %cst_11 = arith.constant dense<0.000000e+00> : vector<16xf32>
    %13 = vector.multi_reduction <add>, %12, %cst_11 [0] : vector<512x16xf32> to vector<16xf32>
    %14 = vector.shape_cast %13 : vector<16xf32> to vector<1x16xf32>
    %cst_12 = arith.constant 5.120000e+02 : f32
    %15 = vector.broadcast %cst_12 : f32 to vector<1x16xf32>
    %16 = arith.divf %14, %15 : vector<1x16xf32>
    %cst_13 = arith.constant 9.99999974E-6 : f32
    %17 = vector.broadcast %cst_13 : f32 to vector<1x16xf32>
    %18 = arith.addf %16, %17 : vector<1x16xf32>
    %19 = math.rsqrt %18 : vector<1x16xf32>
    %20 = vector.broadcast %19 : vector<1x16xf32> to vector<512x16xf32>
    %21 = arith.mulf %11, %20 : vector<512x16xf32>
    %22 = vector.broadcast %4 : vector<1x16xf32> to vector<512x16xf32>
    %23 = arith.mulf %21, %22 : vector<512x16xf32>
    %24 = vector.broadcast %5 : vector<1x16xf32> to vector<512x16xf32>
    %25 = arith.addf %23, %24 : vector<512x16xf32>
    %26 = arith.negf %25 : vector<512x16xf32>
    %27 = math.exp %26 : vector<512x16xf32>
    %cst_14 = arith.constant 1.000000e+00 : f32
    %28 = vector.broadcast %cst_14 : f32 to vector<512x16xf32>
    %29 = arith.addf %28, %27 : vector<512x16xf32>
    %30 = arith.divf %28, %29 : vector<512x16xf32>
    %31 = arith.mulf %25, %30 : vector<512x16xf32>
    %32 = vector.shape_cast %31 : vector<512x16xf32> to vector<2x16x16x16xf32>
    %c0_15 = arith.constant 0 : index
    %c1 = arith.constant 1 : index
    %c8 = arith.constant 8 : index
    %c0_16 = arith.constant 0 : index
    %33 = vector.load %arg16[%c0_15, %c1, %c8, %c0_16] : memref<2x18x25x16xf32, #tpu.memory_space<vmem>>, vector<2x16x16x16xf32>
    tpu.vector_store %arg16[%c0_15, %c1, %c8, %c0_16], %32 {strides = array<i32>} : memref<2x18x25x16xf32, #tpu.memory_space<vmem>>, vector<2x16x16x16xf32>,
    %cst_17 = arith.constant 0.000000e+00 : f32
    %34 = vector.broadcast %cst_17 : f32 to vector<2x1x25x16xf32>
    %c0_18 = arith.constant 0 : index
    %c0_19 = arith.constant 0 : index
    %c0_20 = arith.constant 0 : index
    %c0_21 = arith.constant 0 : index
    %35 = vector.load %arg16[%c0_18, %c0_19, %c0_20, %c0_21] : memref<2x18x25x16xf32, #tpu.memory_space<vmem>>, vector<2x1x25x16xf32>
    tpu.vector_store %arg16[%c0_18, %c0_19, %c0_20, %c0_21], %34 {strides = array<i32>} : memref<2x18x25x16xf32, #tpu.memory_space<vmem>>, vector<2x1x25x16xf32>,
    %c0_22 = arith.constant 0 : index
    %c17 = arith.constant 17 : index
    %c0_23 = arith.constant 0 : index
    %c0_24 = arith.constant 0 : index
    %36 = vector.load %arg16[%c0_22, %c17, %c0_23, %c0_24] : memref<2x18x25x16xf32, #tpu.memory_space<vmem>>, vector<2x1x25x16xf32>
    tpu.vector_store %arg16[%c0_22, %c17, %c0_23, %c0_24], %34 {strides = array<i32>} : memref<2x18x25x16xf32, #tpu.memory_space<vmem>>, vector<2x1x25x16xf32>,
    %cst_25 = arith.constant 0.000000e+00 : f32
    %37 = vector.broadcast %cst_25 : f32 to vector<2x16x8x16xf32>
    %c0_26 = arith.constant 0 : index
    %c1_27 = arith.constant 1 : index
    %c0_28 = arith.constant 0 : index
    %c0_29 = arith.constant 0 : index
    %38 = vector.load %arg16[%c0_26, %c1_27, %c0_28, %c0_29] : memref<2x18x25x16xf32, #tpu.memory_space<vmem>>, vector<2x16x8x16xf32>
    tpu.vector_store %arg16[%c0_26, %c1_27, %c0_28, %c0_29], %37 {strides = array<i32>} : memref<2x18x25x16xf32, #tpu.memory_space<vmem>>, vector<2x16x8x16xf32>,
    %cst_30 = arith.constant 0.000000e+00 : f32
    %39 = vector.broadcast %cst_30 : f32 to vector<2x16x1x16xf32>
    %c0_31 = arith.constant 0 : index
    %c1_32 = arith.constant 1 : index
    %c24 = arith.constant 24 : index
    %c0_33 = arith.constant 0 : index
    %40 = vector.load %arg16[%c0_31, %c1_32, %c24, %c0_33] : memref<2x18x25x16xf32, #tpu.memory_space<vmem>>, vector<2x16x1x16xf32>
    tpu.vector_store %arg16[%c0_31, %c1_32, %c24, %c0_33], %39 {strides = array<i32>} : memref<2x18x25x16xf32, #tpu.memory_space<vmem>>, vector<2x16x1x16xf32>,
    %c0_34 = arith.constant 0 : index
    %c0_35 = arith.constant 0 : index
    %c7 = arith.constant 7 : index
    %c0_36 = arith.constant 0 : index
    %41 = tpu.strided_load %arg16[%c0_34, %c0_35, %c7, %c0_36] {strides = array<i32: 1, 1, 2, 1>} : memref<2x18x25x16xf32, #tpu.memory_space<vmem>>, vector<2x18x9x16xf32>
    %c0_37 = arith.constant 0 : index
    %c0_38 = arith.constant 0 : index
    %c0_39 = arith.constant 0 : index
    %c0_40 = arith.constant 0 : index
    %42 = vector.load %arg17[%c0_37, %c0_38, %c0_39, %c0_40] : memref<2x18x9x16xf32, #tpu.memory_space<vmem>>, vector<2x18x9x16xf32>
    tpu.vector_store %arg17[%c0_37, %c0_38, %c0_39, %c0_40], %41 {strides = array<i32>} : memref<2x18x9x16xf32, #tpu.memory_space<vmem>>, vector<2x18x9x16xf32>,
    %c0_41 = arith.constant 0 : index
    %c0_42 = arith.constant 0 : index
    %c8_43 = arith.constant 8 : index
    %c0_44 = arith.constant 0 : index
    %43 = tpu.strided_load %arg16[%c0_41, %c0_42, %c8_43, %c0_44] {strides = array<i32: 1, 1, 2, 1>} : memref<2x18x25x16xf32, #tpu.memory_space<vmem>>, vector<2x18x9x16xf32>
    %c0_45 = arith.constant 0 : index
    %c0_46 = arith.constant 0 : index
    %c0_47 = arith.constant 0 : index
    %c0_48 = arith.constant 0 : index
    %44 = vector.load %arg18[%c0_45, %c0_46, %c0_47, %c0_48] : memref<2x18x9x16xf32, #tpu.memory_space<vmem>>, vector<2x18x9x16xf32>
    tpu.vector_store %arg18[%c0_45, %c0_46, %c0_47, %c0_48], %43 {strides = array<i32>} : memref<2x18x9x16xf32, #tpu.memory_space<vmem>>, vector<2x18x9x16xf32>,
    %c0_49 = arith.constant 0 : index
    %c0_50 = arith.constant 0 : index
    %c0_51 = arith.constant 0 : index
    %c0_52 = arith.constant 0 : index
    %45 = tpu.strided_load %arg17[%c0_49, %c0_50, %c0_51, %c0_52] {strides = array<i32: 1, 2, 1, 1>} : memref<2x18x9x16xf32, #tpu.memory_space<vmem>>, vector<2x8x8x16xf32>
    %c0_53 = arith.constant 0 : index
    %c0_54 = arith.constant 0 : index
    %46 = vector.load %arg5[%c0_53, %c0_54] : memref<9x16xf32, #tpu.memory_space<vmem>>, vector<1x16xf32>
    %47 = vector.shape_cast %46 : vector<1x16xf32> to vector<16xf32>
    %48 = vector.shape_cast %47 : vector<16xf32> to vector<1x1x1x16xf32>
    %49 = vector.broadcast %48 : vector<1x1x1x16xf32> to vector<2x8x8x16xf32>
    %50 = arith.mulf %45, %49 : vector<2x8x8x16xf32>
    %c0_55 = arith.constant 0 : index
    %c0_56 = arith.constant 0 : index
    %c0_57 = arith.constant 0 : index
    %c0_58 = arith.constant 0 : index
    %51 = tpu.strided_load %arg18[%c0_55, %c0_56, %c0_57, %c0_58] {strides = array<i32: 1, 2, 1, 1>} : memref<2x18x9x16xf32, #tpu.memory_space<vmem>>, vector<2x8x8x16xf32>
    %c1_59 = arith.constant 1 : index
    %c0_60 = arith.constant 0 : index
    %52 = vector.load %arg5[%c1_59, %c0_60] : memref<9x16xf32, #tpu.memory_space<vmem>>, vector<1x16xf32>
    %53 = vector.shape_cast %52 : vector<1x16xf32> to vector<16xf32>
    %54 = vector.shape_cast %53 : vector<16xf32> to vector<1x1x1x16xf32>
    %55 = vector.broadcast %54 : vector<1x1x1x16xf32> to vector<2x8x8x16xf32>
    %56 = arith.mulf %51, %55 : vector<2x8x8x16xf32>
    %57 = arith.addf %50, %56 : vector<2x8x8x16xf32>
    %c0_61 = arith.constant 0 : index
    %c0_62 = arith.constant 0 : index
    %c1_63 = arith.constant 1 : index
    %c0_64 = arith.constant 0 : index
    %58 = tpu.strided_load %arg17[%c0_61, %c0_62, %c1_63, %c0_64] {strides = array<i32: 1, 2, 1, 1>} : memref<2x18x9x16xf32, #tpu.memory_space<vmem>>, vector<2x8x8x16xf32>
    %c2 = arith.constant 2 : index
    %c0_65 = arith.constant 0 : index
    %59 = vector.load %arg5[%c2, %c0_65] : memref<9x16xf32, #tpu.memory_space<vmem>>, vector<1x16xf32>
    %60 = vector.shape_cast %59 : vector<1x16xf32> to vector<16xf32>
    %61 = vector.shape_cast %60 : vector<16xf32> to vector<1x1x1x16xf32>
    %62 = vector.broadcast %61 : vector<1x1x1x16xf32> to vector<2x8x8x16xf32>
    %63 = arith.mulf %58, %62 : vector<2x8x8x16xf32>
    %64 = arith.addf %57, %63 : vector<2x8x8x16xf32>
    %c0_66 = arith.constant 0 : index
    %c1_67 = arith.constant 1 : index
    %c0_68 = arith.constant 0 : index
    %c0_69 = arith.constant 0 : index
    %65 = tpu.strided_load %arg17[%c0_66, %c1_67, %c0_68, %c0_69] {strides = array<i32: 1, 2, 1, 1>} : memref<2x18x9x16xf32, #tpu.memory_space<vmem>>, vector<2x8x8x16xf32>
    %c3 = arith.constant 3 : index
    %c0_70 = arith.constant 0 : index
    %66 = vector.load %arg5[%c3, %c0_70] : memref<9x16xf32, #tpu.memory_space<vmem>>, vector<1x16xf32>
    %67 = vector.shape_cast %66 : vector<1x16xf32> to vector<16xf32>
    %68 = vector.shape_cast %67 : vector<16xf32> to vector<1x1x1x16xf32>
    %69 = vector.broadcast %68 : vector<1x1x1x16xf32> to vector<2x8x8x16xf32>
    %70 = arith.mulf %65, %69 : vector<2x8x8x16xf32>
    %71 = arith.addf %64, %70 : vector<2x8x8x16xf32>
    %c0_71 = arith.constant 0 : index
    %c1_72 = arith.constant 1 : index
    %c0_73 = arith.constant 0 : index
    %c0_74 = arith.constant 0 : index
    %72 = tpu.strided_load %arg18[%c0_71, %c1_72, %c0_73, %c0_74] {strides = array<i32: 1, 2, 1, 1>} : memref<2x18x9x16xf32, #tpu.memory_space<vmem>>, vector<2x8x8x16xf32>
    %c4 = arith.constant 4 : index
    %c0_75 = arith.constant 0 : index
    %73 = vector.load %arg5[%c4, %c0_75] : memref<9x16xf32, #tpu.memory_space<vmem>>, vector<1x16xf32>
    %74 = vector.shape_cast %73 : vector<1x16xf32> to vector<16xf32>
    %75 = vector.shape_cast %74 : vector<16xf32> to vector<1x1x1x16xf32>
    %76 = vector.broadcast %75 : vector<1x1x1x16xf32> to vector<2x8x8x16xf32>
    %77 = arith.mulf %72, %76 : vector<2x8x8x16xf32>
    %78 = arith.addf %71, %77 : vector<2x8x8x16xf32>
    %c0_76 = arith.constant 0 : index
    %c1_77 = arith.constant 1 : index
    %c1_78 = arith.constant 1 : index
    %c0_79 = arith.constant 0 : index
    %79 = tpu.strided_load %arg17[%c0_76, %c1_77, %c1_78, %c0_79] {strides = array<i32: 1, 2, 1, 1>} : memref<2x18x9x16xf32, #tpu.memory_space<vmem>>, vector<2x8x8x16xf32>
    %c5 = arith.constant 5 : index
    %c0_80 = arith.constant 0 : index
    %80 = vector.load %arg5[%c5, %c0_80] : memref<9x16xf32, #tpu.memory_space<vmem>>, vector<1x16xf32>
    %81 = vector.shape_cast %80 : vector<1x16xf32> to vector<16xf32>
    %82 = vector.shape_cast %81 : vector<16xf32> to vector<1x1x1x16xf32>
    %83 = vector.broadcast %82 : vector<1x1x1x16xf32> to vector<2x8x8x16xf32>
    %84 = arith.mulf %79, %83 : vector<2x8x8x16xf32>
    %85 = arith.addf %78, %84 : vector<2x8x8x16xf32>
    %c0_81 = arith.constant 0 : index
    %c2_82 = arith.constant 2 : index
    %c0_83 = arith.constant 0 : index
    %c0_84 = arith.constant 0 : index
    %86 = tpu.strided_load %arg17[%c0_81, %c2_82, %c0_83, %c0_84] {strides = array<i32: 1, 2, 1, 1>} : memref<2x18x9x16xf32, #tpu.memory_space<vmem>>, vector<2x8x8x16xf32>
    %c6 = arith.constant 6 : index
    %c0_85 = arith.constant 0 : index
    %87 = vector.load %arg5[%c6, %c0_85] : memref<9x16xf32, #tpu.memory_space<vmem>>, vector<1x16xf32>
    %88 = vector.shape_cast %87 : vector<1x16xf32> to vector<16xf32>
    %89 = vector.shape_cast %88 : vector<16xf32> to vector<1x1x1x16xf32>
    %90 = vector.broadcast %89 : vector<1x1x1x16xf32> to vector<2x8x8x16xf32>
    %91 = arith.mulf %86, %90 : vector<2x8x8x16xf32>
    %92 = arith.addf %85, %91 : vector<2x8x8x16xf32>
    %c0_86 = arith.constant 0 : index
    %c2_87 = arith.constant 2 : index
    %c0_88 = arith.constant 0 : index
    %c0_89 = arith.constant 0 : index
    %93 = tpu.strided_load %arg18[%c0_86, %c2_87, %c0_88, %c0_89] {strides = array<i32: 1, 2, 1, 1>} : memref<2x18x9x16xf32, #tpu.memory_space<vmem>>, vector<2x8x8x16xf32>
    %c7_90 = arith.constant 7 : index
    %c0_91 = arith.constant 0 : index
    %94 = vector.load %arg5[%c7_90, %c0_91] : memref<9x16xf32, #tpu.memory_space<vmem>>, vector<1x16xf32>
    %95 = vector.shape_cast %94 : vector<1x16xf32> to vector<16xf32>
    %96 = vector.shape_cast %95 : vector<16xf32> to vector<1x1x1x16xf32>
    %97 = vector.broadcast %96 : vector<1x1x1x16xf32> to vector<2x8x8x16xf32>
    %98 = arith.mulf %93, %97 : vector<2x8x8x16xf32>
    %99 = arith.addf %92, %98 : vector<2x8x8x16xf32>
    %c0_92 = arith.constant 0 : index
    %c2_93 = arith.constant 2 : index
    %c1_94 = arith.constant 1 : index
    %c0_95 = arith.constant 0 : index
    %100 = tpu.strided_load %arg17[%c0_92, %c2_93, %c1_94, %c0_95] {strides = array<i32: 1, 2, 1, 1>} : memref<2x18x9x16xf32, #tpu.memory_space<vmem>>, vector<2x8x8x16xf32>
    %c8_96 = arith.constant 8 : index
    %c0_97 = arith.constant 0 : index
    %101 = vector.load %arg5[%c8_96, %c0_97] : memref<9x16xf32, #tpu.memory_space<vmem>>, vector<1x16xf32>
    %102 = vector.shape_cast %101 : vector<1x16xf32> to vector<16xf32>
    %103 = vector.shape_cast %102 : vector<16xf32> to vector<1x1x1x16xf32>
    %104 = vector.broadcast %103 : vector<1x1x1x16xf32> to vector<2x8x8x16xf32>
    %105 = arith.mulf %100, %104 : vector<2x8x8x16xf32>
    %106 = arith.addf %99, %105 : vector<2x8x8x16xf32>
    %c0_98 = arith.constant 0 : index
    %c0_99 = arith.constant 0 : index
    %107 = vector.load %arg6[%c0_98, %c0_99] : memref<1x16xf32, #tpu.memory_space<vmem>>, vector<1x16xf32>
    %c0_100 = arith.constant 0 : index
    %c0_101 = arith.constant 0 : index
    %108 = vector.load %arg7[%c0_100, %c0_101] : memref<1x16xf32, #tpu.memory_space<vmem>>, vector<1x16xf32>
    %cst_102 = arith.constant dense<0.000000e+00> : vector<16xf32>
    %109 = vector.multi_reduction <add>, %106, %cst_102 [0, 1, 2] : vector<2x8x8x16xf32> to vector<16xf32>
    %110 = vector.shape_cast %109 : vector<16xf32> to vector<1x1x1x16xf32>
    %cst_103 = arith.constant 1.280000e+02 : f32
    %111 = vector.broadcast %cst_103 : f32 to vector<1x1x1x16xf32>
    %112 = arith.divf %110, %111 : vector<1x1x1x16xf32>
    %113 = vector.broadcast %112 : vector<1x1x1x16xf32> to vector<2x8x8x16xf32>
    %114 = arith.subf %106, %113 : vector<2x8x8x16xf32>
    %115 = arith.mulf %114, %114 : vector<2x8x8x16xf32>
    %cst_104 = arith.constant dense<0.000000e+00> : vector<16xf32>
    %116 = vector.multi_reduction <add>, %115, %cst_104 [0, 1, 2] : vector<2x8x8x16xf32> to vector<16xf32>
    %117 = vector.shape_cast %116 : vector<16xf32> to vector<1x1x1x16xf32>
    %cst_105 = arith.constant 1.280000e+02 : f32
    %118 = vector.broadcast %cst_105 : f32 to vector<1x1x1x16xf32>
    %119 = arith.divf %117, %118 : vector<1x1x1x16xf32>
    %cst_106 = arith.constant 9.99999974E-6 : f32
    %120 = vector.broadcast %cst_106 : f32 to vector<1x1x1x16xf32>
    %121 = arith.addf %119, %120 : vector<1x1x1x16xf32>
    %122 = math.rsqrt %121 : vector<1x1x1x16xf32>
    %123 = vector.broadcast %122 : vector<1x1x1x16xf32> to vector<2x8x8x16xf32>
    %124 = arith.mulf %114, %123 : vector<2x8x8x16xf32>
    %125 = vector.shape_cast %107 : vector<1x16xf32> to vector<1x1x1x16xf32>
    %126 = vector.broadcast %125 : vector<1x1x1x16xf32> to vector<2x8x8x16xf32>
    %127 = arith.mulf %124, %126 : vector<2x8x8x16xf32>
    %128 = vector.shape_cast %108 : vector<1x16xf32> to vector<1x1x1x16xf32>
    %129 = vector.broadcast %128 : vector<1x1x1x16xf32> to vector<2x8x8x16xf32>
    %130 = arith.addf %127, %129 : vector<2x8x8x16xf32>
    %131 = arith.negf %130 : vector<2x8x8x16xf32>
    %132 = math.exp %131 : vector<2x8x8x16xf32>
    %cst_107 = arith.constant 1.000000e+00 : f32
    %133 = vector.broadcast %cst_107 : f32 to vector<2x8x8x16xf32>
    %134 = arith.addf %133, %132 : vector<2x8x8x16xf32>
    %135 = arith.divf %133, %134 : vector<2x8x8x16xf32>
    %136 = arith.mulf %130, %135 : vector<2x8x8x16xf32>
    %cst_108 = arith.constant dense<0.000000e+00> : vector<2x16xf32>
    %137 = vector.multi_reduction <add>, %136, %cst_108 [1, 2] : vector<2x8x8x16xf32> to vector<2x16xf32>
    %138 = vector.shape_cast %137 : vector<2x16xf32> to vector<2x1x1x16xf32>
    %cst_109 = arith.constant 6.400000e+01 : f32
    %139 = vector.broadcast %cst_109 : f32 to vector<2x1x1x16xf32>
    %140 = arith.divf %138, %139 : vector<2x1x1x16xf32>
    %141 = vector.shape_cast %140 : vector<2x1x1x16xf32> to vector<2x16xf32>
    %c0_110 = arith.constant 0 : index
    %c0_111 = arith.constant 0 : index
    %142 = vector.load %arg8[%c0_110, %c0_111] : memref<16x4xf32, #tpu.memory_space<vmem>>, vector<16x4xf32>
    %cst_112 = arith.constant dense<0.000000e+00> : vector<2x4xf32>
    %143 = tpu.matmul %141, %142, %cst_112 {dimension_numbers = #tpu.dot_dimension_numbers<[1], [0], [0], [1], [0, 0, 1, 1], [], []>} : vector<2x16xf32>, vector<16x4xf32>, vector<2x4xf32> -> vector<2x4xf32>
    %c0_113 = arith.constant 0 : index
    %c0_114 = arith.constant 0 : index
    %144 = vector.load %arg9[%c0_113, %c0_114] : memref<1x4xf32, #tpu.memory_space<vmem>>, vector<1x4xf32>
    %145 = vector.broadcast %144 : vector<1x4xf32> to vector<2x4xf32>
    %146 = arith.addf %143, %145 : vector<2x4xf32>
    %147 = arith.negf %146 : vector<2x4xf32>
    %148 = math.exp %147 : vector<2x4xf32>
    %cst_115 = arith.constant 1.000000e+00 : f32
    %149 = vector.broadcast %cst_115 : f32 to vector<2x4xf32>
    %150 = arith.addf %149, %148 : vector<2x4xf32>
    %151 = arith.divf %149, %150 : vector<2x4xf32>
    %152 = arith.mulf %146, %151 : vector<2x4xf32>
    %c0_116 = arith.constant 0 : index
    %c0_117 = arith.constant 0 : index
    %153 = vector.load %arg10[%c0_116, %c0_117] : memref<4x16xf32, #tpu.memory_space<vmem>>, vector<4x16xf32>
    %cst_118 = arith.constant dense<0.000000e+00> : vector<2x16xf32>
    %154 = tpu.matmul %152, %153, %cst_118 {dimension_numbers = #tpu.dot_dimension_numbers<[1], [0], [0], [1], [0, 0, 1, 1], [], []>} : vector<2x4xf32>, vector<4x16xf32>, vector<2x16xf32> -> vector<2x16xf32>
    %c0_119 = arith.constant 0 : index
    %c0_120 = arith.constant 0 : index
    %155 = vector.load %arg11[%c0_119, %c0_120] : memref<1x16xf32, #tpu.memory_space<vmem>>, vector<1x16xf32>
    %156 = vector.broadcast %155 : vector<1x16xf32> to vector<2x16xf32>
    %157 = arith.addf %154, %156 : vector<2x16xf32>
    %158 = arith.negf %157 : vector<2x16xf32>
    %159 = math.exp %158 : vector<2x16xf32>
    %cst_121 = arith.constant 1.000000e+00 : f32
    %160 = vector.broadcast %cst_121 : f32 to vector<2x16xf32>
    %161 = arith.addf %160, %159 : vector<2x16xf32>
    %162 = arith.divf %160, %161 : vector<2x16xf32>
    %163 = vector.shape_cast %162 : vector<2x16xf32> to vector<2x1x1x16xf32>
    %164 = vector.broadcast %163 : vector<2x1x1x16xf32> to vector<2x8x8x16xf32>
    %165 = arith.mulf %136, %164 : vector<2x8x8x16xf32>
    %166 = vector.shape_cast %165 : vector<2x8x8x16xf32> to vector<128x16xf32>
    %c0_122 = arith.constant 0 : index
    %c0_123 = arith.constant 0 : index
    %167 = vector.load %arg12[%c0_122, %c0_123] : memref<16x8xf32, #tpu.memory_space<vmem>>, vector<16x8xf32>
    %cst_124 = arith.constant dense<0.000000e+00> : vector<128x8xf32>
    %168 = tpu.matmul %166, %167, %cst_124 {dimension_numbers = #tpu.dot_dimension_numbers<[1], [0], [0], [1], [0, 0, 1, 1], [], []>} : vector<128x16xf32>, vector<16x8xf32>, vector<128x8xf32> -> vector<128x8xf32>
    %c0_125 = arith.constant 0 : index
    %c0_126 = arith.constant 0 : index
    %169 = vector.load %arg13[%c0_125, %c0_126] : memref<1x8xf32, #tpu.memory_space<vmem>>, vector<1x8xf32>
    %c0_127 = arith.constant 0 : index
    %c0_128 = arith.constant 0 : index
    %170 = vector.load %arg14[%c0_127, %c0_128] : memref<1x8xf32, #tpu.memory_space<vmem>>, vector<1x8xf32>
    %cst_129 = arith.constant dense<0.000000e+00> : vector<8xf32>
    %171 = vector.multi_reduction <add>, %168, %cst_129 [0] : vector<128x8xf32> to vector<8xf32>
    %172 = vector.shape_cast %171 : vector<8xf32> to vector<1x8xf32>
    %cst_130 = arith.constant 1.280000e+02 : f32
    %173 = vector.broadcast %cst_130 : f32 to vector<1x8xf32>
    %174 = arith.divf %172, %173 : vector<1x8xf32>
    %175 = vector.broadcast %174 : vector<1x8xf32> to vector<128x8xf32>
    %176 = arith.subf %168, %175 : vector<128x8xf32>
    %177 = arith.mulf %176, %176 : vector<128x8xf32>
    %cst_131 = arith.constant dense<0.000000e+00> : vector<8xf32>
    %178 = vector.multi_reduction <add>, %177, %cst_131 [0] : vector<128x8xf32> to vector<8xf32>
    %179 = vector.shape_cast %178 : vector<8xf32> to vector<1x8xf32>
    %cst_132 = arith.constant 1.280000e+02 : f32
    %180 = vector.broadcast %cst_132 : f32 to vector<1x8xf32>
    %181 = arith.divf %179, %180 : vector<1x8xf32>
    %cst_133 = arith.constant 9.99999974E-6 : f32
    %182 = vector.broadcast %cst_133 : f32 to vector<1x8xf32>
    %183 = arith.addf %181, %182 : vector<1x8xf32>
    %184 = math.rsqrt %183 : vector<1x8xf32>
    %185 = vector.broadcast %184 : vector<1x8xf32> to vector<128x8xf32>
    %186 = arith.mulf %176, %185 : vector<128x8xf32>
    %187 = vector.broadcast %169 : vector<1x8xf32> to vector<128x8xf32>
    %188 = arith.mulf %186, %187 : vector<128x8xf32>
    %189 = vector.broadcast %170 : vector<1x8xf32> to vector<128x8xf32>
    %190 = arith.addf %188, %189 : vector<128x8xf32>
    %191 = tpu.iota {dimensions = array<i32: 0>} : vector<8x8xi32>
    %192 = tpu.iota {dimensions = array<i32: 1>} : vector<8x8xi32>
    %193 = arith.cmpi eq, %191, %192 : vector<8x8xi32>
    %194 = arith.extui %193 : vector<8x8xi1> to vector<8x8xi32>
    %195 = arith.sitofp %194 : vector<8x8xi32> to vector<8x8xf32>
    %cst_134 = arith.constant dense<0.000000e+00> : vector<8x128xf32>
    %196 = tpu.matmul %195, %190, %cst_134 {dimension_numbers = #tpu.dot_dimension_numbers<[1], [1], [0], [0], [0, 0, 1, 0], [], []>} : vector<8x8xf32>, vector<128x8xf32>, vector<8x128xf32> -> vector<8x128xf32>
    %c0_135 = arith.constant 0 : index
    %c0_136 = arith.constant 0 : index
    %197 = vector.load %arg15[%c0_135, %c0_136] : memref<8x128xf32, #tpu.memory_space<vmem>>, vector<8x128xf32>
    tpu.vector_store %arg15[%c0_135, %c0_136], %196 {strides = array<i32>} : memref<8x128xf32, #tpu.memory_space<vmem>>, vector<8x128xf32>,
    return
  }
  func.func @transform_0(%arg0: i32) -> (i32, i32, i32, i32) {
    %c0_i32 = arith.constant 0 : i32
    %c0_i32_0 = arith.constant 0 : i32
    %c0_i32_1 = arith.constant 0 : i32
    %c0_i32_2 = arith.constant 0 : i32
    %c0_i32_3 = arith.constant 0 : i32
    return %c0_i32, %c0_i32_0, %c0_i32_1, %c0_i32_2 : i32, i32, i32, i32
  }
  func.func @transform_1(%arg0: i32) -> (i32, i32) {
    %c0_i32 = arith.constant 0 : i32
    %c0_i32_0 = arith.constant 0 : i32
    %c0_i32_1 = arith.constant 0 : i32
    return %c0_i32, %c0_i32_0 : i32, i32
  }
  func.func @transform_2(%arg0: i32) -> (i32, i32) {
    %c0_i32 = arith.constant 0 : i32
    %c0_i32_0 = arith.constant 0 : i32
    %c0_i32_1 = arith.constant 0 : i32
    return %c0_i32, %c0_i32_0 : i32, i32
  }
  func.func @transform_3(%arg0: i32) -> (i32, i32) {
    %c0_i32 = arith.constant 0 : i32
    %c0_i32_0 = arith.constant 0 : i32
    %c0_i32_1 = arith.constant 0 : i32
    return %c0_i32, %c0_i32_0 : i32, i32
  }
  func.func @transform_4(%arg0: i32) -> (i32, i32) {
    %c0_i32 = arith.constant 0 : i32
    %c0_i32_0 = arith.constant 0 : i32
    %c0_i32_1 = arith.constant 0 : i32
    return %c0_i32, %c0_i32_0 : i32, i32
  }
  func.func @transform_5(%arg0: i32) -> (i32, i32) {
    %c0_i32 = arith.constant 0 : i32
    %c0_i32_0 = arith.constant 0 : i32
    %c0_i32_1 = arith.constant 0 : i32
    return %c0_i32, %c0_i32_0 : i32, i32
  }
  func.func @transform_6(%arg0: i32) -> (i32, i32) {
    %c0_i32 = arith.constant 0 : i32
    %c0_i32_0 = arith.constant 0 : i32
    %c0_i32_1 = arith.constant 0 : i32
    return %c0_i32, %c0_i32_0 : i32, i32
  }
  func.func @transform_7(%arg0: i32) -> (i32, i32) {
    %c0_i32 = arith.constant 0 : i32
    %c0_i32_0 = arith.constant 0 : i32
    %c0_i32_1 = arith.constant 0 : i32
    return %c0_i32, %c0_i32_0 : i32, i32
  }
  func.func @transform_8(%arg0: i32) -> (i32, i32) {
    %c0_i32 = arith.constant 0 : i32
    %c0_i32_0 = arith.constant 0 : i32
    %c0_i32_1 = arith.constant 0 : i32
    return %c0_i32, %c0_i32_0 : i32, i32
  }
  func.func @transform_9(%arg0: i32) -> (i32, i32) {
    %c0_i32 = arith.constant 0 : i32
    %c0_i32_0 = arith.constant 0 : i32
    %c0_i32_1 = arith.constant 0 : i32
    return %c0_i32, %c0_i32_0 : i32, i32
  }
  func.func @transform_10(%arg0: i32) -> (i32, i32) {
    %c0_i32 = arith.constant 0 : i32
    %c0_i32_0 = arith.constant 0 : i32
    %c0_i32_1 = arith.constant 0 : i32
    return %c0_i32, %c0_i32_0 : i32, i32
  }
  func.func @transform_11(%arg0: i32) -> (i32, i32) {
    %c0_i32 = arith.constant 0 : i32
    %c0_i32_0 = arith.constant 0 : i32
    %c0_i32_1 = arith.constant 0 : i32
    return %c0_i32, %c0_i32_0 : i32, i32
  }
  func.func @transform_12(%arg0: i32) -> (i32, i32) {
    %c0_i32 = arith.constant 0 : i32
    %c0_i32_0 = arith.constant 0 : i32
    %c0_i32_1 = arith.constant 0 : i32
    return %c0_i32, %c0_i32_0 : i32, i32
  }
  func.func @transform_13(%arg0: i32) -> (i32, i32) {
    %c0_i32 = arith.constant 0 : i32
    %c0_i32_0 = arith.constant 0 : i32
    %c0_i32_1 = arith.constant 0 : i32
    return %c0_i32, %c0_i32_0 : i32, i32
  }
  func.func @transform_14(%arg0: i32) -> (i32, i32) {
    %c0_i32 = arith.constant 0 : i32
    %c0_i32_0 = arith.constant 0 : i32
    %c0_i32_1 = arith.constant 0 : i32
    return %c0_i32, %c0_i32_0 : i32, i32
  }
}

module attributes {stable_mosaic.version = 11 : i64} {
  func.func @_mbconv_kernel(%arg0: i32, %arg1: memref<2x8x8x8xf32, #tpu.memory_space<vmem>>, %arg2: memref<8x32xf32, #tpu.memory_space<vmem>>, %arg3: memref<1x32xf32, #tpu.memory_space<vmem>>, %arg4: memref<1x32xf32, #tpu.memory_space<vmem>>, %arg5: memref<9x32xf32, #tpu.memory_space<vmem>>, %arg6: memref<1x32xf32, #tpu.memory_space<vmem>>, %arg7: memref<1x32xf32, #tpu.memory_space<vmem>>, %arg8: memref<32x8xf32, #tpu.memory_space<vmem>>, %arg9: memref<1x8xf32, #tpu.memory_space<vmem>>, %arg10: memref<8x32xf32, #tpu.memory_space<vmem>>, %arg11: memref<1x32xf32, #tpu.memory_space<vmem>>, %arg12: memref<32x8xf32, #tpu.memory_space<vmem>>, %arg13: memref<1x8xf32, #tpu.memory_space<vmem>>, %arg14: memref<1x8xf32, #tpu.memory_space<vmem>>, %arg15: memref<8x128xf32, #tpu.memory_space<vmem>>, %arg16: memref<2x10x17x32xf32, #tpu.memory_space<vmem>>) attributes {dimension_semantics = [#tpu.dimension_semantics<arbitrary>], iteration_bounds = array<i64: 1>, scalar_prefetch = 0 : i64, scratch_operands = 1 : i64, tpu.core_type = #tpu.core_type<tc>, window_params = [{pipeline_mode = #tpu.pipeline_mode<synchronous>, transform_indices = @transform_0, window_bounds = array<i64: 2, 8, 8, 8>}, {pipeline_mode = #tpu.pipeline_mode<synchronous>, transform_indices = @transform_1, window_bounds = array<i64: 8, 32>}, {pipeline_mode = #tpu.pipeline_mode<synchronous>, transform_indices = @transform_2, window_bounds = array<i64: 1, 32>}, {pipeline_mode = #tpu.pipeline_mode<synchronous>, transform_indices = @transform_3, window_bounds = array<i64: 1, 32>}, {pipeline_mode = #tpu.pipeline_mode<synchronous>, transform_indices = @transform_4, window_bounds = array<i64: 9, 32>}, {pipeline_mode = #tpu.pipeline_mode<synchronous>, transform_indices = @transform_5, window_bounds = array<i64: 1, 32>}, {pipeline_mode = #tpu.pipeline_mode<synchronous>, transform_indices = @transform_6, window_bounds = array<i64: 1, 32>}, {pipeline_mode = #tpu.pipeline_mode<synchronous>, transform_indices = @transform_7, window_bounds = array<i64: 32, 8>}, {pipeline_mode = #tpu.pipeline_mode<synchronous>, transform_indices = @transform_8, window_bounds = array<i64: 1, 8>}, {pipeline_mode = #tpu.pipeline_mode<synchronous>, transform_indices = @transform_9, window_bounds = array<i64: 8, 32>}, {pipeline_mode = #tpu.pipeline_mode<synchronous>, transform_indices = @transform_10, window_bounds = array<i64: 1, 32>}, {pipeline_mode = #tpu.pipeline_mode<synchronous>, transform_indices = @transform_11, window_bounds = array<i64: 32, 8>}, {pipeline_mode = #tpu.pipeline_mode<synchronous>, transform_indices = @transform_12, window_bounds = array<i64: 1, 8>}, {pipeline_mode = #tpu.pipeline_mode<synchronous>, transform_indices = @transform_13, window_bounds = array<i64: 1, 8>}, {pipeline_mode = #tpu.pipeline_mode<synchronous>, transform_indices = @transform_14, window_bounds = array<i64: 8, 128>}]} {
    %c0 = arith.constant 0 : index
    %c0_0 = arith.constant 0 : index
    %c0_1 = arith.constant 0 : index
    %c0_2 = arith.constant 0 : index
    %0 = vector.load %arg1[%c0, %c0_0, %c0_1, %c0_2] : memref<2x8x8x8xf32, #tpu.memory_space<vmem>>, vector<2x8x8x8xf32>
    %1 = vector.shape_cast %0 : vector<2x8x8x8xf32> to vector<128x8xf32>
    %c0_3 = arith.constant 0 : index
    %c0_4 = arith.constant 0 : index
    %2 = vector.load %arg2[%c0_3, %c0_4] : memref<8x32xf32, #tpu.memory_space<vmem>>, vector<8x32xf32>
    %cst = arith.constant dense<0.000000e+00> : vector<128x32xf32>
    %3 = tpu.matmul %1, %2, %cst {dimension_numbers = #tpu.dot_dimension_numbers<[1], [0], [0], [1], [0, 0, 1, 1], [], []>} : vector<128x8xf32>, vector<8x32xf32>, vector<128x32xf32> -> vector<128x32xf32>
    %c0_5 = arith.constant 0 : index
    %c0_6 = arith.constant 0 : index
    %4 = vector.load %arg3[%c0_5, %c0_6] : memref<1x32xf32, #tpu.memory_space<vmem>>, vector<1x32xf32>
    %c0_7 = arith.constant 0 : index
    %c0_8 = arith.constant 0 : index
    %5 = vector.load %arg4[%c0_7, %c0_8] : memref<1x32xf32, #tpu.memory_space<vmem>>, vector<1x32xf32>
    %cst_9 = arith.constant dense<0.000000e+00> : vector<32xf32>
    %6 = vector.multi_reduction <add>, %3, %cst_9 [0] : vector<128x32xf32> to vector<32xf32>
    %7 = vector.shape_cast %6 : vector<32xf32> to vector<1x32xf32>
    %cst_10 = arith.constant 1.280000e+02 : f32
    %8 = vector.broadcast %cst_10 : f32 to vector<1x32xf32>
    %9 = arith.divf %7, %8 : vector<1x32xf32>
    %10 = vector.broadcast %9 : vector<1x32xf32> to vector<128x32xf32>
    %11 = arith.subf %3, %10 : vector<128x32xf32>
    %12 = arith.mulf %11, %11 : vector<128x32xf32>
    %cst_11 = arith.constant dense<0.000000e+00> : vector<32xf32>
    %13 = vector.multi_reduction <add>, %12, %cst_11 [0] : vector<128x32xf32> to vector<32xf32>
    %14 = vector.shape_cast %13 : vector<32xf32> to vector<1x32xf32>
    %cst_12 = arith.constant 1.280000e+02 : f32
    %15 = vector.broadcast %cst_12 : f32 to vector<1x32xf32>
    %16 = arith.divf %14, %15 : vector<1x32xf32>
    %cst_13 = arith.constant 9.99999974E-6 : f32
    %17 = vector.broadcast %cst_13 : f32 to vector<1x32xf32>
    %18 = arith.addf %16, %17 : vector<1x32xf32>
    %19 = math.rsqrt %18 : vector<1x32xf32>
    %20 = vector.broadcast %19 : vector<1x32xf32> to vector<128x32xf32>
    %21 = arith.mulf %11, %20 : vector<128x32xf32>
    %22 = vector.broadcast %4 : vector<1x32xf32> to vector<128x32xf32>
    %23 = arith.mulf %21, %22 : vector<128x32xf32>
    %24 = vector.broadcast %5 : vector<1x32xf32> to vector<128x32xf32>
    %25 = arith.addf %23, %24 : vector<128x32xf32>
    %26 = arith.negf %25 : vector<128x32xf32>
    %27 = math.exp %26 : vector<128x32xf32>
    %cst_14 = arith.constant 1.000000e+00 : f32
    %28 = vector.broadcast %cst_14 : f32 to vector<128x32xf32>
    %29 = arith.addf %28, %27 : vector<128x32xf32>
    %30 = arith.divf %28, %29 : vector<128x32xf32>
    %31 = arith.mulf %25, %30 : vector<128x32xf32>
    %32 = vector.shape_cast %31 : vector<128x32xf32> to vector<2x8x8x32xf32>
    %c0_15 = arith.constant 0 : index
    %c1 = arith.constant 1 : index
    %c8 = arith.constant 8 : index
    %c0_16 = arith.constant 0 : index
    %33 = vector.load %arg16[%c0_15, %c1, %c8, %c0_16] : memref<2x10x17x32xf32, #tpu.memory_space<vmem>>, vector<2x8x8x32xf32>
    tpu.vector_store %arg16[%c0_15, %c1, %c8, %c0_16], %32 {strides = array<i32>} : memref<2x10x17x32xf32, #tpu.memory_space<vmem>>, vector<2x8x8x32xf32>,
    %cst_17 = arith.constant 0.000000e+00 : f32
    %34 = vector.broadcast %cst_17 : f32 to vector<2x1x17x32xf32>
    %c0_18 = arith.constant 0 : index
    %c0_19 = arith.constant 0 : index
    %c0_20 = arith.constant 0 : index
    %c0_21 = arith.constant 0 : index
    %35 = vector.load %arg16[%c0_18, %c0_19, %c0_20, %c0_21] : memref<2x10x17x32xf32, #tpu.memory_space<vmem>>, vector<2x1x17x32xf32>
    tpu.vector_store %arg16[%c0_18, %c0_19, %c0_20, %c0_21], %34 {strides = array<i32>} : memref<2x10x17x32xf32, #tpu.memory_space<vmem>>, vector<2x1x17x32xf32>,
    %c0_22 = arith.constant 0 : index
    %c9 = arith.constant 9 : index
    %c0_23 = arith.constant 0 : index
    %c0_24 = arith.constant 0 : index
    %36 = vector.load %arg16[%c0_22, %c9, %c0_23, %c0_24] : memref<2x10x17x32xf32, #tpu.memory_space<vmem>>, vector<2x1x17x32xf32>
    tpu.vector_store %arg16[%c0_22, %c9, %c0_23, %c0_24], %34 {strides = array<i32>} : memref<2x10x17x32xf32, #tpu.memory_space<vmem>>, vector<2x1x17x32xf32>,
    %cst_25 = arith.constant 0.000000e+00 : f32
    %37 = vector.broadcast %cst_25 : f32 to vector<2x8x8x32xf32>
    %c0_26 = arith.constant 0 : index
    %c1_27 = arith.constant 1 : index
    %c0_28 = arith.constant 0 : index
    %c0_29 = arith.constant 0 : index
    %38 = vector.load %arg16[%c0_26, %c1_27, %c0_28, %c0_29] : memref<2x10x17x32xf32, #tpu.memory_space<vmem>>, vector<2x8x8x32xf32>
    tpu.vector_store %arg16[%c0_26, %c1_27, %c0_28, %c0_29], %37 {strides = array<i32>} : memref<2x10x17x32xf32, #tpu.memory_space<vmem>>, vector<2x8x8x32xf32>,
    %cst_30 = arith.constant 0.000000e+00 : f32
    %39 = vector.broadcast %cst_30 : f32 to vector<2x8x1x32xf32>
    %c0_31 = arith.constant 0 : index
    %c1_32 = arith.constant 1 : index
    %c16 = arith.constant 16 : index
    %c0_33 = arith.constant 0 : index
    %40 = vector.load %arg16[%c0_31, %c1_32, %c16, %c0_33] : memref<2x10x17x32xf32, #tpu.memory_space<vmem>>, vector<2x8x1x32xf32>
    tpu.vector_store %arg16[%c0_31, %c1_32, %c16, %c0_33], %39 {strides = array<i32>} : memref<2x10x17x32xf32, #tpu.memory_space<vmem>>, vector<2x8x1x32xf32>,
    %c0_34 = arith.constant 0 : index
    %c0_35 = arith.constant 0 : index
    %c7 = arith.constant 7 : index
    %c0_36 = arith.constant 0 : index
    %41 = vector.load %arg16[%c0_34, %c0_35, %c7, %c0_36] : memref<2x10x17x32xf32, #tpu.memory_space<vmem>>, vector<2x8x8x32xf32>
    %c0_37 = arith.constant 0 : index
    %c0_38 = arith.constant 0 : index
    %42 = vector.load %arg5[%c0_37, %c0_38] : memref<9x32xf32, #tpu.memory_space<vmem>>, vector<1x32xf32>
    %43 = vector.shape_cast %42 : vector<1x32xf32> to vector<32xf32>
    %44 = vector.shape_cast %43 : vector<32xf32> to vector<1x1x1x32xf32>
    %45 = vector.broadcast %44 : vector<1x1x1x32xf32> to vector<2x8x8x32xf32>
    %46 = arith.mulf %41, %45 : vector<2x8x8x32xf32>
    %c0_39 = arith.constant 0 : index
    %c0_40 = arith.constant 0 : index
    %c8_41 = arith.constant 8 : index
    %c0_42 = arith.constant 0 : index
    %47 = vector.load %arg16[%c0_39, %c0_40, %c8_41, %c0_42] : memref<2x10x17x32xf32, #tpu.memory_space<vmem>>, vector<2x8x8x32xf32>
    %c1_43 = arith.constant 1 : index
    %c0_44 = arith.constant 0 : index
    %48 = vector.load %arg5[%c1_43, %c0_44] : memref<9x32xf32, #tpu.memory_space<vmem>>, vector<1x32xf32>
    %49 = vector.shape_cast %48 : vector<1x32xf32> to vector<32xf32>
    %50 = vector.shape_cast %49 : vector<32xf32> to vector<1x1x1x32xf32>
    %51 = vector.broadcast %50 : vector<1x1x1x32xf32> to vector<2x8x8x32xf32>
    %52 = arith.mulf %47, %51 : vector<2x8x8x32xf32>
    %53 = arith.addf %46, %52 : vector<2x8x8x32xf32>
    %c0_45 = arith.constant 0 : index
    %c0_46 = arith.constant 0 : index
    %c9_47 = arith.constant 9 : index
    %c0_48 = arith.constant 0 : index
    %54 = vector.load %arg16[%c0_45, %c0_46, %c9_47, %c0_48] : memref<2x10x17x32xf32, #tpu.memory_space<vmem>>, vector<2x8x8x32xf32>
    %c2 = arith.constant 2 : index
    %c0_49 = arith.constant 0 : index
    %55 = vector.load %arg5[%c2, %c0_49] : memref<9x32xf32, #tpu.memory_space<vmem>>, vector<1x32xf32>
    %56 = vector.shape_cast %55 : vector<1x32xf32> to vector<32xf32>
    %57 = vector.shape_cast %56 : vector<32xf32> to vector<1x1x1x32xf32>
    %58 = vector.broadcast %57 : vector<1x1x1x32xf32> to vector<2x8x8x32xf32>
    %59 = arith.mulf %54, %58 : vector<2x8x8x32xf32>
    %60 = arith.addf %53, %59 : vector<2x8x8x32xf32>
    %c0_50 = arith.constant 0 : index
    %c1_51 = arith.constant 1 : index
    %c7_52 = arith.constant 7 : index
    %c0_53 = arith.constant 0 : index
    %61 = vector.load %arg16[%c0_50, %c1_51, %c7_52, %c0_53] : memref<2x10x17x32xf32, #tpu.memory_space<vmem>>, vector<2x8x8x32xf32>
    %c3 = arith.constant 3 : index
    %c0_54 = arith.constant 0 : index
    %62 = vector.load %arg5[%c3, %c0_54] : memref<9x32xf32, #tpu.memory_space<vmem>>, vector<1x32xf32>
    %63 = vector.shape_cast %62 : vector<1x32xf32> to vector<32xf32>
    %64 = vector.shape_cast %63 : vector<32xf32> to vector<1x1x1x32xf32>
    %65 = vector.broadcast %64 : vector<1x1x1x32xf32> to vector<2x8x8x32xf32>
    %66 = arith.mulf %61, %65 : vector<2x8x8x32xf32>
    %67 = arith.addf %60, %66 : vector<2x8x8x32xf32>
    %c0_55 = arith.constant 0 : index
    %c1_56 = arith.constant 1 : index
    %c8_57 = arith.constant 8 : index
    %c0_58 = arith.constant 0 : index
    %68 = vector.load %arg16[%c0_55, %c1_56, %c8_57, %c0_58] : memref<2x10x17x32xf32, #tpu.memory_space<vmem>>, vector<2x8x8x32xf32>
    %c4 = arith.constant 4 : index
    %c0_59 = arith.constant 0 : index
    %69 = vector.load %arg5[%c4, %c0_59] : memref<9x32xf32, #tpu.memory_space<vmem>>, vector<1x32xf32>
    %70 = vector.shape_cast %69 : vector<1x32xf32> to vector<32xf32>
    %71 = vector.shape_cast %70 : vector<32xf32> to vector<1x1x1x32xf32>
    %72 = vector.broadcast %71 : vector<1x1x1x32xf32> to vector<2x8x8x32xf32>
    %73 = arith.mulf %68, %72 : vector<2x8x8x32xf32>
    %74 = arith.addf %67, %73 : vector<2x8x8x32xf32>
    %c0_60 = arith.constant 0 : index
    %c1_61 = arith.constant 1 : index
    %c9_62 = arith.constant 9 : index
    %c0_63 = arith.constant 0 : index
    %75 = vector.load %arg16[%c0_60, %c1_61, %c9_62, %c0_63] : memref<2x10x17x32xf32, #tpu.memory_space<vmem>>, vector<2x8x8x32xf32>
    %c5 = arith.constant 5 : index
    %c0_64 = arith.constant 0 : index
    %76 = vector.load %arg5[%c5, %c0_64] : memref<9x32xf32, #tpu.memory_space<vmem>>, vector<1x32xf32>
    %77 = vector.shape_cast %76 : vector<1x32xf32> to vector<32xf32>
    %78 = vector.shape_cast %77 : vector<32xf32> to vector<1x1x1x32xf32>
    %79 = vector.broadcast %78 : vector<1x1x1x32xf32> to vector<2x8x8x32xf32>
    %80 = arith.mulf %75, %79 : vector<2x8x8x32xf32>
    %81 = arith.addf %74, %80 : vector<2x8x8x32xf32>
    %c0_65 = arith.constant 0 : index
    %c2_66 = arith.constant 2 : index
    %c7_67 = arith.constant 7 : index
    %c0_68 = arith.constant 0 : index
    %82 = vector.load %arg16[%c0_65, %c2_66, %c7_67, %c0_68] : memref<2x10x17x32xf32, #tpu.memory_space<vmem>>, vector<2x8x8x32xf32>
    %c6 = arith.constant 6 : index
    %c0_69 = arith.constant 0 : index
    %83 = vector.load %arg5[%c6, %c0_69] : memref<9x32xf32, #tpu.memory_space<vmem>>, vector<1x32xf32>
    %84 = vector.shape_cast %83 : vector<1x32xf32> to vector<32xf32>
    %85 = vector.shape_cast %84 : vector<32xf32> to vector<1x1x1x32xf32>
    %86 = vector.broadcast %85 : vector<1x1x1x32xf32> to vector<2x8x8x32xf32>
    %87 = arith.mulf %82, %86 : vector<2x8x8x32xf32>
    %88 = arith.addf %81, %87 : vector<2x8x8x32xf32>
    %c0_70 = arith.constant 0 : index
    %c2_71 = arith.constant 2 : index
    %c8_72 = arith.constant 8 : index
    %c0_73 = arith.constant 0 : index
    %89 = vector.load %arg16[%c0_70, %c2_71, %c8_72, %c0_73] : memref<2x10x17x32xf32, #tpu.memory_space<vmem>>, vector<2x8x8x32xf32>
    %c7_74 = arith.constant 7 : index
    %c0_75 = arith.constant 0 : index
    %90 = vector.load %arg5[%c7_74, %c0_75] : memref<9x32xf32, #tpu.memory_space<vmem>>, vector<1x32xf32>
    %91 = vector.shape_cast %90 : vector<1x32xf32> to vector<32xf32>
    %92 = vector.shape_cast %91 : vector<32xf32> to vector<1x1x1x32xf32>
    %93 = vector.broadcast %92 : vector<1x1x1x32xf32> to vector<2x8x8x32xf32>
    %94 = arith.mulf %89, %93 : vector<2x8x8x32xf32>
    %95 = arith.addf %88, %94 : vector<2x8x8x32xf32>
    %c0_76 = arith.constant 0 : index
    %c2_77 = arith.constant 2 : index
    %c9_78 = arith.constant 9 : index
    %c0_79 = arith.constant 0 : index
    %96 = vector.load %arg16[%c0_76, %c2_77, %c9_78, %c0_79] : memref<2x10x17x32xf32, #tpu.memory_space<vmem>>, vector<2x8x8x32xf32>
    %c8_80 = arith.constant 8 : index
    %c0_81 = arith.constant 0 : index
    %97 = vector.load %arg5[%c8_80, %c0_81] : memref<9x32xf32, #tpu.memory_space<vmem>>, vector<1x32xf32>
    %98 = vector.shape_cast %97 : vector<1x32xf32> to vector<32xf32>
    %99 = vector.shape_cast %98 : vector<32xf32> to vector<1x1x1x32xf32>
    %100 = vector.broadcast %99 : vector<1x1x1x32xf32> to vector<2x8x8x32xf32>
    %101 = arith.mulf %96, %100 : vector<2x8x8x32xf32>
    %102 = arith.addf %95, %101 : vector<2x8x8x32xf32>
    %c0_82 = arith.constant 0 : index
    %c0_83 = arith.constant 0 : index
    %103 = vector.load %arg6[%c0_82, %c0_83] : memref<1x32xf32, #tpu.memory_space<vmem>>, vector<1x32xf32>
    %c0_84 = arith.constant 0 : index
    %c0_85 = arith.constant 0 : index
    %104 = vector.load %arg7[%c0_84, %c0_85] : memref<1x32xf32, #tpu.memory_space<vmem>>, vector<1x32xf32>
    %cst_86 = arith.constant dense<0.000000e+00> : vector<32xf32>
    %105 = vector.multi_reduction <add>, %102, %cst_86 [0, 1, 2] : vector<2x8x8x32xf32> to vector<32xf32>
    %106 = vector.shape_cast %105 : vector<32xf32> to vector<1x1x1x32xf32>
    %cst_87 = arith.constant 1.280000e+02 : f32
    %107 = vector.broadcast %cst_87 : f32 to vector<1x1x1x32xf32>
    %108 = arith.divf %106, %107 : vector<1x1x1x32xf32>
    %109 = vector.broadcast %108 : vector<1x1x1x32xf32> to vector<2x8x8x32xf32>
    %110 = arith.subf %102, %109 : vector<2x8x8x32xf32>
    %111 = arith.mulf %110, %110 : vector<2x8x8x32xf32>
    %cst_88 = arith.constant dense<0.000000e+00> : vector<32xf32>
    %112 = vector.multi_reduction <add>, %111, %cst_88 [0, 1, 2] : vector<2x8x8x32xf32> to vector<32xf32>
    %113 = vector.shape_cast %112 : vector<32xf32> to vector<1x1x1x32xf32>
    %cst_89 = arith.constant 1.280000e+02 : f32
    %114 = vector.broadcast %cst_89 : f32 to vector<1x1x1x32xf32>
    %115 = arith.divf %113, %114 : vector<1x1x1x32xf32>
    %cst_90 = arith.constant 9.99999974E-6 : f32
    %116 = vector.broadcast %cst_90 : f32 to vector<1x1x1x32xf32>
    %117 = arith.addf %115, %116 : vector<1x1x1x32xf32>
    %118 = math.rsqrt %117 : vector<1x1x1x32xf32>
    %119 = vector.broadcast %118 : vector<1x1x1x32xf32> to vector<2x8x8x32xf32>
    %120 = arith.mulf %110, %119 : vector<2x8x8x32xf32>
    %121 = vector.shape_cast %103 : vector<1x32xf32> to vector<1x1x1x32xf32>
    %122 = vector.broadcast %121 : vector<1x1x1x32xf32> to vector<2x8x8x32xf32>
    %123 = arith.mulf %120, %122 : vector<2x8x8x32xf32>
    %124 = vector.shape_cast %104 : vector<1x32xf32> to vector<1x1x1x32xf32>
    %125 = vector.broadcast %124 : vector<1x1x1x32xf32> to vector<2x8x8x32xf32>
    %126 = arith.addf %123, %125 : vector<2x8x8x32xf32>
    %127 = arith.negf %126 : vector<2x8x8x32xf32>
    %128 = math.exp %127 : vector<2x8x8x32xf32>
    %cst_91 = arith.constant 1.000000e+00 : f32
    %129 = vector.broadcast %cst_91 : f32 to vector<2x8x8x32xf32>
    %130 = arith.addf %129, %128 : vector<2x8x8x32xf32>
    %131 = arith.divf %129, %130 : vector<2x8x8x32xf32>
    %132 = arith.mulf %126, %131 : vector<2x8x8x32xf32>
    %cst_92 = arith.constant dense<0.000000e+00> : vector<2x32xf32>
    %133 = vector.multi_reduction <add>, %132, %cst_92 [1, 2] : vector<2x8x8x32xf32> to vector<2x32xf32>
    %134 = vector.shape_cast %133 : vector<2x32xf32> to vector<2x1x1x32xf32>
    %cst_93 = arith.constant 6.400000e+01 : f32
    %135 = vector.broadcast %cst_93 : f32 to vector<2x1x1x32xf32>
    %136 = arith.divf %134, %135 : vector<2x1x1x32xf32>
    %137 = vector.shape_cast %136 : vector<2x1x1x32xf32> to vector<2x32xf32>
    %c0_94 = arith.constant 0 : index
    %c0_95 = arith.constant 0 : index
    %138 = vector.load %arg8[%c0_94, %c0_95] : memref<32x8xf32, #tpu.memory_space<vmem>>, vector<32x8xf32>
    %cst_96 = arith.constant dense<0.000000e+00> : vector<2x8xf32>
    %139 = tpu.matmul %137, %138, %cst_96 {dimension_numbers = #tpu.dot_dimension_numbers<[1], [0], [0], [1], [0, 0, 1, 1], [], []>} : vector<2x32xf32>, vector<32x8xf32>, vector<2x8xf32> -> vector<2x8xf32>
    %c0_97 = arith.constant 0 : index
    %c0_98 = arith.constant 0 : index
    %140 = vector.load %arg9[%c0_97, %c0_98] : memref<1x8xf32, #tpu.memory_space<vmem>>, vector<1x8xf32>
    %141 = vector.broadcast %140 : vector<1x8xf32> to vector<2x8xf32>
    %142 = arith.addf %139, %141 : vector<2x8xf32>
    %143 = arith.negf %142 : vector<2x8xf32>
    %144 = math.exp %143 : vector<2x8xf32>
    %cst_99 = arith.constant 1.000000e+00 : f32
    %145 = vector.broadcast %cst_99 : f32 to vector<2x8xf32>
    %146 = arith.addf %145, %144 : vector<2x8xf32>
    %147 = arith.divf %145, %146 : vector<2x8xf32>
    %148 = arith.mulf %142, %147 : vector<2x8xf32>
    %c0_100 = arith.constant 0 : index
    %c0_101 = arith.constant 0 : index
    %149 = vector.load %arg10[%c0_100, %c0_101] : memref<8x32xf32, #tpu.memory_space<vmem>>, vector<8x32xf32>
    %cst_102 = arith.constant dense<0.000000e+00> : vector<2x32xf32>
    %150 = tpu.matmul %148, %149, %cst_102 {dimension_numbers = #tpu.dot_dimension_numbers<[1], [0], [0], [1], [0, 0, 1, 1], [], []>} : vector<2x8xf32>, vector<8x32xf32>, vector<2x32xf32> -> vector<2x32xf32>
    %c0_103 = arith.constant 0 : index
    %c0_104 = arith.constant 0 : index
    %151 = vector.load %arg11[%c0_103, %c0_104] : memref<1x32xf32, #tpu.memory_space<vmem>>, vector<1x32xf32>
    %152 = vector.broadcast %151 : vector<1x32xf32> to vector<2x32xf32>
    %153 = arith.addf %150, %152 : vector<2x32xf32>
    %154 = arith.negf %153 : vector<2x32xf32>
    %155 = math.exp %154 : vector<2x32xf32>
    %cst_105 = arith.constant 1.000000e+00 : f32
    %156 = vector.broadcast %cst_105 : f32 to vector<2x32xf32>
    %157 = arith.addf %156, %155 : vector<2x32xf32>
    %158 = arith.divf %156, %157 : vector<2x32xf32>
    %159 = vector.shape_cast %158 : vector<2x32xf32> to vector<2x1x1x32xf32>
    %160 = vector.broadcast %159 : vector<2x1x1x32xf32> to vector<2x8x8x32xf32>
    %161 = arith.mulf %132, %160 : vector<2x8x8x32xf32>
    %162 = vector.shape_cast %161 : vector<2x8x8x32xf32> to vector<128x32xf32>
    %c0_106 = arith.constant 0 : index
    %c0_107 = arith.constant 0 : index
    %163 = vector.load %arg12[%c0_106, %c0_107] : memref<32x8xf32, #tpu.memory_space<vmem>>, vector<32x8xf32>
    %cst_108 = arith.constant dense<0.000000e+00> : vector<128x8xf32>
    %164 = tpu.matmul %162, %163, %cst_108 {dimension_numbers = #tpu.dot_dimension_numbers<[1], [0], [0], [1], [0, 0, 1, 1], [], []>} : vector<128x32xf32>, vector<32x8xf32>, vector<128x8xf32> -> vector<128x8xf32>
    %c0_109 = arith.constant 0 : index
    %c0_110 = arith.constant 0 : index
    %165 = vector.load %arg13[%c0_109, %c0_110] : memref<1x8xf32, #tpu.memory_space<vmem>>, vector<1x8xf32>
    %c0_111 = arith.constant 0 : index
    %c0_112 = arith.constant 0 : index
    %166 = vector.load %arg14[%c0_111, %c0_112] : memref<1x8xf32, #tpu.memory_space<vmem>>, vector<1x8xf32>
    %cst_113 = arith.constant dense<0.000000e+00> : vector<8xf32>
    %167 = vector.multi_reduction <add>, %164, %cst_113 [0] : vector<128x8xf32> to vector<8xf32>
    %168 = vector.shape_cast %167 : vector<8xf32> to vector<1x8xf32>
    %cst_114 = arith.constant 1.280000e+02 : f32
    %169 = vector.broadcast %cst_114 : f32 to vector<1x8xf32>
    %170 = arith.divf %168, %169 : vector<1x8xf32>
    %171 = vector.broadcast %170 : vector<1x8xf32> to vector<128x8xf32>
    %172 = arith.subf %164, %171 : vector<128x8xf32>
    %173 = arith.mulf %172, %172 : vector<128x8xf32>
    %cst_115 = arith.constant dense<0.000000e+00> : vector<8xf32>
    %174 = vector.multi_reduction <add>, %173, %cst_115 [0] : vector<128x8xf32> to vector<8xf32>
    %175 = vector.shape_cast %174 : vector<8xf32> to vector<1x8xf32>
    %cst_116 = arith.constant 1.280000e+02 : f32
    %176 = vector.broadcast %cst_116 : f32 to vector<1x8xf32>
    %177 = arith.divf %175, %176 : vector<1x8xf32>
    %cst_117 = arith.constant 9.99999974E-6 : f32
    %178 = vector.broadcast %cst_117 : f32 to vector<1x8xf32>
    %179 = arith.addf %177, %178 : vector<1x8xf32>
    %180 = math.rsqrt %179 : vector<1x8xf32>
    %181 = vector.broadcast %180 : vector<1x8xf32> to vector<128x8xf32>
    %182 = arith.mulf %172, %181 : vector<128x8xf32>
    %183 = vector.broadcast %165 : vector<1x8xf32> to vector<128x8xf32>
    %184 = arith.mulf %182, %183 : vector<128x8xf32>
    %185 = vector.broadcast %166 : vector<1x8xf32> to vector<128x8xf32>
    %186 = arith.addf %184, %185 : vector<128x8xf32>
    %187 = arith.addf %186, %1 : vector<128x8xf32>
    %188 = tpu.iota {dimensions = array<i32: 0>} : vector<8x8xi32>
    %189 = tpu.iota {dimensions = array<i32: 1>} : vector<8x8xi32>
    %190 = arith.cmpi eq, %188, %189 : vector<8x8xi32>
    %191 = arith.extui %190 : vector<8x8xi1> to vector<8x8xi32>
    %192 = arith.sitofp %191 : vector<8x8xi32> to vector<8x8xf32>
    %cst_118 = arith.constant dense<0.000000e+00> : vector<8x128xf32>
    %193 = tpu.matmul %192, %187, %cst_118 {dimension_numbers = #tpu.dot_dimension_numbers<[1], [1], [0], [0], [0, 0, 1, 0], [], []>} : vector<8x8xf32>, vector<128x8xf32>, vector<8x128xf32> -> vector<8x128xf32>
    %c0_119 = arith.constant 0 : index
    %c0_120 = arith.constant 0 : index
    %194 = vector.load %arg15[%c0_119, %c0_120] : memref<8x128xf32, #tpu.memory_space<vmem>>, vector<8x128xf32>
    tpu.vector_store %arg15[%c0_119, %c0_120], %193 {strides = array<i32>} : memref<8x128xf32, #tpu.memory_space<vmem>>, vector<8x128xf32>,
    return
  }
  func.func @transform_0(%arg0: i32) -> (i32, i32, i32, i32) {
    %c0_i32 = arith.constant 0 : i32
    %c0_i32_0 = arith.constant 0 : i32
    %c0_i32_1 = arith.constant 0 : i32
    %c0_i32_2 = arith.constant 0 : i32
    %c0_i32_3 = arith.constant 0 : i32
    return %c0_i32, %c0_i32_0, %c0_i32_1, %c0_i32_2 : i32, i32, i32, i32
  }
  func.func @transform_1(%arg0: i32) -> (i32, i32) {
    %c0_i32 = arith.constant 0 : i32
    %c0_i32_0 = arith.constant 0 : i32
    %c0_i32_1 = arith.constant 0 : i32
    return %c0_i32, %c0_i32_0 : i32, i32
  }
  func.func @transform_2(%arg0: i32) -> (i32, i32) {
    %c0_i32 = arith.constant 0 : i32
    %c0_i32_0 = arith.constant 0 : i32
    %c0_i32_1 = arith.constant 0 : i32
    return %c0_i32, %c0_i32_0 : i32, i32
  }
  func.func @transform_3(%arg0: i32) -> (i32, i32) {
    %c0_i32 = arith.constant 0 : i32
    %c0_i32_0 = arith.constant 0 : i32
    %c0_i32_1 = arith.constant 0 : i32
    return %c0_i32, %c0_i32_0 : i32, i32
  }
  func.func @transform_4(%arg0: i32) -> (i32, i32) {
    %c0_i32 = arith.constant 0 : i32
    %c0_i32_0 = arith.constant 0 : i32
    %c0_i32_1 = arith.constant 0 : i32
    return %c0_i32, %c0_i32_0 : i32, i32
  }
  func.func @transform_5(%arg0: i32) -> (i32, i32) {
    %c0_i32 = arith.constant 0 : i32
    %c0_i32_0 = arith.constant 0 : i32
    %c0_i32_1 = arith.constant 0 : i32
    return %c0_i32, %c0_i32_0 : i32, i32
  }
  func.func @transform_6(%arg0: i32) -> (i32, i32) {
    %c0_i32 = arith.constant 0 : i32
    %c0_i32_0 = arith.constant 0 : i32
    %c0_i32_1 = arith.constant 0 : i32
    return %c0_i32, %c0_i32_0 : i32, i32
  }
  func.func @transform_7(%arg0: i32) -> (i32, i32) {
    %c0_i32 = arith.constant 0 : i32
    %c0_i32_0 = arith.constant 0 : i32
    %c0_i32_1 = arith.constant 0 : i32
    return %c0_i32, %c0_i32_0 : i32, i32
  }
  func.func @transform_8(%arg0: i32) -> (i32, i32) {
    %c0_i32 = arith.constant 0 : i32
    %c0_i32_0 = arith.constant 0 : i32
    %c0_i32_1 = arith.constant 0 : i32
    return %c0_i32, %c0_i32_0 : i32, i32
  }
  func.func @transform_9(%arg0: i32) -> (i32, i32) {
    %c0_i32 = arith.constant 0 : i32
    %c0_i32_0 = arith.constant 0 : i32
    %c0_i32_1 = arith.constant 0 : i32
    return %c0_i32, %c0_i32_0 : i32, i32
  }
  func.func @transform_10(%arg0: i32) -> (i32, i32) {
    %c0_i32 = arith.constant 0 : i32
    %c0_i32_0 = arith.constant 0 : i32
    %c0_i32_1 = arith.constant 0 : i32
    return %c0_i32, %c0_i32_0 : i32, i32
  }
  func.func @transform_11(%arg0: i32) -> (i32, i32) {
    %c0_i32 = arith.constant 0 : i32
    %c0_i32_0 = arith.constant 0 : i32
    %c0_i32_1 = arith.constant 0 : i32
    return %c0_i32, %c0_i32_0 : i32, i32
  }
  func.func @transform_12(%arg0: i32) -> (i32, i32) {
    %c0_i32 = arith.constant 0 : i32
    %c0_i32_0 = arith.constant 0 : i32
    %c0_i32_1 = arith.constant 0 : i32
    return %c0_i32, %c0_i32_0 : i32, i32
  }
  func.func @transform_13(%arg0: i32) -> (i32, i32) {
    %c0_i32 = arith.constant 0 : i32
    %c0_i32_0 = arith.constant 0 : i32
    %c0_i32_1 = arith.constant 0 : i32
    return %c0_i32, %c0_i32_0 : i32, i32
  }
  func.func @transform_14(%arg0: i32) -> (i32, i32) {
    %c0_i32 = arith.constant 0 : i32
    %c0_i32_0 = arith.constant 0 : i32
    %c0_i32_1 = arith.constant 0 : i32
    return %c0_i32, %c0_i32_0 : i32, i32
  }
}

</mosaic_0001>

<llo_original>
// kernel: mbconv_layers_forward.3
$region0: #{mbconv_layers_forward.3}
  #allocation0 [shape = 'u32[]', space=smem, size = 0x4, offset = 0x4, fixed_abs, tag = 'smem constant byte address 0x4 - core index']
  #allocation1 [shape = 'u32[144,128]{1,0:T(1,128)}', space=vmem, size = 0x12000, scoped, tag = 'internal scratch']
  #allocation2 [shape = 'f32[2,10,17,32]{3,2,1,0:T(8,128)}', space=vmem, size = 0x3c000, scoped, tag = 'scratch operand']
  %s0 = inlined_call_operand.vmem [shape: f32[2,8,8,8], index: 0, kind: input, shape index: {}]
  %s1 = inlined_call_operand.vmem [shape: f32[8,32], index: 1, kind: input, shape index: {}]
  %s2 = inlined_call_operand.vmem [shape: f32[1,32], index: 2, kind: input, shape index: {}]
  %s3 = inlined_call_operand.vmem [shape: f32[1,32], index: 3, kind: input, shape index: {}]
  %s4 = inlined_call_operand.vmem [shape: f32[9,32], index: 4, kind: input, shape index: {}]
  %s5 = inlined_call_operand.vmem [shape: f32[1,32], index: 5, kind: input, shape index: {}]
  %s6 = inlined_call_operand.vmem [shape: f32[1,32], index: 6, kind: input, shape index: {}]
  %s7 = inlined_call_operand.vmem [shape: f32[32,8], index: 7, kind: input, shape index: {}]
  %s8 = inlined_call_operand.vmem [shape: f32[1,8], index: 8, kind: input, shape index: {}]
  %s9 = inlined_call_operand.vmem [shape: f32[8,32], index: 9, kind: input, shape index: {}]
  %s10 = inlined_call_operand.vmem [shape: f32[1,32], index: 10, kind: input, shape index: {}]
  %s11 = inlined_call_operand.vmem [shape: f32[32,8], index: 11, kind: input, shape index: {}]
  %s12 = inlined_call_operand.vmem [shape: f32[1,8], index: 12, kind: input, shape index: {}]
  %s13 = inlined_call_operand.vmem [shape: f32[1,8], index: 13, kind: input, shape index: {}]
  %s14 = inlined_call_operand.vmem [shape: f32[8,128], index: 14, kind: output, shape index: {}]
  %s15 = sld [smem:[#allocation0]]
  $region66: #{mbconv_layers_forward.3} parent=0
    _
  %s17 = ssub.s32 1, %s15
  %s18 = scalar_select 0, %s17, %s15
  // Predicated region
  $region2: #{mbconv_layers_forward.3} parent=0 // pred_check
    _
  $region3: #{mbconv_layers_forward.3} parent=0 // pred_check_branch
    %20 = sbr.rel (0) target = $region5
  $region4: #{mbconv_layers_forward.3} parent=0 // pred_region
    _
  $region5: #{mbconv_layers_forward.3} parent=0 // pred_fallthru
    _
  // Predicated region
  $region6: #{mbconv_layers_forward.3} parent=0 // pred_check
    _
  $region7: #{mbconv_layers_forward.3} parent=0 // pred_check_branch
    %22 = sbr.rel (0) target = $region9
  $region8: #{mbconv_layers_forward.3} parent=0 // pred_region
    _
  $region9: #{mbconv_layers_forward.3} parent=0 // pred_fallthru
    _
  // Predicated region
  $region10: #{mbconv_layers_forward.3} parent=0 // pred_check
    _
  $region11: #{mbconv_layers_forward.3} parent=0 // pred_check_branch
    %24 = sbr.rel (0) target = $region13
  $region12: #{mbconv_layers_forward.3} parent=0 // pred_region
    _
  $region13: #{mbconv_layers_forward.3} parent=0 // pred_fallthru
    _
  // Predicated region
  $region14: #{mbconv_layers_forward.3} parent=0 // pred_check
    _
  $region15: #{mbconv_layers_forward.3} parent=0 // pred_check_branch
    %26 = sbr.rel (0) target = $region17
  $region16: #{mbconv_layers_forward.3} parent=0 // pred_region
    _
  $region17: #{mbconv_layers_forward.3} parent=0 // pred_fallthru
    _
  // Predicated region
  $region18: #{mbconv_layers_forward.3} parent=0 // pred_check
    _
  $region19: #{mbconv_layers_forward.3} parent=0 // pred_check_branch
    %28 = sbr.rel (0) target = $region21
  $region20: #{mbconv_layers_forward.3} parent=0 // pred_region
    _
  $region21: #{mbconv_layers_forward.3} parent=0 // pred_fallthru
    _
  // Predicated region
  $region22: #{mbconv_layers_forward.3} parent=0 // pred_check
    _
  $region23: #{mbconv_layers_forward.3} parent=0 // pred_check_branch
    %30 = sbr.rel (0) target = $region25
  $region24: #{mbconv_layers_forward.3} parent=0 // pred_region
    _
  $region25: #{mbconv_layers_forward.3} parent=0 // pred_fallthru
    _
  // Predicated region
  $region26: #{mbconv_layers_forward.3} parent=0 // pred_check
    _
  $region27: #{mbconv_layers_forward.3} parent=0 // pred_check_branch
    %32 = sbr.rel (0) target = $region29
  $region28: #{mbconv_layers_forward.3} parent=0 // pred_region
    _
  $region29: #{mbconv_layers_forward.3} parent=0 // pred_fallthru
    _
  // Predicated region
  $region30: #{mbconv_layers_forward.3} parent=0 // pred_check
    _
  $region31: #{mbconv_layers_forward.3} parent=0 // pred_check_branch
    %34 = sbr.rel (0) target = $region33
  $region32: #{mbconv_layers_forward.3} parent=0 // pred_region
    _
  $region33: #{mbconv_layers_forward.3} parent=0 // pred_fallthru
    _
  // Predicated region
  $region34: #{mbconv_layers_forward.3} parent=0 // pred_check
    _
  $region35: #{mbconv_layers_forward.3} parent=0 // pred_check_branch
    %36 = sbr.rel (0) target = $region37
  $region36: #{mbconv_layers_forward.3} parent=0 // pred_region
    _
  $region37: #{mbconv_layers_forward.3} parent=0 // pred_fallthru
    _
  // Predicated region
  $region38: #{mbconv_layers_forward.3} parent=0 // pred_check
    _
  $region39: #{mbconv_layers_forward.3} parent=0 // pred_check_branch
    %38 = sbr.rel (0) target = $region41
  $region40: #{mbconv_layers_forward.3} parent=0 // pred_region
    _
  $region41: #{mbconv_layers_forward.3} parent=0 // pred_fallthru
    _
  // Predicated region
  $region42: #{mbconv_layers_forward.3} parent=0 // pred_check
    _
  $region43: #{mbconv_layers_forward.3} parent=0 // pred_check_branch
    %40 = sbr.rel (0) target = $region45
  $region44: #{mbconv_layers_forward.3} parent=0 // pred_region
    _
  $region45: #{mbconv_layers_forward.3} parent=0 // pred_fallthru
    _
  // Predicated region
  $region46: #{mbconv_layers_forward.3} parent=0 // pred_check
    _
  $region47: #{mbconv_layers_forward.3} parent=0 // pred_check_branch
    %42 = sbr.rel (0) target = $region49
  $region48: #{mbconv_layers_forward.3} parent=0 // pred_region
    _
  $region49: #{mbconv_layers_forward.3} parent=0 // pred_fallthru
    _
  // Predicated region
  $region50: #{mbconv_layers_forward.3} parent=0 // pred_check
    _
  $region51: #{mbconv_layers_forward.3} parent=0 // pred_check_branch
    %44 = sbr.rel (0) target = $region53
  $region52: #{mbconv_layers_forward.3} parent=0 // pred_region
    _
  $region53: #{mbconv_layers_forward.3} parent=0 // pred_fallthru
    _
  // Predicated region
  $region54: #{mbconv_layers_forward.3} parent=0 // pred_check
    _
  $region55: #{mbconv_layers_forward.3} parent=0 // pred_check_branch
    %46 = sbr.rel (0) target = $region57
  $region56: #{mbconv_layers_forward.3} parent=0 // pred_region
    _
  $region57: #{mbconv_layers_forward.3} parent=0 // pred_fallthru
    _
  %v47 = vld [vmem:[%s0] sm:$0xff]
  %v48 = vld [vmem:[%s0 + $0x8] sm:$0xff]
  %v49 = vld [vmem:[%s0 + $0x10] sm:$0xff]
  %v50 = vld [vmem:[%s0 + $0x18] sm:$0xff]
  %v51 = vld [vmem:[%s0 + $0x20] sm:$0xff]
  %v52 = vld [vmem:[%s0 + $0x28] sm:$0xff]
  %v53 = vld [vmem:[%s0 + $0x30] sm:$0xff]
  %v54 = vld [vmem:[%s0 + $0x38] sm:$0xff]
  %v55 = vld [vmem:[%s0 + $0x40] sm:$0xff]
  %v56 = vld [vmem:[%s0 + $0x48] sm:$0xff]
  %v57 = vld [vmem:[%s0 + $0x50] sm:$0xff]
  %v58 = vld [vmem:[%s0 + $0x58] sm:$0xff]
  %v59 = vld [vmem:[%s0 + $0x60] sm:$0xff]
  %v60 = vld [vmem:[%s0 + $0x68] sm:$0xff]
  %v61 = vld [vmem:[%s0 + $0x70] sm:$0xff]
  %v62 = vld [vmem:[%s0 + $0x78] sm:$0xff]
  %v63 = vld [vmem:[%s1] sm:$0xff]
  %vm64 = vcmask 64512
  %v66 = vsel %vm64, %v47, 0
  %v69 = vsel %vm64, %v48, 0
  %v72 = vsel %vm64, %v49, 0
  %v75 = vsel %vm64, %v50, 0
  %v78 = vsel %vm64, %v51, 0
  %v81 = vsel %vm64, %v52, 0
  %v84 = vsel %vm64, %v53, 0
  %v87 = vsel %vm64, %v54, 0
  %v90 = vsel %vm64, %v55, 0
  %v93 = vsel %vm64, %v56, 0
  %v96 = vsel %vm64, %v57, 0
  %v99 = vsel %vm64, %v58, 0
  %v102 = vsel %vm64, %v59, 0
  %v105 = vsel %vm64, %v60, 0
  %v108 = vsel %vm64, %v61, 0
  %v111 = vsel %vm64, %v62, 0
  %113 = vmatprep.subr.mxu0 0.0
  %114 = vmatpush1.msra.mxu0 %v63
  %115 = vmatprep.subr.mxu0 0.0
  %116 = vmatpush1.msra.mxu0 0.0
  %117 = vmatprep.subr.mxu0 0.0
  %118 = vmatpush1.msra.mxu0 0.0
  %119 = vmatprep.subr.mxu0 0.0
  %120 = vmatpush1.msra.mxu0 0.0
  %121 = vmatprep.subr.mxu0 0.0
  %122 = vmatpush1.msra.mxu0 0.0
  %123 = vmatprep.subr.mxu0 0.0
  %124 = vmatpush1.msra.mxu0 0.0
  %125 = vmatprep.subr.mxu0 0.0
  %126 = vmatpush1.msra.mxu0 0.0
  %127 = vmatprep.subr.mxu0 0.0
  %128 = vmatpush1.msra.mxu0 0.0
  %129 = vmatprep.subr.mxu0 0.0
  %130 = vmatpush1.msra.mxu0 0.0
  %131 = vmatprep.subr.mxu0 0.0
  %132 = vmatpush1.msra.mxu0 0.0
  %133 = vmatprep.subr.mxu0 0.0
  %134 = vmatpush1.msra.mxu0 0.0
  %135 = vmatprep.subr.mxu0 0.0
  %136 = vmatpush1.msra.mxu0 0.0
  %137 = vmatprep.subr.mxu0 0.0
  %138 = vmatpush1.msra.mxu0 0.0
  %139 = vmatprep.subr.mxu0 0.0
  %140 = vmatpush1.msra.mxu0 0.0
  %141 = vmatprep.subr.mxu0 0.0
  %142 = vmatpush1.msra.mxu0 0.0
  %143 = vmatprep.subr.mxu0 0.0
  %144 = vmatpush1.msra.mxu0 0.0
  %145 = vmatprep.subr.mxu0 0.0
  %146 = vmatpush1.msra.mxu0 0.0
  %147 = vmatprep.subr.mxu0 0.0
  %148 = vmatpush1.msra.mxu0 0.0
  %149 = vmatprep.subr.mxu0 0.0
  %150 = vmatpush1.msra.mxu0 0.0
  %151 = vmatprep.subr.mxu0 0.0
  %152 = vmatpush1.msra.mxu0 0.0
  %153 = vmatprep.subr.mxu0 0.0
  %154 = vmatpush1.msra.mxu0 0.0
  %155 = vmatprep.subr.mxu0 0.0
  %156 = vmatpush1.msra.mxu0 0.0
  %157 = vmatprep.subr.mxu0 0.0
  %158 = vmatpush1.msra.mxu0 0.0
  %159 = vmatprep.subr.mxu0 0.0
  %160 = vmatpush1.msra.mxu0 0.0
  %161 = vmatprep.subr.mxu0 0.0
  %162 = vmatpush1.msra.mxu0 0.0
  %163 = vmatprep.subr.mxu0 0.0
  %164 = vmatpush1.msra.mxu0 0.0
  %165 = vmatprep.subr.mxu0 0.0
  %166 = vmatpush1.msra.mxu0 0.0
  %167 = vmatprep.subr.mxu0 0.0
  %168 = vmatpush1.msra.mxu0 0.0
  %169 = vmatprep.subr.mxu0 0.0
  %170 = vmatpush1.msra.mxu0 0.0
  %171 = vmatprep.subr.mxu0 0.0
  %172 = vmatpush1.msra.mxu0 0.0
  %173 = vmatprep.subr.mxu0 0.0
  %174 = vmatpush1.msra.mxu0 0.0
  %175 = vmatprep.subr.mxu0 0.0
  %176 = vmatpush1.msra.mxu0 0.0
  %177 = vmatprep.mubr.f32.mxu0 0.0
  %178 = vmatmul.mubr.f32.gmra.mrb[0].mxu0 %v66
  %v179 = vpop.f32.mrb[0].mxu0
  %v180 = vadd.f32 0.0, %v179
  %v181 = vpop.f32.mrb[0].mxu0
  %182 = vmatprep.mubr.f32.mxu0 0.0
  %183 = vmatmul.mubr.f32.gmra.mrb[0].mxu0 %v69
  %v184 = vpop.f32.mrb[0].mxu0
  %v185 = vadd.f32 0.0, %v184
  %v186 = vpop.f32.mrb[0].mxu0
  %187 = vmatprep.mubr.f32.mxu0 0.0
  %188 = vmatmul.mubr.f32.gmra.mrb[0].mxu0 %v72
  %v189 = vpop.f32.mrb[0].mxu0
  %v190 = vadd.f32 0.0, %v189
  %v191 = vpop.f32.mrb[0].mxu0
  %192 = vmatprep.mubr.f32.mxu0 0.0
  %193 = vmatmul.mubr.f32.gmra.mrb[0].mxu0 %v75
  %v194 = vpop.f32.mrb[0].mxu0
  %v195 = vadd.f32 0.0, %v194
  %v196 = vpop.f32.mrb[0].mxu0
  %197 = vmatprep.mubr.f32.mxu0 0.0
  %198 = vmatmul.mubr.f32.gmra.mrb[0].mxu0 %v78
  %v199 = vpop.f32.mrb[0].mxu0
  %v200 = vadd.f32 0.0, %v199
  %v201 = vpop.f32.mrb[0].mxu0
  %202 = vmatprep.mubr.f32.mxu0 0.0
  %203 = vmatmul.mubr.f32.gmra.mrb[0].mxu0 %v81
  %v204 = vpop.f32.mrb[0].mxu0
  %v205 = vadd.f32 0.0, %v204
  %v206 = vpop.f32.mrb[0].mxu0
  %207 = vmatprep.mubr.f32.mxu0 0.0
  %208 = vmatmul.mubr.f32.gmra.mrb[0].mxu0 %v84
  %v209 = vpop.f32.mrb[0].mxu0
  %v210 = vadd.f32 0.0, %v209
  %v211 = vpop.f32.mrb[0].mxu0
  %212 = vmatprep.mubr.f32.mxu0 0.0
  %213 = vmatmul.mubr.f32.gmra.mrb[0].mxu0 %v87
  %v214 = vpop.f32.mrb[0].mxu0
  %v215 = vadd.f32 0.0, %v214
  %v216 = vpop.f32.mrb[0].mxu0
  %217 = vmatprep.mubr.f32.mxu0 0.0
  %218 = vmatmul.mubr.f32.gmra.mrb[0].mxu0 %v90
  %v219 = vpop.f32.mrb[0].mxu0
  %v220 = vadd.f32 0.0, %v219
  %v221 = vpop.f32.mrb[0].mxu0
  %222 = vmatprep.mubr.f32.mxu0 0.0
  %223 = vmatmul.mubr.f32.gmra.mrb[0].mxu0 %v93
  %v224 = vpop.f32.mrb[0].mxu0
  %v225 = vadd.f32 0.0, %v224
  %v226 = vpop.f32.mrb[0].mxu0
  %227 = vmatprep.mubr.f32.mxu0 0.0
  %228 = vmatmul.mubr.f32.gmra.mrb[0].mxu0 %v96
  %v229 = vpop.f32.mrb[0].mxu0
  %v230 = vadd.f32 0.0, %v229
  %v231 = vpop.f32.mrb[0].mxu0
  %232 = vmatprep.mubr.f32.mxu0 0.0
  %233 = vmatmul.mubr.f32.gmra.mrb[0].mxu0 %v99
  %v234 = vpop.f32.mrb[0].mxu0
  %v235 = vadd.f32 0.0, %v234
  %v236 = vpop.f32.mrb[0].mxu0
  %237 = vmatprep.mubr.f32.mxu0 0.0
  %238 = vmatmul.mubr.f32.gmra.mrb[0].mxu0 %v102
  %v239 = vpop.f32.mrb[0].mxu0
  %v240 = vadd.f32 0.0, %v239
  %v241 = vpop.f32.mrb[0].mxu0
  %242 = vmatprep.mubr.f32.mxu0 0.0
  %243 = vmatmul.mubr.f32.gmra.mrb[0].mxu0 %v105
  %v244 = vpop.f32.mrb[0].mxu0
  %v245 = vadd.f32 0.0, %v244
  %v246 = vpop.f32.mrb[0].mxu0
  %247 = vmatprep.mubr.f32.mxu0 0.0
  %248 = vmatmul.mubr.f32.gmra.mrb[0].mxu0 %v108
  %v249 = vpop.f32.mrb[0].mxu0
  %v250 = vadd.f32 0.0, %v249
  %v251 = vpop.f32.mrb[0].mxu0
  %252 = vmatprep.mubr.f32.mxu0 0.0
  %253 = vmatmul.mubr.f32.gmra.mrb[0].mxu0 %v111
  %v254 = vpop.f32.mrb[0].mxu0
  %v255 = vadd.f32 0.0, %v254
  %v256 = vpop.f32.mrb[0].mxu0
  %257 = vdwg.mxu0
  %v258 = vld [vmem:[%s2] sm:$0x1]
  %v259 = vld [vmem:[%s3] sm:$0x1]
  %vm260 = vcmask 261120
  %v261 = vsel %vm260, %v180, 0.0
  %v262 = vsel %vm260, %v185, 0.0
  %v263 = vadd.f32 %v261, %v262
  %v264 = vsel %vm260, %v190, 0.0
  %v265 = vadd.f32 %v263, %v264
  %v266 = vsel %vm260, %v195, 0.0
  %v267 = vadd.f32 %v265, %v266
  %v268 = vsel %vm260, %v200, 0.0
  %v269 = vadd.f32 %v267, %v268
  %v270 = vsel %vm260, %v205, 0.0
  %v271 = vadd.f32 %v269, %v270
  %v272 = vsel %vm260, %v210, 0.0
  %v273 = vadd.f32 %v271, %v272
  %v274 = vsel %vm260, %v215, 0.0
  %v275 = vadd.f32 %v273, %v274
  %v276 = vsel %vm260, %v220, 0.0
  %v277 = vadd.f32 %v275, %v276
  %v278 = vsel %vm260, %v225, 0.0
  %v279 = vadd.f32 %v277, %v278
  %v280 = vsel %vm260, %v230, 0.0
  %v281 = vadd.f32 %v279, %v280
  %v282 = vsel %vm260, %v235, 0.0
  %v283 = vadd.f32 %v281, %v282
  %v284 = vsel %vm260, %v240, 0.0
  %v285 = vadd.f32 %v283, %v284
  %v286 = vsel %vm260, %v245, 0.0
  %v287 = vadd.f32 %v285, %v286
  %v288 = vsel %vm260, %v250, 0.0
  %v289 = vadd.f32 %v287, %v288
  %v290 = vsel %vm260, %v255, 0.0
  %v291 = vadd.f32 %v289, %v290
  %v292 = vrot.slane %v291, 4
  %v293 = vadd.f32 %v291, %v292
  %v294 = vrot.slane %v293, 2
  %v295 = vadd.f32 %v293, %v294
  %v296 = vrot.slane %v295, 1
  %v297 = vadd.f32 %v295, %v296
  %v298 = vrcp.pop 128.0
  %v299 = vmul.f32 %v297, %v298
  %v300 = vsub.f32 %v180, %v299
  %v301 = vsub.f32 %v185, %v299
  %v302 = vsub.f32 %v190, %v299
  %v303 = vsub.f32 %v195, %v299
  %v304 = vsub.f32 %v200, %v299
  %v305 = vsub.f32 %v205, %v299
  %v306 = vsub.f32 %v210, %v299
  %v307 = vsub.f32 %v215, %v299
  %v308 = vsub.f32 %v220, %v299
  %v309 = vsub.f32 %v225, %v299
  %v310 = vsub.f32 %v230, %v299
  %v311 = vsub.f32 %v235, %v299
  %v312 = vsub.f32 %v240, %v299
  %v313 = vsub.f32 %v245, %v299
  %v314 = vsub.f32 %v250, %v299
  %v315 = vsub.f32 %v255, %v299
  %v316 = vmul.f32 %v300, %v300
  %v317 = vmul.f32 %v301, %v301
  %v318 = vmul.f32 %v302, %v302
  %v319 = vmul.f32 %v303, %v303
  %v320 = vmul.f32 %v304, %v304
  %v321 = vmul.f32 %v305, %v305
  %v322 = vmul.f32 %v306, %v306
  %v323 = vmul.f32 %v307, %v307
  %v324 = vmul.f32 %v308, %v308
  %v325 = vmul.f32 %v309, %v309
  %v326 = vmul.f32 %v310, %v310
  %v327 = vmul.f32 %v311, %v311
  %v328 = vmul.f32 %v312, %v312
  %v329 = vmul.f32 %v313, %v313
  %v330 = vmul.f32 %v314, %v314
  %v331 = vmul.f32 %v315, %v315
  %v332 = vsel %vm260, %v316, 0.0
  %v333 = vsel %vm260, %v317, 0.0
  %v334 = vadd.f32 %v332, %v333
  %v335 = vsel %vm260, %v318, 0.0
  %v336 = vadd.f32 %v334, %v335
  %v337 = vsel %vm260, %v319, 0.0
  %v338 = vadd.f32 %v336, %v337
  %v339 = vsel %vm260, %v320, 0.0
  %v340 = vadd.f32 %v338, %v339
  %v341 = vsel %vm260, %v321, 0.0
  %v342 = vadd.f32 %v340, %v341
  %v343 = vsel %vm260, %v322, 0.0
  %v344 = vadd.f32 %v342, %v343
  %v345 = vsel %vm260, %v323, 0.0
  %v346 = vadd.f32 %v344, %v345
  %v347 = vsel %vm260, %v324, 0.0
  %v348 = vadd.f32 %v346, %v347
  %v349 = vsel %vm260, %v325, 0.0
  %v350 = vadd.f32 %v348, %v349
  %v351 = vsel %vm260, %v326, 0.0
  %v352 = vadd.f32 %v350, %v351
  %v353 = vsel %vm260, %v327, 0.0
  %v354 = vadd.f32 %v352, %v353
  %v355 = vsel %vm260, %v328, 0.0
  %v356 = vadd.f32 %v354, %v355
  %v357 = vsel %vm260, %v329, 0.0
  %v358 = vadd.f32 %v356, %v357
  %v359 = vsel %vm260, %v330, 0.0
  %v360 = vadd.f32 %v358, %v359
  %v361 = vsel %vm260, %v331, 0.0
  %v362 = vadd.f32 %v360, %v361
  %v363 = vrot.slane %v362, 4
  %v364 = vadd.f32 %v362, %v363
  %v365 = vrot.slane %v364, 2
  %v366 = vadd.f32 %v364, %v365
  %v367 = vrot.slane %v366, 1
  %v368 = vadd.f32 %v366, %v367
  %v369 = vmul.f32 %v368, %v298
  %v370 = vadd.f32 %v369, 1e-05
  %v371 = vrsqrt.pop %v370
  %v372 = vmul.f32 %v300, %v371
  %v373 = vmul.f32 %v301, %v371
  %v374 = vmul.f32 %v302, %v371
  %v375 = vmul.f32 %v303, %v371
  %v376 = vmul.f32 %v304, %v371
  %v377 = vmul.f32 %v305, %v371
  %v378 = vmul.f32 %v306, %v371
  %v379 = vmul.f32 %v307, %v371
  %v380 = vmul.f32 %v308, %v371
  %v381 = vmul.f32 %v309, %v371
  %v382 = vmul.f32 %v310, %v371
  %v383 = vmul.f32 %v311, %v371
  %v384 = vmul.f32 %v312, %v371
  %v385 = vmul.f32 %v313, %v371
  %v386 = vmul.f32 %v314, %v371
  %v387 = vmul.f32 %v315, %v371
  %v389 = vlaneseq
  %v390 = vshrl.u32 %v389, 7
  %v391 = vsub.s32 0, %v390
  %v392 = vrot.slane %v258, %v391
  %v394 = vmul.f32 %v372, %v392
  %v395 = vmul.f32 %v373, %v392
  %v396 = vmul.f32 %v374, %v392
  %v397 = vmul.f32 %v375, %v392
  %v398 = vmul.f32 %v376, %v392
  %v399 = vmul.f32 %v377, %v392
  %v400 = vmul.f32 %v378, %v392
  %v401 = vmul.f32 %v379, %v392
  %v402 = vmul.f32 %v380, %v392
  %v403 = vmul.f32 %v381, %v392
  %v404 = vmul.f32 %v382, %v392
  %v405 = vmul.f32 %v383, %v392
  %v406 = vmul.f32 %v384, %v392
  %v407 = vmul.f32 %v385, %v392
  %v408 = vmul.f32 %v386, %v392
  %v409 = vmul.f32 %v387, %v392
  %v411 = vlaneseq
  %v412 = vshrl.u32 %v411, 7
  %v413 = vsub.s32 0, %v412
  %v414 = vrot.slane %v259, %v413
  %v416 = vadd.f32 %v394, %v414
  %v417 = vadd.f32 %v395, %v414
  %v418 = vadd.f32 %v396, %v414
  %v419 = vadd.f32 %v397, %v414
  %v420 = vadd.f32 %v398, %v414
  %v421 = vadd.f32 %v399, %v414
  %v422 = vadd.f32 %v400, %v414
  %v423 = vadd.f32 %v401, %v414
  %v424 = vadd.f32 %v402, %v414
  %v425 = vadd.f32 %v403, %v414
  %v426 = vadd.f32 %v404, %v414
  %v427 = vadd.f32 %v405, %v414
  %v428 = vadd.f32 %v406, %v414
  %v429 = vadd.f32 %v407, %v414
  %v430 = vadd.f32 %v408, %v414
  %v431 = vadd.f32 %v409, %v414
  %v432 = vxor.u32 %v416, 2147483648
  %v433 = vxor.u32 %v417, 2147483648
  %v434 = vxor.u32 %v418, 2147483648
  %v435 = vxor.u32 %v419, 2147483648
  %v436 = vxor.u32 %v420, 2147483648
  %v437 = vxor.u32 %v421, 2147483648
  %v438 = vxor.u32 %v422, 2147483648
  %v439 = vxor.u32 %v423, 2147483648
  %v440 = vxor.u32 %v424, 2147483648
  %v441 = vxor.u32 %v425, 2147483648
  %v442 = vxor.u32 %v426, 2147483648
  %v443 = vxor.u32 %v427, 2147483648
  %v444 = vxor.u32 %v428, 2147483648
  %v445 = vxor.u32 %v429, 2147483648
  %v446 = vxor.u32 %v430, 2147483648
  %v447 = vxor.u32 %v431, 2147483648
  %v448 = vmul.f32 %v432, 1.442695
  %v449 = vpow.pop %v448
  %v450 = vmul.f32 %v433, 1.442695
  %v451 = vpow.pop %v450
  %v452 = vmul.f32 %v434, 1.442695
  %v453 = vpow.pop %v452
  %v454 = vmul.f32 %v435, 1.442695
  %v455 = vpow.pop %v454
  %v456 = vmul.f32 %v436, 1.442695
  %v457 = vpow.pop %v456
  %v458 = vmul.f32 %v437, 1.442695
  %v459 = vpow.pop %v458
  %v460 = vmul.f32 %v438, 1.442695
  %v461 = vpow.pop %v460
  %v462 = vmul.f32 %v439, 1.442695
  %v463 = vpow.pop %v462
  %v464 = vmul.f32 %v440, 1.442695
  %v465 = vpow.pop %v464
  %v466 = vmul.f32 %v441, 1.442695
  %v467 = vpow.pop %v466
  %v468 = vmul.f32 %v442, 1.442695
  %v469 = vpow.pop %v468
  %v470 = vmul.f32 %v443, 1.442695
  %v471 = vpow.pop %v470
  %v472 = vmul.f32 %v444, 1.442695
  %v473 = vpow.pop %v472
  %v474 = vmul.f32 %v445, 1.442695
  %v475 = vpow.pop %v474
  %v476 = vmul.f32 %v446, 1.442695
  %v477 = vpow.pop %v476
  %v478 = vmul.f32 %v447, 1.442695
  %v479 = vpow.pop %v478
  %v480 = vadd.f32 %v449, 1.0
  %v481 = vadd.f32 %v451, 1.0
  %v482 = vadd.f32 %v453, 1.0
  %v483 = vadd.f32 %v455, 1.0
  %v484 = vadd.f32 %v457, 1.0
  %v485 = vadd.f32 %v459, 1.0
  %v486 = vadd.f32 %v461, 1.0
  %v487 = vadd.f32 %v463, 1.0
  %v488 = vadd.f32 %v465, 1.0
  %v489 = vadd.f32 %v467, 1.0
  %v490 = vadd.f32 %v469, 1.0
  %v491 = vadd.f32 %v471, 1.0
  %v492 = vadd.f32 %v473, 1.0
  %v493 = vadd.f32 %v475, 1.0
  %v494 = vadd.f32 %v477, 1.0
  %v495 = vadd.f32 %v479, 1.0
  %v496 = vrcp.pop %v480
  %v497 = vmul.f32 1.0, %v496
  %v498 = vrcp.pop %v481
  %v499 = vmul.f32 1.0, %v498
  %v500 = vrcp.pop %v482
  %v501 = vmul.f32 1.0, %v500
  %v502 = vrcp.pop %v483
  %v503 = vmul.f32 1.0, %v502
  %v504 = vrcp.pop %v484
  %v505 = vmul.f32 1.0, %v504
  %v506 = vrcp.pop %v485
  %v507 = vmul.f32 1.0, %v506
  %v508 = vrcp.pop %v486
  %v509 = vmul.f32 1.0, %v508
  %v510 = vrcp.pop %v487
  %v511 = vmul.f32 1.0, %v510
  %v512 = vrcp.pop %v488
  %v513 = vmul.f32 1.0, %v512
  %v514 = vrcp.pop %v489
  %v515 = vmul.f32 1.0, %v514
  %v516 = vrcp.pop %v490
  %v517 = vmul.f32 1.0, %v516
  %v518 = vrcp.pop %v491
  %v519 = vmul.f32 1.0, %v518
  %v520 = vrcp.pop %v492
  %v521 = vmul.f32 1.0, %v520
  %v522 = vrcp.pop %v493
  %v523 = vmul.f32 1.0, %v522
  %v524 = vrcp.pop %v494
  %v525 = vmul.f32 1.0, %v524
  %v526 = vrcp.pop %v495
  %v527 = vmul.f32 1.0, %v526
  %v528 = vmul.f32 %v416, %v497
  %v529 = vmul.f32 %v417, %v499
  %v530 = vmul.f32 %v418, %v501
  %v531 = vmul.f32 %v419, %v503
  %v532 = vmul.f32 %v420, %v505
  %v533 = vmul.f32 %v421, %v507
  %v534 = vmul.f32 %v422, %v509
  %v535 = vmul.f32 %v423, %v511
  %v536 = vmul.f32 %v424, %v513
  %v537 = vmul.f32 %v425, %v515
  %v538 = vmul.f32 %v426, %v517
  %v539 = vmul.f32 %v427, %v519
  %v540 = vmul.f32 %v428, %v521
  %v541 = vmul.f32 %v429, %v523
  %v542 = vmul.f32 %v430, %v525
  %v543 = vmul.f32 %v431, %v527
  %s544 = scalar_lea.vmem [#allocation2], 24
  %545 = vst.msk [vmem:[%s544 + $0x8] sm:$0xff] %vm260, %v528
  %546 = vst.msk [vmem:[%s544 + $0x20] sm:$0xff] %vm260, %v529
  %547 = vst.msk [vmem:[%s544 + $0x38] sm:$0xff] %vm260, %v530
  %548 = vst.msk [vmem:[%s544 + $0x50] sm:$0xff] %vm260, %v531
  %549 = vst.msk [vmem:[%s544 + $0x68] sm:$0xff] %vm260, %v532
  %550 = vst.msk [vmem:[%s544 + $0x80] sm:$0xff] %vm260, %v533
  %551 = vst.msk [vmem:[%s544 + $0x98] sm:$0xff] %vm260, %v534
  %552 = vst.msk [vmem:[%s544 + $0xb0] sm:$0xff] %vm260, %v535
  %553 = vst.msk [vmem:[%s544 + $0xf8] sm:$0xff] %vm260, %v536
  %554 = vst.msk [vmem:[%s544 + $0x110] sm:$0xff] %vm260, %v537
  %555 = vst.msk [vmem:[%s544 + $0x128] sm:$0xff] %vm260, %v538
  %556 = vst.msk [vmem:[%s544 + $0x140] sm:$0xff] %vm260, %v539
  %557 = vst.msk [vmem:[%s544 + $0x158] sm:$0xff] %vm260, %v540
  %558 = vst.msk [vmem:[%s544 + $0x170] sm:$0xff] %vm260, %v541
  %559 = vst.msk [vmem:[%s544 + $0x188] sm:$0xff] %vm260, %v542
  %560 = vst.msk [vmem:[%s544 + $0x1a0] sm:$0xff] %vm260, %v543
  %561 = vst.msk [vmem:[#allocation2] sm:$0xff] %vm260, 0.0
  %562 = vst.msk [vmem:[#allocation2 + $0x8] sm:$0xff] %vm260, 0.0
  %vm563 = vcmask 253952
  %564 = vst.msk [vmem:[#allocation2 + $0x10] sm:$0x1] %vm563, 0.0
  %565 = vst.msk [vmem:[#allocation2 + $0xf0] sm:$0xff] %vm260, 0.0
  %566 = vst.msk [vmem:[#allocation2 + $0xf8] sm:$0xff] %vm260, 0.0
  %567 = vst.msk [vmem:[#allocation2 + $0x100] sm:$0x1] %vm563, 0.0
  %s568 = scalar_lea.vmem [#allocation2], 216
  %569 = vst.msk [vmem:[%s568] sm:$0xff] %vm260, 0.0
  %570 = vst.msk [vmem:[%s568 + $0x8] sm:$0xff] %vm260, 0.0
  %571 = vst.msk [vmem:[%s568 + $0x10] sm:$0x1] %vm563, 0.0
  %572 = vst.msk [vmem:[%s568 + $0xf0] sm:$0xff] %vm260, 0.0
  %573 = vst.msk [vmem:[%s568 + $0xf8] sm:$0xff] %vm260, 0.0
  %574 = vst.msk [vmem:[%s568 + $0x100] sm:$0x1] %vm563, 0.0
  %575 = vst.msk [vmem:[%s544] sm:$0xff] %vm260, 0.0
  %576 = vst.msk [vmem:[%s544 + $0x18] sm:$0xff] %vm260, 0.0
  %577 = vst.msk [vmem:[%s544 + $0x30] sm:$0xff] %vm260, 0.0
  %578 = vst.msk [vmem:[%s544 + $0x48] sm:$0xff] %vm260, 0.0
  %579 = vst.msk [vmem:[%s544 + $0x60] sm:$0xff] %vm260, 0.0
  %580 = vst.msk [vmem:[%s544 + $0x78] sm:$0xff] %vm260, 0.0
  %581 = vst.msk [vmem:[%s544 + $0x90] sm:$0xff] %vm260, 0.0
  %582 = vst.msk [vmem:[%s544 + $0xa8] sm:$0xff] %vm260, 0.0
  %583 = vst.msk [vmem:[%s544 + $0xf0] sm:$0xff] %vm260, 0.0
  %584 = vst.msk [vmem:[%s544 + $0x108] sm:$0xff] %vm260, 0.0
  %585 = vst.msk [vmem:[%s544 + $0x120] sm:$0xff] %vm260, 0.0
  %586 = vst.msk [vmem:[%s544 + $0x138] sm:$0xff] %vm260, 0.0
  %587 = vst.msk [vmem:[%s544 + $0x150] sm:$0xff] %vm260, 0.0
  %588 = vst.msk [vmem:[%s544 + $0x168] sm:$0xff] %vm260, 0.0
  %589 = vst.msk [vmem:[%s544 + $0x180] sm:$0xff] %vm260, 0.0
  %590 = vst.msk [vmem:[%s544 + $0x198] sm:$0xff] %vm260, 0.0
  %591 = vst.msk [vmem:[%s544 + $0x10] sm:$0x1] %vm563, 0.0
  %592 = vst.msk [vmem:[%s544 + $0x28] sm:$0x1] %vm563, 0.0
  %593 = vst.msk [vmem:[%s544 + $0x40] sm:$0x1] %vm563, 0.0
  %594 = vst.msk [vmem:[%s544 + $0x58] sm:$0x1] %vm563, 0.0
  %595 = vst.msk [vmem:[%s544 + $0x70] sm:$0x1] %vm563, 0.0
  %596 = vst.msk [vmem:[%s544 + $0x88] sm:$0x1] %vm563, 0.0
  %597 = vst.msk [vmem:[%s544 + $0xa0] sm:$0x1] %vm563, 0.0
  %598 = vst.msk [vmem:[%s544 + $0xb8] sm:$0x1] %vm563, 0.0
  %599 = vst.msk [vmem:[%s544 + $0x100] sm:$0x1] %vm563, 0.0
  %600 = vst.msk [vmem:[%s544 + $0x118] sm:$0x1] %vm563, 0.0
  %601 = vst.msk [vmem:[%s544 + $0x130] sm:$0x1] %vm563, 0.0
  %602 = vst.msk [vmem:[%s544 + $0x148] sm:$0x1] %vm563, 0.0
  %603 = vst.msk [vmem:[%s544 + $0x160] sm:$0x1] %vm563, 0.0
  %604 = vst.msk [vmem:[%s544 + $0x178] sm:$0x1] %vm563, 0.0
  %605 = vst.msk [vmem:[%s544 + $0x190] sm:$0x1] %vm563, 0.0
  %606 = vst.msk [vmem:[%s544 + $0x1a8] sm:$0x1] %vm563, 0.0
  %v607 = vld [vmem:[#allocation2 + $0x7] sm:$0xff]
  %v608 = vld [vmem:[#allocation2 + $0x1f] sm:$0xff]
  %v609 = vld [vmem:[#allocation2 + $0x37] sm:$0xff]
  %v610 = vld [vmem:[#allocation2 + $0x4f] sm:$0xff]
  %v611 = vld [vmem:[#allocation2 + $0x67] sm:$0xff]
  %v612 = vld [vmem:[#allocation2 + $0x7f] sm:$0xff]
  %v613 = vld [vmem:[#allocation2 + $0x97] sm:$0xff]
  %v614 = vld [vmem:[#allocation2 + $0xaf] sm:$0xff]
  %v615 = vld [vmem:[#allocation2 + $0xf7] sm:$0xff]
  %v616 = vld [vmem:[#allocation2 + $0x10f] sm:$0xff]
  %v617 = vld [vmem:[#allocation2 + $0x127] sm:$0xff]
  %v618 = vld [vmem:[#allocation2 + $0x13f] sm:$0xff]
  %v619 = vld [vmem:[#allocation2 + $0x157] sm:$0xff]
  %v620 = vld [vmem:[#allocation2 + $0x16f] sm:$0xff]
  %v621 = vld [vmem:[#allocation2 + $0x187] sm:$0xff]
  %v622 = vld [vmem:[#allocation2 + $0x19f] sm:$0xff]
  %v623 = vld [vmem:[%s4] sm:$0x1]
  %v624 = vlaneseq
  %v625 = vshrl.u32 %v624, 7
  %v626 = vsub.s32 0, %v625
  %v627 = vrot.slane %v623, %v626
  %v628 = vmul.f32 %v607, %v627
  %v629 = vmul.f32 %v608, %v627
  %v630 = vmul.f32 %v609, %v627
  %v631 = vmul.f32 %v610, %v627
  %v632 = vmul.f32 %v611, %v627
  %v633 = vmul.f32 %v612, %v627
  %v634 = vmul.f32 %v613, %v627
  %v635 = vmul.f32 %v614, %v627
  %v636 = vmul.f32 %v615, %v627
  %v637 = vmul.f32 %v616, %v627
  %v638 = vmul.f32 %v617, %v627
  %v639 = vmul.f32 %v618, %v627
  %v640 = vmul.f32 %v619, %v627
  %v641 = vmul.f32 %v620, %v627
  %v642 = vmul.f32 %v621, %v627
  %v643 = vmul.f32 %v622, %v627
  %v644 = vld [vmem:[#allocation2 + $0x8] sm:$0xff]
  %v645 = vld [vmem:[#allocation2 + $0x20] sm:$0xff]
  %v646 = vld [vmem:[#allocation2 + $0x38] sm:$0xff]
  %v647 = vld [vmem:[#allocation2 + $0x50] sm:$0xff]
  %v648 = vld [vmem:[#allocation2 + $0x68] sm:$0xff]
  %v649 = vld [vmem:[#allocation2 + $0x80] sm:$0xff]
  %v650 = vld [vmem:[#allocation2 + $0x98] sm:$0xff]
  %v651 = vld [vmem:[#allocation2 + $0xb0] sm:$0xff]
  %v652 = vld [vmem:[#allocation2 + $0xf8] sm:$0xff]
  %v653 = vld [vmem:[#allocation2 + $0x110] sm:$0xff]
  %v654 = vld [vmem:[#allocation2 + $0x128] sm:$0xff]
  %v655 = vld [vmem:[#allocation2 + $0x140] sm:$0xff]
  %v656 = vld [vmem:[#allocation2 + $0x158] sm:$0xff]
  %v657 = vld [vmem:[#allocation2 + $0x170] sm:$0xff]
  %v658 = vld [vmem:[#allocation2 + $0x188] sm:$0xff]
  %v659 = vld [vmem:[#allocation2 + $0x1a0] sm:$0xff]
  %v660 = vld [vmem:[%s4 + $0x1] sm:$0x1]
  %v661 = vlaneseq
  %v662 = vshrl.u32 %v661, 7
  %v663 = vsub.s32 0, %v662
  %v664 = vrot.slane %v660, %v663
  %v665 = vmul.f32 %v644, %v664
  %v666 = vmul.f32 %v645, %v664
  %v667 = vmul.f32 %v646, %v664
  %v668 = vmul.f32 %v647, %v664
  %v669 = vmul.f32 %v648, %v664
  %v670 = vmul.f32 %v649, %v664
  %v671 = vmul.f32 %v650, %v664
  %v672 = vmul.f32 %v651, %v664
  %v673 = vmul.f32 %v652, %v664
  %v674 = vmul.f32 %v653, %v664
  %v675 = vmul.f32 %v654, %v664
  %v676 = vmul.f32 %v655, %v664
  %v677 = vmul.f32 %v656, %v664
  %v678 = vmul.f32 %v657, %v664
  %v679 = vmul.f32 %v658, %v664
  %v680 = vmul.f32 %v659, %v664
  %v681 = vadd.f32 %v628, %v665
  %v682 = vadd.f32 %v629, %v666
  %v683 = vadd.f32 %v630, %v667
  %v684 = vadd.f32 %v631, %v668
  %v685 = vadd.f32 %v632, %v669
  %v686 = vadd.f32 %v633, %v670
  %v687 = vadd.f32 %v634, %v671
  %v688 = vadd.f32 %v635, %v672
  %v689 = vadd.f32 %v636, %v673
  %v690 = vadd.f32 %v637, %v674
  %v691 = vadd.f32 %v638, %v675
  %v692 = vadd.f32 %v639, %v676
  %v693 = vadd.f32 %v640, %v677
  %v694 = vadd.f32 %v641, %v678
  %v695 = vadd.f32 %v642, %v679
  %v696 = vadd.f32 %v643, %v680
  %v697 = vld [vmem:[#allocation2 + $0x9] sm:$0xff]
  %v698 = vld [vmem:[#allocation2 + $0x21] sm:$0xff]
  %v699 = vld [vmem:[#allocation2 + $0x39] sm:$0xff]
  %v700 = vld [vmem:[#allocation2 + $0x51] sm:$0xff]
  %v701 = vld [vmem:[#allocation2 + $0x69] sm:$0xff]
  %v702 = vld [vmem:[#allocation2 + $0x81] sm:$0xff]
  %v703 = vld [vmem:[#allocation2 + $0x99] sm:$0xff]
  %v704 = vld [vmem:[#allocation2 + $0xb1] sm:$0xff]
  %v705 = vld [vmem:[#allocation2 + $0xf9] sm:$0xff]
  %v706 = vld [vmem:[#allocation2 + $0x111] sm:$0xff]
  %v707 = vld [vmem:[#allocation2 + $0x129] sm:$0xff]
  %v708 = vld [vmem:[#allocation2 + $0x141] sm:$0xff]
  %v709 = vld [vmem:[#allocation2 + $0x159] sm:$0xff]
  %v710 = vld [vmem:[#allocation2 + $0x171] sm:$0xff]
  %v711 = vld [vmem:[#allocation2 + $0x189] sm:$0xff]
  %v712 = vld [vmem:[#allocation2 + $0x1a1] sm:$0xff]
  %v713 = vld [vmem:[%s4 + $0x2] sm:$0x1]
  %v714 = vlaneseq
  %v715 = vshrl.u32 %v714, 7
  %v716 = vsub.s32 0, %v715
  %v717 = vrot.slane %v713, %v716
  %v718 = vmul.f32 %v697, %v717
  %v719 = vmul.f32 %v698, %v717
  %v720 = vmul.f32 %v699, %v717
  %v721 = vmul.f32 %v700, %v717
  %v722 = vmul.f32 %v701, %v717
  %v723 = vmul.f32 %v702, %v717
  %v724 = vmul.f32 %v703, %v717
  %v725 = vmul.f32 %v704, %v717
  %v726 = vmul.f32 %v705, %v717
  %v727 = vmul.f32 %v706, %v717
  %v728 = vmul.f32 %v707, %v717
  %v729 = vmul.f32 %v708, %v717
  %v730 = vmul.f32 %v709, %v717
  %v731 = vmul.f32 %v710, %v717
  %v732 = vmul.f32 %v711, %v717
  %v733 = vmul.f32 %v712, %v717
  %v734 = vadd.f32 %v681, %v718
  %v735 = vadd.f32 %v682, %v719
  %v736 = vadd.f32 %v683, %v720
  %v737 = vadd.f32 %v684, %v721
  %v738 = vadd.f32 %v685, %v722
  %v739 = vadd.f32 %v686, %v723
  %v740 = vadd.f32 %v687, %v724
  %v741 = vadd.f32 %v688, %v725
  %v742 = vadd.f32 %v689, %v726
  %v743 = vadd.f32 %v690, %v727
  %v744 = vadd.f32 %v691, %v728
  %v745 = vadd.f32 %v692, %v729
  %v746 = vadd.f32 %v693, %v730
  %v747 = vadd.f32 %v694, %v731
  %v748 = vadd.f32 %v695, %v732
  %v749 = vadd.f32 %v696, %v733
  %v750 = vld [vmem:[%s544 + $0x7] sm:$0xff]
  %v751 = vld [vmem:[%s544 + $0x1f] sm:$0xff]
  %v752 = vld [vmem:[%s544 + $0x37] sm:$0xff]
  %v753 = vld [vmem:[%s544 + $0x4f] sm:$0xff]
  %v754 = vld [vmem:[%s544 + $0x67] sm:$0xff]
  %v755 = vld [vmem:[%s544 + $0x7f] sm:$0xff]
  %v756 = vld [vmem:[%s544 + $0x97] sm:$0xff]
  %v757 = vld [vmem:[%s544 + $0xaf] sm:$0xff]
  %v758 = vld [vmem:[%s544 + $0xf7] sm:$0xff]
  %v759 = vld [vmem:[%s544 + $0x10f] sm:$0xff]
  %v760 = vld [vmem:[%s544 + $0x127] sm:$0xff]
  %v761 = vld [vmem:[%s544 + $0x13f] sm:$0xff]
  %v762 = vld [vmem:[%s544 + $0x157] sm:$0xff]
  %v763 = vld [vmem:[%s544 + $0x16f] sm:$0xff]
  %v764 = vld [vmem:[%s544 + $0x187] sm:$0xff]
  %v765 = vld [vmem:[%s544 + $0x19f] sm:$0xff]
  %v766 = vld [vmem:[%s4 + $0x3] sm:$0x1]
  %v767 = vlaneseq
  %v768 = vshrl.u32 %v767, 7
  %v769 = vsub.s32 0, %v768
  %v770 = vrot.slane %v766, %v769
  %v771 = vmul.f32 %v750, %v770
  %v772 = vmul.f32 %v751, %v770
  %v773 = vmul.f32 %v752, %v770
  %v774 = vmul.f32 %v753, %v770
  %v775 = vmul.f32 %v754, %v770
  %v776 = vmul.f32 %v755, %v770
  %v777 = vmul.f32 %v756, %v770
  %v778 = vmul.f32 %v757, %v770
  %v779 = vmul.f32 %v758, %v770
  %v780 = vmul.f32 %v759, %v770
  %v781 = vmul.f32 %v760, %v770
  %v782 = vmul.f32 %v761, %v770
  %v783 = vmul.f32 %v762, %v770
  %v784 = vmul.f32 %v763, %v770
  %v785 = vmul.f32 %v764, %v770
  %v786 = vmul.f32 %v765, %v770
  %v787 = vadd.f32 %v734, %v771
  %v788 = vadd.f32 %v735, %v772
  %v789 = vadd.f32 %v736, %v773
  %v790 = vadd.f32 %v737, %v774
  %v791 = vadd.f32 %v738, %v775
  %v792 = vadd.f32 %v739, %v776
  %v793 = vadd.f32 %v740, %v777
  %v794 = vadd.f32 %v741, %v778
  %v795 = vadd.f32 %v742, %v779
  %v796 = vadd.f32 %v743, %v780
  %v797 = vadd.f32 %v744, %v781
  %v798 = vadd.f32 %v745, %v782
  %v799 = vadd.f32 %v746, %v783
  %v800 = vadd.f32 %v747, %v784
  %v801 = vadd.f32 %v748, %v785
  %v802 = vadd.f32 %v749, %v786
  %v803 = vld [vmem:[%s544 + $0x8] sm:$0xff]
  %v804 = vld [vmem:[%s544 + $0x20] sm:$0xff]
  %v805 = vld [vmem:[%s544 + $0x38] sm:$0xff]
  %v806 = vld [vmem:[%s544 + $0x50] sm:$0xff]
  %v807 = vld [vmem:[%s544 + $0x68] sm:$0xff]
  %v808 = vld [vmem:[%s544 + $0x80] sm:$0xff]
  %v809 = vld [vmem:[%s544 + $0x98] sm:$0xff]
  %v810 = vld [vmem:[%s544 + $0xb0] sm:$0xff]
  %v811 = vld [vmem:[%s544 + $0xf8] sm:$0xff]
  %v812 = vld [vmem:[%s544 + $0x110] sm:$0xff]
  %v813 = vld [vmem:[%s544 + $0x128] sm:$0xff]
  %v814 = vld [vmem:[%s544 + $0x140] sm:$0xff]
  %v815 = vld [vmem:[%s544 + $0x158] sm:$0xff]
  %v816 = vld [vmem:[%s544 + $0x170] sm:$0xff]
  %v817 = vld [vmem:[%s544 + $0x188] sm:$0xff]
  %v818 = vld [vmem:[%s544 + $0x1a0] sm:$0xff]
  %v819 = vld [vmem:[%s4 + $0x4] sm:$0x1]
  %v820 = vlaneseq
  %v821 = vshrl.u32 %v820, 7
  %v822 = vsub.s32 0, %v821
  %v823 = vrot.slane %v819, %v822
  %v824 = vmul.f32 %v803, %v823
  %v825 = vmul.f32 %v804, %v823
  %v826 = vmul.f32 %v805, %v823
  %v827 = vmul.f32 %v806, %v823
  %v828 = vmul.f32 %v807, %v823
  %v829 = vmul.f32 %v808, %v823
  %v830 = vmul.f32 %v809, %v823
  %v831 = vmul.f32 %v810, %v823
  %v832 = vmul.f32 %v811, %v823
  %v833 = vmul.f32 %v812, %v823
  %v834 = vmul.f32 %v813, %v823
  %v835 = vmul.f32 %v814, %v823
  %v836 = vmul.f32 %v815, %v823
  %v837 = vmul.f32 %v816, %v823
  %v838 = vmul.f32 %v817, %v823
  %v839 = vmul.f32 %v818, %v823
  %v840 = vadd.f32 %v787, %v824
  %v841 = vadd.f32 %v788, %v825
  %v842 = vadd.f32 %v789, %v826
  %v843 = vadd.f32 %v790, %v827
  %v844 = vadd.f32 %v791, %v828
  %v845 = vadd.f32 %v792, %v829
  %v846 = vadd.f32 %v793, %v830
  %v847 = vadd.f32 %v794, %v831
  %v848 = vadd.f32 %v795, %v832
  %v849 = vadd.f32 %v796, %v833
  %v850 = vadd.f32 %v797, %v834
  %v851 = vadd.f32 %v798, %v835
  %v852 = vadd.f32 %v799, %v836
  %v853 = vadd.f32 %v800, %v837
  %v854 = vadd.f32 %v801, %v838
  %v855 = vadd.f32 %v802, %v839
  %v856 = vld [vmem:[%s544 + $0x9] sm:$0xff]
  %v857 = vld [vmem:[%s544 + $0x21] sm:$0xff]
  %v858 = vld [vmem:[%s544 + $0x39] sm:$0xff]
  %v859 = vld [vmem:[%s544 + $0x51] sm:$0xff]
  %v860 = vld [vmem:[%s544 + $0x69] sm:$0xff]
  %v861 = vld [vmem:[%s544 + $0x81] sm:$0xff]
  %v862 = vld [vmem:[%s544 + $0x99] sm:$0xff]
  %v863 = vld [vmem:[%s544 + $0xb1] sm:$0xff]
  %v864 = vld [vmem:[%s544 + $0xf9] sm:$0xff]
  %v865 = vld [vmem:[%s544 + $0x111] sm:$0xff]
  %v866 = vld [vmem:[%s544 + $0x129] sm:$0xff]
  %v867 = vld [vmem:[%s544 + $0x141] sm:$0xff]
  %v868 = vld [vmem:[%s544 + $0x159] sm:$0xff]
  %v869 = vld [vmem:[%s544 + $0x171] sm:$0xff]
  %v870 = vld [vmem:[%s544 + $0x189] sm:$0xff]
  %v871 = vld [vmem:[%s544 + $0x1a1] sm:$0xff]
  %v872 = vld [vmem:[%s4 + $0x5] sm:$0x1]
  %v873 = vlaneseq
  %v874 = vshrl.u32 %v873, 7
  %v875 = vsub.s32 0, %v874
  %v876 = vrot.slane %v872, %v875
  %v877 = vmul.f32 %v856, %v876
  %v878 = vmul.f32 %v857, %v876
  %v879 = vmul.f32 %v858, %v876
  %v880 = vmul.f32 %v859, %v876
  %v881 = vmul.f32 %v860, %v876
  %v882 = vmul.f32 %v861, %v876
  %v883 = vmul.f32 %v862, %v876
  %v884 = vmul.f32 %v863, %v876
  %v885 = vmul.f32 %v864, %v876
  %v886 = vmul.f32 %v865, %v876
  %v887 = vmul.f32 %v866, %v876
  %v888 = vmul.f32 %v867, %v876
  %v889 = vmul.f32 %v868, %v876
  %v890 = vmul.f32 %v869, %v876
  %v891 = vmul.f32 %v870, %v876
  %v892 = vmul.f32 %v871, %v876
  %v893 = vadd.f32 %v840, %v877
  %v894 = vadd.f32 %v841, %v878
  %v895 = vadd.f32 %v842, %v879
  %v896 = vadd.f32 %v843, %v880
  %v897 = vadd.f32 %v844, %v881
  %v898 = vadd.f32 %v845, %v882
  %v899 = vadd.f32 %v846, %v883
  %v900 = vadd.f32 %v847, %v884
  %v901 = vadd.f32 %v848, %v885
  %v902 = vadd.f32 %v849, %v886
  %v903 = vadd.f32 %v850, %v887
  %v904 = vadd.f32 %v851, %v888
  %v905 = vadd.f32 %v852, %v889
  %v906 = vadd.f32 %v853, %v890
  %v907 = vadd.f32 %v854, %v891
  %v908 = vadd.f32 %v855, %v892
  %s909 = scalar_lea.vmem [#allocation2], 48
  %v910 = vld [vmem:[%s909 + $0x7] sm:$0xff]
  %v911 = vld [vmem:[%s909 + $0x1f] sm:$0xff]
  %v912 = vld [vmem:[%s909 + $0x37] sm:$0xff]
  %v913 = vld [vmem:[%s909 + $0x4f] sm:$0xff]
  %v914 = vld [vmem:[%s909 + $0x67] sm:$0xff]
  %v915 = vld [vmem:[%s909 + $0x7f] sm:$0xff]
  %v916 = vld [vmem:[%s909 + $0x97] sm:$0xff]
  %v917 = vld [vmem:[%s909 + $0xaf] sm:$0xff]
  %v918 = vld [vmem:[%s909 + $0xf7] sm:$0xff]
  %v919 = vld [vmem:[%s909 + $0x10f] sm:$0xff]
  %v920 = vld [vmem:[%s909 + $0x127] sm:$0xff]
  %v921 = vld [vmem:[%s909 + $0x13f] sm:$0xff]
  %v922 = vld [vmem:[%s909 + $0x157] sm:$0xff]
  %v923 = vld [vmem:[%s909 + $0x16f] sm:$0xff]
  %v924 = vld [vmem:[%s909 + $0x187] sm:$0xff]
  %v925 = vld [vmem:[%s909 + $0x19f] sm:$0xff]
  %v926 = vld [vmem:[%s4 + $0x6] sm:$0x1]
  %v927 = vlaneseq
  %v928 = vshrl.u32 %v927, 7
  %v929 = vsub.s32 0, %v928
  %v930 = vrot.slane %v926, %v929
  %v931 = vmul.f32 %v910, %v930
  %v932 = vmul.f32 %v911, %v930
  %v933 = vmul.f32 %v912, %v930
  %v934 = vmul.f32 %v913, %v930
  %v935 = vmul.f32 %v914, %v930
  %v936 = vmul.f32 %v915, %v930
  %v937 = vmul.f32 %v916, %v930
  %v938 = vmul.f32 %v917, %v930
  %v939 = vmul.f32 %v918, %v930
  %v940 = vmul.f32 %v919, %v930
  %v941 = vmul.f32 %v920, %v930
  %v942 = vmul.f32 %v921, %v930
  %v943 = vmul.f32 %v922, %v930
  %v944 = vmul.f32 %v923, %v930
  %v945 = vmul.f32 %v924, %v930
  %v946 = vmul.f32 %v925, %v930
  %v947 = vadd.f32 %v893, %v931
  %v948 = vadd.f32 %v894, %v932
  %v949 = vadd.f32 %v895, %v933
  %v950 = vadd.f32 %v896, %v934
  %v951 = vadd.f32 %v897, %v935
  %v952 = vadd.f32 %v898, %v936
  %v953 = vadd.f32 %v899, %v937
  %v954 = vadd.f32 %v900, %v938
  %v955 = vadd.f32 %v901, %v939
  %v956 = vadd.f32 %v902, %v940
  %v957 = vadd.f32 %v903, %v941
  %v958 = vadd.f32 %v904, %v942
  %v959 = vadd.f32 %v905, %v943
  %v960 = vadd.f32 %v906, %v944
  %v961 = vadd.f32 %v907, %v945
  %v962 = vadd.f32 %v908, %v946
  %v963 = vld [vmem:[%s909 + $0x8] sm:$0xff]
  %v964 = vld [vmem:[%s909 + $0x20] sm:$0xff]
  %v965 = vld [vmem:[%s909 + $0x38] sm:$0xff]
  %v966 = vld [vmem:[%s909 + $0x50] sm:$0xff]
  %v967 = vld [vmem:[%s909 + $0x68] sm:$0xff]
  %v968 = vld [vmem:[%s909 + $0x80] sm:$0xff]
  %v969 = vld [vmem:[%s909 + $0x98] sm:$0xff]
  %v970 = vld [vmem:[%s909 + $0xb0] sm:$0xff]
  %v971 = vld [vmem:[%s909 + $0xf8] sm:$0xff]
  %v972 = vld [vmem:[%s909 + $0x110] sm:$0xff]
  %v973 = vld [vmem:[%s909 + $0x128] sm:$0xff]
  %v974 = vld [vmem:[%s909 + $0x140] sm:$0xff]
  %v975 = vld [vmem:[%s909 + $0x158] sm:$0xff]
  %v976 = vld [vmem:[%s909 + $0x170] sm:$0xff]
  %v977 = vld [vmem:[%s909 + $0x188] sm:$0xff]
  %v978 = vld [vmem:[%s909 + $0x1a0] sm:$0xff]
  %v979 = vld [vmem:[%s4 + $0x7] sm:$0x1]
  %v980 = vlaneseq
  %v981 = vshrl.u32 %v980, 7
  %v982 = vsub.s32 0, %v981
  %v983 = vrot.slane %v979, %v982
  %v984 = vmul.f32 %v963, %v983
  %v985 = vmul.f32 %v964, %v983
  %v986 = vmul.f32 %v965, %v983
  %v987 = vmul.f32 %v966, %v983
  %v988 = vmul.f32 %v967, %v983
  %v989 = vmul.f32 %v968, %v983
  %v990 = vmul.f32 %v969, %v983
  %v991 = vmul.f32 %v970, %v983
  %v992 = vmul.f32 %v971, %v983
  %v993 = vmul.f32 %v972, %v983
  %v994 = vmul.f32 %v973, %v983
  %v995 = vmul.f32 %v974, %v983
  %v996 = vmul.f32 %v975, %v983
  %v997 = vmul.f32 %v976, %v983
  %v998 = vmul.f32 %v977, %v983
  %v999 = vmul.f32 %v978, %v983
  %v1000 = vadd.f32 %v947, %v984
  %v1001 = vadd.f32 %v948, %v985
  %v1002 = vadd.f32 %v949, %v986
  %v1003 = vadd.f32 %v950, %v987
  %v1004 = vadd.f32 %v951, %v988
  %v1005 = vadd.f32 %v952, %v989
  %v1006 = vadd.f32 %v953, %v990
  %v1007 = vadd.f32 %v954, %v991
  %v1008 = vadd.f32 %v955, %v992
  %v1009 = vadd.f32 %v956, %v993
  %v1010 = vadd.f32 %v957, %v994
  %v1011 = vadd.f32 %v958, %v995
  %v1012 = vadd.f32 %v959, %v996
  %v1013 = vadd.f32 %v960, %v997
  %v1014 = vadd.f32 %v961, %v998
  %v1015 = vadd.f32 %v962, %v999
  %v1016 = vld [vmem:[%s909 + $0x9] sm:$0xff]
  %v1017 = vld [vmem:[%s909 + $0x21] sm:$0xff]
  %v1018 = vld [vmem:[%s909 + $0x39] sm:$0xff]
  %v1019 = vld [vmem:[%s909 + $0x51] sm:$0xff]
  %v1020 = vld [vmem:[%s909 + $0x69] sm:$0xff]
  %v1021 = vld [vmem:[%s909 + $0x81] sm:$0xff]
  %v1022 = vld [vmem:[%s909 + $0x99] sm:$0xff]
  %v1023 = vld [vmem:[%s909 + $0xb1] sm:$0xff]
  %v1024 = vld [vmem:[%s909 + $0xf9] sm:$0xff]
  %v1025 = vld [vmem:[%s909 + $0x111] sm:$0xff]
  %v1026 = vld [vmem:[%s909 + $0x129] sm:$0xff]
  %v1027 = vld [vmem:[%s909 + $0x141] sm:$0xff]
  %v1028 = vld [vmem:[%s909 + $0x159] sm:$0xff]
  %v1029 = vld [vmem:[%s909 + $0x171] sm:$0xff]
  %v1030 = vld [vmem:[%s909 + $0x189] sm:$0xff]
  %v1031 = vld [vmem:[%s909 + $0x1a1] sm:$0xff]
  %v1032 = vld [vmem:[%s4 + $0x8] sm:$0x1]
  %v1033 = vlaneseq
  %v1034 = vshrl.u32 %v1033, 7
  %v1035 = vsub.s32 0, %v1034
  %v1036 = vrot.slane %v1032, %v1035
  %v1037 = vmul.f32 %v1016, %v1036
  %v1038 = vmul.f32 %v1017, %v1036
  %v1039 = vmul.f32 %v1018, %v1036
  %v1040 = vmul.f32 %v1019, %v1036
  %v1041 = vmul.f32 %v1020, %v1036
  %v1042 = vmul.f32 %v1021, %v1036
  %v1043 = vmul.f32 %v1022, %v1036
  %v1044 = vmul.f32 %v1023, %v1036
  %v1045 = vmul.f32 %v1024, %v1036
  %v1046 = vmul.f32 %v1025, %v1036
  %v1047 = vmul.f32 %v1026, %v1036
  %v1048 = vmul.f32 %v1027, %v1036
  %v1049 = vmul.f32 %v1028, %v1036
  %v1050 = vmul.f32 %v1029, %v1036
  %v1051 = vmul.f32 %v1030, %v1036
  %v1052 = vmul.f32 %v1031, %v1036
  %v1053 = vadd.f32 %v1000, %v1037
  %v1054 = vadd.f32 %v1001, %v1038
  %v1055 = vadd.f32 %v1002, %v1039
  %v1056 = vadd.f32 %v1003, %v1040
  %v1057 = vadd.f32 %v1004, %v1041
  %v1058 = vadd.f32 %v1005, %v1042
  %v1059 = vadd.f32 %v1006, %v1043
  %v1060 = vadd.f32 %v1007, %v1044
  %v1061 = vadd.f32 %v1008, %v1045
  %v1062 = vadd.f32 %v1009, %v1046
  %v1063 = vadd.f32 %v1010, %v1047
  %v1064 = vadd.f32 %v1011, %v1048
  %v1065 = vadd.f32 %v1012, %v1049
  %v1066 = vadd.f32 %v1013, %v1050
  %v1067 = vadd.f32 %v1014, %v1051
  %v1068 = vadd.f32 %v1015, %v1052
  %v1069 = vld [vmem:[%s5] sm:$0x1]
  %v1070 = vld [vmem:[%s6] sm:$0x1]
  %v1071 = vsel %vm260, %v1053, 0.0
  %v1072 = vsel %vm260, %v1054, 0.0
  %v1073 = vadd.f32 %v1071, %v1072
  %v1074 = vsel %vm260, %v1055, 0.0
  %v1075 = vadd.f32 %v1073, %v1074
  %v1076 = vsel %vm260, %v1056, 0.0
  %v1077 = vadd.f32 %v1075, %v1076
  %v1078 = vsel %vm260, %v1057, 0.0
  %v1079 = vadd.f32 %v1077, %v1078
  %v1080 = vsel %vm260, %v1058, 0.0
  %v1081 = vadd.f32 %v1079, %v1080
  %v1082 = vsel %vm260, %v1059, 0.0
  %v1083 = vadd.f32 %v1081, %v1082
  %v1084 = vsel %vm260, %v1060, 0.0
  %v1085 = vadd.f32 %v1083, %v1084
  %v1086 = vsel %vm260, %v1061, 0.0
  %v1087 = vadd.f32 %v1085, %v1086
  %v1088 = vsel %vm260, %v1062, 0.0
  %v1089 = vadd.f32 %v1087, %v1088
  %v1090 = vsel %vm260, %v1063, 0.0
  %v1091 = vadd.f32 %v1089, %v1090
  %v1092 = vsel %vm260, %v1064, 0.0
  %v1093 = vadd.f32 %v1091, %v1092
  %v1094 = vsel %vm260, %v1065, 0.0
  %v1095 = vadd.f32 %v1093, %v1094
  %v1096 = vsel %vm260, %v1066, 0.0
  %v1097 = vadd.f32 %v1095, %v1096
  %v1098 = vsel %vm260, %v1067, 0.0
  %v1099 = vadd.f32 %v1097, %v1098
  %v1100 = vsel %vm260, %v1068, 0.0
  %v1101 = vadd.f32 %v1099, %v1100
  %v1102 = vrot.slane %v1101, 4
  %v1103 = vadd.f32 %v1101, %v1102
  %v1104 = vrot.slane %v1103, 2
  %v1105 = vadd.f32 %v1103, %v1104
  %v1106 = vrot.slane %v1105, 1
  %v1107 = vadd.f32 %v1105, %v1106
  %v1108 = vmul.f32 %v1107, %v298
  %v1109 = vsub.f32 %v1053, %v1108
  %v1110 = vsub.f32 %v1054, %v1108
  %v1111 = vsub.f32 %v1055, %v1108
  %v1112 = vsub.f32 %v1056, %v1108
  %v1113 = vsub.f32 %v1057, %v1108
  %v1114 = vsub.f32 %v1058, %v1108
  %v1115 = vsub.f32 %v1059, %v1108
  %v1116 = vsub.f32 %v1060, %v1108
  %v1117 = vsub.f32 %v1061, %v1108
  %v1118 = vsub.f32 %v1062, %v1108
  %v1119 = vsub.f32 %v1063, %v1108
  %v1120 = vsub.f32 %v1064, %v1108
  %v1121 = vsub.f32 %v1065, %v1108
  %v1122 = vsub.f32 %v1066, %v1108
  %v1123 = vsub.f32 %v1067, %v1108
  %v1124 = vsub.f32 %v1068, %v1108
  %v1125 = vmul.f32 %v1109, %v1109
  %v1126 = vmul.f32 %v1110, %v1110
  %v1127 = vmul.f32 %v1111, %v1111
  %v1128 = vmul.f32 %v1112, %v1112
  %v1129 = vmul.f32 %v1113, %v1113
  %v1130 = vmul.f32 %v1114, %v1114
  %v1131 = vmul.f32 %v1115, %v1115
  %v1132 = vmul.f32 %v1116, %v1116
  %v1133 = vmul.f32 %v1117, %v1117
  %v1134 = vmul.f32 %v1118, %v1118
  %v1135 = vmul.f32 %v1119, %v1119
  %v1136 = vmul.f32 %v1120, %v1120
  %v1137 = vmul.f32 %v1121, %v1121
  %v1138 = vmul.f32 %v1122, %v1122
  %v1139 = vmul.f32 %v1123, %v1123
  %v1140 = vmul.f32 %v1124, %v1124
  %v1141 = vsel %vm260, %v1125, 0.0
  %v1142 = vsel %vm260, %v1126, 0.0
  %v1143 = vadd.f32 %v1141, %v1142
  %v1144 = vsel %vm260, %v1127, 0.0
  %v1145 = vadd.f32 %v1143, %v1144
  %v1146 = vsel %vm260, %v1128, 0.0
  %v1147 = vadd.f32 %v1145, %v1146
  %v1148 = vsel %vm260, %v1129, 0.0
  %v1149 = vadd.f32 %v1147, %v1148
  %v1150 = vsel %vm260, %v1130, 0.0
  %v1151 = vadd.f32 %v1149, %v1150
  %v1152 = vsel %vm260, %v1131, 0.0
  %v1153 = vadd.f32 %v1151, %v1152
  %v1154 = vsel %vm260, %v1132, 0.0
  %v1155 = vadd.f32 %v1153, %v1154
  %v1156 = vsel %vm260, %v1133, 0.0
  %v1157 = vadd.f32 %v1155, %v1156
  %v1158 = vsel %vm260, %v1134, 0.0
  %v1159 = vadd.f32 %v1157, %v1158
  %v1160 = vsel %vm260, %v1135, 0.0
  %v1161 = vadd.f32 %v1159, %v1160
  %v1162 = vsel %vm260, %v1136, 0.0
  %v1163 = vadd.f32 %v1161, %v1162
  %v1164 = vsel %vm260, %v1137, 0.0
  %v1165 = vadd.f32 %v1163, %v1164
  %v1166 = vsel %vm260, %v1138, 0.0
  %v1167 = vadd.f32 %v1165, %v1166
  %v1168 = vsel %vm260, %v1139, 0.0
  %v1169 = vadd.f32 %v1167, %v1168
  %v1170 = vsel %vm260, %v1140, 0.0
  %v1171 = vadd.f32 %v1169, %v1170
  %v1172 = vrot.slane %v1171, 4
  %v1173 = vadd.f32 %v1171, %v1172
  %v1174 = vrot.slane %v1173, 2
  %v1175 = vadd.f32 %v1173, %v1174
  %v1176 = vrot.slane %v1175, 1
  %v1177 = vadd.f32 %v1175, %v1176
  %v1178 = vmul.f32 %v1177, %v298
  %v1179 = vadd.f32 %v1178, 1e-05
  %v1180 = vrsqrt.pop %v1179
  %v1181 = vmul.f32 %v1109, %v1180
  %v1182 = vmul.f32 %v1110, %v1180
  %v1183 = vmul.f32 %v1111, %v1180
  %v1184 = vmul.f32 %v1112, %v1180
  %v1185 = vmul.f32 %v1113, %v1180
  %v1186 = vmul.f32 %v1114, %v1180
  %v1187 = vmul.f32 %v1115, %v1180
  %v1188 = vmul.f32 %v1116, %v1180
  %v1189 = vmul.f32 %v1117, %v1180
  %v1190 = vmul.f32 %v1118, %v1180
  %v1191 = vmul.f32 %v1119, %v1180
  %v1192 = vmul.f32 %v1120, %v1180
  %v1193 = vmul.f32 %v1121, %v1180
  %v1194 = vmul.f32 %v1122, %v1180
  %v1195 = vmul.f32 %v1123, %v1180
  %v1196 = vmul.f32 %v1124, %v1180
  %v1198 = vlaneseq
  %v1199 = vshrl.u32 %v1198, 7
  %v1200 = vsub.s32 0, %v1199
  %v1201 = vrot.slane %v1069, %v1200
  %v1203 = vmul.f32 %v1181, %v1201
  %v1204 = vmul.f32 %v1182, %v1201
  %v1205 = vmul.f32 %v1183, %v1201
  %v1206 = vmul.f32 %v1184, %v1201
  %v1207 = vmul.f32 %v1185, %v1201
  %v1208 = vmul.f32 %v1186, %v1201
  %v1209 = vmul.f32 %v1187, %v1201
  %v1210 = vmul.f32 %v1188, %v1201
  %v1211 = vmul.f32 %v1189, %v1201
  %v1212 = vmul.f32 %v1190, %v1201
  %v1213 = vmul.f32 %v1191, %v1201
  %v1214 = vmul.f32 %v1192, %v1201
  %v1215 = vmul.f32 %v1193, %v1201
  %v1216 = vmul.f32 %v1194, %v1201
  %v1217 = vmul.f32 %v1195, %v1201
  %v1218 = vmul.f32 %v1196, %v1201
  %v1220 = vlaneseq
  %v1221 = vshrl.u32 %v1220, 7
  %v1222 = vsub.s32 0, %v1221
  %v1223 = vrot.slane %v1070, %v1222
  %v1225 = vadd.f32 %v1203, %v1223
  %v1226 = vadd.f32 %v1204, %v1223
  %v1227 = vadd.f32 %v1205, %v1223
  %v1228 = vadd.f32 %v1206, %v1223
  %v1229 = vadd.f32 %v1207, %v1223
  %v1230 = vadd.f32 %v1208, %v1223
  %v1231 = vadd.f32 %v1209, %v1223
  %v1232 = vadd.f32 %v1210, %v1223
  %v1233 = vadd.f32 %v1211, %v1223
  %v1234 = vadd.f32 %v1212, %v1223
  %v1235 = vadd.f32 %v1213, %v1223
  %v1236 = vadd.f32 %v1214, %v1223
  %v1237 = vadd.f32 %v1215, %v1223
  %v1238 = vadd.f32 %v1216, %v1223
  %v1239 = vadd.f32 %v1217, %v1223
  %v1240 = vadd.f32 %v1218, %v1223
  %v1241 = vxor.u32 %v1225, 2147483648
  %v1242 = vxor.u32 %v1226, 2147483648
  %v1243 = vxor.u32 %v1227, 2147483648
  %v1244 = vxor.u32 %v1228, 2147483648
  %v1245 = vxor.u32 %v1229, 2147483648
  %v1246 = vxor.u32 %v1230, 2147483648
  %v1247 = vxor.u32 %v1231, 2147483648
  %v1248 = vxor.u32 %v1232, 2147483648
  %v1249 = vxor.u32 %v1233, 2147483648
  %v1250 = vxor.u32 %v1234, 2147483648
  %v1251 = vxor.u32 %v1235, 2147483648
  %v1252 = vxor.u32 %v1236, 2147483648
  %v1253 = vxor.u32 %v1237, 2147483648
  %v1254 = vxor.u32 %v1238, 2147483648
  %v1255 = vxor.u32 %v1239, 2147483648
  %v1256 = vxor.u32 %v1240, 2147483648
  %v1257 = vmul.f32 %v1241, 1.442695
  %v1258 = vpow.pop %v1257
  %v1259 = vmul.f32 %v1242, 1.442695
  %v1260 = vpow.pop %v1259
  %v1261 = vmul.f32 %v1243, 1.442695
  %v1262 = vpow.pop %v1261
  %v1263 = vmul.f32 %v1244, 1.442695
  %v1264 = vpow.pop %v1263
  %v1265 = vmul.f32 %v1245, 1.442695
  %v1266 = vpow.pop %v1265
  %v1267 = vmul.f32 %v1246, 1.442695
  %v1268 = vpow.pop %v1267
  %v1269 = vmul.f32 %v1247, 1.442695
  %v1270 = vpow.pop %v1269
  %v1271 = vmul.f32 %v1248, 1.442695
  %v1272 = vpow.pop %v1271
  %v1273 = vmul.f32 %v1249, 1.442695
  %v1274 = vpow.pop %v1273
  %v1275 = vmul.f32 %v1250, 1.442695
  %v1276 = vpow.pop %v1275
  %v1277 = vmul.f32 %v1251, 1.442695
  %v1278 = vpow.pop %v1277
  %v1279 = vmul.f32 %v1252, 1.442695
  %v1280 = vpow.pop %v1279
  %v1281 = vmul.f32 %v1253, 1.442695
  %v1282 = vpow.pop %v1281
  %v1283 = vmul.f32 %v1254, 1.442695
  %v1284 = vpow.pop %v1283
  %v1285 = vmul.f32 %v1255, 1.442695
  %v1286 = vpow.pop %v1285
  %v1287 = vmul.f32 %v1256, 1.442695
  %v1288 = vpow.pop %v1287
  %v1289 = vadd.f32 %v1258, 1.0
  %v1290 = vadd.f32 %v1260, 1.0
  %v1291 = vadd.f32 %v1262, 1.0
  %v1292 = vadd.f32 %v1264, 1.0
  %v1293 = vadd.f32 %v1266, 1.0
  %v1294 = vadd.f32 %v1268, 1.0
  %v1295 = vadd.f32 %v1270, 1.0
  %v1296 = vadd.f32 %v1272, 1.0
  %v1297 = vadd.f32 %v1274, 1.0
  %v1298 = vadd.f32 %v1276, 1.0
  %v1299 = vadd.f32 %v1278, 1.0
  %v1300 = vadd.f32 %v1280, 1.0
  %v1301 = vadd.f32 %v1282, 1.0
  %v1302 = vadd.f32 %v1284, 1.0
  %v1303 = vadd.f32 %v1286, 1.0
  %v1304 = vadd.f32 %v1288, 1.0
  %v1305 = vrcp.pop %v1289
  %v1306 = vmul.f32 1.0, %v1305
  %v1307 = vrcp.pop %v1290
  %v1308 = vmul.f32 1.0, %v1307
  %v1309 = vrcp.pop %v1291
  %v1310 = vmul.f32 1.0, %v1309
  %v1311 = vrcp.pop %v1292
  %v1312 = vmul.f32 1.0, %v1311
  %v1313 = vrcp.pop %v1293
  %v1314 = vmul.f32 1.0, %v1313
  %v1315 = vrcp.pop %v1294
  %v1316 = vmul.f32 1.0, %v1315
  %v1317 = vrcp.pop %v1295
  %v1318 = vmul.f32 1.0, %v1317
  %v1319 = vrcp.pop %v1296
  %v1320 = vmul.f32 1.0, %v1319
  %v1321 = vrcp.pop %v1297
  %v1322 = vmul.f32 1.0, %v1321
  %v1323 = vrcp.pop %v1298
  %v1324 = vmul.f32 1.0, %v1323
  %v1325 = vrcp.pop %v1299
  %v1326 = vmul.f32 1.0, %v1325
  %v1327 = vrcp.pop %v1300
  %v1328 = vmul.f32 1.0, %v1327
  %v1329 = vrcp.pop %v1301
  %v1330 = vmul.f32 1.0, %v1329
  %v1331 = vrcp.pop %v1302
  %v1332 = vmul.f32 1.0, %v1331
  %v1333 = vrcp.pop %v1303
  %v1334 = vmul.f32 1.0, %v1333
  %v1335 = vrcp.pop %v1304
  %v1336 = vmul.f32 1.0, %v1335
  %v1337 = vmul.f32 %v1225, %v1306
  %v1338 = vmul.f32 %v1226, %v1308
  %v1339 = vmul.f32 %v1227, %v1310
  %v1340 = vmul.f32 %v1228, %v1312
  %v1341 = vmul.f32 %v1229, %v1314
  %v1342 = vmul.f32 %v1230, %v1316
  %v1343 = vmul.f32 %v1231, %v1318
  %v1344 = vmul.f32 %v1232, %v1320
  %v1345 = vmul.f32 %v1233, %v1322
  %v1346 = vmul.f32 %v1234, %v1324
  %v1347 = vmul.f32 %v1235, %v1326
  %v1348 = vmul.f32 %v1236, %v1328
  %v1349 = vmul.f32 %v1237, %v1330
  %v1350 = vmul.f32 %v1238, %v1332
  %v1351 = vmul.f32 %v1239, %v1334
  %v1352 = vmul.f32 %v1240, %v1336
  %v1353 = vsel %vm260, %v1337, 0.0
  %v1354 = vsel %vm260, %v1338, 0.0
  %v1355 = vadd.f32 %v1353, %v1354
  %v1356 = vsel %vm260, %v1339, 0.0
  %v1357 = vadd.f32 %v1355, %v1356
  %v1358 = vsel %vm260, %v1340, 0.0
  %v1359 = vadd.f32 %v1357, %v1358
  %v1360 = vsel %vm260, %v1341, 0.0
  %v1361 = vadd.f32 %v1359, %v1360
  %v1362 = vsel %vm260, %v1342, 0.0
  %v1363 = vadd.f32 %v1361, %v1362
  %v1364 = vsel %vm260, %v1343, 0.0
  %v1365 = vadd.f32 %v1363, %v1364
  %v1366 = vsel %vm260, %v1344, 0.0
  %v1367 = vadd.f32 %v1365, %v1366
  %v1368 = vrot.slane %v1367, 4
  %v1369 = vadd.f32 %v1367, %v1368
  %v1370 = vrot.slane %v1369, 2
  %v1371 = vadd.f32 %v1369, %v1370
  %v1372 = vrot.slane %v1371, 1
  %v1373 = vadd.f32 %v1371, %v1372
  %v1374 = vsel %vm260, %v1345, 0.0
  %v1375 = vsel %vm260, %v1346, 0.0
  %v1376 = vadd.f32 %v1374, %v1375
  %v1377 = vsel %vm260, %v1347, 0.0
  %v1378 = vadd.f32 %v1376, %v1377
  %v1379 = vsel %vm260, %v1348, 0.0
  %v1380 = vadd.f32 %v1378, %v1379
  %v1381 = vsel %vm260, %v1349, 0.0
  %v1382 = vadd.f32 %v1380, %v1381
  %v1383 = vsel %vm260, %v1350, 0.0
  %v1384 = vadd.f32 %v1382, %v1383
  %v1385 = vsel %vm260, %v1351, 0.0
  %v1386 = vadd.f32 %v1384, %v1385
  %v1387 = vsel %vm260, %v1352, 0.0
  %v1388 = vadd.f32 %v1386, %v1387
  %v1389 = vrot.slane %v1388, 4
  %v1390 = vadd.f32 %v1388, %v1389
  %v1391 = vrot.slane %v1390, 2
  %v1392 = vadd.f32 %v1390, %v1391
  %v1393 = vrot.slane %v1392, 1
  %v1394 = vadd.f32 %v1392, %v1393
  %v1395 = vrcp.pop 64.0
  %v1396 = vmul.f32 %v1373, %v1395
  %v1397 = vmul.f32 %v1394, %v1395
  %v1398 = vld [vmem:[%s7] sm:$0xff]
  %v1399 = vld [vmem:[%s7 + $0x8] sm:$0xff]
  %v1400 = vld [vmem:[%s7 + $0x10] sm:$0xff]
  %v1401 = vld [vmem:[%s7 + $0x18] sm:$0xff]
  %v1402 = vld [vmem:[%s8] sm:$0x1]
  %v1404 = vlaneseq
  %v1405 = vshrl.u32 %v1404, 7
  %v1406 = vsub.s32 0, %v1405
  %v1407 = vrot.slane %v1402, %v1406
  %vm1411 = vcmask 1041409
  %v1412 = vsel %vm1411, %v1397, %v1396
  %v1413 = vsel %vm260, %v1412, 0
  %1415 = vmatprep.subr.mxu0 0.0
  %1416 = vmatpush1.msra.mxu0 %v1398
  %1417 = vmatprep.subr.mxu0 0.0
  %1418 = vmatpush1.msra.mxu0 %v1399
  %1419 = vmatprep.subr.mxu0 0.0
  %1420 = vmatpush1.msra.mxu0 %v1400
  %1421 = vmatprep.subr.mxu0 0.0
  %1422 = vmatpush1.msra.mxu0 %v1401
  %1423 = vmatprep.subr.mxu0 0.0
  %1424 = vmatpush1.msra.mxu0 0.0
  %1425 = vmatprep.subr.mxu0 0.0
  %1426 = vmatpush1.msra.mxu0 0.0
  %1427 = vmatprep.subr.mxu0 0.0
  %1428 = vmatpush1.msra.mxu0 0.0
  %1429 = vmatprep.subr.mxu0 0.0
  %1430 = vmatpush1.msra.mxu0 0.0
  %1431 = vmatprep.subr.mxu0 0.0
  %1432 = vmatpush1.msra.mxu0 0.0
  %1433 = vmatprep.subr.mxu0 0.0
  %1434 = vmatpush1.msra.mxu0 0.0
  %1435 = vmatprep.subr.mxu0 0.0
  %1436 = vmatpush1.msra.mxu0 0.0
  %1437 = vmatprep.subr.mxu0 0.0
  %1438 = vmatpush1.msra.mxu0 0.0
  %1439 = vmatprep.subr.mxu0 0.0
  %1440 = vmatpush1.msra.mxu0 0.0
  %1441 = vmatprep.subr.mxu0 0.0
  %1442 = vmatpush1.msra.mxu0 0.0
  %1443 = vmatprep.subr.mxu0 0.0
  %1444 = vmatpush1.msra.mxu0 0.0
  %1445 = vmatprep.subr.mxu0 0.0
  %1446 = vmatpush1.msra.mxu0 0.0
  %1447 = vmatprep.subr.mxu0 0.0
  %1448 = vmatpush1.msra.mxu0 0.0
  %1449 = vmatprep.subr.mxu0 0.0
  %1450 = vmatpush1.msra.mxu0 0.0
  %1451 = vmatprep.subr.mxu0 0.0
  %1452 = vmatpush1.msra.mxu0 0.0
  %1453 = vmatprep.subr.mxu0 0.0
  %1454 = vmatpush1.msra.mxu0 0.0
  %1455 = vmatprep.subr.mxu0 0.0
  %1456 = vmatpush1.msra.mxu0 0.0
  %1457 = vmatprep.subr.mxu0 0.0
  %1458 = vmatpush1.msra.mxu0 0.0
  %1459 = vmatprep.subr.mxu0 0.0
  %1460 = vmatpush1.msra.mxu0 0.0
  %1461 = vmatprep.subr.mxu0 0.0
  %1462 = vmatpush1.msra.mxu0 0.0
  %1463 = vmatprep.subr.mxu0 0.0
  %1464 = vmatpush1.msra.mxu0 0.0
  %1465 = vmatprep.subr.mxu0 0.0
  %1466 = vmatpush1.msra.mxu0 0.0
  %1467 = vmatprep.subr.mxu0 0.0
  %1468 = vmatpush1.msra.mxu0 0.0
  %1469 = vmatprep.subr.mxu0 0.0
  %1470 = vmatpush1.msra.mxu0 0.0
  %1471 = vmatprep.subr.mxu0 0.0
  %1472 = vmatpush1.msra.mxu0 0.0
  %1473 = vmatprep.subr.mxu0 0.0
  %1474 = vmatpush1.msra.mxu0 0.0
  %1475 = vmatprep.subr.mxu0 0.0
  %1476 = vmatpush1.msra.mxu0 0.0
  %1477 = vmatprep.subr.mxu0 0.0
  %1478 = vmatpush1.msra.mxu0 0.0
  %1479 = vmatprep.mubr.f32.mxu0 0.0
  %1480 = vmatmul.mubr.f32.gmra.mrb[0].mxu0 %v1413
  %v1481 = vpop.f32.mrb[0].mxu0
  %v1482 = vadd.f32 %v1407, %v1481
  %v1483 = vpop.f32.mrb[0].mxu0
  %1484 = vdwg.mxu0
  %v1485 = vxor.u32 %v1482, 2147483648
  %v1486 = vmul.f32 %v1485, 1.442695
  %v1487 = vpow.pop %v1486
  %v1488 = vadd.f32 %v1487, 1.0
  %v1489 = vrcp.pop %v1488
  %v1490 = vmul.f32 1.0, %v1489
  %v1491 = vmul.f32 %v1482, %v1490
  %v1492 = vld [vmem:[%s9] sm:$0xff]
  %v1493 = vld [vmem:[%s10] sm:$0x1]
  %v1495 = vlaneseq
  %v1496 = vshrl.u32 %v1495, 7
  %v1497 = vsub.s32 0, %v1496
  %v1498 = vrot.slane %v1493, %v1497
  %v1501 = vsel %vm64, %v1491, 0
  %1503 = vmatprep.subr.mxu0 0.0
  %1504 = vmatpush1.msra.mxu0 %v1492
  %1505 = vmatprep.subr.mxu0 0.0
  %1506 = vmatpush1.msra.mxu0 0.0
  %1507 = vmatprep.subr.mxu0 0.0
  %1508 = vmatpush1.msra.mxu0 0.0
  %1509 = vmatprep.subr.mxu0 0.0
  %1510 = vmatpush1.msra.mxu0 0.0
  %1511 = vmatprep.subr.mxu0 0.0
  %1512 = vmatpush1.msra.mxu0 0.0
  %1513 = vmatprep.subr.mxu0 0.0
  %1514 = vmatpush1.msra.mxu0 0.0
  %1515 = vmatprep.subr.mxu0 0.0
  %1516 = vmatpush1.msra.mxu0 0.0
  %1517 = vmatprep.subr.mxu0 0.0
  %1518 = vmatpush1.msra.mxu0 0.0
  %1519 = vmatprep.subr.mxu0 0.0
  %1520 = vmatpush1.msra.mxu0 0.0
  %1521 = vmatprep.subr.mxu0 0.0
  %1522 = vmatpush1.msra.mxu0 0.0
  %1523 = vmatprep.subr.mxu0 0.0
  %1524 = vmatpush1.msra.mxu0 0.0
  %1525 = vmatprep.subr.mxu0 0.0
  %1526 = vmatpush1.msra.mxu0 0.0
  %1527 = vmatprep.subr.mxu0 0.0
  %1528 = vmatpush1.msra.mxu0 0.0
  %1529 = vmatprep.subr.mxu0 0.0
  %1530 = vmatpush1.msra.mxu0 0.0
  %1531 = vmatprep.subr.mxu0 0.0
  %1532 = vmatpush1.msra.mxu0 0.0
  %1533 = vmatprep.subr.mxu0 0.0
  %1534 = vmatpush1.msra.mxu0 0.0
  %1535 = vmatprep.subr.mxu0 0.0
  %1536 = vmatpush1.msra.mxu0 0.0
  %1537 = vmatprep.subr.mxu0 0.0
  %1538 = vmatpush1.msra.mxu0 0.0
  %1539 = vmatprep.subr.mxu0 0.0
  %1540 = vmatpush1.msra.mxu0 0.0
  %1541 = vmatprep.subr.mxu0 0.0
  %1542 = vmatpush1.msra.mxu0 0.0
  %1543 = vmatprep.subr.mxu0 0.0
  %1544 = vmatpush1.msra.mxu0 0.0
  %1545 = vmatprep.subr.mxu0 0.0
  %1546 = vmatpush1.msra.mxu0 0.0
  %1547 = vmatprep.subr.mxu0 0.0
  %1548 = vmatpush1.msra.mxu0 0.0
  %1549 = vmatprep.subr.mxu0 0.0
  %1550 = vmatpush1.msra.mxu0 0.0
  %1551 = vmatprep.subr.mxu0 0.0
  %1552 = vmatpush1.msra.mxu0 0.0
  %1553 = vmatprep.subr.mxu0 0.0
  %1554 = vmatpush1.msra.mxu0 0.0
  %1555 = vmatprep.subr.mxu0 0.0
  %1556 = vmatpush1.msra.mxu0 0.0
  %1557 = vmatprep.subr.mxu0 0.0
  %1558 = vmatpush1.msra.mxu0 0.0
  %1559 = vmatprep.subr.mxu0 0.0
  %1560 = vmatpush1.msra.mxu0 0.0
  %1561 = vmatprep.subr.mxu0 0.0
  %1562 = vmatpush1.msra.mxu0 0.0
  %1563 = vmatprep.subr.mxu0 0.0
  %1564 = vmatpush1.msra.mxu0 0.0
  %1565 = vmatprep.subr.mxu0 0.0
  %1566 = vmatpush1.msra.mxu0 0.0
  %1567 = vmatprep.mubr.f32.mxu0 0.0
  %1568 = vmatmul.mubr.f32.gmra.mrb[0].mxu0 %v1501
  %v1569 = vpop.f32.mrb[0].mxu0
  %v1570 = vadd.f32 %v1498, %v1569
  %v1571 = vpop.f32.mrb[0].mxu0
  %1572 = vdwg.mxu0
  %v1573 = vxor.u32 %v1570, 2147483648
  %v1574 = vmul.f32 %v1573, 1.442695
  %v1575 = vpow.pop %v1574
  %v1576 = vadd.f32 %v1575, 1.0
  %v1577 = vrcp.pop %v1576
  %v1578 = vmul.f32 1.0, %v1577
  %v1581 = vunpack.c.l.s4 1966171168
  %v1582 = vunpack.c.0.s8 %v1581
  %v1583 = vlaneseq
  %v1584 = vshrl.u32 %v1583, 7
  %v1585 = vsub.s32 %v1582, %v1584
  %v1586 = vrot.slane %v1578, %v1585
  %v1587 = vcombine.high %v1586, %v1586
  %v1589 = vunpack.c.l.s4 1966171168
  %v1590 = vunpack.c.0.s8 %v1589
  %v1591 = vlaneseq
  %v1592 = vshrl.u32 %v1591, 7
  %v1593 = vsub.s32 %v1590, %v1592
  %v1594 = vrot.slane %v1586, %v1593
  %v1596 = vunpack.c.l.s4 1966171168
  %v1597 = vunpack.c.0.s8 %v1596
  %v1598 = vlaneseq
  %v1599 = vshrl.u32 %v1598, 7
  %v1600 = vsub.s32 %v1597, %v1599
  %v1601 = vrot.slane %v1587, %v1600
  %v1602 = vlaneseq
  %v1603 = vshrl.u32 %v1602, 7
  %v1604 = vsub.s32 0, %v1603
  %v1605 = vrot.slane %v1594, %v1604
  %v1606 = vlaneseq
  %v1607 = vshrl.u32 %v1606, 7
  %v1608 = vsub.s32 0, %v1607
  %v1609 = vrot.slane %v1601, %v1608
  %v1612 = vmul.f32 %v1337, %v1605
  %v1613 = vmul.f32 %v1338, %v1605
  %v1614 = vmul.f32 %v1339, %v1605
  %v1615 = vmul.f32 %v1340, %v1605
  %v1616 = vmul.f32 %v1341, %v1605
  %v1617 = vmul.f32 %v1342, %v1605
  %v1618 = vmul.f32 %v1343, %v1605
  %v1619 = vmul.f32 %v1344, %v1605
  %v1620 = vmul.f32 %v1345, %v1609
  %v1621 = vmul.f32 %v1346, %v1609
  %v1622 = vmul.f32 %v1347, %v1609
  %v1623 = vmul.f32 %v1348, %v1609
  %v1624 = vmul.f32 %v1349, %v1609
  %v1625 = vmul.f32 %v1350, %v1609
  %v1626 = vmul.f32 %v1351, %v1609
  %v1627 = vmul.f32 %v1352, %v1609
  %v1628 = vld [vmem:[%s11] sm:$0xff]
  %v1629 = vld [vmem:[%s11 + $0x8] sm:$0xff]
  %v1630 = vld [vmem:[%s11 + $0x10] sm:$0xff]
  %v1631 = vld [vmem:[%s11 + $0x18] sm:$0xff]
  %v1633 = vsel %vm260, %v1612, 0
  %v1636 = vsel %vm260, %v1613, 0
  %v1639 = vsel %vm260, %v1614, 0
  %v1642 = vsel %vm260, %v1615, 0
  %v1645 = vsel %vm260, %v1616, 0
  %v1648 = vsel %vm260, %v1617, 0
  %v1651 = vsel %vm260, %v1618, 0
  %v1654 = vsel %vm260, %v1619, 0
  %v1657 = vsel %vm260, %v1620, 0
  %v1660 = vsel %vm260, %v1621, 0
  %v1663 = vsel %vm260, %v1622, 0
  %v1666 = vsel %vm260, %v1623, 0
  %v1669 = vsel %vm260, %v1624, 0
  %v1672 = vsel %vm260, %v1625, 0
  %v1675 = vsel %vm260, %v1626, 0
  %v1678 = vsel %vm260, %v1627, 0
  %1680 = vmatprep.subr.mxu0 0.0
  %1681 = vmatpush1.msra.mxu0 %v1628
  %1682 = vmatprep.subr.mxu0 0.0
  %1683 = vmatpush1.msra.mxu0 %v1629
  %1684 = vmatprep.subr.mxu0 0.0
  %1685 = vmatpush1.msra.mxu0 %v1630
  %1686 = vmatprep.subr.mxu0 0.0
  %1687 = vmatpush1.msra.mxu0 %v1631
  %1688 = vmatprep.subr.mxu0 0.0
  %1689 = vmatpush1.msra.mxu0 0.0
  %1690 = vmatprep.subr.mxu0 0.0
  %1691 = vmatpush1.msra.mxu0 0.0
  %1692 = vmatprep.subr.mxu0 0.0
  %1693 = vmatpush1.msra.mxu0 0.0
  %1694 = vmatprep.subr.mxu0 0.0
  %1695 = vmatpush1.msra.mxu0 0.0
  %1696 = vmatprep.subr.mxu0 0.0
  %1697 = vmatpush1.msra.mxu0 0.0
  %1698 = vmatprep.subr.mxu0 0.0
  %1699 = vmatpush1.msra.mxu0 0.0
  %1700 = vmatprep.subr.mxu0 0.0
  %1701 = vmatpush1.msra.mxu0 0.0
  %1702 = vmatprep.subr.mxu0 0.0
  %1703 = vmatpush1.msra.mxu0 0.0
  %1704 = vmatprep.subr.mxu0 0.0
  %1705 = vmatpush1.msra.mxu0 0.0
  %1706 = vmatprep.subr.mxu0 0.0
  %1707 = vmatpush1.msra.mxu0 0.0
  %1708 = vmatprep.subr.mxu0 0.0
  %1709 = vmatpush1.msra.mxu0 0.0
  %1710 = vmatprep.subr.mxu0 0.0
  %1711 = vmatpush1.msra.mxu0 0.0
  %1712 = vmatprep.subr.mxu0 0.0
  %1713 = vmatpush1.msra.mxu0 0.0
  %1714 = vmatprep.subr.mxu0 0.0
  %1715 = vmatpush1.msra.mxu0 0.0
  %1716 = vmatprep.subr.mxu0 0.0
  %1717 = vmatpush1.msra.mxu0 0.0
  %1718 = vmatprep.subr.mxu0 0.0
  %1719 = vmatpush1.msra.mxu0 0.0
  %1720 = vmatprep.subr.mxu0 0.0
  %1721 = vmatpush1.msra.mxu0 0.0
  %1722 = vmatprep.subr.mxu0 0.0
  %1723 = vmatpush1.msra.mxu0 0.0
  %1724 = vmatprep.subr.mxu0 0.0
  %1725 = vmatpush1.msra.mxu0 0.0
  %1726 = vmatprep.subr.mxu0 0.0
  %1727 = vmatpush1.msra.mxu0 0.0
  %1728 = vmatprep.subr.mxu0 0.0
  %1729 = vmatpush1.msra.mxu0 0.0
  %1730 = vmatprep.subr.mxu0 0.0
  %1731 = vmatpush1.msra.mxu0 0.0
  %1732 = vmatprep.subr.mxu0 0.0
  %1733 = vmatpush1.msra.mxu0 0.0
  %1734 = vmatprep.subr.mxu0 0.0
  %1735 = vmatpush1.msra.mxu0 0.0
  %1736 = vmatprep.subr.mxu0 0.0
  %1737 = vmatpush1.msra.mxu0 0.0
  %1738 = vmatprep.subr.mxu0 0.0
  %1739 = vmatpush1.msra.mxu0 0.0
  %1740 = vmatprep.subr.mxu0 0.0
  %1741 = vmatpush1.msra.mxu0 0.0
  %1742 = vmatprep.subr.mxu0 0.0
  %1743 = vmatpush1.msra.mxu0 0.0
  %1744 = vmatprep.mubr.f32.mxu0 0.0
  %1745 = vmatmul.mubr.f32.gmra.mrb[0].mxu0 %v1633
  %v1746 = vpop.f32.mrb[0].mxu0
  %v1747 = vadd.f32 0.0, %v1746
  %v1748 = vpop.f32.mrb[0].mxu0
  %1749 = vmatprep.mubr.f32.mxu0 0.0
  %1750 = vmatmul.mubr.f32.gmra.mrb[0].mxu0 %v1636
  %v1751 = vpop.f32.mrb[0].mxu0
  %v1752 = vadd.f32 0.0, %v1751
  %v1753 = vpop.f32.mrb[0].mxu0
  %1754 = vmatprep.mubr.f32.mxu0 0.0
  %1755 = vmatmul.mubr.f32.gmra.mrb[0].mxu0 %v1639
  %v1756 = vpop.f32.mrb[0].mxu0
  %v1757 = vadd.f32 0.0, %v1756
  %v1758 = vpop.f32.mrb[0].mxu0
  %1759 = vmatprep.mubr.f32.mxu0 0.0
  %1760 = vmatmul.mubr.f32.gmra.mrb[0].mxu0 %v1642
  %v1761 = vpop.f32.mrb[0].mxu0
  %v1762 = vadd.f32 0.0, %v1761
  %v1763 = vpop.f32.mrb[0].mxu0
  %1764 = vmatprep.mubr.f32.mxu0 0.0
  %1765 = vmatmul.mubr.f32.gmra.mrb[0].mxu0 %v1645
  %v1766 = vpop.f32.mrb[0].mxu0
  %v1767 = vadd.f32 0.0, %v1766
  %v1768 = vpop.f32.mrb[0].mxu0
  %1769 = vmatprep.mubr.f32.mxu0 0.0
  %1770 = vmatmul.mubr.f32.gmra.mrb[0].mxu0 %v1648
  %v1771 = vpop.f32.mrb[0].mxu0
  %v1772 = vadd.f32 0.0, %v1771
  %v1773 = vpop.f32.mrb[0].mxu0
  %1774 = vmatprep.mubr.f32.mxu0 0.0
  %1775 = vmatmul.mubr.f32.gmra.mrb[0].mxu0 %v1651
  %v1776 = vpop.f32.mrb[0].mxu0
  %v1777 = vadd.f32 0.0, %v1776
  %v1778 = vpop.f32.mrb[0].mxu0
  %1779 = vmatprep.mubr.f32.mxu0 0.0
  %1780 = vmatmul.mubr.f32.gmra.mrb[0].mxu0 %v1654
  %v1781 = vpop.f32.mrb[0].mxu0
  %v1782 = vadd.f32 0.0, %v1781
  %v1783 = vpop.f32.mrb[0].mxu0
  %1784 = vmatprep.mubr.f32.mxu0 0.0
  %1785 = vmatmul.mubr.f32.gmra.mrb[0].mxu0 %v1657
  %v1786 = vpop.f32.mrb[0].mxu0
  %v1787 = vadd.f32 0.0, %v1786
  %v1788 = vpop.f32.mrb[0].mxu0
  %1789 = vmatprep.mubr.f32.mxu0 0.0
  %1790 = vmatmul.mubr.f32.gmra.mrb[0].mxu0 %v1660
  %v1791 = vpop.f32.mrb[0].mxu0
  %v1792 = vadd.f32 0.0, %v1791
  %v1793 = vpop.f32.mrb[0].mxu0
  %1794 = vmatprep.mubr.f32.mxu0 0.0
  %1795 = vmatmul.mubr.f32.gmra.mrb[0].mxu0 %v1663
  %v1796 = vpop.f32.mrb[0].mxu0
  %v1797 = vadd.f32 0.0, %v1796
  %v1798 = vpop.f32.mrb[0].mxu0
  %1799 = vmatprep.mubr.f32.mxu0 0.0
  %1800 = vmatmul.mubr.f32.gmra.mrb[0].mxu0 %v1666
  %v1801 = vpop.f32.mrb[0].mxu0
  %v1802 = vadd.f32 0.0, %v1801
  %v1803 = vpop.f32.mrb[0].mxu0
  %1804 = vmatprep.mubr.f32.mxu0 0.0
  %1805 = vmatmul.mubr.f32.gmra.mrb[0].mxu0 %v1669
  %v1806 = vpop.f32.mrb[0].mxu0
  %v1807 = vadd.f32 0.0, %v1806
  %v1808 = vpop.f32.mrb[0].mxu0
  %1809 = vmatprep.mubr.f32.mxu0 0.0
  %1810 = vmatmul.mubr.f32.gmra.mrb[0].mxu0 %v1672
  %v1811 = vpop.f32.mrb[0].mxu0
  %v1812 = vadd.f32 0.0, %v1811
  %v1813 = vpop.f32.mrb[0].mxu0
  %1814 = vmatprep.mubr.f32.mxu0 0.0
  %1815 = vmatmul.mubr.f32.gmra.mrb[0].mxu0 %v1675
  %v1816 = vpop.f32.mrb[0].mxu0
  %v1817 = vadd.f32 0.0, %v1816
  %v1818 = vpop.f32.mrb[0].mxu0
  %1819 = vmatprep.mubr.f32.mxu0 0.0
  %1820 = vmatmul.mubr.f32.gmra.mrb[0].mxu0 %v1678
  %v1821 = vpop.f32.mrb[0].mxu0
  %v1822 = vadd.f32 0.0, %v1821
  %v1823 = vpop.f32.mrb[0].mxu0
  %1824 = vdwg.mxu0
  %v1825 = vld [vmem:[%s12] sm:$0x1]
  %v1826 = vld [vmem:[%s13] sm:$0x1]
  %v1827 = vsel %vm64, %v1747, 0.0
  %v1828 = vsel %vm64, %v1752, 0.0
  %v1829 = vadd.f32 %v1827, %v1828
  %v1830 = vsel %vm64, %v1757, 0.0
  %v1831 = vadd.f32 %v1829, %v1830
  %v1832 = vsel %vm64, %v1762, 0.0
  %v1833 = vadd.f32 %v1831, %v1832
  %v1834 = vsel %vm64, %v1767, 0.0
  %v1835 = vadd.f32 %v1833, %v1834
  %v1836 = vsel %vm64, %v1772, 0.0
  %v1837 = vadd.f32 %v1835, %v1836
  %v1838 = vsel %vm64, %v1777, 0.0
  %v1839 = vadd.f32 %v1837, %v1838
  %v1840 = vsel %vm64, %v1782, 0.0
  %v1841 = vadd.f32 %v1839, %v1840
  %v1842 = vsel %vm64, %v1787, 0.0
  %v1843 = vadd.f32 %v1841, %v1842
  %v1844 = vsel %vm64, %v1792, 0.0
  %v1845 = vadd.f32 %v1843, %v1844
  %v1846 = vsel %vm64, %v1797, 0.0
  %v1847 = vadd.f32 %v1845, %v1846
  %v1848 = vsel %vm64, %v1802, 0.0
  %v1849 = vadd.f32 %v1847, %v1848
  %v1850 = vsel %vm64, %v1807, 0.0
  %v1851 = vadd.f32 %v1849, %v1850
  %v1852 = vsel %vm64, %v1812, 0.0
  %v1853 = vadd.f32 %v1851, %v1852
  %v1854 = vsel %vm64, %v1817, 0.0
  %v1855 = vadd.f32 %v1853, %v1854
  %v1856 = vsel %vm64, %v1822, 0.0
  %v1857 = vadd.f32 %v1855, %v1856
  %v1858 = vrot.slane %v1857, 4
  %v1859 = vadd.f32 %v1857, %v1858
  %v1860 = vrot.slane %v1859, 2
  %v1861 = vadd.f32 %v1859, %v1860
  %v1862 = vrot.slane %v1861, 1
  %v1863 = vadd.f32 %v1861, %v1862
  %v1864 = vmul.f32 %v1863, %v298
  %v1865 = vsub.f32 %v1747, %v1864
  %v1866 = vsub.f32 %v1752, %v1864
  %v1867 = vsub.f32 %v1757, %v1864
  %v1868 = vsub.f32 %v1762, %v1864
  %v1869 = vsub.f32 %v1767, %v1864
  %v1870 = vsub.f32 %v1772, %v1864
  %v1871 = vsub.f32 %v1777, %v1864
  %v1872 = vsub.f32 %v1782, %v1864
  %v1873 = vsub.f32 %v1787, %v1864
  %v1874 = vsub.f32 %v1792, %v1864
  %v1875 = vsub.f32 %v1797, %v1864
  %v1876 = vsub.f32 %v1802, %v1864
  %v1877 = vsub.f32 %v1807, %v1864
  %v1878 = vsub.f32 %v1812, %v1864
  %v1879 = vsub.f32 %v1817, %v1864
  %v1880 = vsub.f32 %v1822, %v1864
  %v1881 = vmul.f32 %v1865, %v1865
  %v1882 = vmul.f32 %v1866, %v1866
  %v1883 = vmul.f32 %v1867, %v1867
  %v1884 = vmul.f32 %v1868, %v1868
  %v1885 = vmul.f32 %v1869, %v1869
  %v1886 = vmul.f32 %v1870, %v1870
  %v1887 = vmul.f32 %v1871, %v1871
  %v1888 = vmul.f32 %v1872, %v1872
  %v1889 = vmul.f32 %v1873, %v1873
  %v1890 = vmul.f32 %v1874, %v1874
  %v1891 = vmul.f32 %v1875, %v1875
  %v1892 = vmul.f32 %v1876, %v1876
  %v1893 = vmul.f32 %v1877, %v1877
  %v1894 = vmul.f32 %v1878, %v1878
  %v1895 = vmul.f32 %v1879, %v1879
  %v1896 = vmul.f32 %v1880, %v1880
  %v1897 = vsel %vm64, %v1881, 0.0
  %v1898 = vsel %vm64, %v1882, 0.0
  %v1899 = vadd.f32 %v1897, %v1898
  %v1900 = vsel %vm64, %v1883, 0.0
  %v1901 = vadd.f32 %v1899, %v1900
  %v1902 = vsel %vm64, %v1884, 0.0
  %v1903 = vadd.f32 %v1901, %v1902
  %v1904 = vsel %vm64, %v1885, 0.0
  %v1905 = vadd.f32 %v1903, %v1904
  %v1906 = vsel %vm64, %v1886, 0.0
  %v1907 = vadd.f32 %v1905, %v1906
  %v1908 = vsel %vm64, %v1887, 0.0
  %v1909 = vadd.f32 %v1907, %v1908
  %v1910 = vsel %vm64, %v1888, 0.0
  %v1911 = vadd.f32 %v1909, %v1910
  %v1912 = vsel %vm64, %v1889, 0.0
  %v1913 = vadd.f32 %v1911, %v1912
  %v1914 = vsel %vm64, %v1890, 0.0
  %v1915 = vadd.f32 %v1913, %v1914
  %v1916 = vsel %vm64, %v1891, 0.0
  %v1917 = vadd.f32 %v1915, %v1916
  %v1918 = vsel %vm64, %v1892, 0.0
  %v1919 = vadd.f32 %v1917, %v1918
  %v1920 = vsel %vm64, %v1893, 0.0
  %v1921 = vadd.f32 %v1919, %v1920
  %v1922 = vsel %vm64, %v1894, 0.0
  %v1923 = vadd.f32 %v1921, %v1922
  %v1924 = vsel %vm64, %v1895, 0.0
  %v1925 = vadd.f32 %v1923, %v1924
  %v1926 = vsel %vm64, %v1896, 0.0
  %v1927 = vadd.f32 %v1925, %v1926
  %v1928 = vrot.slane %v1927, 4
  %v1929 = vadd.f32 %v1927, %v1928
  %v1930 = vrot.slane %v1929, 2
  %v1931 = vadd.f32 %v1929, %v1930
  %v1932 = vrot.slane %v1931, 1
  %v1933 = vadd.f32 %v1931, %v1932
  %v1934 = vmul.f32 %v1933, %v298
  %v1935 = vadd.f32 %v1934, 1e-05
  %v1936 = vrsqrt.pop %v1935
  %v1937 = vmul.f32 %v1865, %v1936
  %v1938 = vmul.f32 %v1866, %v1936
  %v1939 = vmul.f32 %v1867, %v1936
  %v1940 = vmul.f32 %v1868, %v1936
  %v1941 = vmul.f32 %v1869, %v1936
  %v1942 = vmul.f32 %v1870, %v1936
  %v1943 = vmul.f32 %v1871, %v1936
  %v1944 = vmul.f32 %v1872, %v1936
  %v1945 = vmul.f32 %v1873, %v1936
  %v1946 = vmul.f32 %v1874, %v1936
  %v1947 = vmul.f32 %v1875, %v1936
  %v1948 = vmul.f32 %v1876, %v1936
  %v1949 = vmul.f32 %v1877, %v1936
  %v1950 = vmul.f32 %v1878, %v1936
  %v1951 = vmul.f32 %v1879, %v1936
  %v1952 = vmul.f32 %v1880, %v1936
  %v1954 = vlaneseq
  %v1955 = vshrl.u32 %v1954, 7
  %v1956 = vsub.s32 0, %v1955
  %v1957 = vrot.slane %v1825, %v1956
  %v1959 = vmul.f32 %v1937, %v1957
  %v1960 = vmul.f32 %v1938, %v1957
  %v1961 = vmul.f32 %v1939, %v1957
  %v1962 = vmul.f32 %v1940, %v1957
  %v1963 = vmul.f32 %v1941, %v1957
  %v1964 = vmul.f32 %v1942, %v1957
  %v1965 = vmul.f32 %v1943, %v1957
  %v1966 = vmul.f32 %v1944, %v1957
  %v1967 = vmul.f32 %v1945, %v1957
  %v1968 = vmul.f32 %v1946, %v1957
  %v1969 = vmul.f32 %v1947, %v1957
  %v1970 = vmul.f32 %v1948, %v1957
  %v1971 = vmul.f32 %v1949, %v1957
  %v1972 = vmul.f32 %v1950, %v1957
  %v1973 = vmul.f32 %v1951, %v1957
  %v1974 = vmul.f32 %v1952, %v1957
  %v1976 = vlaneseq
  %v1977 = vshrl.u32 %v1976, 7
  %v1978 = vsub.s32 0, %v1977
  %v1979 = vrot.slane %v1826, %v1978
  %v1981 = vadd.f32 %v1959, %v1979
  %v1982 = vadd.f32 %v1960, %v1979
  %v1983 = vadd.f32 %v1961, %v1979
  %v1984 = vadd.f32 %v1962, %v1979
  %v1985 = vadd.f32 %v1963, %v1979
  %v1986 = vadd.f32 %v1964, %v1979
  %v1987 = vadd.f32 %v1965, %v1979
  %v1988 = vadd.f32 %v1966, %v1979
  %v1989 = vadd.f32 %v1967, %v1979
  %v1990 = vadd.f32 %v1968, %v1979
  %v1991 = vadd.f32 %v1969, %v1979
  %v1992 = vadd.f32 %v1970, %v1979
  %v1993 = vadd.f32 %v1971, %v1979
  %v1994 = vadd.f32 %v1972, %v1979
  %v1995 = vadd.f32 %v1973, %v1979
  %v1996 = vadd.f32 %v1974, %v1979
  %v1997 = vadd.f32 %v1981, %v47
  %v1998 = vadd.f32 %v1982, %v48
  %v1999 = vadd.f32 %v1983, %v49
  %v2000 = vadd.f32 %v1984, %v50
  %v2001 = vadd.f32 %v1985, %v51
  %v2002 = vadd.f32 %v1986, %v52
  %v2003 = vadd.f32 %v1987, %v53
  %v2004 = vadd.f32 %v1988, %v54
  %v2005 = vadd.f32 %v1989, %v55
  %v2006 = vadd.f32 %v1990, %v56
  %v2007 = vadd.f32 %v1991, %v57
  %v2008 = vadd.f32 %v1992, %v58
  %v2009 = vadd.f32 %v1993, %v59
  %v2010 = vadd.f32 %v1994, %v60
  %v2011 = vadd.f32 %v1995, %v61
  %v2012 = vadd.f32 %v1996, %v62
  %v2013 = vlaneseq
  %v2014 = vshrl.u32 %v2013, 7
  %v2015 = vlaneseq
  %v2016 = vand.u32 %v2015, 127
  %vm2017 = vcmp.eq.s32.totalorder %v2014, %v2016
  %v2018 = vsel %vm2017, 1, 0
  %v2019 = vcvt.s32.f32 %v2018
  %v2021 = vsel %vm64, %v2019, 0
  %v2024 = vsel %vm64, %v1997, 0
  %v2027 = vsel %vm64, %v1998, 0
  %v2030 = vsel %vm64, %v1999, 0
  %v2033 = vsel %vm64, %v2000, 0
  %v2036 = vsel %vm64, %v2001, 0
  %v2039 = vsel %vm64, %v2002, 0
  %v2042 = vsel %vm64, %v2003, 0
  %v2045 = vsel %vm64, %v2004, 0
  %v2048 = vsel %vm64, %v2005, 0
  %v2051 = vsel %vm64, %v2006, 0
  %v2054 = vsel %vm64, %v2007, 0
  %v2057 = vsel %vm64, %v2008, 0
  %v2060 = vsel %vm64, %v2009, 0
  %v2063 = vsel %vm64, %v2010, 0
  %v2066 = vsel %vm64, %v2011, 0
  %v2069 = vsel %vm64, %v2012, 0
  %2071 = vmatprep.subr.mxu0 0.0
  %2072 = vmatpush1.xpose.msra.mxu0 %v2024
  %2073 = vmatprep.subr.mxu0 0.0
  %2074 = vmatpush1.xpose.msra.mxu0 %v2027
  %2075 = vmatprep.subr.mxu0 0.0
  %2076 = vmatpush1.xpose.msra.mxu0 %v2030
  %2077 = vmatprep.subr.mxu0 0.0
  %2078 = vmatpush1.xpose.msra.mxu0 %v2033
  %2079 = vmatprep.subr.mxu0 0.0
  %2080 = vmatpush1.xpose.msra.mxu0 %v2036
  %2081 = vmatprep.subr.mxu0 0.0
  %2082 = vmatpush1.xpose.msra.mxu0 %v2039
  %2083 = vmatprep.subr.mxu0 0.0
  %2084 = vmatpush1.xpose.msra.mxu0 %v2042
  %2085 = vmatprep.subr.mxu0 0.0
  %2086 = vmatpush1.xpose.msra.mxu0 %v2045
  %2087 = vmatprep.subr.mxu0 0.0
  %2088 = vmatpush1.xpose.msra.mxu0 %v2048
  %2089 = vmatprep.subr.mxu0 0.0
  %2090 = vmatpush1.xpose.msra.mxu0 %v2051
  %2091 = vmatprep.subr.mxu0 0.0
  %2092 = vmatpush1.xpose.msra.mxu0 %v2054
  %2093 = vmatprep.subr.mxu0 0.0
  %2094 = vmatpush1.xpose.msra.mxu0 %v2057
  %2095 = vmatprep.subr.mxu0 0.0
  %2096 = vmatpush1.xpose.msra.mxu0 %v2060
  %2097 = vmatprep.subr.mxu0 0.0
  %2098 = vmatpush1.xpose.msra.mxu0 %v2063
  %2099 = vmatprep.subr.mxu0 0.0
  %2100 = vmatpush1.xpose.msra.mxu0 %v2066
  %2101 = vmatprep.subr.mxu0 0.0
  %2102 = vmatpush1.xpose.msra.mxu0 %v2069
  %2103 = vmatprep.subr.mxu0 0.0
  %2104 = vmatpush1.xpose.msra.mxu0 0.0
  %2105 = vmatprep.subr.mxu0 0.0
  %2106 = vmatpush1.xpose.msra.mxu0 0.0
  %2107 = vmatprep.subr.mxu0 0.0
  %2108 = vmatpush1.xpose.msra.mxu0 0.0
  %2109 = vmatprep.subr.mxu0 0.0
  %2110 = vmatpush1.xpose.msra.mxu0 0.0
  %2111 = vmatprep.subr.mxu0 0.0
  %2112 = vmatpush1.xpose.msra.mxu0 0.0
  %2113 = vmatprep.subr.mxu0 0.0
  %2114 = vmatpush1.xpose.msra.mxu0 0.0
  %2115 = vmatprep.subr.mxu0 0.0
  %2116 = vmatpush1.xpose.msra.mxu0 0.0
  %2117 = vmatprep.subr.mxu0 0.0
  %2118 = vmatpush1.xpose.msra.mxu0 0.0
  %2119 = vmatprep.subr.mxu0 0.0
  %2120 = vmatpush1.xpose.msra.mxu0 0.0
  %2121 = vmatprep.subr.mxu0 0.0
  %2122 = vmatpush1.xpose.msra.mxu0 0.0
  %2123 = vmatprep.subr.mxu0 0.0
  %2124 = vmatpush1.xpose.msra.mxu0 0.0
  %2125 = vmatprep.subr.mxu0 0.0
  %2126 = vmatpush1.xpose.msra.mxu0 0.0
  %2127 = vmatprep.subr.mxu0 0.0
  %2128 = vmatpush1.xpose.msra.mxu0 0.0
  %2129 = vmatprep.subr.mxu0 0.0
  %2130 = vmatpush1.xpose.msra.mxu0 0.0
  %2131 = vmatprep.subr.mxu0 0.0
  %2132 = vmatpush1.xpose.msra.mxu0 0.0
  %2133 = vmatprep.subr.mxu0 0.0
  %2134 = vmatpush1.xpose.msra.mxu0 0.0
  %2135 = vmatprep.mubr.f32.mxu0 0.0
  %2136 = vmatmul.mubr.f32.gmra.mrb[0].mxu0 %v2021
  %v2137 = vpop.f32.mrb[0].mxu0
  %v2138 = vadd.f32 0.0, %v2137
  %v2139 = vpop.f32.mrb[0].mxu0
  %2140 = vdwg.mxu0
  %2141 = vst [vmem:[%s14] sm:$0xff] %v2138
  // Predicated region
  $region58: #{mbconv_layers_forward.3} parent=0 // pred_check
    _
  $region59: #{mbconv_layers_forward.3} parent=0 // pred_check_branch
    %2143 = sbr.rel (0) target = $region61
  $region60: #{mbconv_layers_forward.3} parent=0 // pred_region
    _
  $region61: #{mbconv_layers_forward.3} parent=0 // pred_fallthru
    _
  // Predicated region
  $region62: #{mbconv_layers_forward.3} parent=0 // pred_check
    _
  $region63: #{mbconv_layers_forward.3} parent=0 // pred_check_branch
    %2145 = sbr.rel (0) target = $region65
  $region64: #{mbconv_layers_forward.3} parent=0 // pred_region
    _
  $region65: #{mbconv_layers_forward.3} parent=0 // pred_fallthru
    _

// kernel: mbconv_layers_forward.2
$region0: #{mbconv_layers_forward.2}
  #allocation0 [shape = 'u32[]', space=smem, size = 0x4, offset = 0x4, fixed_abs, tag = 'smem constant byte address 0x4 - core index']
  #allocation1 [shape = 'u32[144,128]{1,0:T(1,128)}', space=vmem, size = 0x12000, scoped, tag = 'internal scratch']
  #allocation2 [shape = 'f32[2,18,25,16]{3,2,1,0:T(8,128)}', space=vmem, size = 0x90000, scoped, tag = 'scratch operand']
  #allocation3 [shape = 'f32[2,18,9,16]{3,2,1,0:T(8,128)}', space=vmem, size = 0x48000, scoped, tag = 'scratch operand']
  #allocation4 [shape = 'f32[2,18,9,16]{3,2,1,0:T(8,128)}', space=vmem, size = 0x48000, scoped, tag = 'scratch operand']
  %s0 = inlined_call_operand.vmem [shape: f32[2,16,16,4], index: 0, kind: input, shape index: {}]
  %s1 = inlined_call_operand.vmem [shape: f32[4,16], index: 1, kind: input, shape index: {}]
  %s2 = inlined_call_operand.vmem [shape: f32[1,16], index: 2, kind: input, shape index: {}]
  %s3 = inlined_call_operand.vmem [shape: f32[1,16], index: 3, kind: input, shape index: {}]
  %s4 = inlined_call_operand.vmem [shape: f32[9,16], index: 4, kind: input, shape index: {}]
  %s5 = inlined_call_operand.vmem [shape: f32[1,16], index: 5, kind: input, shape index: {}]
  %s6 = inlined_call_operand.vmem [shape: f32[1,16], index: 6, kind: input, shape index: {}]
  %s7 = inlined_call_operand.vmem [shape: f32[16,4], index: 7, kind: input, shape index: {}]
  %s8 = inlined_call_operand.vmem [shape: f32[1,4], index: 8, kind: input, shape index: {}]
  %s9 = inlined_call_operand.vmem [shape: f32[4,16], index: 9, kind: input, shape index: {}]
  %s10 = inlined_call_operand.vmem [shape: f32[1,16], index: 10, kind: input, shape index: {}]
  %s11 = inlined_call_operand.vmem [shape: f32[16,8], index: 11, kind: input, shape index: {}]
  %s12 = inlined_call_operand.vmem [shape: f32[1,8], index: 12, kind: input, shape index: {}]
  %s13 = inlined_call_operand.vmem [shape: f32[1,8], index: 13, kind: input, shape index: {}]
  %s14 = inlined_call_operand.vmem [shape: f32[8,128], index: 14, kind: output, shape index: {}]
  %s15 = sld [smem:[#allocation0]]
  $region66: #{mbconv_layers_forward.2} parent=0
    _
  %s17 = ssub.s32 1, %s15
  %s18 = scalar_select 0, %s17, %s15
  // Predicated region
  $region2: #{mbconv_layers_forward.2} parent=0 // pred_check
    _
  $region3: #{mbconv_layers_forward.2} parent=0 // pred_check_branch
    %20 = sbr.rel (0) target = $region5
  $region4: #{mbconv_layers_forward.2} parent=0 // pred_region
    _
  $region5: #{mbconv_layers_forward.2} parent=0 // pred_fallthru
    _
  // Predicated region
  $region6: #{mbconv_layers_forward.2} parent=0 // pred_check
    _
  $region7: #{mbconv_layers_forward.2} parent=0 // pred_check_branch
    %22 = sbr.rel (0) target = $region9
  $region8: #{mbconv_layers_forward.2} parent=0 // pred_region
    _
  $region9: #{mbconv_layers_forward.2} parent=0 // pred_fallthru
    _
  // Predicated region
  $region10: #{mbconv_layers_forward.2} parent=0 // pred_check
    _
  $region11: #{mbconv_layers_forward.2} parent=0 // pred_check_branch
    %24 = sbr.rel (0) target = $region13
  $region12: #{mbconv_layers_forward.2} parent=0 // pred_region
    _
  $region13: #{mbconv_layers_forward.2} parent=0 // pred_fallthru
    _
  // Predicated region
  $region14: #{mbconv_layers_forward.2} parent=0 // pred_check
    _
  $region15: #{mbconv_layers_forward.2} parent=0 // pred_check_branch
    %26 = sbr.rel (0) target = $region17
  $region16: #{mbconv_layers_forward.2} parent=0 // pred_region
    _
  $region17: #{mbconv_layers_forward.2} parent=0 // pred_fallthru
    _
  // Predicated region
  $region18: #{mbconv_layers_forward.2} parent=0 // pred_check
    _
  $region19: #{mbconv_layers_forward.2} parent=0 // pred_check_branch
    %28 = sbr.rel (0) target = $region21
  $region20: #{mbconv_layers_forward.2} parent=0 // pred_region
    _
  $region21: #{mbconv_layers_forward.2} parent=0 // pred_fallthru
    _
  // Predicated region
  $region22: #{mbconv_layers_forward.2} parent=0 // pred_check
    _
  $region23: #{mbconv_layers_forward.2} parent=0 // pred_check_branch
    %30 = sbr.rel (0) target = $region25
  $region24: #{mbconv_layers_forward.2} parent=0 // pred_region
    _
  $region25: #{mbconv_layers_forward.2} parent=0 // pred_fallthru
    _
  // Predicated region
  $region26: #{mbconv_layers_forward.2} parent=0 // pred_check
    _
  $region27: #{mbconv_layers_forward.2} parent=0 // pred_check_branch
    %32 = sbr.rel (0) target = $region29
  $region28: #{mbconv_layers_forward.2} parent=0 // pred_region
    _
  $region29: #{mbconv_layers_forward.2} parent=0 // pred_fallthru
    _
  // Predicated region
  $region30: #{mbconv_layers_forward.2} parent=0 // pred_check
    _
  $region31: #{mbconv_layers_forward.2} parent=0 // pred_check_branch
    %34 = sbr.rel (0) target = $region33
  $region32: #{mbconv_layers_forward.2} parent=0 // pred_region
    _
  $region33: #{mbconv_layers_forward.2} parent=0 // pred_fallthru
    _
  // Predicated region
  $region34: #{mbconv_layers_forward.2} parent=0 // pred_check
    _
  $region35: #{mbconv_layers_forward.2} parent=0 // pred_check_branch
    %36 = sbr.rel (0) target = $region37
  $region36: #{mbconv_layers_forward.2} parent=0 // pred_region
    _
  $region37: #{mbconv_layers_forward.2} parent=0 // pred_fallthru
    _
  // Predicated region
  $region38: #{mbconv_layers_forward.2} parent=0 // pred_check
    _
  $region39: #{mbconv_layers_forward.2} parent=0 // pred_check_branch
    %38 = sbr.rel (0) target = $region41
  $region40: #{mbconv_layers_forward.2} parent=0 // pred_region
    _
  $region41: #{mbconv_layers_forward.2} parent=0 // pred_fallthru
    _
  // Predicated region
  $region42: #{mbconv_layers_forward.2} parent=0 // pred_check
    _
  $region43: #{mbconv_layers_forward.2} parent=0 // pred_check_branch
    %40 = sbr.rel (0) target = $region45
  $region44: #{mbconv_layers_forward.2} parent=0 // pred_region
    _
  $region45: #{mbconv_layers_forward.2} parent=0 // pred_fallthru
    _
  // Predicated region
  $region46: #{mbconv_layers_forward.2} parent=0 // pred_check
    _
  $region47: #{mbconv_layers_forward.2} parent=0 // pred_check_branch
    %42 = sbr.rel (0) target = $region49
  $region48: #{mbconv_layers_forward.2} parent=0 // pred_region
    _
  $region49: #{mbconv_layers_forward.2} parent=0 // pred_fallthru
    _
  // Predicated region
  $region50: #{mbconv_layers_forward.2} parent=0 // pred_check
    _
  $region51: #{mbconv_layers_forward.2} parent=0 // pred_check_branch
    %44 = sbr.rel (0) target = $region53
  $region52: #{mbconv_layers_forward.2} parent=0 // pred_region
    _
  $region53: #{mbconv_layers_forward.2} parent=0 // pred_fallthru
    _
  // Predicated region
  $region54: #{mbconv_layers_forward.2} parent=0 // pred_check
    _
  $region55: #{mbconv_layers_forward.2} parent=0 // pred_check_branch
    %46 = sbr.rel (0) target = $region57
  $region56: #{mbconv_layers_forward.2} parent=0 // pred_region
    _
  $region57: #{mbconv_layers_forward.2} parent=0 // pred_fallthru
    _
  %v47 = vld [vmem:[%s0] sm:$0xff]
  %v48 = vld [vmem:[%s0 + $0x8] sm:$0xff]
  %v49 = vld [vmem:[%s0 + $0x10] sm:$0xff]
  %v50 = vld [vmem:[%s0 + $0x18] sm:$0xff]
  %v51 = vld [vmem:[%s0 + $0x20] sm:$0xff]
  %v52 = vld [vmem:[%s0 + $0x28] sm:$0xff]
  %v53 = vld [vmem:[%s0 + $0x30] sm:$0xff]
  %v54 = vld [vmem:[%s0 + $0x38] sm:$0xff]
  %v55 = vld [vmem:[%s0 + $0x40] sm:$0xff]
  %v56 = vld [vmem:[%s0 + $0x48] sm:$0xff]
  %v57 = vld [vmem:[%s0 + $0x50] sm:$0xff]
  %v58 = vld [vmem:[%s0 + $0x58] sm:$0xff]
  %v59 = vld [vmem:[%s0 + $0x60] sm:$0xff]
  %v60 = vld [vmem:[%s0 + $0x68] sm:$0xff]
  %v61 = vld [vmem:[%s0 + $0x70] sm:$0xff]
  %v62 = vld [vmem:[%s0 + $0x78] sm:$0xff]
  %v63 = vld [vmem:[%s0 + $0x80] sm:$0xff]
  %v64 = vld [vmem:[%s0 + $0x88] sm:$0xff]
  %v65 = vld [vmem:[%s0 + $0x90] sm:$0xff]
  %v66 = vld [vmem:[%s0 + $0x98] sm:$0xff]
  %v67 = vld [vmem:[%s0 + $0xa0] sm:$0xff]
  %v68 = vld [vmem:[%s0 + $0xa8] sm:$0xff]
  %v69 = vld [vmem:[%s0 + $0xb0] sm:$0xff]
  %v70 = vld [vmem:[%s0 + $0xb8] sm:$0xff]
  %v71 = vld [vmem:[%s0 + $0xc0] sm:$0xff]
  %v72 = vld [vmem:[%s0 + $0xc8] sm:$0xff]
  %v73 = vld [vmem:[%s0 + $0xd0] sm:$0xff]
  %v74 = vld [vmem:[%s0 + $0xd8] sm:$0xff]
  %v75 = vld [vmem:[%s0 + $0xe0] sm:$0xff]
  %v76 = vld [vmem:[%s0 + $0xe8] sm:$0xff]
  %v77 = vld [vmem:[%s0 + $0xf0] sm:$0xff]
  %v78 = vld [vmem:[%s0 + $0xf8] sm:$0xff]
  %v79 = vld [vmem:[%s0 + $0x100] sm:$0xff]
  %v80 = vld [vmem:[%s0 + $0x108] sm:$0xff]
  %v81 = vld [vmem:[%s0 + $0x110] sm:$0xff]
  %v82 = vld [vmem:[%s0 + $0x118] sm:$0xff]
  %v83 = vld [vmem:[%s0 + $0x120] sm:$0xff]
  %v84 = vld [vmem:[%s0 + $0x128] sm:$0xff]
  %v85 = vld [vmem:[%s0 + $0x130] sm:$0xff]
  %v86 = vld [vmem:[%s0 + $0x138] sm:$0xff]
  %v87 = vld [vmem:[%s0 + $0x140] sm:$0xff]
  %v88 = vld [vmem:[%s0 + $0x148] sm:$0xff]
  %v89 = vld [vmem:[%s0 + $0x150] sm:$0xff]
  %v90 = vld [vmem:[%s0 + $0x158] sm:$0xff]
  %v91 = vld [vmem:[%s0 + $0x160] sm:$0xff]
  %v92 = vld [vmem:[%s0 + $0x168] sm:$0xff]
  %v93 = vld [vmem:[%s0 + $0x170] sm:$0xff]
  %v94 = vld [vmem:[%s0 + $0x178] sm:$0xff]
  %v95 = vld [vmem:[%s0 + $0x180] sm:$0xff]
  %v96 = vld [vmem:[%s0 + $0x188] sm:$0xff]
  %v97 = vld [vmem:[%s0 + $0x190] sm:$0xff]
  %v98 = vld [vmem:[%s0 + $0x198] sm:$0xff]
  %v99 = vld [vmem:[%s0 + $0x1a0] sm:$0xff]
  %v100 = vld [vmem:[%s0 + $0x1a8] sm:$0xff]
  %v101 = vld [vmem:[%s0 + $0x1b0] sm:$0xff]
  %v102 = vld [vmem:[%s0 + $0x1b8] sm:$0xff]
  %v103 = vld [vmem:[%s0 + $0x1c0] sm:$0xff]
  %v104 = vld [vmem:[%s0 + $0x1c8] sm:$0xff]
  %v105 = vld [vmem:[%s0 + $0x1d0] sm:$0xff]
  %v106 = vld [vmem:[%s0 + $0x1d8] sm:$0xff]
  %v107 = vld [vmem:[%s0 + $0x1e0] sm:$0xff]
  %v108 = vld [vmem:[%s0 + $0x1e8] sm:$0xff]
  %v109 = vld [vmem:[%s0 + $0x1f0] sm:$0xff]
  %v110 = vld [vmem:[%s0 + $0x1f8] sm:$0xff]
  %v111 = vld [vmem:[%s1] sm:$0xf]
  %vm112 = vcmask 31744
  %v114 = vsel %vm112, %v47, 0
  %v117 = vsel %vm112, %v48, 0
  %v120 = vsel %vm112, %v49, 0
  %v123 = vsel %vm112, %v50, 0
  %v126 = vsel %vm112, %v51, 0
  %v129 = vsel %vm112, %v52, 0
  %v132 = vsel %vm112, %v53, 0
  %v135 = vsel %vm112, %v54, 0
  %v138 = vsel %vm112, %v55, 0
  %v141 = vsel %vm112, %v56, 0
  %v144 = vsel %vm112, %v57, 0
  %v147 = vsel %vm112, %v58, 0
  %v150 = vsel %vm112, %v59, 0
  %v153 = vsel %vm112, %v60, 0
  %v156 = vsel %vm112, %v61, 0
  %v159 = vsel %vm112, %v62, 0
  %v162 = vsel %vm112, %v63, 0
  %v165 = vsel %vm112, %v64, 0
  %v168 = vsel %vm112, %v65, 0
  %v171 = vsel %vm112, %v66, 0
  %v174 = vsel %vm112, %v67, 0
  %v177 = vsel %vm112, %v68, 0
  %v180 = vsel %vm112, %v69, 0
  %v183 = vsel %vm112, %v70, 0
  %v186 = vsel %vm112, %v71, 0
  %v189 = vsel %vm112, %v72, 0
  %v192 = vsel %vm112, %v73, 0
  %v195 = vsel %vm112, %v74, 0
  %v198 = vsel %vm112, %v75, 0
  %v201 = vsel %vm112, %v76, 0
  %v204 = vsel %vm112, %v77, 0
  %v207 = vsel %vm112, %v78, 0
  %v210 = vsel %vm112, %v79, 0
  %v213 = vsel %vm112, %v80, 0
  %v216 = vsel %vm112, %v81, 0
  %v219 = vsel %vm112, %v82, 0
  %v222 = vsel %vm112, %v83, 0
  %v225 = vsel %vm112, %v84, 0
  %v228 = vsel %vm112, %v85, 0
  %v231 = vsel %vm112, %v86, 0
  %v234 = vsel %vm112, %v87, 0
  %v237 = vsel %vm112, %v88, 0
  %v240 = vsel %vm112, %v89, 0
  %v243 = vsel %vm112, %v90, 0
  %v246 = vsel %vm112, %v91, 0
  %v249 = vsel %vm112, %v92, 0
  %v252 = vsel %vm112, %v93, 0
  %v255 = vsel %vm112, %v94, 0
  %v258 = vsel %vm112, %v95, 0
  %v261 = vsel %vm112, %v96, 0
  %v264 = vsel %vm112, %v97, 0
  %v267 = vsel %vm112, %v98, 0
  %v270 = vsel %vm112, %v99, 0
  %v273 = vsel %vm112, %v100, 0
  %v276 = vsel %vm112, %v101, 0
  %v279 = vsel %vm112, %v102, 0
  %v282 = vsel %vm112, %v103, 0
  %v285 = vsel %vm112, %v104, 0
  %v288 = vsel %vm112, %v105, 0
  %v291 = vsel %vm112, %v106, 0
  %v294 = vsel %vm112, %v107, 0
  %v297 = vsel %vm112, %v108, 0
  %v300 = vsel %vm112, %v109, 0
  %v303 = vsel %vm112, %v110, 0
  %vm305 = vcmask 1043456
  %v307 = vsel %vm305, %v111, 0
  %309 = vmatprep.subr.mxu0 0.0
  %310 = vmatpush1.msra.mxu0 %v307
  %311 = vmatprep.subr.mxu0 0.0
  %312 = vmatpush1.msra.mxu0 0.0
  %313 = vmatprep.subr.mxu0 0.0
  %314 = vmatpush1.msra.mxu0 0.0
  %315 = vmatprep.subr.mxu0 0.0
  %316 = vmatpush1.msra.mxu0 0.0
  %317 = vmatprep.subr.mxu0 0.0
  %318 = vmatpush1.msra.mxu0 0.0
  %319 = vmatprep.subr.mxu0 0.0
  %320 = vmatpush1.msra.mxu0 0.0
  %321 = vmatprep.subr.mxu0 0.0
  %322 = vmatpush1.msra.mxu0 0.0
  %323 = vmatprep.subr.mxu0 0.0
  %324 = vmatpush1.msra.mxu0 0.0
  %325 = vmatprep.subr.mxu0 0.0
  %326 = vmatpush1.msra.mxu0 0.0
  %327 = vmatprep.subr.mxu0 0.0
  %328 = vmatpush1.msra.mxu0 0.0
  %329 = vmatprep.subr.mxu0 0.0
  %330 = vmatpush1.msra.mxu0 0.0
  %331 = vmatprep.subr.mxu0 0.0
  %332 = vmatpush1.msra.mxu0 0.0
  %333 = vmatprep.subr.mxu0 0.0
  %334 = vmatpush1.msra.mxu0 0.0
  %335 = vmatprep.subr.mxu0 0.0
  %336 = vmatpush1.msra.mxu0 0.0
  %337 = vmatprep.subr.mxu0 0.0
  %338 = vmatpush1.msra.mxu0 0.0
  %339 = vmatprep.subr.mxu0 0.0
  %340 = vmatpush1.msra.mxu0 0.0
  %341 = vmatprep.subr.mxu0 0.0
  %342 = vmatpush1.msra.mxu0 0.0
  %343 = vmatprep.subr.mxu0 0.0
  %344 = vmatpush1.msra.mxu0 0.0
  %345 = vmatprep.subr.mxu0 0.0
  %346 = vmatpush1.msra.mxu0 0.0
  %347 = vmatprep.subr.mxu0 0.0
  %348 = vmatpush1.msra.mxu0 0.0
  %349 = vmatprep.subr.mxu0 0.0
  %350 = vmatpush1.msra.mxu0 0.0
  %351 = vmatprep.subr.mxu0 0.0
  %352 = vmatpush1.msra.mxu0 0.0
  %353 = vmatprep.subr.mxu0 0.0
  %354 = vmatpush1.msra.mxu0 0.0
  %355 = vmatprep.subr.mxu0 0.0
  %356 = vmatpush1.msra.mxu0 0.0
  %357 = vmatprep.subr.mxu0 0.0
  %358 = vmatpush1.msra.mxu0 0.0
  %359 = vmatprep.subr.mxu0 0.0
  %360 = vmatpush1.msra.mxu0 0.0
  %361 = vmatprep.subr.mxu0 0.0
  %362 = vmatpush1.msra.mxu0 0.0
  %363 = vmatprep.subr.mxu0 0.0
  %364 = vmatpush1.msra.mxu0 0.0
  %365 = vmatprep.subr.mxu0 0.0
  %366 = vmatpush1.msra.mxu0 0.0
  %367 = vmatprep.subr.mxu0 0.0
  %368 = vmatpush1.msra.mxu0 0.0
  %369 = vmatprep.subr.mxu0 0.0
  %370 = vmatpush1.msra.mxu0 0.0
  %371 = vmatprep.subr.mxu0 0.0
  %372 = vmatpush1.msra.mxu0 0.0
  %373 = vmatprep.mubr.f32.mxu0 0.0
  %374 = vmatmul.mubr.f32.gmra.mrb[0].mxu0 %v114
  %v375 = vpop.f32.mrb[0].mxu0
  %v376 = vadd.f32 0.0, %v375
  %v377 = vpop.f32.mrb[0].mxu0
  %378 = vmatprep.mubr.f32.mxu0 0.0
  %379 = vmatmul.mubr.f32.gmra.mrb[0].mxu0 %v117
  %v380 = vpop.f32.mrb[0].mxu0
  %v381 = vadd.f32 0.0, %v380
  %v382 = vpop.f32.mrb[0].mxu0
  %383 = vmatprep.mubr.f32.mxu0 0.0
  %384 = vmatmul.mubr.f32.gmra.mrb[0].mxu0 %v120
  %v385 = vpop.f32.mrb[0].mxu0
  %v386 = vadd.f32 0.0, %v385
  %v387 = vpop.f32.mrb[0].mxu0
  %388 = vmatprep.mubr.f32.mxu0 0.0
  %389 = vmatmul.mubr.f32.gmra.mrb[0].mxu0 %v123
  %v390 = vpop.f32.mrb[0].mxu0
  %v391 = vadd.f32 0.0, %v390
  %v392 = vpop.f32.mrb[0].mxu0
  %393 = vmatprep.mubr.f32.mxu0 0.0
  %394 = vmatmul.mubr.f32.gmra.mrb[0].mxu0 %v126
  %v395 = vpop.f32.mrb[0].mxu0
  %v396 = vadd.f32 0.0, %v395
  %v397 = vpop.f32.mrb[0].mxu0
  %398 = vmatprep.mubr.f32.mxu0 0.0
  %399 = vmatmul.mubr.f32.gmra.mrb[0].mxu0 %v129
  %v400 = vpop.f32.mrb[0].mxu0
  %v401 = vadd.f32 0.0, %v400
  %v402 = vpop.f32.mrb[0].mxu0
  %403 = vmatprep.mubr.f32.mxu0 0.0
  %404 = vmatmul.mubr.f32.gmra.mrb[0].mxu0 %v132
  %v405 = vpop.f32.mrb[0].mxu0
  %v406 = vadd.f32 0.0, %v405
  %v407 = vpop.f32.mrb[0].mxu0
  %408 = vmatprep.mubr.f32.mxu0 0.0
  %409 = vmatmul.mubr.f32.gmra.mrb[0].mxu0 %v135
  %v410 = vpop.f32.mrb[0].mxu0
  %v411 = vadd.f32 0.0, %v410
  %v412 = vpop.f32.mrb[0].mxu0
  %413 = vmatprep.mubr.f32.mxu0 0.0
  %414 = vmatmul.mubr.f32.gmra.mrb[0].mxu0 %v138
  %v415 = vpop.f32.mrb[0].mxu0
  %v416 = vadd.f32 0.0, %v415
  %v417 = vpop.f32.mrb[0].mxu0
  %418 = vmatprep.mubr.f32.mxu0 0.0
  %419 = vmatmul.mubr.f32.gmra.mrb[0].mxu0 %v141
  %v420 = vpop.f32.mrb[0].mxu0
  %v421 = vadd.f32 0.0, %v420
  %v422 = vpop.f32.mrb[0].mxu0
  %423 = vmatprep.mubr.f32.mxu0 0.0
  %424 = vmatmul.mubr.f32.gmra.mrb[0].mxu0 %v144
  %v425 = vpop.f32.mrb[0].mxu0
  %v426 = vadd.f32 0.0, %v425
  %v427 = vpop.f32.mrb[0].mxu0
  %428 = vmatprep.mubr.f32.mxu0 0.0
  %429 = vmatmul.mubr.f32.gmra.mrb[0].mxu0 %v147
  %v430 = vpop.f32.mrb[0].mxu0
  %v431 = vadd.f32 0.0, %v430
  %v432 = vpop.f32.mrb[0].mxu0
  %433 = vmatprep.mubr.f32.mxu0 0.0
  %434 = vmatmul.mubr.f32.gmra.mrb[0].mxu0 %v150
  %v435 = vpop.f32.mrb[0].mxu0
  %v436 = vadd.f32 0.0, %v435
  %v437 = vpop.f32.mrb[0].mxu0
  %438 = vmatprep.mubr.f32.mxu0 0.0
  %439 = vmatmul.mubr.f32.gmra.mrb[0].mxu0 %v153
  %v440 = vpop.f32.mrb[0].mxu0
  %v441 = vadd.f32 0.0, %v440
  %v442 = vpop.f32.mrb[0].mxu0
  %443 = vmatprep.mubr.f32.mxu0 0.0
  %444 = vmatmul.mubr.f32.gmra.mrb[0].mxu0 %v156
  %v445 = vpop.f32.mrb[0].mxu0
  %v446 = vadd.f32 0.0, %v445
  %v447 = vpop.f32.mrb[0].mxu0
  %448 = vmatprep.mubr.f32.mxu0 0.0
  %449 = vmatmul.mubr.f32.gmra.mrb[0].mxu0 %v159
  %v450 = vpop.f32.mrb[0].mxu0
  %v451 = vadd.f32 0.0, %v450
  %v452 = vpop.f32.mrb[0].mxu0
  %453 = vmatprep.mubr.f32.mxu0 0.0
  %454 = vmatmul.mubr.f32.gmra.mrb[0].mxu0 %v162
  %v455 = vpop.f32.mrb[0].mxu0
  %v456 = vadd.f32 0.0, %v455
  %v457 = vpop.f32.mrb[0].mxu0
  %458 = vmatprep.mubr.f32.mxu0 0.0
  %459 = vmatmul.mubr.f32.gmra.mrb[0].mxu0 %v165
  %v460 = vpop.f32.mrb[0].mxu0
  %v461 = vadd.f32 0.0, %v460
  %v462 = vpop.f32.mrb[0].mxu0
  %463 = vmatprep.mubr.f32.mxu0 0.0
  %464 = vmatmul.mubr.f32.gmra.mrb[0].mxu0 %v168
  %v465 = vpop.f32.mrb[0].mxu0
  %v466 = vadd.f32 0.0, %v465
  %v467 = vpop.f32.mrb[0].mxu0
  %468 = vmatprep.mubr.f32.mxu0 0.0
  %469 = vmatmul.mubr.f32.gmra.mrb[0].mxu0 %v171
  %v470 = vpop.f32.mrb[0].mxu0
  %v471 = vadd.f32 0.0, %v470
  %v472 = vpop.f32.mrb[0].mxu0
  %473 = vmatprep.mubr.f32.mxu0 0.0
  %474 = vmatmul.mubr.f32.gmra.mrb[0].mxu0 %v174
  %v475 = vpop.f32.mrb[0].mxu0
  %v476 = vadd.f32 0.0, %v475
  %v477 = vpop.f32.mrb[0].mxu0
  %478 = vmatprep.mubr.f32.mxu0 0.0
  %479 = vmatmul.mubr.f32.gmra.mrb[0].mxu0 %v177
  %v480 = vpop.f32.mrb[0].mxu0
  %v481 = vadd.f32 0.0, %v480
  %v482 = vpop.f32.mrb[0].mxu0
  %483 = vmatprep.mubr.f32.mxu0 0.0
  %484 = vmatmul.mubr.f32.gmra.mrb[0].mxu0 %v180
  %v485 = vpop.f32.mrb[0].mxu0
  %v486 = vadd.f32 0.0, %v485
  %v487 = vpop.f32.mrb[0].mxu0
  %488 = vmatprep.mubr.f32.mxu0 0.0
  %489 = vmatmul.mubr.f32.gmra.mrb[0].mxu0 %v183
  %v490 = vpop.f32.mrb[0].mxu0
  %v491 = vadd.f32 0.0, %v490
  %v492 = vpop.f32.mrb[0].mxu0
  %493 = vmatprep.mubr.f32.mxu0 0.0
  %494 = vmatmul.mubr.f32.gmra.mrb[0].mxu0 %v186
  %v495 = vpop.f32.mrb[0].mxu0
  %v496 = vadd.f32 0.0, %v495
  %v497 = vpop.f32.mrb[0].mxu0
  %498 = vmatprep.mubr.f32.mxu0 0.0
  %499 = vmatmul.mubr.f32.gmra.mrb[0].mxu0 %v189
  %v500 = vpop.f32.mrb[0].mxu0
  %v501 = vadd.f32 0.0, %v500
  %v502 = vpop.f32.mrb[0].mxu0
  %503 = vmatprep.mubr.f32.mxu0 0.0
  %504 = vmatmul.mubr.f32.gmra.mrb[0].mxu0 %v192
  %v505 = vpop.f32.mrb[0].mxu0
  %v506 = vadd.f32 0.0, %v505
  %v507 = vpop.f32.mrb[0].mxu0
  %508 = vmatprep.mubr.f32.mxu0 0.0
  %509 = vmatmul.mubr.f32.gmra.mrb[0].mxu0 %v195
  %v510 = vpop.f32.mrb[0].mxu0
  %v511 = vadd.f32 0.0, %v510
  %v512 = vpop.f32.mrb[0].mxu0
  %513 = vmatprep.mubr.f32.mxu0 0.0
  %514 = vmatmul.mubr.f32.gmra.mrb[0].mxu0 %v198
  %v515 = vpop.f32.mrb[0].mxu0
  %v516 = vadd.f32 0.0, %v515
  %v517 = vpop.f32.mrb[0].mxu0
  %518 = vmatprep.mubr.f32.mxu0 0.0
  %519 = vmatmul.mubr.f32.gmra.mrb[0].mxu0 %v201
  %v520 = vpop.f32.mrb[0].mxu0
  %v521 = vadd.f32 0.0, %v520
  %v522 = vpop.f32.mrb[0].mxu0
  %523 = vmatprep.mubr.f32.mxu0 0.0
  %524 = vmatmul.mubr.f32.gmra.mrb[0].mxu0 %v204
  %v525 = vpop.f32.mrb[0].mxu0
  %v526 = vadd.f32 0.0, %v525
  %v527 = vpop.f32.mrb[0].mxu0
  %528 = vmatprep.mubr.f32.mxu0 0.0
  %529 = vmatmul.mubr.f32.gmra.mrb[0].mxu0 %v207
  %v530 = vpop.f32.mrb[0].mxu0
  %v531 = vadd.f32 0.0, %v530
  %v532 = vpop.f32.mrb[0].mxu0
  %533 = vmatprep.mubr.f32.mxu0 0.0
  %534 = vmatmul.mubr.f32.gmra.mrb[0].mxu0 %v210
  %v535 = vpop.f32.mrb[0].mxu0
  %v536 = vadd.f32 0.0, %v535
  %v537 = vpop.f32.mrb[0].mxu0
  %538 = vmatprep.mubr.f32.mxu0 0.0
  %539 = vmatmul.mubr.f32.gmra.mrb[0].mxu0 %v213
  %v540 = vpop.f32.mrb[0].mxu0
  %v541 = vadd.f32 0.0, %v540
  %v542 = vpop.f32.mrb[0].mxu0
  %543 = vmatprep.mubr.f32.mxu0 0.0
  %544 = vmatmul.mubr.f32.gmra.mrb[0].mxu0 %v216
  %v545 = vpop.f32.mrb[0].mxu0
  %v546 = vadd.f32 0.0, %v545
  %v547 = vpop.f32.mrb[0].mxu0
  %548 = vmatprep.mubr.f32.mxu0 0.0
  %549 = vmatmul.mubr.f32.gmra.mrb[0].mxu0 %v219
  %v550 = vpop.f32.mrb[0].mxu0
  %v551 = vadd.f32 0.0, %v550
  %v552 = vpop.f32.mrb[0].mxu0
  %553 = vmatprep.mubr.f32.mxu0 0.0
  %554 = vmatmul.mubr.f32.gmra.mrb[0].mxu0 %v222
  %v555 = vpop.f32.mrb[0].mxu0
  %v556 = vadd.f32 0.0, %v555
  %v557 = vpop.f32.mrb[0].mxu0
  %558 = vmatprep.mubr.f32.mxu0 0.0
  %559 = vmatmul.mubr.f32.gmra.mrb[0].mxu0 %v225
  %v560 = vpop.f32.mrb[0].mxu0
  %v561 = vadd.f32 0.0, %v560
  %v562 = vpop.f32.mrb[0].mxu0
  %563 = vmatprep.mubr.f32.mxu0 0.0
  %564 = vmatmul.mubr.f32.gmra.mrb[0].mxu0 %v228
  %v565 = vpop.f32.mrb[0].mxu0
  %v566 = vadd.f32 0.0, %v565
  %v567 = vpop.f32.mrb[0].mxu0
  %568 = vmatprep.mubr.f32.mxu0 0.0
  %569 = vmatmul.mubr.f32.gmra.mrb[0].mxu0 %v231
  %v570 = vpop.f32.mrb[0].mxu0
  %v571 = vadd.f32 0.0, %v570
  %v572 = vpop.f32.mrb[0].mxu0
  %573 = vmatprep.mubr.f32.mxu0 0.0
  %574 = vmatmul.mubr.f32.gmra.mrb[0].mxu0 %v234
  %v575 = vpop.f32.mrb[0].mxu0
  %v576 = vadd.f32 0.0, %v575
  %v577 = vpop.f32.mrb[0].mxu0
  %578 = vmatprep.mubr.f32.mxu0 0.0
  %579 = vmatmul.mubr.f32.gmra.mrb[0].mxu0 %v237
  %v580 = vpop.f32.mrb[0].mxu0
  %v581 = vadd.f32 0.0, %v580
  %v582 = vpop.f32.mrb[0].mxu0
  %583 = vmatprep.mubr.f32.mxu0 0.0
  %584 = vmatmul.mubr.f32.gmra.mrb[0].mxu0 %v240
  %v585 = vpop.f32.mrb[0].mxu0
  %v586 = vadd.f32 0.0, %v585
  %v587 = vpop.f32.mrb[0].mxu0
  %588 = vmatprep.mubr.f32.mxu0 0.0
  %589 = vmatmul.mubr.f32.gmra.mrb[0].mxu0 %v243
  %v590 = vpop.f32.mrb[0].mxu0
  %v591 = vadd.f32 0.0, %v590
  %v592 = vpop.f32.mrb[0].mxu0
  %593 = vmatprep.mubr.f32.mxu0 0.0
  %594 = vmatmul.mubr.f32.gmra.mrb[0].mxu0 %v246
  %v595 = vpop.f32.mrb[0].mxu0
  %v596 = vadd.f32 0.0, %v595
  %v597 = vpop.f32.mrb[0].mxu0
  %598 = vmatprep.mubr.f32.mxu0 0.0
  %599 = vmatmul.mubr.f32.gmra.mrb[0].mxu0 %v249
  %v600 = vpop.f32.mrb[0].mxu0
  %v601 = vadd.f32 0.0, %v600
  %v602 = vpop.f32.mrb[0].mxu0
  %603 = vmatprep.mubr.f32.mxu0 0.0
  %604 = vmatmul.mubr.f32.gmra.mrb[0].mxu0 %v252
  %v605 = vpop.f32.mrb[0].mxu0
  %v606 = vadd.f32 0.0, %v605
  %v607 = vpop.f32.mrb[0].mxu0
  %608 = vmatprep.mubr.f32.mxu0 0.0
  %609 = vmatmul.mubr.f32.gmra.mrb[0].mxu0 %v255
  %v610 = vpop.f32.mrb[0].mxu0
  %v611 = vadd.f32 0.0, %v610
  %v612 = vpop.f32.mrb[0].mxu0
  %613 = vmatprep.mubr.f32.mxu0 0.0
  %614 = vmatmul.mubr.f32.gmra.mrb[0].mxu0 %v258
  %v615 = vpop.f32.mrb[0].mxu0
  %v616 = vadd.f32 0.0, %v615
  %v617 = vpop.f32.mrb[0].mxu0
  %618 = vmatprep.mubr.f32.mxu0 0.0
  %619 = vmatmul.mubr.f32.gmra.mrb[0].mxu0 %v261
  %v620 = vpop.f32.mrb[0].mxu0
  %v621 = vadd.f32 0.0, %v620
  %v622 = vpop.f32.mrb[0].mxu0
  %623 = vmatprep.mubr.f32.mxu0 0.0
  %624 = vmatmul.mubr.f32.gmra.mrb[0].mxu0 %v264
  %v625 = vpop.f32.mrb[0].mxu0
  %v626 = vadd.f32 0.0, %v625
  %v627 = vpop.f32.mrb[0].mxu0
  %628 = vmatprep.mubr.f32.mxu0 0.0
  %629 = vmatmul.mubr.f32.gmra.mrb[0].mxu0 %v267
  %v630 = vpop.f32.mrb[0].mxu0
  %v631 = vadd.f32 0.0, %v630
  %v632 = vpop.f32.mrb[0].mxu0
  %633 = vmatprep.mubr.f32.mxu0 0.0
  %634 = vmatmul.mubr.f32.gmra.mrb[0].mxu0 %v270
  %v635 = vpop.f32.mrb[0].mxu0
  %v636 = vadd.f32 0.0, %v635
  %v637 = vpop.f32.mrb[0].mxu0
  %638 = vmatprep.mubr.f32.mxu0 0.0
  %639 = vmatmul.mubr.f32.gmra.mrb[0].mxu0 %v273
  %v640 = vpop.f32.mrb[0].mxu0
  %v641 = vadd.f32 0.0, %v640
  %v642 = vpop.f32.mrb[0].mxu0
  %643 = vmatprep.mubr.f32.mxu0 0.0
  %644 = vmatmul.mubr.f32.gmra.mrb[0].mxu0 %v276
  %v645 = vpop.f32.mrb[0].mxu0
  %v646 = vadd.f32 0.0, %v645
  %v647 = vpop.f32.mrb[0].mxu0
  %648 = vmatprep.mubr.f32.mxu0 0.0
  %649 = vmatmul.mubr.f32.gmra.mrb[0].mxu0 %v279
  %v650 = vpop.f32.mrb[0].mxu0
  %v651 = vadd.f32 0.0, %v650
  %v652 = vpop.f32.mrb[0].mxu0
  %653 = vmatprep.mubr.f32.mxu0 0.0
  %654 = vmatmul.mubr.f32.gmra.mrb[0].mxu0 %v282
  %v655 = vpop.f32.mrb[0].mxu0
  %v656 = vadd.f32 0.0, %v655
  %v657 = vpop.f32.mrb[0].mxu0
  %658 = vmatprep.mubr.f32.mxu0 0.0
  %659 = vmatmul.mubr.f32.gmra.mrb[0].mxu0 %v285
  %v660 = vpop.f32.mrb[0].mxu0
  %v661 = vadd.f32 0.0, %v660
  %v662 = vpop.f32.mrb[0].mxu0
  %663 = vmatprep.mubr.f32.mxu0 0.0
  %664 = vmatmul.mubr.f32.gmra.mrb[0].mxu0 %v288
  %v665 = vpop.f32.mrb[0].mxu0
  %v666 = vadd.f32 0.0, %v665
  %v667 = vpop.f32.mrb[0].mxu0
  %668 = vmatprep.mubr.f32.mxu0 0.0
  %669 = vmatmul.mubr.f32.gmra.mrb[0].mxu0 %v291
  %v670 = vpop.f32.mrb[0].mxu0
  %v671 = vadd.f32 0.0, %v670
  %v672 = vpop.f32.mrb[0].mxu0
  %673 = vmatprep.mubr.f32.mxu0 0.0
  %674 = vmatmul.mubr.f32.gmra.mrb[0].mxu0 %v294
  %v675 = vpop.f32.mrb[0].mxu0
  %v676 = vadd.f32 0.0, %v675
  %v677 = vpop.f32.mrb[0].mxu0
  %678 = vmatprep.mubr.f32.mxu0 0.0
  %679 = vmatmul.mubr.f32.gmra.mrb[0].mxu0 %v297
  %v680 = vpop.f32.mrb[0].mxu0
  %v681 = vadd.f32 0.0, %v680
  %v682 = vpop.f32.mrb[0].mxu0
  %683 = vmatprep.mubr.f32.mxu0 0.0
  %684 = vmatmul.mubr.f32.gmra.mrb[0].mxu0 %v300
  %v685 = vpop.f32.mrb[0].mxu0
  %v686 = vadd.f32 0.0, %v685
  %v687 = vpop.f32.mrb[0].mxu0
  %688 = vmatprep.mubr.f32.mxu0 0.0
  %689 = vmatmul.mubr.f32.gmra.mrb[0].mxu0 %v303
  %v690 = vpop.f32.mrb[0].mxu0
  %v691 = vadd.f32 0.0, %v690
  %v692 = vpop.f32.mrb[0].mxu0
  %693 = vdwg.mxu0
  %v694 = vld [vmem:[%s2] sm:$0x1]
  %v695 = vld [vmem:[%s3] sm:$0x1]
  %vm696 = vcmask 130048
  %v697 = vsel %vm696, %v376, 0.0
  %v698 = vsel %vm696, %v381, 0.0
  %v699 = vadd.f32 %v697, %v698
  %v700 = vsel %vm696, %v386, 0.0
  %v701 = vadd.f32 %v699, %v700
  %v702 = vsel %vm696, %v391, 0.0
  %v703 = vadd.f32 %v701, %v702
  %v704 = vsel %vm696, %v396, 0.0
  %v705 = vadd.f32 %v703, %v704
  %v706 = vsel %vm696, %v401, 0.0
  %v707 = vadd.f32 %v705, %v706
  %v708 = vsel %vm696, %v406, 0.0
  %v709 = vadd.f32 %v707, %v708
  %v710 = vsel %vm696, %v411, 0.0
  %v711 = vadd.f32 %v709, %v710
  %v712 = vsel %vm696, %v416, 0.0
  %v713 = vadd.f32 %v711, %v712
  %v714 = vsel %vm696, %v421, 0.0
  %v715 = vadd.f32 %v713, %v714
  %v716 = vsel %vm696, %v426, 0.0
  %v717 = vadd.f32 %v715, %v716
  %v718 = vsel %vm696, %v431, 0.0
  %v719 = vadd.f32 %v717, %v718
  %v720 = vsel %vm696, %v436, 0.0
  %v721 = vadd.f32 %v719, %v720
  %v722 = vsel %vm696, %v441, 0.0
  %v723 = vadd.f32 %v721, %v722
  %v724 = vsel %vm696, %v446, 0.0
  %v725 = vadd.f32 %v723, %v724
  %v726 = vsel %vm696, %v451, 0.0
  %v727 = vadd.f32 %v725, %v726
  %v728 = vsel %vm696, %v456, 0.0
  %v729 = vadd.f32 %v727, %v728
  %v730 = vsel %vm696, %v461, 0.0
  %v731 = vadd.f32 %v729, %v730
  %v732 = vsel %vm696, %v466, 0.0
  %v733 = vadd.f32 %v731, %v732
  %v734 = vsel %vm696, %v471, 0.0
  %v735 = vadd.f32 %v733, %v734
  %v736 = vsel %vm696, %v476, 0.0
  %v737 = vadd.f32 %v735, %v736
  %v738 = vsel %vm696, %v481, 0.0
  %v739 = vadd.f32 %v737, %v738
  %v740 = vsel %vm696, %v486, 0.0
  %v741 = vadd.f32 %v739, %v740
  %v742 = vsel %vm696, %v491, 0.0
  %v743 = vadd.f32 %v741, %v742
  %v744 = vsel %vm696, %v496, 0.0
  %v745 = vadd.f32 %v743, %v744
  %v746 = vsel %vm696, %v501, 0.0
  %v747 = vadd.f32 %v745, %v746
  %v748 = vsel %vm696, %v506, 0.0
  %v749 = vadd.f32 %v747, %v748
  %v750 = vsel %vm696, %v511, 0.0
  %v751 = vadd.f32 %v749, %v750
  %v752 = vsel %vm696, %v516, 0.0
  %v753 = vadd.f32 %v751, %v752
  %v754 = vsel %vm696, %v521, 0.0
  %v755 = vadd.f32 %v753, %v754
  %v756 = vsel %vm696, %v526, 0.0
  %v757 = vadd.f32 %v755, %v756
  %v758 = vsel %vm696, %v531, 0.0
  %v759 = vadd.f32 %v757, %v758
  %v760 = vsel %vm696, %v536, 0.0
  %v761 = vadd.f32 %v759, %v760
  %v762 = vsel %vm696, %v541, 0.0
  %v763 = vadd.f32 %v761, %v762
  %v764 = vsel %vm696, %v546, 0.0
  %v765 = vadd.f32 %v763, %v764
  %v766 = vsel %vm696, %v551, 0.0
  %v767 = vadd.f32 %v765, %v766
  %v768 = vsel %vm696, %v556, 0.0
  %v769 = vadd.f32 %v767, %v768
  %v770 = vsel %vm696, %v561, 0.0
  %v771 = vadd.f32 %v769, %v770
  %v772 = vsel %vm696, %v566, 0.0
  %v773 = vadd.f32 %v771, %v772
  %v774 = vsel %vm696, %v571, 0.0
  %v775 = vadd.f32 %v773, %v774
  %v776 = vsel %vm696, %v576, 0.0
  %v777 = vadd.f32 %v775, %v776
  %v778 = vsel %vm696, %v581, 0.0
  %v779 = vadd.f32 %v777, %v778
  %v780 = vsel %vm696, %v586, 0.0
  %v781 = vadd.f32 %v779, %v780
  %v782 = vsel %vm696, %v591, 0.0
  %v783 = vadd.f32 %v781, %v782
  %v784 = vsel %vm696, %v596, 0.0
  %v785 = vadd.f32 %v783, %v784
  %v786 = vsel %vm696, %v601, 0.0
  %v787 = vadd.f32 %v785, %v786
  %v788 = vsel %vm696, %v606, 0.0
  %v789 = vadd.f32 %v787, %v788
  %v790 = vsel %vm696, %v611, 0.0
  %v791 = vadd.f32 %v789, %v790
  %v792 = vsel %vm696, %v616, 0.0
  %v793 = vadd.f32 %v791, %v792
  %v794 = vsel %vm696, %v621, 0.0
  %v795 = vadd.f32 %v793, %v794
  %v796 = vsel %vm696, %v626, 0.0
  %v797 = vadd.f32 %v795, %v796
  %v798 = vsel %vm696, %v631, 0.0
  %v799 = vadd.f32 %v797, %v798
  %v800 = vsel %vm696, %v636, 0.0
  %v801 = vadd.f32 %v799, %v800
  %v802 = vsel %vm696, %v641, 0.0
  %v803 = vadd.f32 %v801, %v802
  %v804 = vsel %vm696, %v646, 0.0
  %v805 = vadd.f32 %v803, %v804
  %v806 = vsel %vm696, %v651, 0.0
  %v807 = vadd.f32 %v805, %v806
  %v808 = vsel %vm696, %v656, 0.0
  %v809 = vadd.f32 %v807, %v808
  %v810 = vsel %vm696, %v661, 0.0
  %v811 = vadd.f32 %v809, %v810
  %v812 = vsel %vm696, %v666, 0.0
  %v813 = vadd.f32 %v811, %v812
  %v814 = vsel %vm696, %v671, 0.0
  %v815 = vadd.f32 %v813, %v814
  %v816 = vsel %vm696, %v676, 0.0
  %v817 = vadd.f32 %v815, %v816
  %v818 = vsel %vm696, %v681, 0.0
  %v819 = vadd.f32 %v817, %v818
  %v820 = vsel %vm696, %v686, 0.0
  %v821 = vadd.f32 %v819, %v820
  %v822 = vsel %vm696, %v691, 0.0
  %v823 = vadd.f32 %v821, %v822
  %v824 = vrot.slane %v823, 4
  %v825 = vadd.f32 %v823, %v824
  %v826 = vrot.slane %v825, 2
  %v827 = vadd.f32 %v825, %v826
  %v828 = vrot.slane %v827, 1
  %v829 = vadd.f32 %v827, %v828
  %v830 = vrcp.pop 512.0
  %v831 = vmul.f32 %v829, %v830
  %v832 = vsub.f32 %v376, %v831
  %v833 = vsub.f32 %v381, %v831
  %v834 = vsub.f32 %v386, %v831
  %v835 = vsub.f32 %v391, %v831
  %v836 = vsub.f32 %v396, %v831
  %v837 = vsub.f32 %v401, %v831
  %v838 = vsub.f32 %v406, %v831
  %v839 = vsub.f32 %v411, %v831
  %v840 = vsub.f32 %v416, %v831
  %v841 = vsub.f32 %v421, %v831
  %v842 = vsub.f32 %v426, %v831
  %v843 = vsub.f32 %v431, %v831
  %v844 = vsub.f32 %v436, %v831
  %v845 = vsub.f32 %v441, %v831
  %v846 = vsub.f32 %v446, %v831
  %v847 = vsub.f32 %v451, %v831
  %v848 = vsub.f32 %v456, %v831
  %v849 = vsub.f32 %v461, %v831
  %v850 = vsub.f32 %v466, %v831
  %v851 = vsub.f32 %v471, %v831
  %v852 = vsub.f32 %v476, %v831
  %v853 = vsub.f32 %v481, %v831
  %v854 = vsub.f32 %v486, %v831
  %v855 = vsub.f32 %v491, %v831
  %v856 = vsub.f32 %v496, %v831
  %v857 = vsub.f32 %v501, %v831
  %v858 = vsub.f32 %v506, %v831
  %v859 = vsub.f32 %v511, %v831
  %v860 = vsub.f32 %v516, %v831
  %v861 = vsub.f32 %v521, %v831
  %v862 = vsub.f32 %v526, %v831
  %v863 = vsub.f32 %v531, %v831
  %v864 = vsub.f32 %v536, %v831
  %v865 = vsub.f32 %v541, %v831
  %v866 = vsub.f32 %v546, %v831
  %v867 = vsub.f32 %v551, %v831
  %v868 = vsub.f32 %v556, %v831
  %v869 = vsub.f32 %v561, %v831
  %v870 = vsub.f32 %v566, %v831
  %v871 = vsub.f32 %v571, %v831
  %v872 = vsub.f32 %v576, %v831
  %v873 = vsub.f32 %v581, %v831
  %v874 = vsub.f32 %v586, %v831
  %v875 = vsub.f32 %v591, %v831
  %v876 = vsub.f32 %v596, %v831
  %v877 = vsub.f32 %v601, %v831
  %v878 = vsub.f32 %v606, %v831
  %v879 = vsub.f32 %v611, %v831
  %v880 = vsub.f32 %v616, %v831
  %v881 = vsub.f32 %v621, %v831
  %v882 = vsub.f32 %v626, %v831
  %v883 = vsub.f32 %v631, %v831
  %v884 = vsub.f32 %v636, %v831
  %v885 = vsub.f32 %v641, %v831
  %v886 = vsub.f32 %v646, %v831
  %v887 = vsub.f32 %v651, %v831
  %v888 = vsub.f32 %v656, %v831
  %v889 = vsub.f32 %v661, %v831
  %v890 = vsub.f32 %v666, %v831
  %v891 = vsub.f32 %v671, %v831
  %v892 = vsub.f32 %v676, %v831
  %v893 = vsub.f32 %v681, %v831
  %v894 = vsub.f32 %v686, %v831
  %v895 = vsub.f32 %v691, %v831
  %v896 = vmul.f32 %v832, %v832
  %v897 = vmul.f32 %v833, %v833
  %v898 = vmul.f32 %v834, %v834
  %v899 = vmul.f32 %v835, %v835
  %v900 = vmul.f32 %v836, %v836
  %v901 = vmul.f32 %v837, %v837
  %v902 = vmul.f32 %v838, %v838
  %v903 = vmul.f32 %v839, %v839
  %v904 = vmul.f32 %v840, %v840
  %v905 = vmul.f32 %v841, %v841
  %v906 = vmul.f32 %v842, %v842
  %v907 = vmul.f32 %v843, %v843
  %v908 = vmul.f32 %v844, %v844
  %v909 = vmul.f32 %v845, %v845
  %v910 = vmul.f32 %v846, %v846
  %v911 = vmul.f32 %v847, %v847
  %v912 = vmul.f32 %v848, %v848
  %v913 = vmul.f32 %v849, %v849
  %v914 = vmul.f32 %v850, %v850
  %v915 = vmul.f32 %v851, %v851
  %v916 = vmul.f32 %v852, %v852
  %v917 = vmul.f32 %v853, %v853
  %v918 = vmul.f32 %v854, %v854
  %v919 = vmul.f32 %v855, %v855
  %v920 = vmul.f32 %v856, %v856
  %v921 = vmul.f32 %v857, %v857
  %v922 = vmul.f32 %v858, %v858
  %v923 = vmul.f32 %v859, %v859
  %v924 = vmul.f32 %v860, %v860
  %v925 = vmul.f32 %v861, %v861
  %v926 = vmul.f32 %v862, %v862
  %v927 = vmul.f32 %v863, %v863
  %v928 = vmul.f32 %v864, %v864
  %v929 = vmul.f32 %v865, %v865
  %v930 = vmul.f32 %v866, %v866
  %v931 = vmul.f32 %v867, %v867
  %v932 = vmul.f32 %v868, %v868
  %v933 = vmul.f32 %v869, %v869
  %v934 = vmul.f32 %v870, %v870
  %v935 = vmul.f32 %v871, %v871
  %v936 = vmul.f32 %v872, %v872
  %v937 = vmul.f32 %v873, %v873
  %v938 = vmul.f32 %v874, %v874
  %v939 = vmul.f32 %v875, %v875
  %v940 = vmul.f32 %v876, %v876
  %v941 = vmul.f32 %v877, %v877
  %v942 = vmul.f32 %v878, %v878
  %v943 = vmul.f32 %v879, %v879
  %v944 = vmul.f32 %v880, %v880
  %v945 = vmul.f32 %v881, %v881
  %v946 = vmul.f32 %v882, %v882
  %v947 = vmul.f32 %v883, %v883
  %v948 = vmul.f32 %v884, %v884
  %v949 = vmul.f32 %v885, %v885
  %v950 = vmul.f32 %v886, %v886
  %v951 = vmul.f32 %v887, %v887
  %v952 = vmul.f32 %v888, %v888
  %v953 = vmul.f32 %v889, %v889
  %v954 = vmul.f32 %v890, %v890
  %v955 = vmul.f32 %v891, %v891
  %v956 = vmul.f32 %v892, %v892
  %v957 = vmul.f32 %v893, %v893
  %v958 = vmul.f32 %v894, %v894
  %v959 = vmul.f32 %v895, %v895
  %v960 = vsel %vm696, %v896, 0.0
  %v961 = vsel %vm696, %v897, 0.0
  %v962 = vadd.f32 %v960, %v961
  %v963 = vsel %vm696, %v898, 0.0
  %v964 = vadd.f32 %v962, %v963
  %v965 = vsel %vm696, %v899, 0.0
  %v966 = vadd.f32 %v964, %v965
  %v967 = vsel %vm696, %v900, 0.0
  %v968 = vadd.f32 %v966, %v967
  %v969 = vsel %vm696, %v901, 0.0
  %v970 = vadd.f32 %v968, %v969
  %v971 = vsel %vm696, %v902, 0.0
  %v972 = vadd.f32 %v970, %v971
  %v973 = vsel %vm696, %v903, 0.0
  %v974 = vadd.f32 %v972, %v973
  %v975 = vsel %vm696, %v904, 0.0
  %v976 = vadd.f32 %v974, %v975
  %v977 = vsel %vm696, %v905, 0.0
  %v978 = vadd.f32 %v976, %v977
  %v979 = vsel %vm696, %v906, 0.0
  %v980 = vadd.f32 %v978, %v979
  %v981 = vsel %vm696, %v907, 0.0
  %v982 = vadd.f32 %v980, %v981
  %v983 = vsel %vm696, %v908, 0.0
  %v984 = vadd.f32 %v982, %v983
  %v985 = vsel %vm696, %v909, 0.0
  %v986 = vadd.f32 %v984, %v985
  %v987 = vsel %vm696, %v910, 0.0
  %v988 = vadd.f32 %v986, %v987
  %v989 = vsel %vm696, %v911, 0.0
  %v990 = vadd.f32 %v988, %v989
  %v991 = vsel %vm696, %v912, 0.0
  %v992 = vadd.f32 %v990, %v991
  %v993 = vsel %vm696, %v913, 0.0
  %v994 = vadd.f32 %v992, %v993
  %v995 = vsel %vm696, %v914, 0.0
  %v996 = vadd.f32 %v994, %v995
  %v997 = vsel %vm696, %v915, 0.0
  %v998 = vadd.f32 %v996, %v997
  %v999 = vsel %vm696, %v916, 0.0
  %v1000 = vadd.f32 %v998, %v999
  %v1001 = vsel %vm696, %v917, 0.0
  %v1002 = vadd.f32 %v1000, %v1001
  %v1003 = vsel %vm696, %v918, 0.0
  %v1004 = vadd.f32 %v1002, %v1003
  %v1005 = vsel %vm696, %v919, 0.0
  %v1006 = vadd.f32 %v1004, %v1005
  %v1007 = vsel %vm696, %v920, 0.0
  %v1008 = vadd.f32 %v1006, %v1007
  %v1009 = vsel %vm696, %v921, 0.0
  %v1010 = vadd.f32 %v1008, %v1009
  %v1011 = vsel %vm696, %v922, 0.0
  %v1012 = vadd.f32 %v1010, %v1011
  %v1013 = vsel %vm696, %v923, 0.0
  %v1014 = vadd.f32 %v1012, %v1013
  %v1015 = vsel %vm696, %v924, 0.0
  %v1016 = vadd.f32 %v1014, %v1015
  %v1017 = vsel %vm696, %v925, 0.0
  %v1018 = vadd.f32 %v1016, %v1017
  %v1019 = vsel %vm696, %v926, 0.0
  %v1020 = vadd.f32 %v1018, %v1019
  %v1021 = vsel %vm696, %v927, 0.0
  %v1022 = vadd.f32 %v1020, %v1021
  %v1023 = vsel %vm696, %v928, 0.0
  %v1024 = vadd.f32 %v1022, %v1023
  %v1025 = vsel %vm696, %v929, 0.0
  %v1026 = vadd.f32 %v1024, %v1025
  %v1027 = vsel %vm696, %v930, 0.0
  %v1028 = vadd.f32 %v1026, %v1027
  %v1029 = vsel %vm696, %v931, 0.0
  %v1030 = vadd.f32 %v1028, %v1029
  %v1031 = vsel %vm696, %v932, 0.0
  %v1032 = vadd.f32 %v1030, %v1031
  %v1033 = vsel %vm696, %v933, 0.0
  %v1034 = vadd.f32 %v1032, %v1033
  %v1035 = vsel %vm696, %v934, 0.0
  %v1036 = vadd.f32 %v1034, %v1035
  %v1037 = vsel %vm696, %v935, 0.0
  %v1038 = vadd.f32 %v1036, %v1037
  %v1039 = vsel %vm696, %v936, 0.0
  %v1040 = vadd.f32 %v1038, %v1039
  %v1041 = vsel %vm696, %v937, 0.0
  %v1042 = vadd.f32 %v1040, %v1041
  %v1043 = vsel %vm696, %v938, 0.0
  %v1044 = vadd.f32 %v1042, %v1043
  %v1045 = vsel %vm696, %v939, 0.0
  %v1046 = vadd.f32 %v1044, %v1045
  %v1047 = vsel %vm696, %v940, 0.0
  %v1048 = vadd.f32 %v1046, %v1047
  %v1049 = vsel %vm696, %v941, 0.0
  %v1050 = vadd.f32 %v1048, %v1049
  %v1051 = vsel %vm696, %v942, 0.0
  %v1052 = vadd.f32 %v1050, %v1051
  %v1053 = vsel %vm696, %v943, 0.0
  %v1054 = vadd.f32 %v1052, %v1053
  %v1055 = vsel %vm696, %v944, 0.0
  %v1056 = vadd.f32 %v1054, %v1055
  %v1057 = vsel %vm696, %v945, 0.0
  %v1058 = vadd.f32 %v1056, %v1057
  %v1059 = vsel %vm696, %v946, 0.0
  %v1060 = vadd.f32 %v1058, %v1059
  %v1061 = vsel %vm696, %v947, 0.0
  %v1062 = vadd.f32 %v1060, %v1061
  %v1063 = vsel %vm696, %v948, 0.0
  %v1064 = vadd.f32 %v1062, %v1063
  %v1065 = vsel %vm696, %v949, 0.0
  %v1066 = vadd.f32 %v1064, %v1065
  %v1067 = vsel %vm696, %v950, 0.0
  %v1068 = vadd.f32 %v1066, %v1067
  %v1069 = vsel %vm696, %v951, 0.0
  %v1070 = vadd.f32 %v1068, %v1069
  %v1071 = vsel %vm696, %v952, 0.0
  %v1072 = vadd.f32 %v1070, %v1071
  %v1073 = vsel %vm696, %v953, 0.0
  %v1074 = vadd.f32 %v1072, %v1073
  %v1075 = vsel %vm696, %v954, 0.0
  %v1076 = vadd.f32 %v1074, %v1075
  %v1077 = vsel %vm696, %v955, 0.0
  %v1078 = vadd.f32 %v1076, %v1077
  %v1079 = vsel %vm696, %v956, 0.0
  %v1080 = vadd.f32 %v1078, %v1079
  %v1081 = vsel %vm696, %v957, 0.0
  %v1082 = vadd.f32 %v1080, %v1081
  %v1083 = vsel %vm696, %v958, 0.0
  %v1084 = vadd.f32 %v1082, %v1083
  %v1085 = vsel %vm696, %v959, 0.0
  %v1086 = vadd.f32 %v1084, %v1085
  %v1087 = vrot.slane %v1086, 4
  %v1088 = vadd.f32 %v1086, %v1087
  %v1089 = vrot.slane %v1088, 2
  %v1090 = vadd.f32 %v1088, %v1089
  %v1091 = vrot.slane %v1090, 1
  %v1092 = vadd.f32 %v1090, %v1091
  %v1093 = vmul.f32 %v1092, %v830
  %v1094 = vadd.f32 %v1093, 1e-05
  %v1095 = vrsqrt.pop %v1094
  %v1096 = vmul.f32 %v832, %v1095
  %v1097 = vmul.f32 %v833, %v1095
  %v1098 = vmul.f32 %v834, %v1095
  %v1099 = vmul.f32 %v835, %v1095
  %v1100 = vmul.f32 %v836, %v1095
  %v1101 = vmul.f32 %v837, %v1095
  %v1102 = vmul.f32 %v838, %v1095
  %v1103 = vmul.f32 %v839, %v1095
  %v1104 = vmul.f32 %v840, %v1095
  %v1105 = vmul.f32 %v841, %v1095
  %v1106 = vmul.f32 %v842, %v1095
  %v1107 = vmul.f32 %v843, %v1095
  %v1108 = vmul.f32 %v844, %v1095
  %v1109 = vmul.f32 %v845, %v1095
  %v1110 = vmul.f32 %v846, %v1095
  %v1111 = vmul.f32 %v847, %v1095
  %v1112 = vmul.f32 %v848, %v1095
  %v1113 = vmul.f32 %v849, %v1095
  %v1114 = vmul.f32 %v850, %v1095
  %v1115 = vmul.f32 %v851, %v1095
  %v1116 = vmul.f32 %v852, %v1095
  %v1117 = vmul.f32 %v853, %v1095
  %v1118 = vmul.f32 %v854, %v1095
  %v1119 = vmul.f32 %v855, %v1095
  %v1120 = vmul.f32 %v856, %v1095
  %v1121 = vmul.f32 %v857, %v1095
  %v1122 = vmul.f32 %v858, %v1095
  %v1123 = vmul.f32 %v859, %v1095
  %v1124 = vmul.f32 %v860, %v1095
  %v1125 = vmul.f32 %v861, %v1095
  %v1126 = vmul.f32 %v862, %v1095
  %v1127 = vmul.f32 %v863, %v1095
  %v1128 = vmul.f32 %v864, %v1095
  %v1129 = vmul.f32 %v865, %v1095
  %v1130 = vmul.f32 %v866, %v1095
  %v1131 = vmul.f32 %v867, %v1095
  %v1132 = vmul.f32 %v868, %v1095
  %v1133 = vmul.f32 %v869, %v1095
  %v1134 = vmul.f32 %v870, %v1095
  %v1135 = vmul.f32 %v871, %v1095
  %v1136 = vmul.f32 %v872, %v1095
  %v1137 = vmul.f32 %v873, %v1095
  %v1138 = vmul.f32 %v874, %v1095
  %v1139 = vmul.f32 %v875, %v1095
  %v1140 = vmul.f32 %v876, %v1095
  %v1141 = vmul.f32 %v877, %v1095
  %v1142 = vmul.f32 %v878, %v1095
  %v1143 = vmul.f32 %v879, %v1095
  %v1144 = vmul.f32 %v880, %v1095
  %v1145 = vmul.f32 %v881, %v1095
  %v1146 = vmul.f32 %v882, %v1095
  %v1147 = vmul.f32 %v883, %v1095
  %v1148 = vmul.f32 %v884, %v1095
  %v1149 = vmul.f32 %v885, %v1095
  %v1150 = vmul.f32 %v886, %v1095
  %v1151 = vmul.f32 %v887, %v1095
  %v1152 = vmul.f32 %v888, %v1095
  %v1153 = vmul.f32 %v889, %v1095
  %v1154 = vmul.f32 %v890, %v1095
  %v1155 = vmul.f32 %v891, %v1095
  %v1156 = vmul.f32 %v892, %v1095
  %v1157 = vmul.f32 %v893, %v1095
  %v1158 = vmul.f32 %v894, %v1095
  %v1159 = vmul.f32 %v895, %v1095
  %v1161 = vlaneseq
  %v1162 = vshrl.u32 %v1161, 7
  %v1163 = vsub.s32 0, %v1162
  %v1164 = vrot.slane %v694, %v1163
  %v1166 = vmul.f32 %v1096, %v1164
  %v1167 = vmul.f32 %v1097, %v1164
  %v1168 = vmul.f32 %v1098, %v1164
  %v1169 = vmul.f32 %v1099, %v1164
  %v1170 = vmul.f32 %v1100, %v1164
  %v1171 = vmul.f32 %v1101, %v1164
  %v1172 = vmul.f32 %v1102, %v1164
  %v1173 = vmul.f32 %v1103, %v1164
  %v1174 = vmul.f32 %v1104, %v1164
  %v1175 = vmul.f32 %v1105, %v1164
  %v1176 = vmul.f32 %v1106, %v1164
  %v1177 = vmul.f32 %v1107, %v1164
  %v1178 = vmul.f32 %v1108, %v1164
  %v1179 = vmul.f32 %v1109, %v1164
  %v1180 = vmul.f32 %v1110, %v1164
  %v1181 = vmul.f32 %v1111, %v1164
  %v1182 = vmul.f32 %v1112, %v1164
  %v1183 = vmul.f32 %v1113, %v1164
  %v1184 = vmul.f32 %v1114, %v1164
  %v1185 = vmul.f32 %v1115, %v1164
  %v1186 = vmul.f32 %v1116, %v1164
  %v1187 = vmul.f32 %v1117, %v1164
  %v1188 = vmul.f32 %v1118, %v1164
  %v1189 = vmul.f32 %v1119, %v1164
  %v1190 = vmul.f32 %v1120, %v1164
  %v1191 = vmul.f32 %v1121, %v1164
  %v1192 = vmul.f32 %v1122, %v1164
  %v1193 = vmul.f32 %v1123, %v1164
  %v1194 = vmul.f32 %v1124, %v1164
  %v1195 = vmul.f32 %v1125, %v1164
  %v1196 = vmul.f32 %v1126, %v1164
  %v1197 = vmul.f32 %v1127, %v1164
  %v1198 = vmul.f32 %v1128, %v1164
  %v1199 = vmul.f32 %v1129, %v1164
  %v1200 = vmul.f32 %v1130, %v1164
  %v1201 = vmul.f32 %v1131, %v1164
  %v1202 = vmul.f32 %v1132, %v1164
  %v1203 = vmul.f32 %v1133, %v1164
  %v1204 = vmul.f32 %v1134, %v1164
  %v1205 = vmul.f32 %v1135, %v1164
  %v1206 = vmul.f32 %v1136, %v1164
  %v1207 = vmul.f32 %v1137, %v1164
  %v1208 = vmul.f32 %v1138, %v1164
  %v1209 = vmul.f32 %v1139, %v1164
  %v1210 = vmul.f32 %v1140, %v1164
  %v1211 = vmul.f32 %v1141, %v1164
  %v1212 = vmul.f32 %v1142, %v1164
  %v1213 = vmul.f32 %v1143, %v1164
  %v1214 = vmul.f32 %v1144, %v1164
  %v1215 = vmul.f32 %v1145, %v1164
  %v1216 = vmul.f32 %v1146, %v1164
  %v1217 = vmul.f32 %v1147, %v1164
  %v1218 = vmul.f32 %v1148, %v1164
  %v1219 = vmul.f32 %v1149, %v1164
  %v1220 = vmul.f32 %v1150, %v1164
  %v1221 = vmul.f32 %v1151, %v1164
  %v1222 = vmul.f32 %v1152, %v1164
  %v1223 = vmul.f32 %v1153, %v1164
  %v1224 = vmul.f32 %v1154, %v1164
  %v1225 = vmul.f32 %v1155, %v1164
  %v1226 = vmul.f32 %v1156, %v1164
  %v1227 = vmul.f32 %v1157, %v1164
  %v1228 = vmul.f32 %v1158, %v1164
  %v1229 = vmul.f32 %v1159, %v1164
  %v1231 = vlaneseq
  %v1232 = vshrl.u32 %v1231, 7
  %v1233 = vsub.s32 0, %v1232
  %v1234 = vrot.slane %v695, %v1233
  %v1236 = vadd.f32 %v1166, %v1234
  %v1237 = vadd.f32 %v1167, %v1234
  %v1238 = vadd.f32 %v1168, %v1234
  %v1239 = vadd.f32 %v1169, %v1234
  %v1240 = vadd.f32 %v1170, %v1234
  %v1241 = vadd.f32 %v1171, %v1234
  %v1242 = vadd.f32 %v1172, %v1234
  %v1243 = vadd.f32 %v1173, %v1234
  %v1244 = vadd.f32 %v1174, %v1234
  %v1245 = vadd.f32 %v1175, %v1234
  %v1246 = vadd.f32 %v1176, %v1234
  %v1247 = vadd.f32 %v1177, %v1234
  %v1248 = vadd.f32 %v1178, %v1234
  %v1249 = vadd.f32 %v1179, %v1234
  %v1250 = vadd.f32 %v1180, %v1234
  %v1251 = vadd.f32 %v1181, %v1234
  %v1252 = vadd.f32 %v1182, %v1234
  %v1253 = vadd.f32 %v1183, %v1234
  %v1254 = vadd.f32 %v1184, %v1234
  %v1255 = vadd.f32 %v1185, %v1234
  %v1256 = vadd.f32 %v1186, %v1234
  %v1257 = vadd.f32 %v1187, %v1234
  %v1258 = vadd.f32 %v1188, %v1234
  %v1259 = vadd.f32 %v1189, %v1234
  %v1260 = vadd.f32 %v1190, %v1234
  %v1261 = vadd.f32 %v1191, %v1234
  %v1262 = vadd.f32 %v1192, %v1234
  %v1263 = vadd.f32 %v1193, %v1234
  %v1264 = vadd.f32 %v1194, %v1234
  %v1265 = vadd.f32 %v1195, %v1234
  %v1266 = vadd.f32 %v1196, %v1234
  %v1267 = vadd.f32 %v1197, %v1234
  %v1268 = vadd.f32 %v1198, %v1234
  %v1269 = vadd.f32 %v1199, %v1234
  %v1270 = vadd.f32 %v1200, %v1234
  %v1271 = vadd.f32 %v1201, %v1234
  %v1272 = vadd.f32 %v1202, %v1234
  %v1273 = vadd.f32 %v1203, %v1234
  %v1274 = vadd.f32 %v1204, %v1234
  %v1275 = vadd.f32 %v1205, %v1234
  %v1276 = vadd.f32 %v1206, %v1234
  %v1277 = vadd.f32 %v1207, %v1234
  %v1278 = vadd.f32 %v1208, %v1234
  %v1279 = vadd.f32 %v1209, %v1234
  %v1280 = vadd.f32 %v1210, %v1234
  %v1281 = vadd.f32 %v1211, %v1234
  %v1282 = vadd.f32 %v1212, %v1234
  %v1283 = vadd.f32 %v1213, %v1234
  %v1284 = vadd.f32 %v1214, %v1234
  %v1285 = vadd.f32 %v1215, %v1234
  %v1286 = vadd.f32 %v1216, %v1234
  %v1287 = vadd.f32 %v1217, %v1234
  %v1288 = vadd.f32 %v1218, %v1234
  %v1289 = vadd.f32 %v1219, %v1234
  %v1290 = vadd.f32 %v1220, %v1234
  %v1291 = vadd.f32 %v1221, %v1234
  %v1292 = vadd.f32 %v1222, %v1234
  %v1293 = vadd.f32 %v1223, %v1234
  %v1294 = vadd.f32 %v1224, %v1234
  %v1295 = vadd.f32 %v1225, %v1234
  %v1296 = vadd.f32 %v1226, %v1234
  %v1297 = vadd.f32 %v1227, %v1234
  %v1298 = vadd.f32 %v1228, %v1234
  %v1299 = vadd.f32 %v1229, %v1234
  %v1300 = vxor.u32 %v1236, 2147483648
  %v1301 = vxor.u32 %v1237, 2147483648
  %v1302 = vxor.u32 %v1238, 2147483648
  %v1303 = vxor.u32 %v1239, 2147483648
  %v1304 = vxor.u32 %v1240, 2147483648
  %v1305 = vxor.u32 %v1241, 2147483648
  %v1306 = vxor.u32 %v1242, 2147483648
  %v1307 = vxor.u32 %v1243, 2147483648
  %v1308 = vxor.u32 %v1244, 2147483648
  %v1309 = vxor.u32 %v1245, 2147483648
  %v1310 = vxor.u32 %v1246, 2147483648
  %v1311 = vxor.u32 %v1247, 2147483648
  %v1312 = vxor.u32 %v1248, 2147483648
  %v1313 = vxor.u32 %v1249, 2147483648
  %v1314 = vxor.u32 %v1250, 2147483648
  %v1315 = vxor.u32 %v1251, 2147483648
  %v1316 = vxor.u32 %v1252, 2147483648
  %v1317 = vxor.u32 %v1253, 2147483648
  %v1318 = vxor.u32 %v1254, 2147483648
  %v1319 = vxor.u32 %v1255, 2147483648
  %v1320 = vxor.u32 %v1256, 2147483648
  %v1321 = vxor.u32 %v1257, 2147483648
  %v1322 = vxor.u32 %v1258, 2147483648
  %v1323 = vxor.u32 %v1259, 2147483648
  %v1324 = vxor.u32 %v1260, 2147483648
  %v1325 = vxor.u32 %v1261, 2147483648
  %v1326 = vxor.u32 %v1262, 2147483648
  %v1327 = vxor.u32 %v1263, 2147483648
  %v1328 = vxor.u32 %v1264, 2147483648
  %v1329 = vxor.u32 %v1265, 2147483648
  %v1330 = vxor.u32 %v1266, 2147483648
  %v1331 = vxor.u32 %v1267, 2147483648
  %v1332 = vxor.u32 %v1268, 2147483648
  %v1333 = vxor.u32 %v1269, 2147483648
  %v1334 = vxor.u32 %v1270, 2147483648
  %v1335 = vxor.u32 %v1271, 2147483648
  %v1336 = vxor.u32 %v1272, 2147483648
  %v1337 = vxor.u32 %v1273, 2147483648
  %v1338 = vxor.u32 %v1274, 2147483648
  %v1339 = vxor.u32 %v1275, 2147483648
  %v1340 = vxor.u32 %v1276, 2147483648
  %v1341 = vxor.u32 %v1277, 2147483648
  %v1342 = vxor.u32 %v1278, 2147483648
  %v1343 = vxor.u32 %v1279, 2147483648
  %v1344 = vxor.u32 %v1280, 2147483648
  %v1345 = vxor.u32 %v1281, 2147483648
  %v1346 = vxor.u32 %v1282, 2147483648
  %v1347 = vxor.u32 %v1283, 2147483648
  %v1348 = vxor.u32 %v1284, 2147483648
  %v1349 = vxor.u32 %v1285, 2147483648
  %v1350 = vxor.u32 %v1286, 2147483648
  %v1351 = vxor.u32 %v1287, 2147483648
  %v1352 = vxor.u32 %v1288, 2147483648
  %v1353 = vxor.u32 %v1289, 2147483648
  %v1354 = vxor.u32 %v1290, 2147483648
  %v1355 = vxor.u32 %v1291, 2147483648
  %v1356 = vxor.u32 %v1292, 2147483648
  %v1357 = vxor.u32 %v1293, 2147483648
  %v1358 = vxor.u32 %v1294, 2147483648
  %v1359 = vxor.u32 %v1295, 2147483648
  %v1360 = vxor.u32 %v1296, 2147483648
  %v1361 = vxor.u32 %v1297, 2147483648
  %v1362 = vxor.u32 %v1298, 2147483648
  %v1363 = vxor.u32 %v1299, 2147483648
  %v1364 = vmul.f32 %v1300, 1.442695
  %v1365 = vpow.pop %v1364
  %v1366 = vmul.f32 %v1301, 1.442695
  %v1367 = vpow.pop %v1366
  %v1368 = vmul.f32 %v1302, 1.442695
  %v1369 = vpow.pop %v1368
  %v1370 = vmul.f32 %v1303, 1.442695
  %v1371 = vpow.pop %v1370
  %v1372 = vmul.f32 %v1304, 1.442695
  %v1373 = vpow.pop %v1372
  %v1374 = vmul.f32 %v1305, 1.442695
  %v1375 = vpow.pop %v1374
  %v1376 = vmul.f32 %v1306, 1.442695
  %v1377 = vpow.pop %v1376
  %v1378 = vmul.f32 %v1307, 1.442695
  %v1379 = vpow.pop %v1378
  %v1380 = vmul.f32 %v1308, 1.442695
  %v1381 = vpow.pop %v1380
  %v1382 = vmul.f32 %v1309, 1.442695
  %v1383 = vpow.pop %v1382
  %v1384 = vmul.f32 %v1310, 1.442695
  %v1385 = vpow.pop %v1384
  %v1386 = vmul.f32 %v1311, 1.442695
  %v1387 = vpow.pop %v1386
  %v1388 = vmul.f32 %v1312, 1.442695
  %v1389 = vpow.pop %v1388
  %v1390 = vmul.f32 %v1313, 1.442695
  %v1391 = vpow.pop %v1390
  %v1392 = vmul.f32 %v1314, 1.442695
  %v1393 = vpow.pop %v1392
  %v1394 = vmul.f32 %v1315, 1.442695
  %v1395 = vpow.pop %v1394
  %v1396 = vmul.f32 %v1316, 1.442695
  %v1397 = vpow.pop %v1396
  %v1398 = vmul.f32 %v1317, 1.442695
  %v1399 = vpow.pop %v1398
  %v1400 = vmul.f32 %v1318, 1.442695
  %v1401 = vpow.pop %v1400
  %v1402 = vmul.f32 %v1319, 1.442695
  %v1403 = vpow.pop %v1402
  %v1404 = vmul.f32 %v1320, 1.442695
  %v1405 = vpow.pop %v1404
  %v1406 = vmul.f32 %v1321, 1.442695
  %v1407 = vpow.pop %v1406
  %v1408 = vmul.f32 %v1322, 1.442695
  %v1409 = vpow.pop %v1408
  %v1410 = vmul.f32 %v1323, 1.442695
  %v1411 = vpow.pop %v1410
  %v1412 = vmul.f32 %v1324, 1.442695
  %v1413 = vpow.pop %v1412
  %v1414 = vmul.f32 %v1325, 1.442695
  %v1415 = vpow.pop %v1414
  %v1416 = vmul.f32 %v1326, 1.442695
  %v1417 = vpow.pop %v1416
  %v1418 = vmul.f32 %v1327, 1.442695
  %v1419 = vpow.pop %v1418
  %v1420 = vmul.f32 %v1328, 1.442695
  %v1421 = vpow.pop %v1420
  %v1422 = vmul.f32 %v1329, 1.442695
  %v1423 = vpow.pop %v1422
  %v1424 = vmul.f32 %v1330, 1.442695
  %v1425 = vpow.pop %v1424
  %v1426 = vmul.f32 %v1331, 1.442695
  %v1427 = vpow.pop %v1426
  %v1428 = vmul.f32 %v1332, 1.442695
  %v1429 = vpow.pop %v1428
  %v1430 = vmul.f32 %v1333, 1.442695
  %v1431 = vpow.pop %v1430
  %v1432 = vmul.f32 %v1334, 1.442695
  %v1433 = vpow.pop %v1432
  %v1434 = vmul.f32 %v1335, 1.442695
  %v1435 = vpow.pop %v1434
  %v1436 = vmul.f32 %v1336, 1.442695
  %v1437 = vpow.pop %v1436
  %v1438 = vmul.f32 %v1337, 1.442695
  %v1439 = vpow.pop %v1438
  %v1440 = vmul.f32 %v1338, 1.442695
  %v1441 = vpow.pop %v1440
  %v1442 = vmul.f32 %v1339, 1.442695
  %v1443 = vpow.pop %v1442
  %v1444 = vmul.f32 %v1340, 1.442695
  %v1445 = vpow.pop %v1444
  %v1446 = vmul.f32 %v1341, 1.442695
  %v1447 = vpow.pop %v1446
  %v1448 = vmul.f32 %v1342, 1.442695
  %v1449 = vpow.pop %v1448
  %v1450 = vmul.f32 %v1343, 1.442695
  %v1451 = vpow.pop %v1450
  %v1452 = vmul.f32 %v1344, 1.442695
  %v1453 = vpow.pop %v1452
  %v1454 = vmul.f32 %v1345, 1.442695
  %v1455 = vpow.pop %v1454
  %v1456 = vmul.f32 %v1346, 1.442695
  %v1457 = vpow.pop %v1456
  %v1458 = vmul.f32 %v1347, 1.442695
  %v1459 = vpow.pop %v1458
  %v1460 = vmul.f32 %v1348, 1.442695
  %v1461 = vpow.pop %v1460
  %v1462 = vmul.f32 %v1349, 1.442695
  %v1463 = vpow.pop %v1462
  %v1464 = vmul.f32 %v1350, 1.442695
  %v1465 = vpow.pop %v1464
  %v1466 = vmul.f32 %v1351, 1.442695
  %v1467 = vpow.pop %v1466
  %v1468 = vmul.f32 %v1352, 1.442695
  %v1469 = vpow.pop %v1468
  %v1470 = vmul.f32 %v1353, 1.442695
  %v1471 = vpow.pop %v1470
  %v1472 = vmul.f32 %v1354, 1.442695
  %v1473 = vpow.pop %v1472
  %v1474 = vmul.f32 %v1355, 1.442695
  %v1475 = vpow.pop %v1474
  %v1476 = vmul.f32 %v1356, 1.442695
  %v1477 = vpow.pop %v1476
  %v1478 = vmul.f32 %v1357, 1.442695
  %v1479 = vpow.pop %v1478
  %v1480 = vmul.f32 %v1358, 1.442695
  %v1481 = vpow.pop %v1480
  %v1482 = vmul.f32 %v1359, 1.442695
  %v1483 = vpow.pop %v1482
  %v1484 = vmul.f32 %v1360, 1.442695
  %v1485 = vpow.pop %v1484
  %v1486 = vmul.f32 %v1361, 1.442695
  %v1487 = vpow.pop %v1486
  %v1488 = vmul.f32 %v1362, 1.442695
  %v1489 = vpow.pop %v1488
  %v1490 = vmul.f32 %v1363, 1.442695
  %v1491 = vpow.pop %v1490
  %v1492 = vadd.f32 %v1365, 1.0
  %v1493 = vadd.f32 %v1367, 1.0
  %v1494 = vadd.f32 %v1369, 1.0
  %v1495 = vadd.f32 %v1371, 1.0
  %v1496 = vadd.f32 %v1373, 1.0
  %v1497 = vadd.f32 %v1375, 1.0
  %v1498 = vadd.f32 %v1377, 1.0
  %v1499 = vadd.f32 %v1379, 1.0
  %v1500 = vadd.f32 %v1381, 1.0
  %v1501 = vadd.f32 %v1383, 1.0
  %v1502 = vadd.f32 %v1385, 1.0
  %v1503 = vadd.f32 %v1387, 1.0
  %v1504 = vadd.f32 %v1389, 1.0
  %v1505 = vadd.f32 %v1391, 1.0
  %v1506 = vadd.f32 %v1393, 1.0
  %v1507 = vadd.f32 %v1395, 1.0
  %v1508 = vadd.f32 %v1397, 1.0
  %v1509 = vadd.f32 %v1399, 1.0
  %v1510 = vadd.f32 %v1401, 1.0
  %v1511 = vadd.f32 %v1403, 1.0
  %v1512 = vadd.f32 %v1405, 1.0
  %v1513 = vadd.f32 %v1407, 1.0
  %v1514 = vadd.f32 %v1409, 1.0
  %v1515 = vadd.f32 %v1411, 1.0
  %v1516 = vadd.f32 %v1413, 1.0
  %v1517 = vadd.f32 %v1415, 1.0
  %v1518 = vadd.f32 %v1417, 1.0
  %v1519 = vadd.f32 %v1419, 1.0
  %v1520 = vadd.f32 %v1421, 1.0
  %v1521 = vadd.f32 %v1423, 1.0
  %v1522 = vadd.f32 %v1425, 1.0
  %v1523 = vadd.f32 %v1427, 1.0
  %v1524 = vadd.f32 %v1429, 1.0
  %v1525 = vadd.f32 %v1431, 1.0
  %v1526 = vadd.f32 %v1433, 1.0
  %v1527 = vadd.f32 %v1435, 1.0
  %v1528 = vadd.f32 %v1437, 1.0
  %v1529 = vadd.f32 %v1439, 1.0
  %v1530 = vadd.f32 %v1441, 1.0
  %v1531 = vadd.f32 %v1443, 1.0
  %v1532 = vadd.f32 %v1445, 1.0
  %v1533 = vadd.f32 %v1447, 1.0
  %v1534 = vadd.f32 %v1449, 1.0
  %v1535 = vadd.f32 %v1451, 1.0
  %v1536 = vadd.f32 %v1453, 1.0
  %v1537 = vadd.f32 %v1455, 1.0
  %v1538 = vadd.f32 %v1457, 1.0
  %v1539 = vadd.f32 %v1459, 1.0
  %v1540 = vadd.f32 %v1461, 1.0
  %v1541 = vadd.f32 %v1463, 1.0
  %v1542 = vadd.f32 %v1465, 1.0
  %v1543 = vadd.f32 %v1467, 1.0
  %v1544 = vadd.f32 %v1469, 1.0
  %v1545 = vadd.f32 %v1471, 1.0
  %v1546 = vadd.f32 %v1473, 1.0
  %v1547 = vadd.f32 %v1475, 1.0
  %v1548 = vadd.f32 %v1477, 1.0
  %v1549 = vadd.f32 %v1479, 1.0
  %v1550 = vadd.f32 %v1481, 1.0
  %v1551 = vadd.f32 %v1483, 1.0
  %v1552 = vadd.f32 %v1485, 1.0
  %v1553 = vadd.f32 %v1487, 1.0
  %v1554 = vadd.f32 %v1489, 1.0
  %v1555 = vadd.f32 %v1491, 1.0
  %v1556 = vrcp.pop %v1492
  %v1557 = vmul.f32 1.0, %v1556
  %v1558 = vrcp.pop %v1493
  %v1559 = vmul.f32 1.0, %v1558
  %v1560 = vrcp.pop %v1494
  %v1561 = vmul.f32 1.0, %v1560
  %v1562 = vrcp.pop %v1495
  %v1563 = vmul.f32 1.0, %v1562
  %v1564 = vrcp.pop %v1496
  %v1565 = vmul.f32 1.0, %v1564
  %v1566 = vrcp.pop %v1497
  %v1567 = vmul.f32 1.0, %v1566
  %v1568 = vrcp.pop %v1498
  %v1569 = vmul.f32 1.0, %v1568
  %v1570 = vrcp.pop %v1499
  %v1571 = vmul.f32 1.0, %v1570
  %v1572 = vrcp.pop %v1500
  %v1573 = vmul.f32 1.0, %v1572
  %v1574 = vrcp.pop %v1501
  %v1575 = vmul.f32 1.0, %v1574
  %v1576 = vrcp.pop %v1502
  %v1577 = vmul.f32 1.0, %v1576
  %v1578 = vrcp.pop %v1503
  %v1579 = vmul.f32 1.0, %v1578
  %v1580 = vrcp.pop %v1504
  %v1581 = vmul.f32 1.0, %v1580
  %v1582 = vrcp.pop %v1505
  %v1583 = vmul.f32 1.0, %v1582
  %v1584 = vrcp.pop %v1506
  %v1585 = vmul.f32 1.0, %v1584
  %v1586 = vrcp.pop %v1507
  %v1587 = vmul.f32 1.0, %v1586
  %v1588 = vrcp.pop %v1508
  %v1589 = vmul.f32 1.0, %v1588
  %v1590 = vrcp.pop %v1509
  %v1591 = vmul.f32 1.0, %v1590
  %v1592 = vrcp.pop %v1510
  %v1593 = vmul.f32 1.0, %v1592
  %v1594 = vrcp.pop %v1511
  %v1595 = vmul.f32 1.0, %v1594
  %v1596 = vrcp.pop %v1512
  %v1597 = vmul.f32 1.0, %v1596
  %v1598 = vrcp.pop %v1513
  %v1599 = vmul.f32 1.0, %v1598
  %v1600 = vrcp.pop %v1514
  %v1601 = vmul.f32 1.0, %v1600
  %v1602 = vrcp.pop %v1515
  %v1603 = vmul.f32 1.0, %v1602
  %v1604 = vrcp.pop %v1516
  %v1605 = vmul.f32 1.0, %v1604
  %v1606 = vrcp.pop %v1517
  %v1607 = vmul.f32 1.0, %v1606
  %v1608 = vrcp.pop %v1518
  %v1609 = vmul.f32 1.0, %v1608
  %v1610 = vrcp.pop %v1519
  %v1611 = vmul.f32 1.0, %v1610
  %v1612 = vrcp.pop %v1520
  %v1613 = vmul.f32 1.0, %v1612
  %v1614 = vrcp.pop %v1521
  %v1615 = vmul.f32 1.0, %v1614
  %v1616 = vrcp.pop %v1522
  %v1617 = vmul.f32 1.0, %v1616
  %v1618 = vrcp.pop %v1523
  %v1619 = vmul.f32 1.0, %v1618
  %v1620 = vrcp.pop %v1524
  %v1621 = vmul.f32 1.0, %v1620
  %v1622 = vrcp.pop %v1525
  %v1623 = vmul.f32 1.0, %v1622
  %v1624 = vrcp.pop %v1526
  %v1625 = vmul.f32 1.0, %v1624
  %v1626 = vrcp.pop %v1527
  %v1627 = vmul.f32 1.0, %v1626
  %v1628 = vrcp.pop %v1528
  %v1629 = vmul.f32 1.0, %v1628
  %v1630 = vrcp.pop %v1529
  %v1631 = vmul.f32 1.0, %v1630
  %v1632 = vrcp.pop %v1530
  %v1633 = vmul.f32 1.0, %v1632
  %v1634 = vrcp.pop %v1531
  %v1635 = vmul.f32 1.0, %v1634
  %v1636 = vrcp.pop %v1532
  %v1637 = vmul.f32 1.0, %v1636
  %v1638 = vrcp.pop %v1533
  %v1639 = vmul.f32 1.0, %v1638
  %v1640 = vrcp.pop %v1534
  %v1641 = vmul.f32 1.0, %v1640
  %v1642 = vrcp.pop %v1535
  %v1643 = vmul.f32 1.0, %v1642
  %v1644 = vrcp.pop %v1536
  %v1645 = vmul.f32 1.0, %v1644
  %v1646 = vrcp.pop %v1537
  %v1647 = vmul.f32 1.0, %v1646
  %v1648 = vrcp.pop %v1538
  %v1649 = vmul.f32 1.0, %v1648
  %v1650 = vrcp.pop %v1539
  %v1651 = vmul.f32 1.0, %v1650
  %v1652 = vrcp.pop %v1540
  %v1653 = vmul.f32 1.0, %v1652
  %v1654 = vrcp.pop %v1541
  %v1655 = vmul.f32 1.0, %v1654
  %v1656 = vrcp.pop %v1542
  %v1657 = vmul.f32 1.0, %v1656
  %v1658 = vrcp.pop %v1543
  %v1659 = vmul.f32 1.0, %v1658
  %v1660 = vrcp.pop %v1544
  %v1661 = vmul.f32 1.0, %v1660
  %v1662 = vrcp.pop %v1545
  %v1663 = vmul.f32 1.0, %v1662
  %v1664 = vrcp.pop %v1546
  %v1665 = vmul.f32 1.0, %v1664
  %v1666 = vrcp.pop %v1547
  %v1667 = vmul.f32 1.0, %v1666
  %v1668 = vrcp.pop %v1548
  %v1669 = vmul.f32 1.0, %v1668
  %v1670 = vrcp.pop %v1549
  %v1671 = vmul.f32 1.0, %v1670
  %v1672 = vrcp.pop %v1550
  %v1673 = vmul.f32 1.0, %v1672
  %v1674 = vrcp.pop %v1551
  %v1675 = vmul.f32 1.0, %v1674
  %v1676 = vrcp.pop %v1552
  %v1677 = vmul.f32 1.0, %v1676
  %v1678 = vrcp.pop %v1553
  %v1679 = vmul.f32 1.0, %v1678
  %v1680 = vrcp.pop %v1554
  %v1681 = vmul.f32 1.0, %v1680
  %v1682 = vrcp.pop %v1555
  %v1683 = vmul.f32 1.0, %v1682
  %v1684 = vmul.f32 %v1236, %v1557
  %v1685 = vmul.f32 %v1237, %v1559
  %v1686 = vmul.f32 %v1238, %v1561
  %v1687 = vmul.f32 %v1239, %v1563
  %v1688 = vmul.f32 %v1240, %v1565
  %v1689 = vmul.f32 %v1241, %v1567
  %v1690 = vmul.f32 %v1242, %v1569
  %v1691 = vmul.f32 %v1243, %v1571
  %v1692 = vmul.f32 %v1244, %v1573
  %v1693 = vmul.f32 %v1245, %v1575
  %v1694 = vmul.f32 %v1246, %v1577
  %v1695 = vmul.f32 %v1247, %v1579
  %v1696 = vmul.f32 %v1248, %v1581
  %v1697 = vmul.f32 %v1249, %v1583
  %v1698 = vmul.f32 %v1250, %v1585
  %v1699 = vmul.f32 %v1251, %v1587
  %v1700 = vmul.f32 %v1252, %v1589
  %v1701 = vmul.f32 %v1253, %v1591
  %v1702 = vmul.f32 %v1254, %v1593
  %v1703 = vmul.f32 %v1255, %v1595
  %v1704 = vmul.f32 %v1256, %v1597
  %v1705 = vmul.f32 %v1257, %v1599
  %v1706 = vmul.f32 %v1258, %v1601
  %v1707 = vmul.f32 %v1259, %v1603
  %v1708 = vmul.f32 %v1260, %v1605
  %v1709 = vmul.f32 %v1261, %v1607
  %v1710 = vmul.f32 %v1262, %v1609
  %v1711 = vmul.f32 %v1263, %v1611
  %v1712 = vmul.f32 %v1264, %v1613
  %v1713 = vmul.f32 %v1265, %v1615
  %v1714 = vmul.f32 %v1266, %v1617
  %v1715 = vmul.f32 %v1267, %v1619
  %v1716 = vmul.f32 %v1268, %v1621
  %v1717 = vmul.f32 %v1269, %v1623
  %v1718 = vmul.f32 %v1270, %v1625
  %v1719 = vmul.f32 %v1271, %v1627
  %v1720 = vmul.f32 %v1272, %v1629
  %v1721 = vmul.f32 %v1273, %v1631
  %v1722 = vmul.f32 %v1274, %v1633
  %v1723 = vmul.f32 %v1275, %v1635
  %v1724 = vmul.f32 %v1276, %v1637
  %v1725 = vmul.f32 %v1277, %v1639
  %v1726 = vmul.f32 %v1278, %v1641
  %v1727 = vmul.f32 %v1279, %v1643
  %v1728 = vmul.f32 %v1280, %v1645
  %v1729 = vmul.f32 %v1281, %v1647
  %v1730 = vmul.f32 %v1282, %v1649
  %v1731 = vmul.f32 %v1283, %v1651
  %v1732 = vmul.f32 %v1284, %v1653
  %v1733 = vmul.f32 %v1285, %v1655
  %v1734 = vmul.f32 %v1286, %v1657
  %v1735 = vmul.f32 %v1287, %v1659
  %v1736 = vmul.f32 %v1288, %v1661
  %v1737 = vmul.f32 %v1289, %v1663
  %v1738 = vmul.f32 %v1290, %v1665
  %v1739 = vmul.f32 %v1291, %v1667
  %v1740 = vmul.f32 %v1292, %v1669
  %v1741 = vmul.f32 %v1293, %v1671
  %v1742 = vmul.f32 %v1294, %v1673
  %v1743 = vmul.f32 %v1295, %v1675
  %v1744 = vmul.f32 %v1296, %v1677
  %v1745 = vmul.f32 %v1297, %v1679
  %v1746 = vmul.f32 %v1298, %v1681
  %v1747 = vmul.f32 %v1299, %v1683
  %s1748 = scalar_lea.vmem [#allocation2], 32
  %1749 = vst.msk [vmem:[%s1748 + $0x8] sm:$0xff] %vm696, %v1684
  %1750 = vst.msk [vmem:[%s1748 + $0x10] sm:$0xff] %vm696, %v1685
  %1751 = vst.msk [vmem:[%s1748 + $0x28] sm:$0xff] %vm696, %v1686
  %1752 = vst.msk [vmem:[%s1748 + $0x30] sm:$0xff] %vm696, %v1687
  %1753 = vst.msk [vmem:[%s1748 + $0x48] sm:$0xff] %vm696, %v1688
  %1754 = vst.msk [vmem:[%s1748 + $0x50] sm:$0xff] %vm696, %v1689
  %1755 = vst.msk [vmem:[%s1748 + $0x68] sm:$0xff] %vm696, %v1690
  %1756 = vst.msk [vmem:[%s1748 + $0x70] sm:$0xff] %vm696, %v1691
  %1757 = vst.msk [vmem:[%s1748 + $0x88] sm:$0xff] %vm696, %v1692
  %1758 = vst.msk [vmem:[%s1748 + $0x90] sm:$0xff] %vm696, %v1693
  %1759 = vst.msk [vmem:[%s1748 + $0xa8] sm:$0xff] %vm696, %v1694
  %1760 = vst.msk [vmem:[%s1748 + $0xb0] sm:$0xff] %vm696, %v1695
  %1761 = vst.msk [vmem:[%s1748 + $0xc8] sm:$0xff] %vm696, %v1696
  %1762 = vst.msk [vmem:[%s1748 + $0xd0] sm:$0xff] %vm696, %v1697
  %1763 = vst.msk [vmem:[%s1748 + $0xe8] sm:$0xff] %vm696, %v1698
  %1764 = vst.msk [vmem:[%s1748 + $0xf0] sm:$0xff] %vm696, %v1699
  %1765 = vst.msk [vmem:[%s1748 + $0x108] sm:$0xff] %vm696, %v1700
  %1766 = vst.msk [vmem:[%s1748 + $0x110] sm:$0xff] %vm696, %v1701
  %1767 = vst.msk [vmem:[%s1748 + $0x128] sm:$0xff] %vm696, %v1702
  %1768 = vst.msk [vmem:[%s1748 + $0x130] sm:$0xff] %vm696, %v1703
  %1769 = vst.msk [vmem:[%s1748 + $0x148] sm:$0xff] %vm696, %v1704
  %1770 = vst.msk [vmem:[%s1748 + $0x150] sm:$0xff] %vm696, %v1705
  %1771 = vst.msk [vmem:[%s1748 + $0x168] sm:$0xff] %vm696, %v1706
  %1772 = vst.msk [vmem:[%s1748 + $0x170] sm:$0xff] %vm696, %v1707
  %1773 = vst.msk [vmem:[%s1748 + $0x188] sm:$0xff] %vm696, %v1708
  %1774 = vst.msk [vmem:[%s1748 + $0x190] sm:$0xff] %vm696, %v1709
  %1775 = vst.msk [vmem:[%s1748 + $0x1a8] sm:$0xff] %vm696, %v1710
  %1776 = vst.msk [vmem:[%s1748 + $0x1b0] sm:$0xff] %vm696, %v1711
  %1777 = vst.msk [vmem:[%s1748 + $0x1c8] sm:$0xff] %vm696, %v1712
  %1778 = vst.msk [vmem:[%s1748 + $0x1d0] sm:$0xff] %vm696, %v1713
  %1779 = vst.msk [vmem:[%s1748 + $0x1e8] sm:$0xff] %vm696, %v1714
  %1780 = vst.msk [vmem:[%s1748 + $0x1f0] sm:$0xff] %vm696, %v1715
  %1781 = vst.msk [vmem:[%s1748 + $0x248] sm:$0xff] %vm696, %v1716
  %1782 = vst.msk [vmem:[%s1748 + $0x250] sm:$0xff] %vm696, %v1717
  %1783 = vst.msk [vmem:[%s1748 + $0x268] sm:$0xff] %vm696, %v1718
  %1784 = vst.msk [vmem:[%s1748 + $0x270] sm:$0xff] %vm696, %v1719
  %1785 = vst.msk [vmem:[%s1748 + $0x288] sm:$0xff] %vm696, %v1720
  %1786 = vst.msk [vmem:[%s1748 + $0x290] sm:$0xff] %vm696, %v1721
  %1787 = vst.msk [vmem:[%s1748 + $0x2a8] sm:$0xff] %vm696, %v1722
  %1788 = vst.msk [vmem:[%s1748 + $0x2b0] sm:$0xff] %vm696, %v1723
  %1789 = vst.msk [vmem:[%s1748 + $0x2c8] sm:$0xff] %vm696, %v1724
  %1790 = vst.msk [vmem:[%s1748 + $0x2d0] sm:$0xff] %vm696, %v1725
  %1791 = vst.msk [vmem:[%s1748 + $0x2e8] sm:$0xff] %vm696, %v1726
  %1792 = vst.msk [vmem:[%s1748 + $0x2f0] sm:$0xff] %vm696, %v1727
  %1793 = vst.msk [vmem:[%s1748 + $0x308] sm:$0xff] %vm696, %v1728
  %1794 = vst.msk [vmem:[%s1748 + $0x310] sm:$0xff] %vm696, %v1729
  %1795 = vst.msk [vmem:[%s1748 + $0x328] sm:$0xff] %vm696, %v1730
  %1796 = vst.msk [vmem:[%s1748 + $0x330] sm:$0xff] %vm696, %v1731
  %1797 = vst.msk [vmem:[%s1748 + $0x348] sm:$0xff] %vm696, %v1732
  %1798 = vst.msk [vmem:[%s1748 + $0x350] sm:$0xff] %vm696, %v1733
  %1799 = vst.msk [vmem:[%s1748 + $0x368] sm:$0xff] %vm696, %v1734
  %1800 = vst.msk [vmem:[%s1748 + $0x370] sm:$0xff] %vm696, %v1735
  %1801 = vst.msk [vmem:[%s1748 + $0x388] sm:$0xff] %vm696, %v1736
  %1802 = vst.msk [vmem:[%s1748 + $0x390] sm:$0xff] %vm696, %v1737
  %1803 = vst.msk [vmem:[%s1748 + $0x3a8] sm:$0xff] %vm696, %v1738
  %1804 = vst.msk [vmem:[%s1748 + $0x3b0] sm:$0xff] %vm696, %v1739
  %1805 = vst.msk [vmem:[%s1748 + $0x3c8] sm:$0xff] %vm696, %v1740
  %1806 = vst.msk [vmem:[%s1748 + $0x3d0] sm:$0xff] %vm696, %v1741
  %1807 = vst.msk [vmem:[%s1748 + $0x3e8] sm:$0xff] %vm696, %v1742
  %1808 = vst.msk [vmem:[%s1748 + $0x3f0] sm:$0xff] %vm696, %v1743
  %1809 = vst.msk [vmem:[%s1748 + $0x408] sm:$0xff] %vm696, %v1744
  %1810 = vst.msk [vmem:[%s1748 + $0x410] sm:$0xff] %vm696, %v1745
  %1811 = vst.msk [vmem:[%s1748 + $0x428] sm:$0xff] %vm696, %v1746
  %1812 = vst.msk [vmem:[%s1748 + $0x430] sm:$0xff] %vm696, %v1747
  %1813 = vst.msk [vmem:[#allocation2] sm:$0xff] %vm696, 0.0
  %1814 = vst.msk [vmem:[#allocation2 + $0x8] sm:$0xff] %vm696, 0.0
  %1815 = vst.msk [vmem:[#allocation2 + $0x10] sm:$0xff] %vm696, 0.0
  %vm1816 = vcmask 122880
  %1817 = vst.msk [vmem:[#allocation2 + $0x18] sm:$0x1] %vm1816, 0.0
  %1818 = vst.msk [vmem:[#allocation2 + $0x240] sm:$0xff] %vm696, 0.0
  %1819 = vst.msk [vmem:[#allocation2 + $0x248] sm:$0xff] %vm696, 0.0
  %1820 = vst.msk [vmem:[#allocation2 + $0x250] sm:$0xff] %vm696, 0.0
  %1821 = vst.msk [vmem:[#allocation2 + $0x258] sm:$0x1] %vm1816, 0.0
  %s1822 = scalar_lea.vmem [#allocation2], 544
  %1823 = vst.msk [vmem:[%s1822] sm:$0xff] %vm696, 0.0
  %1824 = vst.msk [vmem:[%s1822 + $0x8] sm:$0xff] %vm696, 0.0
  %1825 = vst.msk [vmem:[%s1822 + $0x10] sm:$0xff] %vm696, 0.0
  %1826 = vst.msk [vmem:[%s1822 + $0x18] sm:$0x1] %vm1816, 0.0
  %1827 = vst.msk [vmem:[%s1822 + $0x240] sm:$0xff] %vm696, 0.0
  %1828 = vst.msk [vmem:[%s1822 + $0x248] sm:$0xff] %vm696, 0.0
  %1829 = vst.msk [vmem:[%s1822 + $0x250] sm:$0xff] %vm696, 0.0
  %1830 = vst.msk [vmem:[%s1822 + $0x258] sm:$0x1] %vm1816, 0.0
  %1831 = vst.msk [vmem:[%s1748] sm:$0xff] %vm696, 0.0
  %1832 = vst.msk [vmem:[%s1748 + $0x20] sm:$0xff] %vm696, 0.0
  %1833 = vst.msk [vmem:[%s1748 + $0x40] sm:$0xff] %vm696, 0.0
  %1834 = vst.msk [vmem:[%s1748 + $0x60] sm:$0xff] %vm696, 0.0
  %1835 = vst.msk [vmem:[%s1748 + $0x80] sm:$0xff] %vm696, 0.0
  %1836 = vst.msk [vmem:[%s1748 + $0xa0] sm:$0xff] %vm696, 0.0
  %1837 = vst.msk [vmem:[%s1748 + $0xc0] sm:$0xff] %vm696, 0.0
  %1838 = vst.msk [vmem:[%s1748 + $0xe0] sm:$0xff] %vm696, 0.0
  %1839 = vst.msk [vmem:[%s1748 + $0x100] sm:$0xff] %vm696, 0.0
  %1840 = vst.msk [vmem:[%s1748 + $0x120] sm:$0xff] %vm696, 0.0
  %1841 = vst.msk [vmem:[%s1748 + $0x140] sm:$0xff] %vm696, 0.0
  %1842 = vst.msk [vmem:[%s1748 + $0x160] sm:$0xff] %vm696, 0.0
  %1843 = vst.msk [vmem:[%s1748 + $0x180] sm:$0xff] %vm696, 0.0
  %1844 = vst.msk [vmem:[%s1748 + $0x1a0] sm:$0xff] %vm696, 0.0
  %1845 = vst.msk [vmem:[%s1748 + $0x1c0] sm:$0xff] %vm696, 0.0
  %1846 = vst.msk [vmem:[%s1748 + $0x1e0] sm:$0xff] %vm696, 0.0
  %1847 = vst.msk [vmem:[%s1748 + $0x240] sm:$0xff] %vm696, 0.0
  %1848 = vst.msk [vmem:[%s1748 + $0x260] sm:$0xff] %vm696, 0.0
  %1849 = vst.msk [vmem:[%s1748 + $0x280] sm:$0xff] %vm696, 0.0
  %1850 = vst.msk [vmem:[%s1748 + $0x2a0] sm:$0xff] %vm696, 0.0
  %1851 = vst.msk [vmem:[%s1748 + $0x2c0] sm:$0xff] %vm696, 0.0
  %1852 = vst.msk [vmem:[%s1748 + $0x2e0] sm:$0xff] %vm696, 0.0
  %1853 = vst.msk [vmem:[%s1748 + $0x300] sm:$0xff] %vm696, 0.0
  %1854 = vst.msk [vmem:[%s1748 + $0x320] sm:$0xff] %vm696, 0.0
  %1855 = vst.msk [vmem:[%s1748 + $0x340] sm:$0xff] %vm696, 0.0
  %1856 = vst.msk [vmem:[%s1748 + $0x360] sm:$0xff] %vm696, 0.0
  %1857 = vst.msk [vmem:[%s1748 + $0x380] sm:$0xff] %vm696, 0.0
  %1858 = vst.msk [vmem:[%s1748 + $0x3a0] sm:$0xff] %vm696, 0.0
  %1859 = vst.msk [vmem:[%s1748 + $0x3c0] sm:$0xff] %vm696, 0.0
  %1860 = vst.msk [vmem:[%s1748 + $0x3e0] sm:$0xff] %vm696, 0.0
  %1861 = vst.msk [vmem:[%s1748 + $0x400] sm:$0xff] %vm696, 0.0
  %1862 = vst.msk [vmem:[%s1748 + $0x420] sm:$0xff] %vm696, 0.0
  %1863 = vst.msk [vmem:[%s1748 + $0x18] sm:$0x1] %vm1816, 0.0
  %1864 = vst.msk [vmem:[%s1748 + $0x38] sm:$0x1] %vm1816, 0.0
  %1865 = vst.msk [vmem:[%s1748 + $0x58] sm:$0x1] %vm1816, 0.0
  %1866 = vst.msk [vmem:[%s1748 + $0x78] sm:$0x1] %vm1816, 0.0
  %1867 = vst.msk [vmem:[%s1748 + $0x98] sm:$0x1] %vm1816, 0.0
  %1868 = vst.msk [vmem:[%s1748 + $0xb8] sm:$0x1] %vm1816, 0.0
  %1869 = vst.msk [vmem:[%s1748 + $0xd8] sm:$0x1] %vm1816, 0.0
  %1870 = vst.msk [vmem:[%s1748 + $0xf8] sm:$0x1] %vm1816, 0.0
  %1871 = vst.msk [vmem:[%s1748 + $0x118] sm:$0x1] %vm1816, 0.0
  %1872 = vst.msk [vmem:[%s1748 + $0x138] sm:$0x1] %vm1816, 0.0
  %1873 = vst.msk [vmem:[%s1748 + $0x158] sm:$0x1] %vm1816, 0.0
  %1874 = vst.msk [vmem:[%s1748 + $0x178] sm:$0x1] %vm1816, 0.0
  %1875 = vst.msk [vmem:[%s1748 + $0x198] sm:$0x1] %vm1816, 0.0
  %1876 = vst.msk [vmem:[%s1748 + $0x1b8] sm:$0x1] %vm1816, 0.0
  %1877 = vst.msk [vmem:[%s1748 + $0x1d8] sm:$0x1] %vm1816, 0.0
  %1878 = vst.msk [vmem:[%s1748 + $0x1f8] sm:$0x1] %vm1816, 0.0
  %1879 = vst.msk [vmem:[%s1748 + $0x258] sm:$0x1] %vm1816, 0.0
  %1880 = vst.msk [vmem:[%s1748 + $0x278] sm:$0x1] %vm1816, 0.0
  %1881 = vst.msk [vmem:[%s1748 + $0x298] sm:$0x1] %vm1816, 0.0
  %1882 = vst.msk [vmem:[%s1748 + $0x2b8] sm:$0x1] %vm1816, 0.0
  %1883 = vst.msk [vmem:[%s1748 + $0x2d8] sm:$0x1] %vm1816, 0.0
  %1884 = vst.msk [vmem:[%s1748 + $0x2f8] sm:$0x1] %vm1816, 0.0
  %1885 = vst.msk [vmem:[%s1748 + $0x318] sm:$0x1] %vm1816, 0.0
  %1886 = vst.msk [vmem:[%s1748 + $0x338] sm:$0x1] %vm1816, 0.0
  %1887 = vst.msk [vmem:[%s1748 + $0x358] sm:$0x1] %vm1816, 0.0
  %1888 = vst.msk [vmem:[%s1748 + $0x378] sm:$0x1] %vm1816, 0.0
  %1889 = vst.msk [vmem:[%s1748 + $0x398] sm:$0x1] %vm1816, 0.0
  %1890 = vst.msk [vmem:[%s1748 + $0x3b8] sm:$0x1] %vm1816, 0.0
  %1891 = vst.msk [vmem:[%s1748 + $0x3d8] sm:$0x1] %vm1816, 0.0
  %1892 = vst.msk [vmem:[%s1748 + $0x3f8] sm:$0x1] %vm1816, 0.0
  %1893 = vst.msk [vmem:[%s1748 + $0x418] sm:$0x1] %vm1816, 0.0
  %1894 = vst.msk [vmem:[%s1748 + $0x438] sm:$0x1] %vm1816, 0.0
  %s1895 = scalar_lea.vmem [#allocation2], 7
  %v1896 = vld [vmem:[%s1895] ss:$2 sm:$0xff]
  %s1897 = scalar_lea.vmem [#allocation2], 23
  %v1898 = vld [vmem:[%s1897] ss:$2 sm:$0x1]
  %s1899 = scalar_lea.vmem [#allocation2], 39
  %v1900 = vld [vmem:[%s1899] ss:$2 sm:$0xff]
  %s1901 = scalar_lea.vmem [#allocation2], 55
  %v1902 = vld [vmem:[%s1901] ss:$2 sm:$0x1]
  %s1903 = scalar_lea.vmem [#allocation2], 71
  %v1904 = vld [vmem:[%s1903] ss:$2 sm:$0xff]
  %s1905 = scalar_lea.vmem [#allocation2], 87
  %v1906 = vld [vmem:[%s1905] ss:$2 sm:$0x1]
  %s1907 = scalar_lea.vmem [#allocation2], 103
  %v1908 = vld [vmem:[%s1907] ss:$2 sm:$0xff]
  %s1909 = scalar_lea.vmem [#allocation2], 119
  %v1910 = vld [vmem:[%s1909] ss:$2 sm:$0x1]
  %s1911 = scalar_lea.vmem [#allocation2], 135
  %v1912 = vld [vmem:[%s1911] ss:$2 sm:$0xff]
  %s1913 = scalar_lea.vmem [#allocation2], 151
  %v1914 = vld [vmem:[%s1913] ss:$2 sm:$0x1]
  %s1915 = scalar_lea.vmem [#allocation2], 167
  %v1916 = vld [vmem:[%s1915] ss:$2 sm:$0xff]
  %s1917 = scalar_lea.vmem [#allocation2], 183
  %v1918 = vld [vmem:[%s1917] ss:$2 sm:$0x1]
  %s1919 = scalar_lea.vmem [#allocation2], 199
  %v1920 = vld [vmem:[%s1919] ss:$2 sm:$0xff]
  %s1921 = scalar_lea.vmem [#allocation2], 215
  %v1922 = vld [vmem:[%s1921] ss:$2 sm:$0x1]
  %s1923 = scalar_lea.vmem [#allocation2], 231
  %v1924 = vld [vmem:[%s1923] ss:$2 sm:$0xff]
  %s1925 = scalar_lea.vmem [#allocation2], 247
  %v1926 = vld [vmem:[%s1925] ss:$2 sm:$0x1]
  %s1927 = scalar_lea.vmem [#allocation2], 263
  %v1928 = vld [vmem:[%s1927] ss:$2 sm:$0xff]
  %s1929 = scalar_lea.vmem [#allocation2], 279
  %v1930 = vld [vmem:[%s1929] ss:$2 sm:$0x1]
  %s1931 = scalar_lea.vmem [#allocation2], 295
  %v1932 = vld [vmem:[%s1931] ss:$2 sm:$0xff]
  %s1933 = scalar_lea.vmem [#allocation2], 311
  %v1934 = vld [vmem:[%s1933] ss:$2 sm:$0x1]
  %s1935 = scalar_lea.vmem [#allocation2], 327
  %v1936 = vld [vmem:[%s1935] ss:$2 sm:$0xff]
  %s1937 = scalar_lea.vmem [#allocation2], 343
  %v1938 = vld [vmem:[%s1937] ss:$2 sm:$0x1]
  %s1939 = scalar_lea.vmem [#allocation2], 359
  %v1940 = vld [vmem:[%s1939] ss:$2 sm:$0xff]
  %s1941 = scalar_lea.vmem [#allocation2], 375
  %v1942 = vld [vmem:[%s1941] ss:$2 sm:$0x1]
  %s1943 = scalar_lea.vmem [#allocation2], 391
  %v1944 = vld [vmem:[%s1943] ss:$2 sm:$0xff]
  %s1945 = scalar_lea.vmem [#allocation2], 407
  %v1946 = vld [vmem:[%s1945] ss:$2 sm:$0x1]
  %s1947 = scalar_lea.vmem [#allocation2], 423
  %v1948 = vld [vmem:[%s1947] ss:$2 sm:$0xff]
  %s1949 = scalar_lea.vmem [#allocation2], 439
  %v1950 = vld [vmem:[%s1949] ss:$2 sm:$0x1]
  %s1951 = scalar_lea.vmem [#allocation2], 455
  %v1952 = vld [vmem:[%s1951] ss:$2 sm:$0xff]
  %s1953 = scalar_lea.vmem [#allocation2], 471
  %v1954 = vld [vmem:[%s1953] ss:$2 sm:$0x1]
  %s1955 = scalar_lea.vmem [#allocation2], 487
  %v1956 = vld [vmem:[%s1955] ss:$2 sm:$0xff]
  %s1957 = scalar_lea.vmem [#allocation2], 503
  %v1958 = vld [vmem:[%s1957] ss:$2 sm:$0x1]
  %s1959 = scalar_lea.vmem [#allocation2], 519
  %v1960 = vld [vmem:[%s1959] ss:$2 sm:$0xff]
  %s1961 = scalar_lea.vmem [#allocation2], 535
  %v1962 = vld [vmem:[%s1961] ss:$2 sm:$0x1]
  %s1963 = scalar_lea.vmem [#allocation2], 551
  %v1964 = vld [vmem:[%s1963] ss:$2 sm:$0xff]
  %s1965 = scalar_lea.vmem [#allocation2], 567
  %v1966 = vld [vmem:[%s1965] ss:$2 sm:$0x1]
  %s1967 = scalar_lea.vmem [#allocation2], 583
  %v1968 = vld [vmem:[%s1967] ss:$2 sm:$0xff]
  %s1969 = scalar_lea.vmem [#allocation2], 599
  %v1970 = vld [vmem:[%s1969] ss:$2 sm:$0x1]
  %s1971 = scalar_lea.vmem [#allocation2], 615
  %v1972 = vld [vmem:[%s1971] ss:$2 sm:$0xff]
  %s1973 = scalar_lea.vmem [#allocation2], 631
  %v1974 = vld [vmem:[%s1973] ss:$2 sm:$0x1]
  %s1975 = scalar_lea.vmem [#allocation2], 647
  %v1976 = vld [vmem:[%s1975] ss:$2 sm:$0xff]
  %s1977 = scalar_lea.vmem [#allocation2], 663
  %v1978 = vld [vmem:[%s1977] ss:$2 sm:$0x1]
  %s1979 = scalar_lea.vmem [#allocation2], 679
  %v1980 = vld [vmem:[%s1979] ss:$2 sm:$0xff]
  %s1981 = scalar_lea.vmem [#allocation2], 695
  %v1982 = vld [vmem:[%s1981] ss:$2 sm:$0x1]
  %s1983 = scalar_lea.vmem [#allocation2], 711
  %v1984 = vld [vmem:[%s1983] ss:$2 sm:$0xff]
  %s1985 = scalar_lea.vmem [#allocation2], 727
  %v1986 = vld [vmem:[%s1985] ss:$2 sm:$0x1]
  %s1987 = scalar_lea.vmem [#allocation2], 743
  %v1988 = vld [vmem:[%s1987] ss:$2 sm:$0xff]
  %s1989 = scalar_lea.vmem [#allocation2], 759
  %v1990 = vld [vmem:[%s1989] ss:$2 sm:$0x1]
  %s1991 = scalar_lea.vmem [#allocation2], 775
  %v1992 = vld [vmem:[%s1991] ss:$2 sm:$0xff]
  %s1993 = scalar_lea.vmem [#allocation2], 791
  %v1994 = vld [vmem:[%s1993] ss:$2 sm:$0x1]
  %s1995 = scalar_lea.vmem [#allocation2], 807
  %v1996 = vld [vmem:[%s1995] ss:$2 sm:$0xff]
  %s1997 = scalar_lea.vmem [#allocation2], 823
  %v1998 = vld [vmem:[%s1997] ss:$2 sm:$0x1]
  %s1999 = scalar_lea.vmem [#allocation2], 839
  %v2000 = vld [vmem:[%s1999] ss:$2 sm:$0xff]
  %s2001 = scalar_lea.vmem [#allocation2], 855
  %v2002 = vld [vmem:[%s2001] ss:$2 sm:$0x1]
  %s2003 = scalar_lea.vmem [#allocation2], 871
  %v2004 = vld [vmem:[%s2003] ss:$2 sm:$0xff]
  %s2005 = scalar_lea.vmem [#allocation2], 887
  %v2006 = vld [vmem:[%s2005] ss:$2 sm:$0x1]
  %s2007 = scalar_lea.vmem [#allocation2], 903
  %v2008 = vld [vmem:[%s2007] ss:$2 sm:$0xff]
  %s2009 = scalar_lea.vmem [#allocation2], 919
  %v2010 = vld [vmem:[%s2009] ss:$2 sm:$0x1]
  %s2011 = scalar_lea.vmem [#allocation2], 935
  %v2012 = vld [vmem:[%s2011] ss:$2 sm:$0xff]
  %s2013 = scalar_lea.vmem [#allocation2], 951
  %v2014 = vld [vmem:[%s2013] ss:$2 sm:$0x1]
  %s2015 = scalar_lea.vmem [#allocation2], 967
  %v2016 = vld [vmem:[%s2015] ss:$2 sm:$0xff]
  %s2017 = scalar_lea.vmem [#allocation2], 983
  %v2018 = vld [vmem:[%s2017] ss:$2 sm:$0x1]
  %s2019 = scalar_lea.vmem [#allocation2], 999
  %v2020 = vld [vmem:[%s2019] ss:$2 sm:$0xff]
  %s2021 = scalar_lea.vmem [#allocation2], 1015
  %v2022 = vld [vmem:[%s2021] ss:$2 sm:$0x1]
  %s2023 = scalar_lea.vmem [#allocation2], 1031
  %v2024 = vld [vmem:[%s2023] ss:$2 sm:$0xff]
  %s2025 = scalar_lea.vmem [#allocation2], 1047
  %v2026 = vld [vmem:[%s2025] ss:$2 sm:$0x1]
  %s2027 = scalar_lea.vmem [#allocation2], 1063
  %v2028 = vld [vmem:[%s2027] ss:$2 sm:$0xff]
  %s2029 = scalar_lea.vmem [#allocation2], 1079
  %v2030 = vld [vmem:[%s2029] ss:$2 sm:$0x1]
  %s2031 = scalar_lea.vmem [#allocation2], 1095
  %v2032 = vld [vmem:[%s2031] ss:$2 sm:$0xff]
  %s2033 = scalar_lea.vmem [#allocation2], 1111
  %v2034 = vld [vmem:[%s2033] ss:$2 sm:$0x1]
  %s2035 = scalar_lea.vmem [#allocation2], 1127
  %v2036 = vld [vmem:[%s2035] ss:$2 sm:$0xff]
  %s2037 = scalar_lea.vmem [#allocation2], 1143
  %v2038 = vld [vmem:[%s2037] ss:$2 sm:$0x1]
  %2039 = vst.msk [vmem:[#allocation3] sm:$0xff] %vm696, %v1896
  %2040 = vst.msk [vmem:[#allocation3 + $0x8] sm:$0x1] %vm1816, %v1898
  %2041 = vst.msk [vmem:[#allocation3 + $0x10] sm:$0xff] %vm696, %v1900
  %2042 = vst.msk [vmem:[#allocation3 + $0x18] sm:$0x1] %vm1816, %v1902
  %2043 = vst.msk [vmem:[#allocation3 + $0x20] sm:$0xff] %vm696, %v1904
  %2044 = vst.msk [vmem:[#allocation3 + $0x28] sm:$0x1] %vm1816, %v1906
  %2045 = vst.msk [vmem:[#allocation3 + $0x30] sm:$0xff] %vm696, %v1908
  %2046 = vst.msk [vmem:[#allocation3 + $0x38] sm:$0x1] %vm1816, %v1910
  %2047 = vst.msk [vmem:[#allocation3 + $0x40] sm:$0xff] %vm696, %v1912
  %2048 = vst.msk [vmem:[#allocation3 + $0x48] sm:$0x1] %vm1816, %v1914
  %2049 = vst.msk [vmem:[#allocation3 + $0x50] sm:$0xff] %vm696, %v1916
  %2050 = vst.msk [vmem:[#allocation3 + $0x58] sm:$0x1] %vm1816, %v1918
  %2051 = vst.msk [vmem:[#allocation3 + $0x60] sm:$0xff] %vm696, %v1920
  %2052 = vst.msk [vmem:[#allocation3 + $0x68] sm:$0x1] %vm1816, %v1922
  %2053 = vst.msk [vmem:[#allocation3 + $0x70] sm:$0xff] %vm696, %v1924
  %2054 = vst.msk [vmem:[#allocation3 + $0x78] sm:$0x1] %vm1816, %v1926
  %2055 = vst.msk [vmem:[#allocation3 + $0x80] sm:$0xff] %vm696, %v1928
  %2056 = vst.msk [vmem:[#allocation3 + $0x88] sm:$0x1] %vm1816, %v1930
  %2057 = vst.msk [vmem:[#allocation3 + $0x90] sm:$0xff] %vm696, %v1932
  %2058 = vst.msk [vmem:[#allocation3 + $0x98] sm:$0x1] %vm1816, %v1934
  %2059 = vst.msk [vmem:[#allocation3 + $0xa0] sm:$0xff] %vm696, %v1936
  %2060 = vst.msk [vmem:[#allocation3 + $0xa8] sm:$0x1] %vm1816, %v1938
  %2061 = vst.msk [vmem:[#allocation3 + $0xb0] sm:$0xff] %vm696, %v1940
  %2062 = vst.msk [vmem:[#allocation3 + $0xb8] sm:$0x1] %vm1816, %v1942
  %2063 = vst.msk [vmem:[#allocation3 + $0xc0] sm:$0xff] %vm696, %v1944
  %2064 = vst.msk [vmem:[#allocation3 + $0xc8] sm:$0x1] %vm1816, %v1946
  %2065 = vst.msk [vmem:[#allocation3 + $0xd0] sm:$0xff] %vm696, %v1948
  %2066 = vst.msk [vmem:[#allocation3 + $0xd8] sm:$0x1] %vm1816, %v1950
  %2067 = vst.msk [vmem:[#allocation3 + $0xe0] sm:$0xff] %vm696, %v1952
  %2068 = vst.msk [vmem:[#allocation3 + $0xe8] sm:$0x1] %vm1816, %v1954
  %2069 = vst.msk [vmem:[#allocation3 + $0xf0] sm:$0xff] %vm696, %v1956
  %2070 = vst.msk [vmem:[#allocation3 + $0xf8] sm:$0x1] %vm1816, %v1958
  %2071 = vst.msk [vmem:[#allocation3 + $0x100] sm:$0xff] %vm696, %v1960
  %2072 = vst.msk [vmem:[#allocation3 + $0x108] sm:$0x1] %vm1816, %v1962
  %2073 = vst.msk [vmem:[#allocation3 + $0x110] sm:$0xff] %vm696, %v1964
  %2074 = vst.msk [vmem:[#allocation3 + $0x118] sm:$0x1] %vm1816, %v1966
  %2075 = vst.msk [vmem:[#allocation3 + $0x120] sm:$0xff] %vm696, %v1968
  %2076 = vst.msk [vmem:[#allocation3 + $0x128] sm:$0x1] %vm1816, %v1970
  %2077 = vst.msk [vmem:[#allocation3 + $0x130] sm:$0xff] %vm696, %v1972
  %2078 = vst.msk [vmem:[#allocation3 + $0x138] sm:$0x1] %vm1816, %v1974
  %2079 = vst.msk [vmem:[#allocation3 + $0x140] sm:$0xff] %vm696, %v1976
  %2080 = vst.msk [vmem:[#allocation3 + $0x148] sm:$0x1] %vm1816, %v1978
  %2081 = vst.msk [vmem:[#allocation3 + $0x150] sm:$0xff] %vm696, %v1980
  %2082 = vst.msk [vmem:[#allocation3 + $0x158] sm:$0x1] %vm1816, %v1982
  %2083 = vst.msk [vmem:[#allocation3 + $0x160] sm:$0xff] %vm696, %v1984
  %2084 = vst.msk [vmem:[#allocation3 + $0x168] sm:$0x1] %vm1816, %v1986
  %2085 = vst.msk [vmem:[#allocation3 + $0x170] sm:$0xff] %vm696, %v1988
  %2086 = vst.msk [vmem:[#allocation3 + $0x178] sm:$0x1] %vm1816, %v1990
  %2087 = vst.msk [vmem:[#allocation3 + $0x180] sm:$0xff] %vm696, %v1992
  %2088 = vst.msk [vmem:[#allocation3 + $0x188] sm:$0x1] %vm1816, %v1994
  %2089 = vst.msk [vmem:[#allocation3 + $0x190] sm:$0xff] %vm696, %v1996
  %2090 = vst.msk [vmem:[#allocation3 + $0x198] sm:$0x1] %vm1816, %v1998
  %2091 = vst.msk [vmem:[#allocation3 + $0x1a0] sm:$0xff] %vm696, %v2000
  %2092 = vst.msk [vmem:[#allocation3 + $0x1a8] sm:$0x1] %vm1816, %v2002
  %2093 = vst.msk [vmem:[#allocation3 + $0x1b0] sm:$0xff] %vm696, %v2004
  %2094 = vst.msk [vmem:[#allocation3 + $0x1b8] sm:$0x1] %vm1816, %v2006
  %2095 = vst.msk [vmem:[#allocation3 + $0x1c0] sm:$0xff] %vm696, %v2008
  %2096 = vst.msk [vmem:[#allocation3 + $0x1c8] sm:$0x1] %vm1816, %v2010
  %2097 = vst.msk [vmem:[#allocation3 + $0x1d0] sm:$0xff] %vm696, %v2012
  %2098 = vst.msk [vmem:[#allocation3 + $0x1d8] sm:$0x1] %vm1816, %v2014
  %2099 = vst.msk [vmem:[#allocation3 + $0x1e0] sm:$0xff] %vm696, %v2016
  %2100 = vst.msk [vmem:[#allocation3 + $0x1e8] sm:$0x1] %vm1816, %v2018
  %2101 = vst.msk [vmem:[#allocation3 + $0x1f0] sm:$0xff] %vm696, %v2020
  %2102 = vst.msk [vmem:[#allocation3 + $0x1f8] sm:$0x1] %vm1816, %v2022
  %2103 = vst.msk [vmem:[#allocation3 + $0x200] sm:$0xff] %vm696, %v2024
  %2104 = vst.msk [vmem:[#allocation3 + $0x208] sm:$0x1] %vm1816, %v2026
  %2105 = vst.msk [vmem:[#allocation3 + $0x210] sm:$0xff] %vm696, %v2028
  %2106 = vst.msk [vmem:[#allocation3 + $0x218] sm:$0x1] %vm1816, %v2030
  %2107 = vst.msk [vmem:[#allocation3 + $0x220] sm:$0xff] %vm696, %v2032
  %2108 = vst.msk [vmem:[#allocation3 + $0x228] sm:$0x1] %vm1816, %v2034
  %2109 = vst.msk [vmem:[#allocation3 + $0x230] sm:$0xff] %vm696, %v2036
  %2110 = vst.msk [vmem:[#allocation3 + $0x238] sm:$0x1] %vm1816, %v2038
  %s2111 = scalar_lea.vmem [#allocation2], 8
  %v2112 = vld [vmem:[%s2111] ss:$2 sm:$0xff]
  %s2113 = scalar_lea.vmem [#allocation2], 24
  %v2114 = vld [vmem:[%s2113] ss:$2 sm:$0x1]
  %s2115 = scalar_lea.vmem [#allocation2], 40
  %v2116 = vld [vmem:[%s2115] ss:$2 sm:$0xff]
  %s2117 = scalar_lea.vmem [#allocation2], 56
  %v2118 = vld [vmem:[%s2117] ss:$2 sm:$0x1]
  %s2119 = scalar_lea.vmem [#allocation2], 72
  %v2120 = vld [vmem:[%s2119] ss:$2 sm:$0xff]
  %s2121 = scalar_lea.vmem [#allocation2], 88
  %v2122 = vld [vmem:[%s2121] ss:$2 sm:$0x1]
  %s2123 = scalar_lea.vmem [#allocation2], 104
  %v2124 = vld [vmem:[%s2123] ss:$2 sm:$0xff]
  %s2125 = scalar_lea.vmem [#allocation2], 120
  %v2126 = vld [vmem:[%s2125] ss:$2 sm:$0x1]
  %s2127 = scalar_lea.vmem [#allocation2], 136
  %v2128 = vld [vmem:[%s2127] ss:$2 sm:$0xff]
  %s2129 = scalar_lea.vmem [#allocation2], 152
  %v2130 = vld [vmem:[%s2129] ss:$2 sm:$0x1]
  %s2131 = scalar_lea.vmem [#allocation2], 168
  %v2132 = vld [vmem:[%s2131] ss:$2 sm:$0xff]
  %s2133 = scalar_lea.vmem [#allocation2], 184
  %v2134 = vld [vmem:[%s2133] ss:$2 sm:$0x1]
  %s2135 = scalar_lea.vmem [#allocation2], 200
  %v2136 = vld [vmem:[%s2135] ss:$2 sm:$0xff]
  %s2137 = scalar_lea.vmem [#allocation2], 216
  %v2138 = vld [vmem:[%s2137] ss:$2 sm:$0x1]
  %s2139 = scalar_lea.vmem [#allocation2], 232
  %v2140 = vld [vmem:[%s2139] ss:$2 sm:$0xff]
  %s2141 = scalar_lea.vmem [#allocation2], 248
  %v2142 = vld [vmem:[%s2141] ss:$2 sm:$0x1]
  %s2143 = scalar_lea.vmem [#allocation2], 264
  %v2144 = vld [vmem:[%s2143] ss:$2 sm:$0xff]
  %s2145 = scalar_lea.vmem [#allocation2], 280
  %v2146 = vld [vmem:[%s2145] ss:$2 sm:$0x1]
  %s2147 = scalar_lea.vmem [#allocation2], 296
  %v2148 = vld [vmem:[%s2147] ss:$2 sm:$0xff]
  %s2149 = scalar_lea.vmem [#allocation2], 312
  %v2150 = vld [vmem:[%s2149] ss:$2 sm:$0x1]
  %s2151 = scalar_lea.vmem [#allocation2], 328
  %v2152 = vld [vmem:[%s2151] ss:$2 sm:$0xff]
  %s2153 = scalar_lea.vmem [#allocation2], 344
  %v2154 = vld [vmem:[%s2153] ss:$2 sm:$0x1]
  %s2155 = scalar_lea.vmem [#allocation2], 360
  %v2156 = vld [vmem:[%s2155] ss:$2 sm:$0xff]
  %s2157 = scalar_lea.vmem [#allocation2], 376
  %v2158 = vld [vmem:[%s2157] ss:$2 sm:$0x1]
  %s2159 = scalar_lea.vmem [#allocation2], 392
  %v2160 = vld [vmem:[%s2159] ss:$2 sm:$0xff]
  %s2161 = scalar_lea.vmem [#allocation2], 408
  %v2162 = vld [vmem:[%s2161] ss:$2 sm:$0x1]
  %s2163 = scalar_lea.vmem [#allocation2], 424
  %v2164 = vld [vmem:[%s2163] ss:$2 sm:$0xff]
  %s2165 = scalar_lea.vmem [#allocation2], 440
  %v2166 = vld [vmem:[%s2165] ss:$2 sm:$0x1]
  %s2167 = scalar_lea.vmem [#allocation2], 456
  %v2168 = vld [vmem:[%s2167] ss:$2 sm:$0xff]
  %s2169 = scalar_lea.vmem [#allocation2], 472
  %v2170 = vld [vmem:[%s2169] ss:$2 sm:$0x1]
  %s2171 = scalar_lea.vmem [#allocation2], 488
  %v2172 = vld [vmem:[%s2171] ss:$2 sm:$0xff]
  %s2173 = scalar_lea.vmem [#allocation2], 504
  %v2174 = vld [vmem:[%s2173] ss:$2 sm:$0x1]
  %s2175 = scalar_lea.vmem [#allocation2], 520
  %v2176 = vld [vmem:[%s2175] ss:$2 sm:$0xff]
  %s2177 = scalar_lea.vmem [#allocation2], 536
  %v2178 = vld [vmem:[%s2177] ss:$2 sm:$0x1]
  %s2179 = scalar_lea.vmem [#allocation2], 552
  %v2180 = vld [vmem:[%s2179] ss:$2 sm:$0xff]
  %s2181 = scalar_lea.vmem [#allocation2], 568
  %v2182 = vld [vmem:[%s2181] ss:$2 sm:$0x1]
  %s2183 = scalar_lea.vmem [#allocation2], 584
  %v2184 = vld [vmem:[%s2183] ss:$2 sm:$0xff]
  %s2185 = scalar_lea.vmem [#allocation2], 600
  %v2186 = vld [vmem:[%s2185] ss:$2 sm:$0x1]
  %s2187 = scalar_lea.vmem [#allocation2], 616
  %v2188 = vld [vmem:[%s2187] ss:$2 sm:$0xff]
  %s2189 = scalar_lea.vmem [#allocation2], 632
  %v2190 = vld [vmem:[%s2189] ss:$2 sm:$0x1]
  %s2191 = scalar_lea.vmem [#allocation2], 648
  %v2192 = vld [vmem:[%s2191] ss:$2 sm:$0xff]
  %s2193 = scalar_lea.vmem [#allocation2], 664
  %v2194 = vld [vmem:[%s2193] ss:$2 sm:$0x1]
  %s2195 = scalar_lea.vmem [#allocation2], 680
  %v2196 = vld [vmem:[%s2195] ss:$2 sm:$0xff]
  %s2197 = scalar_lea.vmem [#allocation2], 696
  %v2198 = vld [vmem:[%s2197] ss:$2 sm:$0x1]
  %s2199 = scalar_lea.vmem [#allocation2], 712
  %v2200 = vld [vmem:[%s2199] ss:$2 sm:$0xff]
  %s2201 = scalar_lea.vmem [#allocation2], 728
  %v2202 = vld [vmem:[%s2201] ss:$2 sm:$0x1]
  %s2203 = scalar_lea.vmem [#allocation2], 744
  %v2204 = vld [vmem:[%s2203] ss:$2 sm:$0xff]
  %s2205 = scalar_lea.vmem [#allocation2], 760
  %v2206 = vld [vmem:[%s2205] ss:$2 sm:$0x1]
  %s2207 = scalar_lea.vmem [#allocation2], 776
  %v2208 = vld [vmem:[%s2207] ss:$2 sm:$0xff]
  %s2209 = scalar_lea.vmem [#allocation2], 792
  %v2210 = vld [vmem:[%s2209] ss:$2 sm:$0x1]
  %s2211 = scalar_lea.vmem [#allocation2], 808
  %v2212 = vld [vmem:[%s2211] ss:$2 sm:$0xff]
  %s2213 = scalar_lea.vmem [#allocation2], 824
  %v2214 = vld [vmem:[%s2213] ss:$2 sm:$0x1]
  %s2215 = scalar_lea.vmem [#allocation2], 840
  %v2216 = vld [vmem:[%s2215] ss:$2 sm:$0xff]
  %s2217 = scalar_lea.vmem [#allocation2], 856
  %v2218 = vld [vmem:[%s2217] ss:$2 sm:$0x1]
  %s2219 = scalar_lea.vmem [#allocation2], 872
  %v2220 = vld [vmem:[%s2219] ss:$2 sm:$0xff]
  %s2221 = scalar_lea.vmem [#allocation2], 888
  %v2222 = vld [vmem:[%s2221] ss:$2 sm:$0x1]
  %s2223 = scalar_lea.vmem [#allocation2], 904
  %v2224 = vld [vmem:[%s2223] ss:$2 sm:$0xff]
  %s2225 = scalar_lea.vmem [#allocation2], 920
  %v2226 = vld [vmem:[%s2225] ss:$2 sm:$0x1]
  %s2227 = scalar_lea.vmem [#allocation2], 936
  %v2228 = vld [vmem:[%s2227] ss:$2 sm:$0xff]
  %s2229 = scalar_lea.vmem [#allocation2], 952
  %v2230 = vld [vmem:[%s2229] ss:$2 sm:$0x1]
  %s2231 = scalar_lea.vmem [#allocation2], 968
  %v2232 = vld [vmem:[%s2231] ss:$2 sm:$0xff]
  %s2233 = scalar_lea.vmem [#allocation2], 984
  %v2234 = vld [vmem:[%s2233] ss:$2 sm:$0x1]
  %s2235 = scalar_lea.vmem [#allocation2], 1000
  %v2236 = vld [vmem:[%s2235] ss:$2 sm:$0xff]
  %s2237 = scalar_lea.vmem [#allocation2], 1016
  %v2238 = vld [vmem:[%s2237] ss:$2 sm:$0x1]
  %s2239 = scalar_lea.vmem [#allocation2], 1032
  %v2240 = vld [vmem:[%s2239] ss:$2 sm:$0xff]
  %s2241 = scalar_lea.vmem [#allocation2], 1048
  %v2242 = vld [vmem:[%s2241] ss:$2 sm:$0x1]
  %s2243 = scalar_lea.vmem [#allocation2], 1064
  %v2244 = vld [vmem:[%s2243] ss:$2 sm:$0xff]
  %s2245 = scalar_lea.vmem [#allocation2], 1080
  %v2246 = vld [vmem:[%s2245] ss:$2 sm:$0x1]
  %s2247 = scalar_lea.vmem [#allocation2], 1096
  %v2248 = vld [vmem:[%s2247] ss:$2 sm:$0xff]
  %s2249 = scalar_lea.vmem [#allocation2], 1112
  %v2250 = vld [vmem:[%s2249] ss:$2 sm:$0x1]
  %s2251 = scalar_lea.vmem [#allocation2], 1128
  %v2252 = vld [vmem:[%s2251] ss:$2 sm:$0xff]
  %s2253 = scalar_lea.vmem [#allocation2], 1144
  %v2254 = vld [vmem:[%s2253] ss:$2 sm:$0x1]
  %2255 = vst.msk [vmem:[#allocation4] sm:$0xff] %vm696, %v2112
  %2256 = vst.msk [vmem:[#allocation4 + $0x8] sm:$0x1] %vm1816, %v2114
  %2257 = vst.msk [vmem:[#allocation4 + $0x10] sm:$0xff] %vm696, %v2116
  %2258 = vst.msk [vmem:[#allocation4 + $0x18] sm:$0x1] %vm1816, %v2118
  %2259 = vst.msk [vmem:[#allocation4 + $0x20] sm:$0xff] %vm696, %v2120
  %2260 = vst.msk [vmem:[#allocation4 + $0x28] sm:$0x1] %vm1816, %v2122
  %2261 = vst.msk [vmem:[#allocation4 + $0x30] sm:$0xff] %vm696, %v2124
  %2262 = vst.msk [vmem:[#allocation4 + $0x38] sm:$0x1] %vm1816, %v2126
  %2263 = vst.msk [vmem:[#allocation4 + $0x40] sm:$0xff] %vm696, %v2128
  %2264 = vst.msk [vmem:[#allocation4 + $0x48] sm:$0x1] %vm1816, %v2130
  %2265 = vst.msk [vmem:[#allocation4 + $0x50] sm:$0xff] %vm696, %v2132
  %2266 = vst.msk [vmem:[#allocation4 + $0x58] sm:$0x1] %vm1816, %v2134
  %2267 = vst.msk [vmem:[#allocation4 + $0x60] sm:$0xff] %vm696, %v2136
  %2268 = vst.msk [vmem:[#allocation4 + $0x68] sm:$0x1] %vm1816, %v2138
  %2269 = vst.msk [vmem:[#allocation4 + $0x70] sm:$0xff] %vm696, %v2140
  %2270 = vst.msk [vmem:[#allocation4 + $0x78] sm:$0x1] %vm1816, %v2142
  %2271 = vst.msk [vmem:[#allocation4 + $0x80] sm:$0xff] %vm696, %v2144
  %2272 = vst.msk [vmem:[#allocation4 + $0x88] sm:$0x1] %vm1816, %v2146
  %2273 = vst.msk [vmem:[#allocation4 + $0x90] sm:$0xff] %vm696, %v2148
  %2274 = vst.msk [vmem:[#allocation4 + $0x98] sm:$0x1] %vm1816, %v2150
  %2275 = vst.msk [vmem:[#allocation4 + $0xa0] sm:$0xff] %vm696, %v2152
  %2276 = vst.msk [vmem:[#allocation4 + $0xa8] sm:$0x1] %vm1816, %v2154
  %2277 = vst.msk [vmem:[#allocation4 + $0xb0] sm:$0xff] %vm696, %v2156
  %2278 = vst.msk [vmem:[#allocation4 + $0xb8] sm:$0x1] %vm1816, %v2158
  %2279 = vst.msk [vmem:[#allocation4 + $0xc0] sm:$0xff] %vm696, %v2160
  %2280 = vst.msk [vmem:[#allocation4 + $0xc8] sm:$0x1] %vm1816, %v2162
  %2281 = vst.msk [vmem:[#allocation4 + $0xd0] sm:$0xff] %vm696, %v2164
  %2282 = vst.msk [vmem:[#allocation4 + $0xd8] sm:$0x1] %vm1816, %v2166
  %2283 = vst.msk [vmem:[#allocation4 + $0xe0] sm:$0xff] %vm696, %v2168
  %2284 = vst.msk [vmem:[#allocation4 + $0xe8] sm:$0x1] %vm1816, %v2170
  %2285 = vst.msk [vmem:[#allocation4 + $0xf0] sm:$0xff] %vm696, %v2172
  %2286 = vst.msk [vmem:[#allocation4 + $0xf8] sm:$0x1] %vm1816, %v2174
  %2287 = vst.msk [vmem:[#allocation4 + $0x100] sm:$0xff] %vm696, %v2176
  %2288 = vst.msk [vmem:[#allocation4 + $0x108] sm:$0x1] %vm1816, %v2178
  %2289 = vst.msk [vmem:[#allocation4 + $0x110] sm:$0xff] %vm696, %v2180
  %2290 = vst.msk [vmem:[#allocation4 + $0x118] sm:$0x1] %vm1816, %v2182
  %2291 = vst.msk [vmem:[#allocation4 + $0x120] sm:$0xff] %vm696, %v2184
  %2292 = vst.msk [vmem:[#allocation4 + $0x128] sm:$0x1] %vm1816, %v2186
  %2293 = vst.msk [vmem:[#allocation4 + $0x130] sm:$0xff] %vm696, %v2188
  %2294 = vst.msk [vmem:[#allocation4 + $0x138] sm:$0x1] %vm1816, %v2190
  %2295 = vst.msk [vmem:[#allocation4 + $0x140] sm:$0xff] %vm696, %v2192
  %2296 = vst.msk [vmem:[#allocation4 + $0x148] sm:$0x1] %vm1816, %v2194
  %2297 = vst.msk [vmem:[#allocation4 + $0x150] sm:$0xff] %vm696, %v2196
  %2298 = vst.msk [vmem:[#allocation4 + $0x158] sm:$0x1] %vm1816, %v2198
  %2299 = vst.msk [vmem:[#allocation4 + $0x160] sm:$0xff] %vm696, %v2200
  %2300 = vst.msk [vmem:[#allocation4 + $0x168] sm:$0x1] %vm1816, %v2202
  %2301 = vst.msk [vmem:[#allocation4 + $0x170] sm:$0xff] %vm696, %v2204
  %2302 = vst.msk [vmem:[#allocation4 + $0x178] sm:$0x1] %vm1816, %v2206
  %2303 = vst.msk [vmem:[#allocation4 + $0x180] sm:$0xff] %vm696, %v2208
  %2304 = vst.msk [vmem:[#allocation4 + $0x188] sm:$0x1] %vm1816, %v2210
  %2305 = vst.msk [vmem:[#allocation4 + $0x190] sm:$0xff] %vm696, %v2212
  %2306 = vst.msk [vmem:[#allocation4 + $0x198] sm:$0x1] %vm1816, %v2214
  %2307 = vst.msk [vmem:[#allocation4 + $0x1a0] sm:$0xff] %vm696, %v2216
  %2308 = vst.msk [vmem:[#allocation4 + $0x1a8] sm:$0x1] %vm1816, %v2218
  %2309 = vst.msk [vmem:[#allocation4 + $0x1b0] sm:$0xff] %vm696, %v2220
  %2310 = vst.msk [vmem:[#allocation4 + $0x1b8] sm:$0x1] %vm1816, %v2222
  %2311 = vst.msk [vmem:[#allocation4 + $0x1c0] sm:$0xff] %vm696, %v2224
  %2312 = vst.msk [vmem:[#allocation4 + $0x1c8] sm:$0x1] %vm1816, %v2226
  %2313 = vst.msk [vmem:[#allocation4 + $0x1d0] sm:$0xff] %vm696, %v2228
  %2314 = vst.msk [vmem:[#allocation4 + $0x1d8] sm:$0x1] %vm1816, %v2230
  %2315 = vst.msk [vmem:[#allocation4 + $0x1e0] sm:$0xff] %vm696, %v2232
  %2316 = vst.msk [vmem:[#allocation4 + $0x1e8] sm:$0x1] %vm1816, %v2234
  %2317 = vst.msk [vmem:[#allocation4 + $0x1f0] sm:$0xff] %vm696, %v2236
  %2318 = vst.msk [vmem:[#allocation4 + $0x1f8] sm:$0x1] %vm1816, %v2238
  %2319 = vst.msk [vmem:[#allocation4 + $0x200] sm:$0xff] %vm696, %v2240
  %2320 = vst.msk [vmem:[#allocation4 + $0x208] sm:$0x1] %vm1816, %v2242
  %2321 = vst.msk [vmem:[#allocation4 + $0x210] sm:$0xff] %vm696, %v2244
  %2322 = vst.msk [vmem:[#allocation4 + $0x218] sm:$0x1] %vm1816, %v2246
  %2323 = vst.msk [vmem:[#allocation4 + $0x220] sm:$0xff] %vm696, %v2248
  %2324 = vst.msk [vmem:[#allocation4 + $0x228] sm:$0x1] %vm1816, %v2250
  %2325 = vst.msk [vmem:[#allocation4 + $0x230] sm:$0xff] %vm696, %v2252
  %2326 = vst.msk [vmem:[#allocation4 + $0x238] sm:$0x1] %vm1816, %v2254
  %v2327 = vld [vmem:[#allocation3] sm:$0xff]
  %v2328 = vld [vmem:[#allocation3 + $0x20] sm:$0xff]
  %v2329 = vld [vmem:[#allocation3 + $0x40] sm:$0xff]
  %v2330 = vld [vmem:[#allocation3 + $0x60] sm:$0xff]
  %v2331 = vld [vmem:[#allocation3 + $0x80] sm:$0xff]
  %v2332 = vld [vmem:[#allocation3 + $0xa0] sm:$0xff]
  %v2333 = vld [vmem:[#allocation3 + $0xc0] sm:$0xff]
  %v2334 = vld [vmem:[#allocation3 + $0xe0] sm:$0xff]
  %v2335 = vld [vmem:[#allocation3 + $0x120] sm:$0xff]
  %v2336 = vld [vmem:[#allocation3 + $0x140] sm:$0xff]
  %v2337 = vld [vmem:[#allocation3 + $0x160] sm:$0xff]
  %v2338 = vld [vmem:[#allocation3 + $0x180] sm:$0xff]
  %v2339 = vld [vmem:[#allocation3 + $0x1a0] sm:$0xff]
  %v2340 = vld [vmem:[#allocation3 + $0x1c0] sm:$0xff]
  %v2341 = vld [vmem:[#allocation3 + $0x1e0] sm:$0xff]
  %v2342 = vld [vmem:[#allocation3 + $0x200] sm:$0xff]
  %v2343 = vld [vmem:[%s4] sm:$0x1]
  %v2344 = vlaneseq
  %v2345 = vshrl.u32 %v2344, 7
  %v2346 = vsub.s32 0, %v2345
  %v2347 = vrot.slane %v2343, %v2346
  %v2348 = vmul.f32 %v2327, %v2347
  %v2349 = vmul.f32 %v2328, %v2347
  %v2350 = vmul.f32 %v2329, %v2347
  %v2351 = vmul.f32 %v2330, %v2347
  %v2352 = vmul.f32 %v2331, %v2347
  %v2353 = vmul.f32 %v2332, %v2347
  %v2354 = vmul.f32 %v2333, %v2347
  %v2355 = vmul.f32 %v2334, %v2347
  %v2356 = vmul.f32 %v2335, %v2347
  %v2357 = vmul.f32 %v2336, %v2347
  %v2358 = vmul.f32 %v2337, %v2347
  %v2359 = vmul.f32 %v2338, %v2347
  %v2360 = vmul.f32 %v2339, %v2347
  %v2361 = vmul.f32 %v2340, %v2347
  %v2362 = vmul.f32 %v2341, %v2347
  %v2363 = vmul.f32 %v2342, %v2347
  %v2364 = vld [vmem:[#allocation4] sm:$0xff]
  %v2365 = vld [vmem:[#allocation4 + $0x20] sm:$0xff]
  %v2366 = vld [vmem:[#allocation4 + $0x40] sm:$0xff]
  %v2367 = vld [vmem:[#allocation4 + $0x60] sm:$0xff]
  %v2368 = vld [vmem:[#allocation4 + $0x80] sm:$0xff]
  %v2369 = vld [vmem:[#allocation4 + $0xa0] sm:$0xff]
  %v2370 = vld [vmem:[#allocation4 + $0xc0] sm:$0xff]
  %v2371 = vld [vmem:[#allocation4 + $0xe0] sm:$0xff]
  %v2372 = vld [vmem:[#allocation4 + $0x120] sm:$0xff]
  %v2373 = vld [vmem:[#allocation4 + $0x140] sm:$0xff]
  %v2374 = vld [vmem:[#allocation4 + $0x160] sm:$0xff]
  %v2375 = vld [vmem:[#allocation4 + $0x180] sm:$0xff]
  %v2376 = vld [vmem:[#allocation4 + $0x1a0] sm:$0xff]
  %v2377 = vld [vmem:[#allocation4 + $0x1c0] sm:$0xff]
  %v2378 = vld [vmem:[#allocation4 + $0x1e0] sm:$0xff]
  %v2379 = vld [vmem:[#allocation4 + $0x200] sm:$0xff]
  %v2380 = vld [vmem:[%s4 + $0x1] sm:$0x1]
  %v2381 = vlaneseq
  %v2382 = vshrl.u32 %v2381, 7
  %v2383 = vsub.s32 0, %v2382
  %v2384 = vrot.slane %v2380, %v2383
  %v2385 = vmul.f32 %v2364, %v2384
  %v2386 = vmul.f32 %v2365, %v2384
  %v2387 = vmul.f32 %v2366, %v2384
  %v2388 = vmul.f32 %v2367, %v2384
  %v2389 = vmul.f32 %v2368, %v2384
  %v2390 = vmul.f32 %v2369, %v2384
  %v2391 = vmul.f32 %v2370, %v2384
  %v2392 = vmul.f32 %v2371, %v2384
  %v2393 = vmul.f32 %v2372, %v2384
  %v2394 = vmul.f32 %v2373, %v2384
  %v2395 = vmul.f32 %v2374, %v2384
  %v2396 = vmul.f32 %v2375, %v2384
  %v2397 = vmul.f32 %v2376, %v2384
  %v2398 = vmul.f32 %v2377, %v2384
  %v2399 = vmul.f32 %v2378, %v2384
  %v2400 = vmul.f32 %v2379, %v2384
  %v2401 = vadd.f32 %v2348, %v2385
  %v2402 = vadd.f32 %v2349, %v2386
  %v2403 = vadd.f32 %v2350, %v2387
  %v2404 = vadd.f32 %v2351, %v2388
  %v2405 = vadd.f32 %v2352, %v2389
  %v2406 = vadd.f32 %v2353, %v2390
  %v2407 = vadd.f32 %v2354, %v2391
  %v2408 = vadd.f32 %v2355, %v2392
  %v2409 = vadd.f32 %v2356, %v2393
  %v2410 = vadd.f32 %v2357, %v2394
  %v2411 = vadd.f32 %v2358, %v2395
  %v2412 = vadd.f32 %v2359, %v2396
  %v2413 = vadd.f32 %v2360, %v2397
  %v2414 = vadd.f32 %v2361, %v2398
  %v2415 = vadd.f32 %v2362, %v2399
  %v2416 = vadd.f32 %v2363, %v2400
  %v2417 = vld [vmem:[#allocation3 + $0x1] sm:$0xff]
  %v2418 = vld [vmem:[#allocation3 + $0x21] sm:$0xff]
  %v2419 = vld [vmem:[#allocation3 + $0x41] sm:$0xff]
  %v2420 = vld [vmem:[#allocation3 + $0x61] sm:$0xff]
  %v2421 = vld [vmem:[#allocation3 + $0x81] sm:$0xff]
  %v2422 = vld [vmem:[#allocation3 + $0xa1] sm:$0xff]
  %v2423 = vld [vmem:[#allocation3 + $0xc1] sm:$0xff]
  %v2424 = vld [vmem:[#allocation3 + $0xe1] sm:$0xff]
  %v2425 = vld [vmem:[#allocation3 + $0x121] sm:$0xff]
  %v2426 = vld [vmem:[#allocation3 + $0x141] sm:$0xff]
  %v2427 = vld [vmem:[#allocation3 + $0x161] sm:$0xff]
  %v2428 = vld [vmem:[#allocation3 + $0x181] sm:$0xff]
  %v2429 = vld [vmem:[#allocation3 + $0x1a1] sm:$0xff]
  %v2430 = vld [vmem:[#allocation3 + $0x1c1] sm:$0xff]
  %v2431 = vld [vmem:[#allocation3 + $0x1e1] sm:$0xff]
  %v2432 = vld [vmem:[#allocation3 + $0x201] sm:$0xff]
  %v2433 = vld [vmem:[%s4 + $0x2] sm:$0x1]
  %v2434 = vlaneseq
  %v2435 = vshrl.u32 %v2434, 7
  %v2436 = vsub.s32 0, %v2435
  %v2437 = vrot.slane %v2433, %v2436
  %v2438 = vmul.f32 %v2417, %v2437
  %v2439 = vmul.f32 %v2418, %v2437
  %v2440 = vmul.f32 %v2419, %v2437
  %v2441 = vmul.f32 %v2420, %v2437
  %v2442 = vmul.f32 %v2421, %v2437
  %v2443 = vmul.f32 %v2422, %v2437
  %v2444 = vmul.f32 %v2423, %v2437
  %v2445 = vmul.f32 %v2424, %v2437
  %v2446 = vmul.f32 %v2425, %v2437
  %v2447 = vmul.f32 %v2426, %v2437
  %v2448 = vmul.f32 %v2427, %v2437
  %v2449 = vmul.f32 %v2428, %v2437
  %v2450 = vmul.f32 %v2429, %v2437
  %v2451 = vmul.f32 %v2430, %v2437
  %v2452 = vmul.f32 %v2431, %v2437
  %v2453 = vmul.f32 %v2432, %v2437
  %v2454 = vadd.f32 %v2401, %v2438
  %v2455 = vadd.f32 %v2402, %v2439
  %v2456 = vadd.f32 %v2403, %v2440
  %v2457 = vadd.f32 %v2404, %v2441
  %v2458 = vadd.f32 %v2405, %v2442
  %v2459 = vadd.f32 %v2406, %v2443
  %v2460 = vadd.f32 %v2407, %v2444
  %v2461 = vadd.f32 %v2408, %v2445
  %v2462 = vadd.f32 %v2409, %v2446
  %v2463 = vadd.f32 %v2410, %v2447
  %v2464 = vadd.f32 %v2411, %v2448
  %v2465 = vadd.f32 %v2412, %v2449
  %v2466 = vadd.f32 %v2413, %v2450
  %v2467 = vadd.f32 %v2414, %v2451
  %v2468 = vadd.f32 %v2415, %v2452
  %v2469 = vadd.f32 %v2416, %v2453
  %s2470 = scalar_lea.vmem [#allocation3], 16
  %v2471 = vld [vmem:[%s2470] sm:$0xff]
  %v2472 = vld [vmem:[%s2470 + $0x20] sm:$0xff]
  %v2473 = vld [vmem:[%s2470 + $0x40] sm:$0xff]
  %v2474 = vld [vmem:[%s2470 + $0x60] sm:$0xff]
  %v2475 = vld [vmem:[%s2470 + $0x80] sm:$0xff]
  %v2476 = vld [vmem:[%s2470 + $0xa0] sm:$0xff]
  %v2477 = vld [vmem:[%s2470 + $0xc0] sm:$0xff]
  %v2478 = vld [vmem:[%s2470 + $0xe0] sm:$0xff]
  %v2479 = vld [vmem:[%s2470 + $0x120] sm:$0xff]
  %v2480 = vld [vmem:[%s2470 + $0x140] sm:$0xff]
  %v2481 = vld [vmem:[%s2470 + $0x160] sm:$0xff]
  %v2482 = vld [vmem:[%s2470 + $0x180] sm:$0xff]
  %v2483 = vld [vmem:[%s2470 + $0x1a0] sm:$0xff]
  %v2484 = vld [vmem:[%s2470 + $0x1c0] sm:$0xff]
  %v2485 = vld [vmem:[%s2470 + $0x1e0] sm:$0xff]
  %v2486 = vld [vmem:[%s2470 + $0x200] sm:$0xff]
  %v2487 = vld [vmem:[%s4 + $0x3] sm:$0x1]
  %v2488 = vlaneseq
  %v2489 = vshrl.u32 %v2488, 7
  %v2490 = vsub.s32 0, %v2489
  %v2491 = vrot.slane %v2487, %v2490
  %v2492 = vmul.f32 %v2471, %v2491
  %v2493 = vmul.f32 %v2472, %v2491
  %v2494 = vmul.f32 %v2473, %v2491
  %v2495 = vmul.f32 %v2474, %v2491
  %v2496 = vmul.f32 %v2475, %v2491
  %v2497 = vmul.f32 %v2476, %v2491
  %v2498 = vmul.f32 %v2477, %v2491
  %v2499 = vmul.f32 %v2478, %v2491
  %v2500 = vmul.f32 %v2479, %v2491
  %v2501 = vmul.f32 %v2480, %v2491
  %v2502 = vmul.f32 %v2481, %v2491
  %v2503 = vmul.f32 %v2482, %v2491
  %v2504 = vmul.f32 %v2483, %v2491
  %v2505 = vmul.f32 %v2484, %v2491
  %v2506 = vmul.f32 %v2485, %v2491
  %v2507 = vmul.f32 %v2486, %v2491
  %v2508 = vadd.f32 %v2454, %v2492
  %v2509 = vadd.f32 %v2455, %v2493
  %v2510 = vadd.f32 %v2456, %v2494
  %v2511 = vadd.f32 %v2457, %v2495
  %v2512 = vadd.f32 %v2458, %v2496
  %v2513 = vadd.f32 %v2459, %v2497
  %v2514 = vadd.f32 %v2460, %v2498
  %v2515 = vadd.f32 %v2461, %v2499
  %v2516 = vadd.f32 %v2462, %v2500
  %v2517 = vadd.f32 %v2463, %v2501
  %v2518 = vadd.f32 %v2464, %v2502
  %v2519 = vadd.f32 %v2465, %v2503
  %v2520 = vadd.f32 %v2466, %v2504
  %v2521 = vadd.f32 %v2467, %v2505
  %v2522 = vadd.f32 %v2468, %v2506
  %v2523 = vadd.f32 %v2469, %v2507
  %s2524 = scalar_lea.vmem [#allocation4], 16
  %v2525 = vld [vmem:[%s2524] sm:$0xff]
  %v2526 = vld [vmem:[%s2524 + $0x20] sm:$0xff]
  %v2527 = vld [vmem:[%s2524 + $0x40] sm:$0xff]
  %v2528 = vld [vmem:[%s2524 + $0x60] sm:$0xff]
  %v2529 = vld [vmem:[%s2524 + $0x80] sm:$0xff]
  %v2530 = vld [vmem:[%s2524 + $0xa0] sm:$0xff]
  %v2531 = vld [vmem:[%s2524 + $0xc0] sm:$0xff]
  %v2532 = vld [vmem:[%s2524 + $0xe0] sm:$0xff]
  %v2533 = vld [vmem:[%s2524 + $0x120] sm:$0xff]
  %v2534 = vld [vmem:[%s2524 + $0x140] sm:$0xff]
  %v2535 = vld [vmem:[%s2524 + $0x160] sm:$0xff]
  %v2536 = vld [vmem:[%s2524 + $0x180] sm:$0xff]
  %v2537 = vld [vmem:[%s2524 + $0x1a0] sm:$0xff]
  %v2538 = vld [vmem:[%s2524 + $0x1c0] sm:$0xff]
  %v2539 = vld [vmem:[%s2524 + $0x1e0] sm:$0xff]
  %v2540 = vld [vmem:[%s2524 + $0x200] sm:$0xff]
  %v2541 = vld [vmem:[%s4 + $0x4] sm:$0x1]
  %v2542 = vlaneseq
  %v2543 = vshrl.u32 %v2542, 7
  %v2544 = vsub.s32 0, %v2543
  %v2545 = vrot.slane %v2541, %v2544
  %v2546 = vmul.f32 %v2525, %v2545
  %v2547 = vmul.f32 %v2526, %v2545
  %v2548 = vmul.f32 %v2527, %v2545
  %v2549 = vmul.f32 %v2528, %v2545
  %v2550 = vmul.f32 %v2529, %v2545
  %v2551 = vmul.f32 %v2530, %v2545
  %v2552 = vmul.f32 %v2531, %v2545
  %v2553 = vmul.f32 %v2532, %v2545
  %v2554 = vmul.f32 %v2533, %v2545
  %v2555 = vmul.f32 %v2534, %v2545
  %v2556 = vmul.f32 %v2535, %v2545
  %v2557 = vmul.f32 %v2536, %v2545
  %v2558 = vmul.f32 %v2537, %v2545
  %v2559 = vmul.f32 %v2538, %v2545
  %v2560 = vmul.f32 %v2539, %v2545
  %v2561 = vmul.f32 %v2540, %v2545
  %v2562 = vadd.f32 %v2508, %v2546
  %v2563 = vadd.f32 %v2509, %v2547
  %v2564 = vadd.f32 %v2510, %v2548
  %v2565 = vadd.f32 %v2511, %v2549
  %v2566 = vadd.f32 %v2512, %v2550
  %v2567 = vadd.f32 %v2513, %v2551
  %v2568 = vadd.f32 %v2514, %v2552
  %v2569 = vadd.f32 %v2515, %v2553
  %v2570 = vadd.f32 %v2516, %v2554
  %v2571 = vadd.f32 %v2517, %v2555
  %v2572 = vadd.f32 %v2518, %v2556
  %v2573 = vadd.f32 %v2519, %v2557
  %v2574 = vadd.f32 %v2520, %v2558
  %v2575 = vadd.f32 %v2521, %v2559
  %v2576 = vadd.f32 %v2522, %v2560
  %v2577 = vadd.f32 %v2523, %v2561
  %v2578 = vld [vmem:[%s2470 + $0x1] sm:$0xff]
  %v2579 = vld [vmem:[%s2470 + $0x21] sm:$0xff]
  %v2580 = vld [vmem:[%s2470 + $0x41] sm:$0xff]
  %v2581 = vld [vmem:[%s2470 + $0x61] sm:$0xff]
  %v2582 = vld [vmem:[%s2470 + $0x81] sm:$0xff]
  %v2583 = vld [vmem:[%s2470 + $0xa1] sm:$0xff]
  %v2584 = vld [vmem:[%s2470 + $0xc1] sm:$0xff]
  %v2585 = vld [vmem:[%s2470 + $0xe1] sm:$0xff]
  %v2586 = vld [vmem:[%s2470 + $0x121] sm:$0xff]
  %v2587 = vld [vmem:[%s2470 + $0x141] sm:$0xff]
  %v2588 = vld [vmem:[%s2470 + $0x161] sm:$0xff]
  %v2589 = vld [vmem:[%s2470 + $0x181] sm:$0xff]
  %v2590 = vld [vmem:[%s2470 + $0x1a1] sm:$0xff]
  %v2591 = vld [vmem:[%s2470 + $0x1c1] sm:$0xff]
  %v2592 = vld [vmem:[%s2470 + $0x1e1] sm:$0xff]
  %v2593 = vld [vmem:[%s2470 + $0x201] sm:$0xff]
  %v2594 = vld [vmem:[%s4 + $0x5] sm:$0x1]
  %v2595 = vlaneseq
  %v2596 = vshrl.u32 %v2595, 7
  %v2597 = vsub.s32 0, %v2596
  %v2598 = vrot.slane %v2594, %v2597
  %v2599 = vmul.f32 %v2578, %v2598
  %v2600 = vmul.f32 %v2579, %v2598
  %v2601 = vmul.f32 %v2580, %v2598
  %v2602 = vmul.f32 %v2581, %v2598
  %v2603 = vmul.f32 %v2582, %v2598
  %v2604 = vmul.f32 %v2583, %v2598
  %v2605 = vmul.f32 %v2584, %v2598
  %v2606 = vmul.f32 %v2585, %v2598
  %v2607 = vmul.f32 %v2586, %v2598
  %v2608 = vmul.f32 %v2587, %v2598
  %v2609 = vmul.f32 %v2588, %v2598
  %v2610 = vmul.f32 %v2589, %v2598
  %v2611 = vmul.f32 %v2590, %v2598
  %v2612 = vmul.f32 %v2591, %v2598
  %v2613 = vmul.f32 %v2592, %v2598
  %v2614 = vmul.f32 %v2593, %v2598
  %v2615 = vadd.f32 %v2562, %v2599
  %v2616 = vadd.f32 %v2563, %v2600
  %v2617 = vadd.f32 %v2564, %v2601
  %v2618 = vadd.f32 %v2565, %v2602
  %v2619 = vadd.f32 %v2566, %v2603
  %v2620 = vadd.f32 %v2567, %v2604
  %v2621 = vadd.f32 %v2568, %v2605
  %v2622 = vadd.f32 %v2569, %v2606
  %v2623 = vadd.f32 %v2570, %v2607
  %v2624 = vadd.f32 %v2571, %v2608
  %v2625 = vadd.f32 %v2572, %v2609
  %v2626 = vadd.f32 %v2573, %v2610
  %v2627 = vadd.f32 %v2574, %v2611
  %v2628 = vadd.f32 %v2575, %v2612
  %v2629 = vadd.f32 %v2576, %v2613
  %v2630 = vadd.f32 %v2577, %v2614
  %s2631 = scalar_lea.vmem [#allocation3], 32
  %v2632 = vld [vmem:[%s2631] sm:$0xff]
  %v2633 = vld [vmem:[%s2631 + $0x20] sm:$0xff]
  %v2634 = vld [vmem:[%s2631 + $0x40] sm:$0xff]
  %v2635 = vld [vmem:[%s2631 + $0x60] sm:$0xff]
  %v2636 = vld [vmem:[%s2631 + $0x80] sm:$0xff]
  %v2637 = vld [vmem:[%s2631 + $0xa0] sm:$0xff]
  %v2638 = vld [vmem:[%s2631 + $0xc0] sm:$0xff]
  %v2639 = vld [vmem:[%s2631 + $0xe0] sm:$0xff]
  %v2640 = vld [vmem:[%s2631 + $0x120] sm:$0xff]
  %v2641 = vld [vmem:[%s2631 + $0x140] sm:$0xff]
  %v2642 = vld [vmem:[%s2631 + $0x160] sm:$0xff]
  %v2643 = vld [vmem:[%s2631 + $0x180] sm:$0xff]
  %v2644 = vld [vmem:[%s2631 + $0x1a0] sm:$0xff]
  %v2645 = vld [vmem:[%s2631 + $0x1c0] sm:$0xff]
  %v2646 = vld [vmem:[%s2631 + $0x1e0] sm:$0xff]
  %v2647 = vld [vmem:[%s2631 + $0x200] sm:$0xff]
  %v2648 = vld [vmem:[%s4 + $0x6] sm:$0x1]
  %v2649 = vlaneseq
  %v2650 = vshrl.u32 %v2649, 7
  %v2651 = vsub.s32 0, %v2650
  %v2652 = vrot.slane %v2648, %v2651
  %v2653 = vmul.f32 %v2632, %v2652
  %v2654 = vmul.f32 %v2633, %v2652
  %v2655 = vmul.f32 %v2634, %v2652
  %v2656 = vmul.f32 %v2635, %v2652
  %v2657 = vmul.f32 %v2636, %v2652
  %v2658 = vmul.f32 %v2637, %v2652
  %v2659 = vmul.f32 %v2638, %v2652
  %v2660 = vmul.f32 %v2639, %v2652
  %v2661 = vmul.f32 %v2640, %v2652
  %v2662 = vmul.f32 %v2641, %v2652
  %v2663 = vmul.f32 %v2642, %v2652
  %v2664 = vmul.f32 %v2643, %v2652
  %v2665 = vmul.f32 %v2644, %v2652
  %v2666 = vmul.f32 %v2645, %v2652
  %v2667 = vmul.f32 %v2646, %v2652
  %v2668 = vmul.f32 %v2647, %v2652
  %v2669 = vadd.f32 %v2615, %v2653
  %v2670 = vadd.f32 %v2616, %v2654
  %v2671 = vadd.f32 %v2617, %v2655
  %v2672 = vadd.f32 %v2618, %v2656
  %v2673 = vadd.f32 %v2619, %v2657
  %v2674 = vadd.f32 %v2620, %v2658
  %v2675 = vadd.f32 %v2621, %v2659
  %v2676 = vadd.f32 %v2622, %v2660
  %v2677 = vadd.f32 %v2623, %v2661
  %v2678 = vadd.f32 %v2624, %v2662
  %v2679 = vadd.f32 %v2625, %v2663
  %v2680 = vadd.f32 %v2626, %v2664
  %v2681 = vadd.f32 %v2627, %v2665
  %v2682 = vadd.f32 %v2628, %v2666
  %v2683 = vadd.f32 %v2629, %v2667
  %v2684 = vadd.f32 %v2630, %v2668
  %s2685 = scalar_lea.vmem [#allocation4], 32
  %v2686 = vld [vmem:[%s2685] sm:$0xff]
  %v2687 = vld [vmem:[%s2685 + $0x20] sm:$0xff]
  %v2688 = vld [vmem:[%s2685 + $0x40] sm:$0xff]
  %v2689 = vld [vmem:[%s2685 + $0x60] sm:$0xff]
  %v2690 = vld [vmem:[%s2685 + $0x80] sm:$0xff]
  %v2691 = vld [vmem:[%s2685 + $0xa0] sm:$0xff]
  %v2692 = vld [vmem:[%s2685 + $0xc0] sm:$0xff]
  %v2693 = vld [vmem:[%s2685 + $0xe0] sm:$0xff]
  %v2694 = vld [vmem:[%s2685 + $0x120] sm:$0xff]
  %v2695 = vld [vmem:[%s2685 + $0x140] sm:$0xff]
  %v2696 = vld [vmem:[%s2685 + $0x160] sm:$0xff]
  %v2697 = vld [vmem:[%s2685 + $0x180] sm:$0xff]
  %v2698 = vld [vmem:[%s2685 + $0x1a0] sm:$0xff]
  %v2699 = vld [vmem:[%s2685 + $0x1c0] sm:$0xff]
  %v2700 = vld [vmem:[%s2685 + $0x1e0] sm:$0xff]
  %v2701 = vld [vmem:[%s2685 + $0x200] sm:$0xff]
  %v2702 = vld [vmem:[%s4 + $0x7] sm:$0x1]
  %v2703 = vlaneseq
  %v2704 = vshrl.u32 %v2703, 7
  %v2705 = vsub.s32 0, %v2704
  %v2706 = vrot.slane %v2702, %v2705
  %v2707 = vmul.f32 %v2686, %v2706
  %v2708 = vmul.f32 %v2687, %v2706
  %v2709 = vmul.f32 %v2688, %v2706
  %v2710 = vmul.f32 %v2689, %v2706
  %v2711 = vmul.f32 %v2690, %v2706
  %v2712 = vmul.f32 %v2691, %v2706
  %v2713 = vmul.f32 %v2692, %v2706
  %v2714 = vmul.f32 %v2693, %v2706
  %v2715 = vmul.f32 %v2694, %v2706
  %v2716 = vmul.f32 %v2695, %v2706
  %v2717 = vmul.f32 %v2696, %v2706
  %v2718 = vmul.f32 %v2697, %v2706
  %v2719 = vmul.f32 %v2698, %v2706
  %v2720 = vmul.f32 %v2699, %v2706
  %v2721 = vmul.f32 %v2700, %v2706
  %v2722 = vmul.f32 %v2701, %v2706
  %v2723 = vadd.f32 %v2669, %v2707
  %v2724 = vadd.f32 %v2670, %v2708
  %v2725 = vadd.f32 %v2671, %v2709
  %v2726 = vadd.f32 %v2672, %v2710
  %v2727 = vadd.f32 %v2673, %v2711
  %v2728 = vadd.f32 %v2674, %v2712
  %v2729 = vadd.f32 %v2675, %v2713
  %v2730 = vadd.f32 %v2676, %v2714
  %v2731 = vadd.f32 %v2677, %v2715
  %v2732 = vadd.f32 %v2678, %v2716
  %v2733 = vadd.f32 %v2679, %v2717
  %v2734 = vadd.f32 %v2680, %v2718
  %v2735 = vadd.f32 %v2681, %v2719
  %v2736 = vadd.f32 %v2682, %v2720
  %v2737 = vadd.f32 %v2683, %v2721
  %v2738 = vadd.f32 %v2684, %v2722
  %v2739 = vld [vmem:[%s2631 + $0x1] sm:$0xff]
  %v2740 = vld [vmem:[%s2631 + $0x21] sm:$0xff]
  %v2741 = vld [vmem:[%s2631 + $0x41] sm:$0xff]
  %v2742 = vld [vmem:[%s2631 + $0x61] sm:$0xff]
  %v2743 = vld [vmem:[%s2631 + $0x81] sm:$0xff]
  %v2744 = vld [vmem:[%s2631 + $0xa1] sm:$0xff]
  %v2745 = vld [vmem:[%s2631 + $0xc1] sm:$0xff]
  %v2746 = vld [vmem:[%s2631 + $0xe1] sm:$0xff]
  %v2747 = vld [vmem:[%s2631 + $0x121] sm:$0xff]
  %v2748 = vld [vmem:[%s2631 + $0x141] sm:$0xff]
  %v2749 = vld [vmem:[%s2631 + $0x161] sm:$0xff]
  %v2750 = vld [vmem:[%s2631 + $0x181] sm:$0xff]
  %v2751 = vld [vmem:[%s2631 + $0x1a1] sm:$0xff]
  %v2752 = vld [vmem:[%s2631 + $0x1c1] sm:$0xff]
  %v2753 = vld [vmem:[%s2631 + $0x1e1] sm:$0xff]
  %v2754 = vld [vmem:[%s2631 + $0x201] sm:$0xff]
  %v2755 = vld [vmem:[%s4 + $0x8] sm:$0x1]
  %v2756 = vlaneseq
  %v2757 = vshrl.u32 %v2756, 7
  %v2758 = vsub.s32 0, %v2757
  %v2759 = vrot.slane %v2755, %v2758
  %v2760 = vmul.f32 %v2739, %v2759
  %v2761 = vmul.f32 %v2740, %v2759
  %v2762 = vmul.f32 %v2741, %v2759
  %v2763 = vmul.f32 %v2742, %v2759
  %v2764 = vmul.f32 %v2743, %v2759
  %v2765 = vmul.f32 %v2744, %v2759
  %v2766 = vmul.f32 %v2745, %v2759
  %v2767 = vmul.f32 %v2746, %v2759
  %v2768 = vmul.f32 %v2747, %v2759
  %v2769 = vmul.f32 %v2748, %v2759
  %v2770 = vmul.f32 %v2749, %v2759
  %v2771 = vmul.f32 %v2750, %v2759
  %v2772 = vmul.f32 %v2751, %v2759
  %v2773 = vmul.f32 %v2752, %v2759
  %v2774 = vmul.f32 %v2753, %v2759
  %v2775 = vmul.f32 %v2754, %v2759
  %v2776 = vadd.f32 %v2723, %v2760
  %v2777 = vadd.f32 %v2724, %v2761
  %v2778 = vadd.f32 %v2725, %v2762
  %v2779 = vadd.f32 %v2726, %v2763
  %v2780 = vadd.f32 %v2727, %v2764
  %v2781 = vadd.f32 %v2728, %v2765
  %v2782 = vadd.f32 %v2729, %v2766
  %v2783 = vadd.f32 %v2730, %v2767
  %v2784 = vadd.f32 %v2731, %v2768
  %v2785 = vadd.f32 %v2732, %v2769
  %v2786 = vadd.f32 %v2733, %v2770
  %v2787 = vadd.f32 %v2734, %v2771
  %v2788 = vadd.f32 %v2735, %v2772
  %v2789 = vadd.f32 %v2736, %v2773
  %v2790 = vadd.f32 %v2737, %v2774
  %v2791 = vadd.f32 %v2738, %v2775
  %v2792 = vld [vmem:[%s5] sm:$0x1]
  %v2793 = vld [vmem:[%s6] sm:$0x1]
  %v2794 = vsel %vm696, %v2776, 0.0
  %v2795 = vsel %vm696, %v2777, 0.0
  %v2796 = vadd.f32 %v2794, %v2795
  %v2797 = vsel %vm696, %v2778, 0.0
  %v2798 = vadd.f32 %v2796, %v2797
  %v2799 = vsel %vm696, %v2779, 0.0
  %v2800 = vadd.f32 %v2798, %v2799
  %v2801 = vsel %vm696, %v2780, 0.0
  %v2802 = vadd.f32 %v2800, %v2801
  %v2803 = vsel %vm696, %v2781, 0.0
  %v2804 = vadd.f32 %v2802, %v2803
  %v2805 = vsel %vm696, %v2782, 0.0
  %v2806 = vadd.f32 %v2804, %v2805
  %v2807 = vsel %vm696, %v2783, 0.0
  %v2808 = vadd.f32 %v2806, %v2807
  %v2809 = vsel %vm696, %v2784, 0.0
  %v2810 = vadd.f32 %v2808, %v2809
  %v2811 = vsel %vm696, %v2785, 0.0
  %v2812 = vadd.f32 %v2810, %v2811
  %v2813 = vsel %vm696, %v2786, 0.0
  %v2814 = vadd.f32 %v2812, %v2813
  %v2815 = vsel %vm696, %v2787, 0.0
  %v2816 = vadd.f32 %v2814, %v2815
  %v2817 = vsel %vm696, %v2788, 0.0
  %v2818 = vadd.f32 %v2816, %v2817
  %v2819 = vsel %vm696, %v2789, 0.0
  %v2820 = vadd.f32 %v2818, %v2819
  %v2821 = vsel %vm696, %v2790, 0.0
  %v2822 = vadd.f32 %v2820, %v2821
  %v2823 = vsel %vm696, %v2791, 0.0
  %v2824 = vadd.f32 %v2822, %v2823
  %v2825 = vrot.slane %v2824, 4
  %v2826 = vadd.f32 %v2824, %v2825
  %v2827 = vrot.slane %v2826, 2
  %v2828 = vadd.f32 %v2826, %v2827
  %v2829 = vrot.slane %v2828, 1
  %v2830 = vadd.f32 %v2828, %v2829
  %v2831 = vrcp.pop 128.0
  %v2832 = vmul.f32 %v2830, %v2831
  %v2833 = vsub.f32 %v2776, %v2832
  %v2834 = vsub.f32 %v2777, %v2832
  %v2835 = vsub.f32 %v2778, %v2832
  %v2836 = vsub.f32 %v2779, %v2832
  %v2837 = vsub.f32 %v2780, %v2832
  %v2838 = vsub.f32 %v2781, %v2832
  %v2839 = vsub.f32 %v2782, %v2832
  %v2840 = vsub.f32 %v2783, %v2832
  %v2841 = vsub.f32 %v2784, %v2832
  %v2842 = vsub.f32 %v2785, %v2832
  %v2843 = vsub.f32 %v2786, %v2832
  %v2844 = vsub.f32 %v2787, %v2832
  %v2845 = vsub.f32 %v2788, %v2832
  %v2846 = vsub.f32 %v2789, %v2832
  %v2847 = vsub.f32 %v2790, %v2832
  %v2848 = vsub.f32 %v2791, %v2832
  %v2849 = vmul.f32 %v2833, %v2833
  %v2850 = vmul.f32 %v2834, %v2834
  %v2851 = vmul.f32 %v2835, %v2835
  %v2852 = vmul.f32 %v2836, %v2836
  %v2853 = vmul.f32 %v2837, %v2837
  %v2854 = vmul.f32 %v2838, %v2838
  %v2855 = vmul.f32 %v2839, %v2839
  %v2856 = vmul.f32 %v2840, %v2840
  %v2857 = vmul.f32 %v2841, %v2841
  %v2858 = vmul.f32 %v2842, %v2842
  %v2859 = vmul.f32 %v2843, %v2843
  %v2860 = vmul.f32 %v2844, %v2844
  %v2861 = vmul.f32 %v2845, %v2845
  %v2862 = vmul.f32 %v2846, %v2846
  %v2863 = vmul.f32 %v2847, %v2847
  %v2864 = vmul.f32 %v2848, %v2848
  %v2865 = vsel %vm696, %v2849, 0.0
  %v2866 = vsel %vm696, %v2850, 0.0
  %v2867 = vadd.f32 %v2865, %v2866
  %v2868 = vsel %vm696, %v2851, 0.0
  %v2869 = vadd.f32 %v2867, %v2868
  %v2870 = vsel %vm696, %v2852, 0.0
  %v2871 = vadd.f32 %v2869, %v2870
  %v2872 = vsel %vm696, %v2853, 0.0
  %v2873 = vadd.f32 %v2871, %v2872
  %v2874 = vsel %vm696, %v2854, 0.0
  %v2875 = vadd.f32 %v2873, %v2874
  %v2876 = vsel %vm696, %v2855, 0.0
  %v2877 = vadd.f32 %v2875, %v2876
  %v2878 = vsel %vm696, %v2856, 0.0
  %v2879 = vadd.f32 %v2877, %v2878
  %v2880 = vsel %vm696, %v2857, 0.0
  %v2881 = vadd.f32 %v2879, %v2880
  %v2882 = vsel %vm696, %v2858, 0.0
  %v2883 = vadd.f32 %v2881, %v2882
  %v2884 = vsel %vm696, %v2859, 0.0
  %v2885 = vadd.f32 %v2883, %v2884
  %v2886 = vsel %vm696, %v2860, 0.0
  %v2887 = vadd.f32 %v2885, %v2886
  %v2888 = vsel %vm696, %v2861, 0.0
  %v2889 = vadd.f32 %v2887, %v2888
  %v2890 = vsel %vm696, %v2862, 0.0
  %v2891 = vadd.f32 %v2889, %v2890
  %v2892 = vsel %vm696, %v2863, 0.0
  %v2893 = vadd.f32 %v2891, %v2892
  %v2894 = vsel %vm696, %v2864, 0.0
  %v2895 = vadd.f32 %v2893, %v2894
  %v2896 = vrot.slane %v2895, 4
  %v2897 = vadd.f32 %v2895, %v2896
  %v2898 = vrot.slane %v2897, 2
  %v2899 = vadd.f32 %v2897, %v2898
  %v2900 = vrot.slane %v2899, 1
  %v2901 = vadd.f32 %v2899, %v2900
  %v2902 = vmul.f32 %v2901, %v2831
  %v2903 = vadd.f32 %v2902, 1e-05
  %v2904 = vrsqrt.pop %v2903
  %v2905 = vmul.f32 %v2833, %v2904
  %v2906 = vmul.f32 %v2834, %v2904
  %v2907 = vmul.f32 %v2835, %v2904
  %v2908 = vmul.f32 %v2836, %v2904
  %v2909 = vmul.f32 %v2837, %v2904
  %v2910 = vmul.f32 %v2838, %v2904
  %v2911 = vmul.f32 %v2839, %v2904
  %v2912 = vmul.f32 %v2840, %v2904
  %v2913 = vmul.f32 %v2841, %v2904
  %v2914 = vmul.f32 %v2842, %v2904
  %v2915 = vmul.f32 %v2843, %v2904
  %v2916 = vmul.f32 %v2844, %v2904
  %v2917 = vmul.f32 %v2845, %v2904
  %v2918 = vmul.f32 %v2846, %v2904
  %v2919 = vmul.f32 %v2847, %v2904
  %v2920 = vmul.f32 %v2848, %v2904
  %v2922 = vlaneseq
  %v2923 = vshrl.u32 %v2922, 7
  %v2924 = vsub.s32 0, %v2923
  %v2925 = vrot.slane %v2792, %v2924
  %v2927 = vmul.f32 %v2905, %v2925
  %v2928 = vmul.f32 %v2906, %v2925
  %v2929 = vmul.f32 %v2907, %v2925
  %v2930 = vmul.f32 %v2908, %v2925
  %v2931 = vmul.f32 %v2909, %v2925
  %v2932 = vmul.f32 %v2910, %v2925
  %v2933 = vmul.f32 %v2911, %v2925
  %v2934 = vmul.f32 %v2912, %v2925
  %v2935 = vmul.f32 %v2913, %v2925
  %v2936 = vmul.f32 %v2914, %v2925
  %v2937 = vmul.f32 %v2915, %v2925
  %v2938 = vmul.f32 %v2916, %v2925
  %v2939 = vmul.f32 %v2917, %v2925
  %v2940 = vmul.f32 %v2918, %v2925
  %v2941 = vmul.f32 %v2919, %v2925
  %v2942 = vmul.f32 %v2920, %v2925
  %v2944 = vlaneseq
  %v2945 = vshrl.u32 %v2944, 7
  %v2946 = vsub.s32 0, %v2945
  %v2947 = vrot.slane %v2793, %v2946
  %v2949 = vadd.f32 %v2927, %v2947
  %v2950 = vadd.f32 %v2928, %v2947
  %v2951 = vadd.f32 %v2929, %v2947
  %v2952 = vadd.f32 %v2930, %v2947
  %v2953 = vadd.f32 %v2931, %v2947
  %v2954 = vadd.f32 %v2932, %v2947
  %v2955 = vadd.f32 %v2933, %v2947
  %v2956 = vadd.f32 %v2934, %v2947
  %v2957 = vadd.f32 %v2935, %v2947
  %v2958 = vadd.f32 %v2936, %v2947
  %v2959 = vadd.f32 %v2937, %v2947
  %v2960 = vadd.f32 %v2938, %v2947
  %v2961 = vadd.f32 %v2939, %v2947
  %v2962 = vadd.f32 %v2940, %v2947
  %v2963 = vadd.f32 %v2941, %v2947
  %v2964 = vadd.f32 %v2942, %v2947
  %v2965 = vxor.u32 %v2949, 2147483648
  %v2966 = vxor.u32 %v2950, 2147483648
  %v2967 = vxor.u32 %v2951, 2147483648
  %v2968 = vxor.u32 %v2952, 2147483648
  %v2969 = vxor.u32 %v2953, 2147483648
  %v2970 = vxor.u32 %v2954, 2147483648
  %v2971 = vxor.u32 %v2955, 2147483648
  %v2972 = vxor.u32 %v2956, 2147483648
  %v2973 = vxor.u32 %v2957, 2147483648
  %v2974 = vxor.u32 %v2958, 2147483648
  %v2975 = vxor.u32 %v2959, 2147483648
  %v2976 = vxor.u32 %v2960, 2147483648
  %v2977 = vxor.u32 %v2961, 2147483648
  %v2978 = vxor.u32 %v2962, 2147483648
  %v2979 = vxor.u32 %v2963, 2147483648
  %v2980 = vxor.u32 %v2964, 2147483648
  %v2981 = vmul.f32 %v2965, 1.442695
  %v2982 = vpow.pop %v2981
  %v2983 = vmul.f32 %v2966, 1.442695
  %v2984 = vpow.pop %v2983
  %v2985 = vmul.f32 %v2967, 1.442695
  %v2986 = vpow.pop %v2985
  %v2987 = vmul.f32 %v2968, 1.442695
  %v2988 = vpow.pop %v2987
  %v2989 = vmul.f32 %v2969, 1.442695
  %v2990 = vpow.pop %v2989
  %v2991 = vmul.f32 %v2970, 1.442695
  %v2992 = vpow.pop %v2991
  %v2993 = vmul.f32 %v2971, 1.442695
  %v2994 = vpow.pop %v2993
  %v2995 = vmul.f32 %v2972, 1.442695
  %v2996 = vpow.pop %v2995
  %v2997 = vmul.f32 %v2973, 1.442695
  %v2998 = vpow.pop %v2997
  %v2999 = vmul.f32 %v2974, 1.442695
  %v3000 = vpow.pop %v2999
  %v3001 = vmul.f32 %v2975, 1.442695
  %v3002 = vpow.pop %v3001
  %v3003 = vmul.f32 %v2976, 1.442695
  %v3004 = vpow.pop %v3003
  %v3005 = vmul.f32 %v2977, 1.442695
  %v3006 = vpow.pop %v3005
  %v3007 = vmul.f32 %v2978, 1.442695
  %v3008 = vpow.pop %v3007
  %v3009 = vmul.f32 %v2979, 1.442695
  %v3010 = vpow.pop %v3009
  %v3011 = vmul.f32 %v2980, 1.442695
  %v3012 = vpow.pop %v3011
  %v3013 = vadd.f32 %v2982, 1.0
  %v3014 = vadd.f32 %v2984, 1.0
  %v3015 = vadd.f32 %v2986, 1.0
  %v3016 = vadd.f32 %v2988, 1.0
  %v3017 = vadd.f32 %v2990, 1.0
  %v3018 = vadd.f32 %v2992, 1.0
  %v3019 = vadd.f32 %v2994, 1.0
  %v3020 = vadd.f32 %v2996, 1.0
  %v3021 = vadd.f32 %v2998, 1.0
  %v3022 = vadd.f32 %v3000, 1.0
  %v3023 = vadd.f32 %v3002, 1.0
  %v3024 = vadd.f32 %v3004, 1.0
  %v3025 = vadd.f32 %v3006, 1.0
  %v3026 = vadd.f32 %v3008, 1.0
  %v3027 = vadd.f32 %v3010, 1.0
  %v3028 = vadd.f32 %v3012, 1.0
  %v3029 = vrcp.pop %v3013
  %v3030 = vmul.f32 1.0, %v3029
  %v3031 = vrcp.pop %v3014
  %v3032 = vmul.f32 1.0, %v3031
  %v3033 = vrcp.pop %v3015
  %v3034 = vmul.f32 1.0, %v3033
  %v3035 = vrcp.pop %v3016
  %v3036 = vmul.f32 1.0, %v3035
  %v3037 = vrcp.pop %v3017
  %v3038 = vmul.f32 1.0, %v3037
  %v3039 = vrcp.pop %v3018
  %v3040 = vmul.f32 1.0, %v3039
  %v3041 = vrcp.pop %v3019
  %v3042 = vmul.f32 1.0, %v3041
  %v3043 = vrcp.pop %v3020
  %v3044 = vmul.f32 1.0, %v3043
  %v3045 = vrcp.pop %v3021
  %v3046 = vmul.f32 1.0, %v3045
  %v3047 = vrcp.pop %v3022
  %v3048 = vmul.f32 1.0, %v3047
  %v3049 = vrcp.pop %v3023
  %v3050 = vmul.f32 1.0, %v3049
  %v3051 = vrcp.pop %v3024
  %v3052 = vmul.f32 1.0, %v3051
  %v3053 = vrcp.pop %v3025
  %v3054 = vmul.f32 1.0, %v3053
  %v3055 = vrcp.pop %v3026
  %v3056 = vmul.f32 1.0, %v3055
  %v3057 = vrcp.pop %v3027
  %v3058 = vmul.f32 1.0, %v3057
  %v3059 = vrcp.pop %v3028
  %v3060 = vmul.f32 1.0, %v3059
  %v3061 = vmul.f32 %v2949, %v3030
  %v3062 = vmul.f32 %v2950, %v3032
  %v3063 = vmul.f32 %v2951, %v3034
  %v3064 = vmul.f32 %v2952, %v3036
  %v3065 = vmul.f32 %v2953, %v3038
  %v3066 = vmul.f32 %v2954, %v3040
  %v3067 = vmul.f32 %v2955, %v3042
  %v3068 = vmul.f32 %v2956, %v3044
  %v3069 = vmul.f32 %v2957, %v3046
  %v3070 = vmul.f32 %v2958, %v3048
  %v3071 = vmul.f32 %v2959, %v3050
  %v3072 = vmul.f32 %v2960, %v3052
  %v3073 = vmul.f32 %v2961, %v3054
  %v3074 = vmul.f32 %v2962, %v3056
  %v3075 = vmul.f32 %v2963, %v3058
  %v3076 = vmul.f32 %v2964, %v3060
  %v3077 = vsel %vm696, %v3061, 0.0
  %v3078 = vsel %vm696, %v3062, 0.0
  %v3079 = vadd.f32 %v3077, %v3078
  %v3080 = vsel %vm696, %v3063, 0.0
  %v3081 = vadd.f32 %v3079, %v3080
  %v3082 = vsel %vm696, %v3064, 0.0
  %v3083 = vadd.f32 %v3081, %v3082
  %v3084 = vsel %vm696, %v3065, 0.0
  %v3085 = vadd.f32 %v3083, %v3084
  %v3086 = vsel %vm696, %v3066, 0.0
  %v3087 = vadd.f32 %v3085, %v3086
  %v3088 = vsel %vm696, %v3067, 0.0
  %v3089 = vadd.f32 %v3087, %v3088
  %v3090 = vsel %vm696, %v3068, 0.0
  %v3091 = vadd.f32 %v3089, %v3090
  %v3092 = vrot.slane %v3091, 4
  %v3093 = vadd.f32 %v3091, %v3092
  %v3094 = vrot.slane %v3093, 2
  %v3095 = vadd.f32 %v3093, %v3094
  %v3096 = vrot.slane %v3095, 1
  %v3097 = vadd.f32 %v3095, %v3096
  %v3098 = vsel %vm696, %v3069, 0.0
  %v3099 = vsel %vm696, %v3070, 0.0
  %v3100 = vadd.f32 %v3098, %v3099
  %v3101 = vsel %vm696, %v3071, 0.0
  %v3102 = vadd.f32 %v3100, %v3101
  %v3103 = vsel %vm696, %v3072, 0.0
  %v3104 = vadd.f32 %v3102, %v3103
  %v3105 = vsel %vm696, %v3073, 0.0
  %v3106 = vadd.f32 %v3104, %v3105
  %v3107 = vsel %vm696, %v3074, 0.0
  %v3108 = vadd.f32 %v3106, %v3107
  %v3109 = vsel %vm696, %v3075, 0.0
  %v3110 = vadd.f32 %v3108, %v3109
  %v3111 = vsel %vm696, %v3076, 0.0
  %v3112 = vadd.f32 %v3110, %v3111
  %v3113 = vrot.slane %v3112, 4
  %v3114 = vadd.f32 %v3112, %v3113
  %v3115 = vrot.slane %v3114, 2
  %v3116 = vadd.f32 %v3114, %v3115
  %v3117 = vrot.slane %v3116, 1
  %v3118 = vadd.f32 %v3116, %v3117
  %v3119 = vrcp.pop 64.0
  %v3120 = vmul.f32 %v3097, %v3119
  %v3121 = vmul.f32 %v3118, %v3119
  %v3122 = vld [vmem:[%s7] sm:$0xff]
  %v3123 = vld [vmem:[%s7 + $0x8] sm:$0xff]
  %v3124 = vld [vmem:[%s8] sm:$0x1]
  %v3126 = vlaneseq
  %v3127 = vshrl.u32 %v3126, 7
  %v3128 = vsub.s32 0, %v3127
  %v3129 = vrot.slane %v3124, %v3128
  %vm3133 = vcmask 1041409
  %v3134 = vsel %vm3133, %v3121, %v3120
  %v3135 = vsel %vm696, %v3134, 0
  %3137 = vmatprep.subr.mxu0 0.0
  %3138 = vmatpush1.msra.mxu0 %v3122
  %3139 = vmatprep.subr.mxu0 0.0
  %3140 = vmatpush1.msra.mxu0 %v3123
  %3141 = vmatprep.subr.mxu0 0.0
  %3142 = vmatpush1.msra.mxu0 0.0
  %3143 = vmatprep.subr.mxu0 0.0
  %3144 = vmatpush1.msra.mxu0 0.0
  %3145 = vmatprep.subr.mxu0 0.0
  %3146 = vmatpush1.msra.mxu0 0.0
  %3147 = vmatprep.subr.mxu0 0.0
  %3148 = vmatpush1.msra.mxu0 0.0
  %3149 = vmatprep.subr.mxu0 0.0
  %3150 = vmatpush1.msra.mxu0 0.0
  %3151 = vmatprep.subr.mxu0 0.0
  %3152 = vmatpush1.msra.mxu0 0.0
  %3153 = vmatprep.subr.mxu0 0.0
  %3154 = vmatpush1.msra.mxu0 0.0
  %3155 = vmatprep.subr.mxu0 0.0
  %3156 = vmatpush1.msra.mxu0 0.0
  %3157 = vmatprep.subr.mxu0 0.0
  %3158 = vmatpush1.msra.mxu0 0.0
  %3159 = vmatprep.subr.mxu0 0.0
  %3160 = vmatpush1.msra.mxu0 0.0
  %3161 = vmatprep.subr.mxu0 0.0
  %3162 = vmatpush1.msra.mxu0 0.0
  %3163 = vmatprep.subr.mxu0 0.0
  %3164 = vmatpush1.msra.mxu0 0.0
  %3165 = vmatprep.subr.mxu0 0.0
  %3166 = vmatpush1.msra.mxu0 0.0
  %3167 = vmatprep.subr.mxu0 0.0
  %3168 = vmatpush1.msra.mxu0 0.0
  %3169 = vmatprep.subr.mxu0 0.0
  %3170 = vmatpush1.msra.mxu0 0.0
  %3171 = vmatprep.subr.mxu0 0.0
  %3172 = vmatpush1.msra.mxu0 0.0
  %3173 = vmatprep.subr.mxu0 0.0
  %3174 = vmatpush1.msra.mxu0 0.0
  %3175 = vmatprep.subr.mxu0 0.0
  %3176 = vmatpush1.msra.mxu0 0.0
  %3177 = vmatprep.subr.mxu0 0.0
  %3178 = vmatpush1.msra.mxu0 0.0
  %3179 = vmatprep.subr.mxu0 0.0
  %3180 = vmatpush1.msra.mxu0 0.0
  %3181 = vmatprep.subr.mxu0 0.0
  %3182 = vmatpush1.msra.mxu0 0.0
  %3183 = vmatprep.subr.mxu0 0.0
  %3184 = vmatpush1.msra.mxu0 0.0
  %3185 = vmatprep.subr.mxu0 0.0
  %3186 = vmatpush1.msra.mxu0 0.0
  %3187 = vmatprep.subr.mxu0 0.0
  %3188 = vmatpush1.msra.mxu0 0.0
  %3189 = vmatprep.subr.mxu0 0.0
  %3190 = vmatpush1.msra.mxu0 0.0
  %3191 = vmatprep.subr.mxu0 0.0
  %3192 = vmatpush1.msra.mxu0 0.0
  %3193 = vmatprep.subr.mxu0 0.0
  %3194 = vmatpush1.msra.mxu0 0.0
  %3195 = vmatprep.subr.mxu0 0.0
  %3196 = vmatpush1.msra.mxu0 0.0
  %3197 = vmatprep.subr.mxu0 0.0
  %3198 = vmatpush1.msra.mxu0 0.0
  %3199 = vmatprep.subr.mxu0 0.0
  %3200 = vmatpush1.msra.mxu0 0.0
  %3201 = vmatprep.mubr.f32.mxu0 0.0
  %3202 = vmatmul.mubr.f32.gmra.mrb[0].mxu0 %v3135
  %v3203 = vpop.f32.mrb[0].mxu0
  %v3204 = vadd.f32 %v3129, %v3203
  %v3205 = vpop.f32.mrb[0].mxu0
  %3206 = vdwg.mxu0
  %v3207 = vxor.u32 %v3204, 2147483648
  %v3208 = vmul.f32 %v3207, 1.442695
  %v3209 = vpow.pop %v3208
  %v3210 = vadd.f32 %v3209, 1.0
  %v3211 = vrcp.pop %v3210
  %v3212 = vmul.f32 1.0, %v3211
  %v3213 = vmul.f32 %v3204, %v3212
  %v3214 = vld [vmem:[%s9] sm:$0xf]
  %v3215 = vld [vmem:[%s10] sm:$0x1]
  %v3217 = vlaneseq
  %v3218 = vshrl.u32 %v3217, 7
  %v3219 = vsub.s32 0, %v3218
  %v3220 = vrot.slane %v3215, %v3219
  %v3223 = vsel %vm112, %v3213, 0
  %v3226 = vsel %vm305, %v3214, 0
  %3228 = vmatprep.subr.mxu0 0.0
  %3229 = vmatpush1.msra.mxu0 %v3226
  %3230 = vmatprep.subr.mxu0 0.0
  %3231 = vmatpush1.msra.mxu0 0.0
  %3232 = vmatprep.subr.mxu0 0.0
  %3233 = vmatpush1.msra.mxu0 0.0
  %3234 = vmatprep.subr.mxu0 0.0
  %3235 = vmatpush1.msra.mxu0 0.0
  %3236 = vmatprep.subr.mxu0 0.0
  %3237 = vmatpush1.msra.mxu0 0.0
  %3238 = vmatprep.subr.mxu0 0.0
  %3239 = vmatpush1.msra.mxu0 0.0
  %3240 = vmatprep.subr.mxu0 0.0
  %3241 = vmatpush1.msra.mxu0 0.0
  %3242 = vmatprep.subr.mxu0 0.0
  %3243 = vmatpush1.msra.mxu0 0.0
  %3244 = vmatprep.subr.mxu0 0.0
  %3245 = vmatpush1.msra.mxu0 0.0
  %3246 = vmatprep.subr.mxu0 0.0
  %3247 = vmatpush1.msra.mxu0 0.0
  %3248 = vmatprep.subr.mxu0 0.0
  %3249 = vmatpush1.msra.mxu0 0.0
  %3250 = vmatprep.subr.mxu0 0.0
  %3251 = vmatpush1.msra.mxu0 0.0
  %3252 = vmatprep.subr.mxu0 0.0
  %3253 = vmatpush1.msra.mxu0 0.0
  %3254 = vmatprep.subr.mxu0 0.0
  %3255 = vmatpush1.msra.mxu0 0.0
  %3256 = vmatprep.subr.mxu0 0.0
  %3257 = vmatpush1.msra.mxu0 0.0
  %3258 = vmatprep.subr.mxu0 0.0
  %3259 = vmatpush1.msra.mxu0 0.0
  %3260 = vmatprep.subr.mxu0 0.0
  %3261 = vmatpush1.msra.mxu0 0.0
  %3262 = vmatprep.subr.mxu0 0.0
  %3263 = vmatpush1.msra.mxu0 0.0
  %3264 = vmatprep.subr.mxu0 0.0
  %3265 = vmatpush1.msra.mxu0 0.0
  %3266 = vmatprep.subr.mxu0 0.0
  %3267 = vmatpush1.msra.mxu0 0.0
  %3268 = vmatprep.subr.mxu0 0.0
  %3269 = vmatpush1.msra.mxu0 0.0
  %3270 = vmatprep.subr.mxu0 0.0
  %3271 = vmatpush1.msra.mxu0 0.0
  %3272 = vmatprep.subr.mxu0 0.0
  %3273 = vmatpush1.msra.mxu0 0.0
  %3274 = vmatprep.subr.mxu0 0.0
  %3275 = vmatpush1.msra.mxu0 0.0
  %3276 = vmatprep.subr.mxu0 0.0
  %3277 = vmatpush1.msra.mxu0 0.0
  %3278 = vmatprep.subr.mxu0 0.0
  %3279 = vmatpush1.msra.mxu0 0.0
  %3280 = vmatprep.subr.mxu0 0.0
  %3281 = vmatpush1.msra.mxu0 0.0
  %3282 = vmatprep.subr.mxu0 0.0
  %3283 = vmatpush1.msra.mxu0 0.0
  %3284 = vmatprep.subr.mxu0 0.0
  %3285 = vmatpush1.msra.mxu0 0.0
  %3286 = vmatprep.subr.mxu0 0.0
  %3287 = vmatpush1.msra.mxu0 0.0
  %3288 = vmatprep.subr.mxu0 0.0
  %3289 = vmatpush1.msra.mxu0 0.0
  %3290 = vmatprep.subr.mxu0 0.0
  %3291 = vmatpush1.msra.mxu0 0.0
  %3292 = vmatprep.mubr.f32.mxu0 0.0
  %3293 = vmatmul.mubr.f32.gmra.mrb[0].mxu0 %v3223
  %v3294 = vpop.f32.mrb[0].mxu0
  %v3295 = vadd.f32 %v3220, %v3294
  %v3296 = vpop.f32.mrb[0].mxu0
  %3297 = vdwg.mxu0
  %v3298 = vxor.u32 %v3295, 2147483648
  %v3299 = vmul.f32 %v3298, 1.442695
  %v3300 = vpow.pop %v3299
  %v3301 = vadd.f32 %v3300, 1.0
  %v3302 = vrcp.pop %v3301
  %v3303 = vmul.f32 1.0, %v3302
  %v3306 = vunpack.c.l.s4 1966171168
  %v3307 = vunpack.c.0.s8 %v3306
  %v3308 = vlaneseq
  %v3309 = vshrl.u32 %v3308, 7
  %v3310 = vsub.s32 %v3307, %v3309
  %v3311 = vrot.slane %v3303, %v3310
  %v3312 = vcombine.high %v3311, %v3311
  %v3314 = vunpack.c.l.s4 1966171168
  %v3315 = vunpack.c.0.s8 %v3314
  %v3316 = vlaneseq
  %v3317 = vshrl.u32 %v3316, 7
  %v3318 = vsub.s32 %v3315, %v3317
  %v3319 = vrot.slane %v3311, %v3318
  %v3321 = vunpack.c.l.s4 1966171168
  %v3322 = vunpack.c.0.s8 %v3321
  %v3323 = vlaneseq
  %v3324 = vshrl.u32 %v3323, 7
  %v3325 = vsub.s32 %v3322, %v3324
  %v3326 = vrot.slane %v3312, %v3325
  %v3327 = vlaneseq
  %v3328 = vshrl.u32 %v3327, 7
  %v3329 = vsub.s32 0, %v3328
  %v3330 = vrot.slane %v3319, %v3329
  %v3331 = vlaneseq
  %v3332 = vshrl.u32 %v3331, 7
  %v3333 = vsub.s32 0, %v3332
  %v3334 = vrot.slane %v3326, %v3333
  %v3337 = vmul.f32 %v3061, %v3330
  %v3338 = vmul.f32 %v3062, %v3330
  %v3339 = vmul.f32 %v3063, %v3330
  %v3340 = vmul.f32 %v3064, %v3330
  %v3341 = vmul.f32 %v3065, %v3330
  %v3342 = vmul.f32 %v3066, %v3330
  %v3343 = vmul.f32 %v3067, %v3330
  %v3344 = vmul.f32 %v3068, %v3330
  %v3345 = vmul.f32 %v3069, %v3334
  %v3346 = vmul.f32 %v3070, %v3334
  %v3347 = vmul.f32 %v3071, %v3334
  %v3348 = vmul.f32 %v3072, %v3334
  %v3349 = vmul.f32 %v3073, %v3334
  %v3350 = vmul.f32 %v3074, %v3334
  %v3351 = vmul.f32 %v3075, %v3334
  %v3352 = vmul.f32 %v3076, %v3334
  %v3353 = vld [vmem:[%s11] sm:$0xff]
  %v3354 = vld [vmem:[%s11 + $0x8] sm:$0xff]
  %v3356 = vsel %vm696, %v3337, 0
  %v3359 = vsel %vm696, %v3338, 0
  %v3362 = vsel %vm696, %v3339, 0
  %v3365 = vsel %vm696, %v3340, 0
  %v3368 = vsel %vm696, %v3341, 0
  %v3371 = vsel %vm696, %v3342, 0
  %v3374 = vsel %vm696, %v3343, 0
  %v3377 = vsel %vm696, %v3344, 0
  %v3380 = vsel %vm696, %v3345, 0
  %v3383 = vsel %vm696, %v3346, 0
  %v3386 = vsel %vm696, %v3347, 0
  %v3389 = vsel %vm696, %v3348, 0
  %v3392 = vsel %vm696, %v3349, 0
  %v3395 = vsel %vm696, %v3350, 0
  %v3398 = vsel %vm696, %v3351, 0
  %v3401 = vsel %vm696, %v3352, 0
  %3403 = vmatprep.subr.mxu0 0.0
  %3404 = vmatpush1.msra.mxu0 %v3353
  %3405 = vmatprep.subr.mxu0 0.0
  %3406 = vmatpush1.msra.mxu0 %v3354
  %3407 = vmatprep.subr.mxu0 0.0
  %3408 = vmatpush1.msra.mxu0 0.0
  %3409 = vmatprep.subr.mxu0 0.0
  %3410 = vmatpush1.msra.mxu0 0.0
  %3411 = vmatprep.subr.mxu0 0.0
  %3412 = vmatpush1.msra.mxu0 0.0
  %3413 = vmatprep.subr.mxu0 0.0
  %3414 = vmatpush1.msra.mxu0 0.0
  %3415 = vmatprep.subr.mxu0 0.0
  %3416 = vmatpush1.msra.mxu0 0.0
  %3417 = vmatprep.subr.mxu0 0.0
  %3418 = vmatpush1.msra.mxu0 0.0
  %3419 = vmatprep.subr.mxu0 0.0
  %3420 = vmatpush1.msra.mxu0 0.0
  %3421 = vmatprep.subr.mxu0 0.0
  %3422 = vmatpush1.msra.mxu0 0.0
  %3423 = vmatprep.subr.mxu0 0.0
  %3424 = vmatpush1.msra.mxu0 0.0
  %3425 = vmatprep.subr.mxu0 0.0
  %3426 = vmatpush1.msra.mxu0 0.0
  %3427 = vmatprep.subr.mxu0 0.0
  %3428 = vmatpush1.msra.mxu0 0.0
  %3429 = vmatprep.subr.mxu0 0.0
  %3430 = vmatpush1.msra.mxu0 0.0
  %3431 = vmatprep.subr.mxu0 0.0
  %3432 = vmatpush1.msra.mxu0 0.0
  %3433 = vmatprep.subr.mxu0 0.0
  %3434 = vmatpush1.msra.mxu0 0.0
  %3435 = vmatprep.subr.mxu0 0.0
  %3436 = vmatpush1.msra.mxu0 0.0
  %3437 = vmatprep.subr.mxu0 0.0
  %3438 = vmatpush1.msra.mxu0 0.0
  %3439 = vmatprep.subr.mxu0 0.0
  %3440 = vmatpush1.msra.mxu0 0.0
  %3441 = vmatprep.subr.mxu0 0.0
  %3442 = vmatpush1.msra.mxu0 0.0
  %3443 = vmatprep.subr.mxu0 0.0
  %3444 = vmatpush1.msra.mxu0 0.0
  %3445 = vmatprep.subr.mxu0 0.0
  %3446 = vmatpush1.msra.mxu0 0.0
  %3447 = vmatprep.subr.mxu0 0.0
  %3448 = vmatpush1.msra.mxu0 0.0
  %3449 = vmatprep.subr.mxu0 0.0
  %3450 = vmatpush1.msra.mxu0 0.0
  %3451 = vmatprep.subr.mxu0 0.0
  %3452 = vmatpush1.msra.mxu0 0.0
  %3453 = vmatprep.subr.mxu0 0.0
  %3454 = vmatpush1.msra.mxu0 0.0
  %3455 = vmatprep.subr.mxu0 0.0
  %3456 = vmatpush1.msra.mxu0 0.0
  %3457 = vmatprep.subr.mxu0 0.0
  %3458 = vmatpush1.msra.mxu0 0.0
  %3459 = vmatprep.subr.mxu0 0.0
  %3460 = vmatpush1.msra.mxu0 0.0
  %3461 = vmatprep.subr.mxu0 0.0
  %3462 = vmatpush1.msra.mxu0 0.0
  %3463 = vmatprep.subr.mxu0 0.0
  %3464 = vmatpush1.msra.mxu0 0.0
  %3465 = vmatprep.subr.mxu0 0.0
  %3466 = vmatpush1.msra.mxu0 0.0
  %3467 = vmatprep.mubr.f32.mxu0 0.0
  %3468 = vmatmul.mubr.f32.gmra.mrb[0].mxu0 %v3356
  %v3469 = vpop.f32.mrb[0].mxu0
  %v3470 = vadd.f32 0.0, %v3469
  %v3471 = vpop.f32.mrb[0].mxu0
  %3472 = vmatprep.mubr.f32.mxu0 0.0
  %3473 = vmatmul.mubr.f32.gmra.mrb[0].mxu0 %v3359
  %v3474 = vpop.f32.mrb[0].mxu0
  %v3475 = vadd.f32 0.0, %v3474
  %v3476 = vpop.f32.mrb[0].mxu0
  %3477 = vmatprep.mubr.f32.mxu0 0.0
  %3478 = vmatmul.mubr.f32.gmra.mrb[0].mxu0 %v3362
  %v3479 = vpop.f32.mrb[0].mxu0
  %v3480 = vadd.f32 0.0, %v3479
  %v3481 = vpop.f32.mrb[0].mxu0
  %3482 = vmatprep.mubr.f32.mxu0 0.0
  %3483 = vmatmul.mubr.f32.gmra.mrb[0].mxu0 %v3365
  %v3484 = vpop.f32.mrb[0].mxu0
  %v3485 = vadd.f32 0.0, %v3484
  %v3486 = vpop.f32.mrb[0].mxu0
  %3487 = vmatprep.mubr.f32.mxu0 0.0
  %3488 = vmatmul.mubr.f32.gmra.mrb[0].mxu0 %v3368
  %v3489 = vpop.f32.mrb[0].mxu0
  %v3490 = vadd.f32 0.0, %v3489
  %v3491 = vpop.f32.mrb[0].mxu0
  %3492 = vmatprep.mubr.f32.mxu0 0.0
  %3493 = vmatmul.mubr.f32.gmra.mrb[0].mxu0 %v3371
  %v3494 = vpop.f32.mrb[0].mxu0
  %v3495 = vadd.f32 0.0, %v3494
  %v3496 = vpop.f32.mrb[0].mxu0
  %3497 = vmatprep.mubr.f32.mxu0 0.0
  %3498 = vmatmul.mubr.f32.gmra.mrb[0].mxu0 %v3374
  %v3499 = vpop.f32.mrb[0].mxu0
  %v3500 = vadd.f32 0.0, %v3499
  %v3501 = vpop.f32.mrb[0].mxu0
  %3502 = vmatprep.mubr.f32.mxu0 0.0
  %3503 = vmatmul.mubr.f32.gmra.mrb[0].mxu0 %v3377
  %v3504 = vpop.f32.mrb[0].mxu0
  %v3505 = vadd.f32 0.0, %v3504
  %v3506 = vpop.f32.mrb[0].mxu0
  %3507 = vmatprep.mubr.f32.mxu0 0.0
  %3508 = vmatmul.mubr.f32.gmra.mrb[0].mxu0 %v3380
  %v3509 = vpop.f32.mrb[0].mxu0
  %v3510 = vadd.f32 0.0, %v3509
  %v3511 = vpop.f32.mrb[0].mxu0
  %3512 = vmatprep.mubr.f32.mxu0 0.0
  %3513 = vmatmul.mubr.f32.gmra.mrb[0].mxu0 %v3383
  %v3514 = vpop.f32.mrb[0].mxu0
  %v3515 = vadd.f32 0.0, %v3514
  %v3516 = vpop.f32.mrb[0].mxu0
  %3517 = vmatprep.mubr.f32.mxu0 0.0
  %3518 = vmatmul.mubr.f32.gmra.mrb[0].mxu0 %v3386
  %v3519 = vpop.f32.mrb[0].mxu0
  %v3520 = vadd.f32 0.0, %v3519
  %v3521 = vpop.f32.mrb[0].mxu0
  %3522 = vmatprep.mubr.f32.mxu0 0.0
  %3523 = vmatmul.mubr.f32.gmra.mrb[0].mxu0 %v3389
  %v3524 = vpop.f32.mrb[0].mxu0
  %v3525 = vadd.f32 0.0, %v3524
  %v3526 = vpop.f32.mrb[0].mxu0
  %3527 = vmatprep.mubr.f32.mxu0 0.0
  %3528 = vmatmul.mubr.f32.gmra.mrb[0].mxu0 %v3392
  %v3529 = vpop.f32.mrb[0].mxu0
  %v3530 = vadd.f32 0.0, %v3529
  %v3531 = vpop.f32.mrb[0].mxu0
  %3532 = vmatprep.mubr.f32.mxu0 0.0
  %3533 = vmatmul.mubr.f32.gmra.mrb[0].mxu0 %v3395
  %v3534 = vpop.f32.mrb[0].mxu0
  %v3535 = vadd.f32 0.0, %v3534
  %v3536 = vpop.f32.mrb[0].mxu0
  %3537 = vmatprep.mubr.f32.mxu0 0.0
  %3538 = vmatmul.mubr.f32.gmra.mrb[0].mxu0 %v3398
  %v3539 = vpop.f32.mrb[0].mxu0
  %v3540 = vadd.f32 0.0, %v3539
  %v3541 = vpop.f32.mrb[0].mxu0
  %3542 = vmatprep.mubr.f32.mxu0 0.0
  %3543 = vmatmul.mubr.f32.gmra.mrb[0].mxu0 %v3401
  %v3544 = vpop.f32.mrb[0].mxu0
  %v3545 = vadd.f32 0.0, %v3544
  %v3546 = vpop.f32.mrb[0].mxu0
  %3547 = vdwg.mxu0
  %v3548 = vld [vmem:[%s12] sm:$0x1]
  %v3549 = vld [vmem:[%s13] sm:$0x1]
  %vm3550 = vcmask 64512
  %v3551 = vsel %vm3550, %v3470, 0.0
  %v3552 = vsel %vm3550, %v3475, 0.0
  %v3553 = vadd.f32 %v3551, %v3552
  %v3554 = vsel %vm3550, %v3480, 0.0
  %v3555 = vadd.f32 %v3553, %v3554
  %v3556 = vsel %vm3550, %v3485, 0.0
  %v3557 = vadd.f32 %v3555, %v3556
  %v3558 = vsel %vm3550, %v3490, 0.0
  %v3559 = vadd.f32 %v3557, %v3558
  %v3560 = vsel %vm3550, %v3495, 0.0
  %v3561 = vadd.f32 %v3559, %v3560
  %v3562 = vsel %vm3550, %v3500, 0.0
  %v3563 = vadd.f32 %v3561, %v3562
  %v3564 = vsel %vm3550, %v3505, 0.0
  %v3565 = vadd.f32 %v3563, %v3564
  %v3566 = vsel %vm3550, %v3510, 0.0
  %v3567 = vadd.f32 %v3565, %v3566
  %v3568 = vsel %vm3550, %v3515, 0.0
  %v3569 = vadd.f32 %v3567, %v3568
  %v3570 = vsel %vm3550, %v3520, 0.0
  %v3571 = vadd.f32 %v3569, %v3570
  %v3572 = vsel %vm3550, %v3525, 0.0
  %v3573 = vadd.f32 %v3571, %v3572
  %v3574 = vsel %vm3550, %v3530, 0.0
  %v3575 = vadd.f32 %v3573, %v3574
  %v3576 = vsel %vm3550, %v3535, 0.0
  %v3577 = vadd.f32 %v3575, %v3576
  %v3578 = vsel %vm3550, %v3540, 0.0
  %v3579 = vadd.f32 %v3577, %v3578
  %v3580 = vsel %vm3550, %v3545, 0.0
  %v3581 = vadd.f32 %v3579, %v3580
  %v3582 = vrot.slane %v3581, 4
  %v3583 = vadd.f32 %v3581, %v3582
  %v3584 = vrot.slane %v3583, 2
  %v3585 = vadd.f32 %v3583, %v3584
  %v3586 = vrot.slane %v3585, 1
  %v3587 = vadd.f32 %v3585, %v3586
  %v3588 = vmul.f32 %v3587, %v2831
  %v3589 = vsub.f32 %v3470, %v3588
  %v3590 = vsub.f32 %v3475, %v3588
  %v3591 = vsub.f32 %v3480, %v3588
  %v3592 = vsub.f32 %v3485, %v3588
  %v3593 = vsub.f32 %v3490, %v3588
  %v3594 = vsub.f32 %v3495, %v3588
  %v3595 = vsub.f32 %v3500, %v3588
  %v3596 = vsub.f32 %v3505, %v3588
  %v3597 = vsub.f32 %v3510, %v3588
  %v3598 = vsub.f32 %v3515, %v3588
  %v3599 = vsub.f32 %v3520, %v3588
  %v3600 = vsub.f32 %v3525, %v3588
  %v3601 = vsub.f32 %v3530, %v3588
  %v3602 = vsub.f32 %v3535, %v3588
  %v3603 = vsub.f32 %v3540, %v3588
  %v3604 = vsub.f32 %v3545, %v3588
  %v3605 = vmul.f32 %v3589, %v3589
  %v3606 = vmul.f32 %v3590, %v3590
  %v3607 = vmul.f32 %v3591, %v3591
  %v3608 = vmul.f32 %v3592, %v3592
  %v3609 = vmul.f32 %v3593, %v3593
  %v3610 = vmul.f32 %v3594, %v3594
  %v3611 = vmul.f32 %v3595, %v3595
  %v3612 = vmul.f32 %v3596, %v3596
  %v3613 = vmul.f32 %v3597, %v3597
  %v3614 = vmul.f32 %v3598, %v3598
  %v3615 = vmul.f32 %v3599, %v3599
  %v3616 = vmul.f32 %v3600, %v3600
  %v3617 = vmul.f32 %v3601, %v3601
  %v3618 = vmul.f32 %v3602, %v3602
  %v3619 = vmul.f32 %v3603, %v3603
  %v3620 = vmul.f32 %v3604, %v3604
  %v3621 = vsel %vm3550, %v3605, 0.0
  %v3622 = vsel %vm3550, %v3606, 0.0
  %v3623 = vadd.f32 %v3621, %v3622
  %v3624 = vsel %vm3550, %v3607, 0.0
  %v3625 = vadd.f32 %v3623, %v3624
  %v3626 = vsel %vm3550, %v3608, 0.0
  %v3627 = vadd.f32 %v3625, %v3626
  %v3628 = vsel %vm3550, %v3609, 0.0
  %v3629 = vadd.f32 %v3627, %v3628
  %v3630 = vsel %vm3550, %v3610, 0.0
  %v3631 = vadd.f32 %v3629, %v3630
  %v3632 = vsel %vm3550, %v3611, 0.0
  %v3633 = vadd.f32 %v3631, %v3632
  %v3634 = vsel %vm3550, %v3612, 0.0
  %v3635 = vadd.f32 %v3633, %v3634
  %v3636 = vsel %vm3550, %v3613, 0.0
  %v3637 = vadd.f32 %v3635, %v3636
  %v3638 = vsel %vm3550, %v3614, 0.0
  %v3639 = vadd.f32 %v3637, %v3638
  %v3640 = vsel %vm3550, %v3615, 0.0
  %v3641 = vadd.f32 %v3639, %v3640
  %v3642 = vsel %vm3550, %v3616, 0.0
  %v3643 = vadd.f32 %v3641, %v3642
  %v3644 = vsel %vm3550, %v3617, 0.0
  %v3645 = vadd.f32 %v3643, %v3644
  %v3646 = vsel %vm3550, %v3618, 0.0
  %v3647 = vadd.f32 %v3645, %v3646
  %v3648 = vsel %vm3550, %v3619, 0.0
  %v3649 = vadd.f32 %v3647, %v3648
  %v3650 = vsel %vm3550, %v3620, 0.0
  %v3651 = vadd.f32 %v3649, %v3650
  %v3652 = vrot.slane %v3651, 4
  %v3653 = vadd.f32 %v3651, %v3652
  %v3654 = vrot.slane %v3653, 2
  %v3655 = vadd.f32 %v3653, %v3654
  %v3656 = vrot.slane %v3655, 1
  %v3657 = vadd.f32 %v3655, %v3656
  %v3658 = vmul.f32 %v3657, %v2831
  %v3659 = vadd.f32 %v3658, 1e-05
  %v3660 = vrsqrt.pop %v3659
  %v3661 = vmul.f32 %v3589, %v3660
  %v3662 = vmul.f32 %v3590, %v3660
  %v3663 = vmul.f32 %v3591, %v3660
  %v3664 = vmul.f32 %v3592, %v3660
  %v3665 = vmul.f32 %v3593, %v3660
  %v3666 = vmul.f32 %v3594, %v3660
  %v3667 = vmul.f32 %v3595, %v3660
  %v3668 = vmul.f32 %v3596, %v3660
  %v3669 = vmul.f32 %v3597, %v3660
  %v3670 = vmul.f32 %v3598, %v3660
  %v3671 = vmul.f32 %v3599, %v3660
  %v3672 = vmul.f32 %v3600, %v3660
  %v3673 = vmul.f32 %v3601, %v3660
  %v3674 = vmul.f32 %v3602, %v3660
  %v3675 = vmul.f32 %v3603, %v3660
  %v3676 = vmul.f32 %v3604, %v3660
  %v3678 = vlaneseq
  %v3679 = vshrl.u32 %v3678, 7
  %v3680 = vsub.s32 0, %v3679
  %v3681 = vrot.slane %v3548, %v3680
  %v3683 = vmul.f32 %v3661, %v3681
  %v3684 = vmul.f32 %v3662, %v3681
  %v3685 = vmul.f32 %v3663, %v3681
  %v3686 = vmul.f32 %v3664, %v3681
  %v3687 = vmul.f32 %v3665, %v3681
  %v3688 = vmul.f32 %v3666, %v3681
  %v3689 = vmul.f32 %v3667, %v3681
  %v3690 = vmul.f32 %v3668, %v3681
  %v3691 = vmul.f32 %v3669, %v3681
  %v3692 = vmul.f32 %v3670, %v3681
  %v3693 = vmul.f32 %v3671, %v3681
  %v3694 = vmul.f32 %v3672, %v3681
  %v3695 = vmul.f32 %v3673, %v3681
  %v3696 = vmul.f32 %v3674, %v3681
  %v3697 = vmul.f32 %v3675, %v3681
  %v3698 = vmul.f32 %v3676, %v3681
  %v3700 = vlaneseq
  %v3701 = vshrl.u32 %v3700, 7
  %v3702 = vsub.s32 0, %v3701
  %v3703 = vrot.slane %v3549, %v3702
  %v3705 = vadd.f32 %v3683, %v3703
  %v3706 = vadd.f32 %v3684, %v3703
  %v3707 = vadd.f32 %v3685, %v3703
  %v3708 = vadd.f32 %v3686, %v3703
  %v3709 = vadd.f32 %v3687, %v3703
  %v3710 = vadd.f32 %v3688, %v3703
  %v3711 = vadd.f32 %v3689, %v3703
  %v3712 = vadd.f32 %v3690, %v3703
  %v3713 = vadd.f32 %v3691, %v3703
  %v3714 = vadd.f32 %v3692, %v3703
  %v3715 = vadd.f32 %v3693, %v3703
  %v3716 = vadd.f32 %v3694, %v3703
  %v3717 = vadd.f32 %v3695, %v3703
  %v3718 = vadd.f32 %v3696, %v3703
  %v3719 = vadd.f32 %v3697, %v3703
  %v3720 = vadd.f32 %v3698, %v3703
  %v3721 = vlaneseq
  %v3722 = vshrl.u32 %v3721, 7
  %v3723 = vlaneseq
  %v3724 = vand.u32 %v3723, 127
  %vm3725 = vcmp.eq.s32.totalorder %v3722, %v3724
  %v3726 = vsel %vm3725, 1, 0
  %v3727 = vcvt.s32.f32 %v3726
  %v3729 = vsel %vm3550, %v3727, 0
  %v3732 = vsel %vm3550, %v3705, 0
  %v3735 = vsel %vm3550, %v3706, 0
  %v3738 = vsel %vm3550, %v3707, 0
  %v3741 = vsel %vm3550, %v3708, 0
  %v3744 = vsel %vm3550, %v3709, 0
  %v3747 = vsel %vm3550, %v3710, 0
  %v3750 = vsel %vm3550, %v3711, 0
  %v3753 = vsel %vm3550, %v3712, 0
  %v3756 = vsel %vm3550, %v3713, 0
  %v3759 = vsel %vm3550, %v3714, 0
  %v3762 = vsel %vm3550, %v3715, 0
  %v3765 = vsel %vm3550, %v3716, 0
  %v3768 = vsel %vm3550, %v3717, 0
  %v3771 = vsel %vm3550, %v3718, 0
  %v3774 = vsel %vm3550, %v3719, 0
  %v3777 = vsel %vm3550, %v3720, 0
  %3779 = vmatprep.subr.mxu0 0.0
  %3780 = vmatpush1.xpose.msra.mxu0 %v3732
  %3781 = vmatprep.subr.mxu0 0.0
  %3782 = vmatpush1.xpose.msra.mxu0 %v3735
  %3783 = vmatprep.subr.mxu0 0.0
  %3784 = vmatpush1.xpose.msra.mxu0 %v3738
  %3785 = vmatprep.subr.mxu0 0.0
  %3786 = vmatpush1.xpose.msra.mxu0 %v3741
  %3787 = vmatprep.subr.mxu0 0.0
  %3788 = vmatpush1.xpose.msra.mxu0 %v3744
  %3789 = vmatprep.subr.mxu0 0.0
  %3790 = vmatpush1.xpose.msra.mxu0 %v3747
  %3791 = vmatprep.subr.mxu0 0.0
  %3792 = vmatpush1.xpose.msra.mxu0 %v3750
  %3793 = vmatprep.subr.mxu0 0.0
  %3794 = vmatpush1.xpose.msra.mxu0 %v3753
  %3795 = vmatprep.subr.mxu0 0.0
  %3796 = vmatpush1.xpose.msra.mxu0 %v3756
  %3797 = vmatprep.subr.mxu0 0.0
  %3798 = vmatpush1.xpose.msra.mxu0 %v3759
  %3799 = vmatprep.subr.mxu0 0.0
  %3800 = vmatpush1.xpose.msra.mxu0 %v3762
  %3801 = vmatprep.subr.mxu0 0.0
  %3802 = vmatpush1.xpose.msra.mxu0 %v3765
  %3803 = vmatprep.subr.mxu0 0.0
  %3804 = vmatpush1.xpose.msra.mxu0 %v3768
  %3805 = vmatprep.subr.mxu0 0.0
  %3806 = vmatpush1.xpose.msra.mxu0 %v3771
  %3807 = vmatprep.subr.mxu0 0.0
  %3808 = vmatpush1.xpose.msra.mxu0 %v3774
  %3809 = vmatprep.subr.mxu0 0.0
  %3810 = vmatpush1.xpose.msra.mxu0 %v3777
  %3811 = vmatprep.subr.mxu0 0.0
  %3812 = vmatpush1.xpose.msra.mxu0 0.0
  %3813 = vmatprep.subr.mxu0 0.0
  %3814 = vmatpush1.xpose.msra.mxu0 0.0
  %3815 = vmatprep.subr.mxu0 0.0
  %3816 = vmatpush1.xpose.msra.mxu0 0.0
  %3817 = vmatprep.subr.mxu0 0.0
  %3818 = vmatpush1.xpose.msra.mxu0 0.0
  %3819 = vmatprep.subr.mxu0 0.0
  %3820 = vmatpush1.xpose.msra.mxu0 0.0
  %3821 = vmatprep.subr.mxu0 0.0
  %3822 = vmatpush1.xpose.msra.mxu0 0.0
  %3823 = vmatprep.subr.mxu0 0.0
  %3824 = vmatpush1.xpose.msra.mxu0 0.0
  %3825 = vmatprep.subr.mxu0 0.0
  %3826 = vmatpush1.xpose.msra.mxu0 0.0
  %3827 = vmatprep.subr.mxu0 0.0
  %3828 = vmatpush1.xpose.msra.mxu0 0.0
  %3829 = vmatprep.subr.mxu0 0.0
  %3830 = vmatpush1.xpose.msra.mxu0 0.0
  %3831 = vmatprep.subr.mxu0 0.0
  %3832 = vmatpush1.xpose.msra.mxu0 0.0
  %3833 = vmatprep.subr.mxu0 0.0
  %3834 = vmatpush1.xpose.msra.mxu0 0.0
  %3835 = vmatprep.subr.mxu0 0.0
  %3836 = vmatpush1.xpose.msra.mxu0 0.0
  %3837 = vmatprep.subr.mxu0 0.0
  %3838 = vmatpush1.xpose.msra.mxu0 0.0
  %3839 = vmatprep.subr.mxu0 0.0
  %3840 = vmatpush1.xpose.msra.mxu0 0.0
  %3841 = vmatprep.subr.mxu0 0.0
  %3842 = vmatpush1.xpose.msra.mxu0 0.0
  %3843 = vmatprep.mubr.f32.mxu0 0.0
  %3844 = vmatmul.mubr.f32.gmra.mrb[0].mxu0 %v3729
  %v3845 = vpop.f32.mrb[0].mxu0
  %v3846 = vadd.f32 0.0, %v3845
  %v3847 = vpop.f32.mrb[0].mxu0
  %3848 = vdwg.mxu0
  %3849 = vst [vmem:[%s14] sm:$0xff] %v3846
  // Predicated region
  $region58: #{mbconv_layers_forward.2} parent=0 // pred_check
    _
  $region59: #{mbconv_layers_forward.2} parent=0 // pred_check_branch
    %3851 = sbr.rel (0) target = $region61
  $region60: #{mbconv_layers_forward.2} parent=0 // pred_region
    _
  $region61: #{mbconv_layers_forward.2} parent=0 // pred_fallthru
    _
  // Predicated region
  $region62: #{mbconv_layers_forward.2} parent=0 // pred_check
    _
  $region63: #{mbconv_layers_forward.2} parent=0 // pred_check_branch
    %3853 = sbr.rel (0) target = $region65
  $region64: #{mbconv_layers_forward.2} parent=0 // pred_region
    _
  $region65: #{mbconv_layers_forward.2} parent=0 // pred_fallthru
    _

</llo_original>
